<compile_context>
chip_gen: v6e
topology: v6e:2x2x1
jax: 0.10.0
libtpu: 0.0.40
codegen_flags: <defaults>
</compile_context>

<pallas_src>
import jax
import jax.numpy as jnp
from jax.experimental import pallas as pl
from jax.experimental.pallas import tpu as pltpu

D_IN = 1000
D_IN_PAD = 1024   # 128-lane aligned contraction dim for fc1
D_HID = 512


def mlp_kernel(x_ref,
               w1, b1, w2, b2, w3, b3, w4, b4, w5, b5, w6, b6,
               o_ref, xpad_ref):
    """One batch tile of the 6-layer MLP. Weights bf16, biases f32."""
    tb = x_ref.shape[0]

    # Build the bf16, 1024-wide fc1 input in VMEM scratch.  The 24 pad lanes
    # are zeroed every step (trivial masked store) so the result is correct
    # regardless of how the grid is split across TensorCores.
    xpad_ref[:, D_IN:] = jnp.zeros((tb, D_IN_PAD - D_IN), jnp.bfloat16)
    xpad_ref[:, :D_IN] = x_ref[...].astype(jnp.bfloat16)

    def layer(h_bf16, w_ref, b_ref):
        acc = jnp.dot(h_bf16, w_ref[...], preferred_element_type=jnp.float32)
        return jnp.maximum(acc + b_ref[...], 0.0)   # bias + ReLU in f32

    h = layer(xpad_ref[...], w1, b1)                 # fc1
    h1 = h.astype(jnp.bfloat16)                      # residual branch, kept bf16
    h = layer(h1, w2, b2)                            # fc2
    h = layer(h.astype(jnp.bfloat16), w3, b3)        # fc3
    h = layer(h.astype(jnp.bfloat16), w4, b4)        # fc4
    h = layer(h.astype(jnp.bfloat16) + h1, w5, b5)   # fc5 on residual sum (bf16 add)
    h = layer(h.astype(jnp.bfloat16), w6, b6)        # fc6

    o_ref[...] = h.astype(o_ref.dtype)


def _round_up(n, m):
    return ((n + m - 1) // m) * m


def diffraction_embedder(x, params, *, tb=256):
    """x: (B, 1000) float32.  params: 6 (W, b) pairs with W laid out (in, out)."""
    B, D = x.shape
    assert D == D_IN

    # Fill the 256-wide MXU M pass, but keep the grid >= 2 steps when possible
    # so the "parallel" batch axis can shard across the 2 TensorCores on v7x.
    # (If xprof shows a single-core run on v7x, switch this axis to
    #  pltpu.CORE_PARALLEL; "parallel" is the portable default.)
    tb = max(8, min(tb, _round_up(pl.cdiv(B, 2), 8)))

    flat_params = []
    in_specs = [pl.BlockSpec((tb, D_IN), lambda i: (i, 0))]   # last dim == full dim
    # Whole-array VMEM refs: resident once for all batch tiles, no double buffer.
    weight_spec = pl.BlockSpec(memory_space=pltpu.MemorySpace.VMEM)
    for li, (w, b) in enumerate(params):
        if li == 0:
            # Zero-pad fc1's contraction dim to 128-multiple (zeros are exact no-ops).
            w = jnp.pad(w, ((0, D_IN_PAD - D_IN), (0, 0)))
        flat_params.append(w.astype(jnp.bfloat16))                # MXU operands in bf16
        flat_params.append(b.reshape(1, -1).astype(jnp.float32))  # 2-D f32 bias
        in_specs.append(weight_spec)
        in_specs.append(weight_spec)

    grid = (pl.cdiv(B, tb),)
    out_spec = pl.BlockSpec((tb, D_HID), lambda i: (i, 0))

    flops = 2 * B * (D_IN_PAD * D_HID + 5 * D_HID * D_HID)
    bytes_accessed = (2 * (D_IN_PAD * D_HID + 5 * D_HID * D_HID)  # bf16 weights
                      + 4 * 6 * D_HID                             # f32 biases
                      + 4 * B * (D_IN + D_HID))                   # f32 x in, f32 out
    cost = pl.CostEstimate(flops=flops, transcendentals=0,
                           bytes_accessed=bytes_accessed)

    return pl.pallas_call(
        mlp_kernel,
        out_shape=jax.ShapeDtypeStruct((B, D_HID), jnp.float32),
        grid_spec=pltpu.PrefetchScalarGridSpec(
            num_scalar_prefetch=0,
            grid=grid,
            in_specs=in_specs,
            out_specs=out_spec,
            scratch_shapes=[pltpu.VMEM((tb, D_IN_PAD), jnp.bfloat16)],
        ),
        compiler_params=pltpu.CompilerParams(
            dimension_semantics=("parallel",),   # batch axis shards across TCs
            vmem_limit_bytes=32 << 20,           # need ~8-12 MB; headroom on v7x
        ),
        cost_estimate=cost,
    )(x, *flat_params)


def init_params(key):
    """Deterministic init mirroring nn.Linear's U(-1/sqrt(fan_in), 1/sqrt(fan_in))."""
    dims = [(D_IN, D_HID)] + [(D_HID, D_HID)] * 5
    params = []
    for (fan_in, fan_out) in dims:
        key, kw, kb = jax.random.split(key, 3)
        bound = 1.0 / jnp.sqrt(fan_in)
        w = jax.random.uniform(kw, (fan_in, fan_out), jnp.float32, -bound, bound)
        b = jax.random.uniform(kb, (fan_out,), jnp.float32, -bound, bound)
        params.append((w, b))
    return params


def reference_forward_f32(x, params):
    """Pure-JAX f32 reference of the PyTorch forward."""
    (w1, b1), (w2, b2), (w3, b3), (w4, b4), (w5, b5), (w6, b6) = params
    h = jnp.maximum(x @ w1 + b1, 0.0)
    h1 = h
    h = jnp.maximum(h @ w2 + b2, 0.0)
    h = jnp.maximum(h @ w3 + b3, 0.0)
    h = jnp.maximum(h @ w4 + b4, 0.0)
    h = jnp.maximum((h + h1) @ w5 + b5, 0.0)
    h = jnp.maximum(h @ w6 + b6, 0.0)
    return h


def reference_forward_bf16(x, params):
    """Reference matching the kernel numerics: bf16 matmul operands, f32 accum,
    bf16 residual branch."""
    bf16 = jnp.bfloat16

    def layer(h_bf, w, b):
        acc = jnp.dot(h_bf, w.astype(bf16), preferred_element_type=jnp.float32)
        return jnp.maximum(acc + b, 0.0)

    (w1, b1), (w2, b2), (w3, b3), (w4, b4), (w5, b5), (w6, b6) = params
    h = layer(x.astype(bf16), w1, b1)
    h1 = h.astype(bf16)
    h = layer(h1, w2, b2)
    h = layer(h.astype(bf16), w3, b3)
    h = layer(h.astype(bf16), w4, b4)
    h = layer(h.astype(bf16) + h1, w5, b5)
    h = layer(h.astype(bf16), w6, b6)
    return h


if __name__ == "__main__":
    key = jax.random.PRNGKey(0)
    kx, kp = jax.random.split(key)

    # Two grid steps (tb = round_up(cdiv(200,2),8) = 104), second one partial
    # -> exercises both the multi-step pipeline and the tail-masked output write.
    B = 200
    x = jax.random.normal(kx, (B, D_IN), jnp.float32)
    params = init_params(kp)

    out = diffraction_embedder(x, params)
    out = jax.block_until_ready(out)
    assert out.shape == (B, D_HID)

    ref_bf16 = reference_forward_bf16(x, params)
    ref_f32 = reference_forward_f32(x, params)

    # Tight check against a reference with matching (bf16-matmul) numerics.
    # NOTE: the bf16-operand / f32-accumulate path is the intended numeric
    # contract; the f32 check below is only a loose sanity bound.
    assert jnp.allclose(out, ref_bf16, atol=1e-2, rtol=1e-2), \
        "mismatch vs bf16-matmul reference"
    assert jnp.allclose(out, ref_f32, atol=1e-1, rtol=1e-1), \
        "mismatch vs f32 reference"

    print("KERNEL_OK")
</pallas_src>

<mosaic_0001>
module attributes {stable_mosaic.version = 11 : i64} {
  func.func @mlp_kernel(%arg0: i32, %arg1: memref<104x1000xf32, #tpu.memory_space<vmem>>, %arg2: memref<1024x512xbf16, #tpu.memory_space<vmem>>, %arg3: memref<1x512xf32, #tpu.memory_space<vmem>>, %arg4: memref<512x512xbf16, #tpu.memory_space<vmem>>, %arg5: memref<1x512xf32, #tpu.memory_space<vmem>>, %arg6: memref<512x512xbf16, #tpu.memory_space<vmem>>, %arg7: memref<1x512xf32, #tpu.memory_space<vmem>>, %arg8: memref<512x512xbf16, #tpu.memory_space<vmem>>, %arg9: memref<1x512xf32, #tpu.memory_space<vmem>>, %arg10: memref<512x512xbf16, #tpu.memory_space<vmem>>, %arg11: memref<1x512xf32, #tpu.memory_space<vmem>>, %arg12: memref<512x512xbf16, #tpu.memory_space<vmem>>, %arg13: memref<1x512xf32, #tpu.memory_space<vmem>>, %arg14: memref<104x512xf32, #tpu.memory_space<vmem>>, %arg15: memref<104x1024xbf16, #tpu.memory_space<vmem>>) attributes {dimension_semantics = [#tpu.dimension_semantics<parallel>], iteration_bounds = array<i64: 2>, scalar_prefetch = 0 : i64, scratch_operands = 1 : i64, tpu.core_type = #tpu.core_type<tc>, window_params = [{transform_indices = @transform_0, window_bounds = array<i64: 104, 1000>}, {pipeline_mode = #tpu.pipeline_mode<synchronous>, transform_indices = @transform_1, window_bounds = array<i64: 1024, 512>}, {pipeline_mode = #tpu.pipeline_mode<synchronous>, transform_indices = @transform_2, window_bounds = array<i64: 1, 512>}, {pipeline_mode = #tpu.pipeline_mode<synchronous>, transform_indices = @transform_3, window_bounds = array<i64: 512, 512>}, {pipeline_mode = #tpu.pipeline_mode<synchronous>, transform_indices = @transform_4, window_bounds = array<i64: 1, 512>}, {pipeline_mode = #tpu.pipeline_mode<synchronous>, transform_indices = @transform_5, window_bounds = array<i64: 512, 512>}, {pipeline_mode = #tpu.pipeline_mode<synchronous>, transform_indices = @transform_6, window_bounds = array<i64: 1, 512>}, {pipeline_mode = #tpu.pipeline_mode<synchronous>, transform_indices = @transform_7, window_bounds = array<i64: 512, 512>}, {pipeline_mode = #tpu.pipeline_mode<synchronous>, transform_indices = @transform_8, window_bounds = array<i64: 1, 512>}, {pipeline_mode = #tpu.pipeline_mode<synchronous>, transform_indices = @transform_9, window_bounds = array<i64: 512, 512>}, {pipeline_mode = #tpu.pipeline_mode<synchronous>, transform_indices = @transform_10, window_bounds = array<i64: 1, 512>}, {pipeline_mode = #tpu.pipeline_mode<synchronous>, transform_indices = @transform_11, window_bounds = array<i64: 512, 512>}, {pipeline_mode = #tpu.pipeline_mode<synchronous>, transform_indices = @transform_12, window_bounds = array<i64: 1, 512>}, {transform_indices = @transform_13, window_bounds = array<i64: 104, 512>}]} {
    %cst = arith.constant 0.000000e+00 : bf16
    %0 = vector.broadcast %cst : bf16 to vector<104x24xbf16>
    %c0 = arith.constant 0 : index
    %c1000 = arith.constant 1000 : index
    %1 = vector.load %arg15[%c0, %c1000] : memref<104x1024xbf16, #tpu.memory_space<vmem>>, vector<104x24xbf16>
    tpu.vector_store %arg15[%c0, %c1000], %0 {strides = array<i32>} : memref<104x1024xbf16, #tpu.memory_space<vmem>>, vector<104x24xbf16>,
    %c0_0 = arith.constant 0 : index
    %c0_1 = arith.constant 0 : index
    %2 = vector.load %arg1[%c0_0, %c0_1] : memref<104x1000xf32, #tpu.memory_space<vmem>>, vector<104x1000xf32>
    %3 = arith.truncf %2 : vector<104x1000xf32> to vector<104x1000xbf16>
    %c0_2 = arith.constant 0 : index
    %c0_3 = arith.constant 0 : index
    %4 = vector.load %arg15[%c0_2, %c0_3] : memref<104x1024xbf16, #tpu.memory_space<vmem>>, vector<104x1000xbf16>
    tpu.vector_store %arg15[%c0_2, %c0_3], %3 {strides = array<i32>} : memref<104x1024xbf16, #tpu.memory_space<vmem>>, vector<104x1000xbf16>,
    %c0_4 = arith.constant 0 : index
    %c0_5 = arith.constant 0 : index
    %5 = vector.load %arg15[%c0_4, %c0_5] : memref<104x1024xbf16, #tpu.memory_space<vmem>>, vector<104x1024xbf16>
    %c0_6 = arith.constant 0 : index
    %c0_7 = arith.constant 0 : index
    %6 = vector.load %arg2[%c0_6, %c0_7] : memref<1024x512xbf16, #tpu.memory_space<vmem>>, vector<1024x512xbf16>
    %cst_8 = arith.constant dense<0.000000e+00> : vector<104x512xf32>
    %7 = tpu.matmul %5, %6, %cst_8 {dimension_numbers = #tpu.dot_dimension_numbers<[1], [0], [0], [1], [0, 0, 1, 1], [], []>} : vector<104x1024xbf16>, vector<1024x512xbf16>, vector<104x512xf32> -> vector<104x512xf32>
    %c0_9 = arith.constant 0 : index
    %c0_10 = arith.constant 0 : index
    %8 = vector.load %arg3[%c0_9, %c0_10] : memref<1x512xf32, #tpu.memory_space<vmem>>, vector<1x512xf32>
    %9 = vector.broadcast %8 : vector<1x512xf32> to vector<104x512xf32>
    %10 = arith.addf %7, %9 : vector<104x512xf32>
    %cst_11 = arith.constant 0.000000e+00 : f32
    %11 = vector.broadcast %cst_11 : f32 to vector<104x512xf32>
    %12 = arith.maximumf %10, %11 : vector<104x512xf32>
    %13 = arith.truncf %12 : vector<104x512xf32> to vector<104x512xbf16>
    %c0_12 = arith.constant 0 : index
    %c0_13 = arith.constant 0 : index
    %14 = vector.load %arg4[%c0_12, %c0_13] : memref<512x512xbf16, #tpu.memory_space<vmem>>, vector<512x512xbf16>
    %cst_14 = arith.constant dense<0.000000e+00> : vector<104x512xf32>
    %15 = tpu.matmul %13, %14, %cst_14 {dimension_numbers = #tpu.dot_dimension_numbers<[1], [0], [0], [1], [0, 0, 1, 1], [], []>} : vector<104x512xbf16>, vector<512x512xbf16>, vector<104x512xf32> -> vector<104x512xf32>
    %c0_15 = arith.constant 0 : index
    %c0_16 = arith.constant 0 : index
    %16 = vector.load %arg5[%c0_15, %c0_16] : memref<1x512xf32, #tpu.memory_space<vmem>>, vector<1x512xf32>
    %17 = vector.broadcast %16 : vector<1x512xf32> to vector<104x512xf32>
    %18 = arith.addf %15, %17 : vector<104x512xf32>
    %cst_17 = arith.constant 0.000000e+00 : f32
    %19 = vector.broadcast %cst_17 : f32 to vector<104x512xf32>
    %20 = arith.maximumf %18, %19 : vector<104x512xf32>
    %21 = arith.truncf %20 : vector<104x512xf32> to vector<104x512xbf16>
    %c0_18 = arith.constant 0 : index
    %c0_19 = arith.constant 0 : index
    %22 = vector.load %arg6[%c0_18, %c0_19] : memref<512x512xbf16, #tpu.memory_space<vmem>>, vector<512x512xbf16>
    %cst_20 = arith.constant dense<0.000000e+00> : vector<104x512xf32>
    %23 = tpu.matmul %21, %22, %cst_20 {dimension_numbers = #tpu.dot_dimension_numbers<[1], [0], [0], [1], [0, 0, 1, 1], [], []>} : vector<104x512xbf16>, vector<512x512xbf16>, vector<104x512xf32> -> vector<104x512xf32>
    %c0_21 = arith.constant 0 : index
    %c0_22 = arith.constant 0 : index
    %24 = vector.load %arg7[%c0_21, %c0_22] : memref<1x512xf32, #tpu.memory_space<vmem>>, vector<1x512xf32>
    %25 = vector.broadcast %24 : vector<1x512xf32> to vector<104x512xf32>
    %26 = arith.addf %23, %25 : vector<104x512xf32>
    %cst_23 = arith.constant 0.000000e+00 : f32
    %27 = vector.broadcast %cst_23 : f32 to vector<104x512xf32>
    %28 = arith.maximumf %26, %27 : vector<104x512xf32>
    %29 = arith.truncf %28 : vector<104x512xf32> to vector<104x512xbf16>
    %c0_24 = arith.constant 0 : index
    %c0_25 = arith.constant 0 : index
    %30 = vector.load %arg8[%c0_24, %c0_25] : memref<512x512xbf16, #tpu.memory_space<vmem>>, vector<512x512xbf16>
    %cst_26 = arith.constant dense<0.000000e+00> : vector<104x512xf32>
    %31 = tpu.matmul %29, %30, %cst_26 {dimension_numbers = #tpu.dot_dimension_numbers<[1], [0], [0], [1], [0, 0, 1, 1], [], []>} : vector<104x512xbf16>, vector<512x512xbf16>, vector<104x512xf32> -> vector<104x512xf32>
    %c0_27 = arith.constant 0 : index
    %c0_28 = arith.constant 0 : index
    %32 = vector.load %arg9[%c0_27, %c0_28] : memref<1x512xf32, #tpu.memory_space<vmem>>, vector<1x512xf32>
    %33 = vector.broadcast %32 : vector<1x512xf32> to vector<104x512xf32>
    %34 = arith.addf %31, %33 : vector<104x512xf32>
    %cst_29 = arith.constant 0.000000e+00 : f32
    %35 = vector.broadcast %cst_29 : f32 to vector<104x512xf32>
    %36 = arith.maximumf %34, %35 : vector<104x512xf32>
    %37 = arith.truncf %36 : vector<104x512xf32> to vector<104x512xbf16>
    %38 = arith.addf %37, %13 : vector<104x512xbf16>
    %c0_30 = arith.constant 0 : index
    %c0_31 = arith.constant 0 : index
    %39 = vector.load %arg10[%c0_30, %c0_31] : memref<512x512xbf16, #tpu.memory_space<vmem>>, vector<512x512xbf16>
    %cst_32 = arith.constant dense<0.000000e+00> : vector<104x512xf32>
    %40 = tpu.matmul %38, %39, %cst_32 {dimension_numbers = #tpu.dot_dimension_numbers<[1], [0], [0], [1], [0, 0, 1, 1], [], []>} : vector<104x512xbf16>, vector<512x512xbf16>, vector<104x512xf32> -> vector<104x512xf32>
    %c0_33 = arith.constant 0 : index
    %c0_34 = arith.constant 0 : index
    %41 = vector.load %arg11[%c0_33, %c0_34] : memref<1x512xf32, #tpu.memory_space<vmem>>, vector<1x512xf32>
    %42 = vector.broadcast %41 : vector<1x512xf32> to vector<104x512xf32>
    %43 = arith.addf %40, %42 : vector<104x512xf32>
    %cst_35 = arith.constant 0.000000e+00 : f32
    %44 = vector.broadcast %cst_35 : f32 to vector<104x512xf32>
    %45 = arith.maximumf %43, %44 : vector<104x512xf32>
    %46 = arith.truncf %45 : vector<104x512xf32> to vector<104x512xbf16>
    %c0_36 = arith.constant 0 : index
    %c0_37 = arith.constant 0 : index
    %47 = vector.load %arg12[%c0_36, %c0_37] : memref<512x512xbf16, #tpu.memory_space<vmem>>, vector<512x512xbf16>
    %cst_38 = arith.constant dense<0.000000e+00> : vector<104x512xf32>
    %48 = tpu.matmul %46, %47, %cst_38 {dimension_numbers = #tpu.dot_dimension_numbers<[1], [0], [0], [1], [0, 0, 1, 1], [], []>} : vector<104x512xbf16>, vector<512x512xbf16>, vector<104x512xf32> -> vector<104x512xf32>
    %c0_39 = arith.constant 0 : index
    %c0_40 = arith.constant 0 : index
    %49 = vector.load %arg13[%c0_39, %c0_40] : memref<1x512xf32, #tpu.memory_space<vmem>>, vector<1x512xf32>
    %50 = vector.broadcast %49 : vector<1x512xf32> to vector<104x512xf32>
    %51 = arith.addf %48, %50 : vector<104x512xf32>
    %cst_41 = arith.constant 0.000000e+00 : f32
    %52 = vector.broadcast %cst_41 : f32 to vector<104x512xf32>
    %53 = arith.maximumf %51, %52 : vector<104x512xf32>
    %c0_42 = arith.constant 0 : index
    %c0_43 = arith.constant 0 : index
    %54 = vector.load %arg14[%c0_42, %c0_43] : memref<104x512xf32, #tpu.memory_space<vmem>>, vector<104x512xf32>
    tpu.vector_store %arg14[%c0_42, %c0_43], %53 {strides = array<i32>} : memref<104x512xf32, #tpu.memory_space<vmem>>, vector<104x512xf32>,
    return
  }
  func.func @transform_0(%arg0: i32) -> (i32, i32) {
    %c0_i32 = arith.constant 0 : i32
    %c0_i32_0 = arith.constant 0 : i32
    return %arg0, %c0_i32 : i32, i32
  }
  func.func @transform_1(%arg0: i32) -> (i32, i32) {
    %c0_i32 = arith.constant 0 : i32
    %c0_i32_0 = arith.constant 0 : i32
    %c0_i32_1 = arith.constant 0 : i32
    return %c0_i32, %c0_i32_0 : i32, i32
  }
  func.func @transform_2(%arg0: i32) -> (i32, i32) {
    %c0_i32 = arith.constant 0 : i32
    %c0_i32_0 = arith.constant 0 : i32
    %c0_i32_1 = arith.constant 0 : i32
    return %c0_i32, %c0_i32_0 : i32, i32
  }
  func.func @transform_3(%arg0: i32) -> (i32, i32) {
    %c0_i32 = arith.constant 0 : i32
    %c0_i32_0 = arith.constant 0 : i32
    %c0_i32_1 = arith.constant 0 : i32
    return %c0_i32, %c0_i32_0 : i32, i32
  }
  func.func @transform_4(%arg0: i32) -> (i32, i32) {
    %c0_i32 = arith.constant 0 : i32
    %c0_i32_0 = arith.constant 0 : i32
    %c0_i32_1 = arith.constant 0 : i32
    return %c0_i32, %c0_i32_0 : i32, i32
  }
  func.func @transform_5(%arg0: i32) -> (i32, i32) {
    %c0_i32 = arith.constant 0 : i32
    %c0_i32_0 = arith.constant 0 : i32
    %c0_i32_1 = arith.constant 0 : i32
    return %c0_i32, %c0_i32_0 : i32, i32
  }
  func.func @transform_6(%arg0: i32) -> (i32, i32) {
    %c0_i32 = arith.constant 0 : i32
    %c0_i32_0 = arith.constant 0 : i32
    %c0_i32_1 = arith.constant 0 : i32
    return %c0_i32, %c0_i32_0 : i32, i32
  }
  func.func @transform_7(%arg0: i32) -> (i32, i32) {
    %c0_i32 = arith.constant 0 : i32
    %c0_i32_0 = arith.constant 0 : i32
    %c0_i32_1 = arith.constant 0 : i32
    return %c0_i32, %c0_i32_0 : i32, i32
  }
  func.func @transform_8(%arg0: i32) -> (i32, i32) {
    %c0_i32 = arith.constant 0 : i32
    %c0_i32_0 = arith.constant 0 : i32
    %c0_i32_1 = arith.constant 0 : i32
    return %c0_i32, %c0_i32_0 : i32, i32
  }
  func.func @transform_9(%arg0: i32) -> (i32, i32) {
    %c0_i32 = arith.constant 0 : i32
    %c0_i32_0 = arith.constant 0 : i32
    %c0_i32_1 = arith.constant 0 : i32
    return %c0_i32, %c0_i32_0 : i32, i32
  }
  func.func @transform_10(%arg0: i32) -> (i32, i32) {
    %c0_i32 = arith.constant 0 : i32
    %c0_i32_0 = arith.constant 0 : i32
    %c0_i32_1 = arith.constant 0 : i32
    return %c0_i32, %c0_i32_0 : i32, i32
  }
  func.func @transform_11(%arg0: i32) -> (i32, i32) {
    %c0_i32 = arith.constant 0 : i32
    %c0_i32_0 = arith.constant 0 : i32
    %c0_i32_1 = arith.constant 0 : i32
    return %c0_i32, %c0_i32_0 : i32, i32
  }
  func.func @transform_12(%arg0: i32) -> (i32, i32) {
    %c0_i32 = arith.constant 0 : i32
    %c0_i32_0 = arith.constant 0 : i32
    %c0_i32_1 = arith.constant 0 : i32
    return %c0_i32, %c0_i32_0 : i32, i32
  }
  func.func @transform_13(%arg0: i32) -> (i32, i32) {
    %c0_i32 = arith.constant 0 : i32
    %c0_i32_0 = arith.constant 0 : i32
    return %arg0, %c0_i32 : i32, i32
  }
}

</mosaic_0001>

<llo_original>
// kernel: tpu_custom_call.1
$region0: #{tpu_custom_call.1}
  #allocation0 [shape = 'u32[]', space=smem, size = 0x4, offset = 0x4, fixed_abs, tag = 'smem constant byte address 0x4 - core index']
  #allocation1 [shape = 'u32[144,128]{1,0:T(1,128)}', space=vmem, size = 0x12000, scoped, tag = 'internal scratch']
  #allocation2 [shape = 'bf16[104,1024]{1,0:T(8,128)(2,1)}', space=vmem, size = 0x34000, scoped, tag = 'scratch operand']
  %s0 = inlined_call_operand.hbm [shape: f32[200,1000], index: 0, kind: input, shape index: {}]
  %s1 = inlined_call_operand.hbm [shape: bf16[1024,512], index: 1, kind: input, shape index: {}]
  %s2 = inlined_call_operand.hbm [shape: f32[1,512], index: 2, kind: input, shape index: {}]
  %s3 = inlined_call_operand.hbm [shape: bf16[512,512], index: 3, kind: input, shape index: {}]
  %s4 = inlined_call_operand.vmem [shape: f32[1,512], index: 4, kind: input, shape index: {}]
  %s5 = inlined_call_operand.hbm [shape: bf16[512,512], index: 5, kind: input, shape index: {}]
  %s6 = inlined_call_operand.vmem [shape: f32[1,512], index: 6, kind: input, shape index: {}]
  %s7 = inlined_call_operand.hbm [shape: bf16[512,512], index: 7, kind: input, shape index: {}]
  %s8 = inlined_call_operand.vmem [shape: f32[1,512], index: 8, kind: input, shape index: {}]
  %s9 = inlined_call_operand.hbm [shape: bf16[512,512], index: 9, kind: input, shape index: {}]
  %s10 = inlined_call_operand.vmem [shape: f32[1,512], index: 10, kind: input, shape index: {}]
  %s11 = inlined_call_operand.hbm [shape: bf16[512,512], index: 11, kind: input, shape index: {}]
  %s12 = inlined_call_operand.vmem [shape: f32[1,512], index: 12, kind: input, shape index: {}]
  %s13 = inlined_call_operand.hbm [shape: f32[200,512], index: 13, kind: output, shape index: {}]
  %s14 = sld [smem:[#allocation0]]
  $region117: #{tpu_custom_call.1} parent=0
    _
  %s16 = ssub.s32 1, %s14
  %s17 = scalar_select 0, %s16, %s14
  $region1: #{tpu_custom_call.1} parent=0
    #allocation3 [shape = 'u8[851968]{0}', space=vmem, size = 0xd0000, scoped, tag = 'input window, operand 0']
    #allocation4 [shape = 's32[2]{0}', space=sflag, size = 0x8, scoped, tag = 'scoped memory for tpu_custom_call.1']
    #allocation5 [shape = 's32[2]{0}', space=sflag, size = 0x8, scoped, tag = 'scoped memory for tpu_custom_call.1']
    #allocation6 [shape = 'u8[1048576]{0}', space=vmem, size = 0x100000, scoped, tag = 'input window, operand 1, single buffered']
    #allocation7 [shape = 's32[1]{0}', space=sflag, size = 0x4, scoped, tag = 'scoped memory for tpu_custom_call.1']
    #allocation8 [shape = 'u8[2048]{0}', space=vmem, size = 0x800, scoped, tag = 'input window, operand 2, single buffered']
    #allocation9 [shape = 'u8[524288]{0}', space=vmem, size = 0x80000, scoped, tag = 'input window, operand 3, single buffered']
    #allocation10 [shape = 's32[1]{0}', space=sflag, size = 0x4, scoped, tag = 'scoped memory for tpu_custom_call.1']
    #allocation11 [shape = 'u8[524288]{0}', space=vmem, size = 0x80000, scoped, tag = 'input window, operand 5, single buffered']
    #allocation12 [shape = 'u8[524288]{0}', space=vmem, size = 0x80000, scoped, tag = 'input window, operand 7, single buffered']
    #allocation13 [shape = 's32[1]{0}', space=sflag, size = 0x4, scoped, tag = 'scoped memory for tpu_custom_call.1']
    #allocation14 [shape = 'u8[524288]{0}', space=vmem, size = 0x80000, scoped, tag = 'input window, operand 9, single buffered']
    #allocation15 [shape = 'u8[524288]{0}', space=vmem, size = 0x80000, scoped, tag = 'input window, operand 11, single buffered']
    #allocation16 [shape = 's32[1]{0}', space=sflag, size = 0x4, scoped, tag = 'scoped memory for tpu_custom_call.1']
    #allocation17 [shape = 'u8[425984]{0}', space=vmem, size = 0x68000, scoped, tag = 'output window, operand 0']
    %18 = vsyncpa [#allocation4], 0
    %s19 = scalar_lea.sflag [#allocation4], 1
    %20 = vsyncpa %s19, 0
    %21 = vsyncpa [#allocation7], 0
    %22 = vsyncpa [#allocation10], 0
    %23 = vsyncpa [#allocation13], 0
    %24 = vsyncpa [#allocation16], 0
    %25 = vsyncpa [#allocation5], 0
    %s26 = scalar_lea.sflag [#allocation5], 1
    %27 = vsyncpa %s26, 0
    loop: start=0, step=1, limit=4
    $region2: #{tpu_custom_call.1} parent=1 // loop_pre_header
      _
    $region3: #{tpu_custom_call.1} parent=1 // loop_header
      %s29 = sphi 0, %s33
      %p30 = scmp.ge.s32.totalorder %s29, 4
      %s39 = sphi 0, %s41
      %s42 = sphi 0, %s39
      %s43 = sphi 0, %s42
      %s59 = sphi 0, %s43
      %s63 = sphi 0, %s63
      %s65 = sphi 0, %s63
      %s66 = sphi 0, %s65
      %s80 = sphi 0, %s66
      %s84 = sphi 0, %s84
      %s86 = sphi 0, %s84
      %s87 = sphi 0, %s86
      %s101 = sphi 0, %s87
      %s105 = sphi 0, %s105
      %s107 = sphi 0, %s105
      %s108 = sphi 0, %s107
      %s122 = sphi 0, %s108
      %s126 = sphi 0, %s126
      %s128 = sphi 0, %s126
      %s129 = sphi 0, %s128
      %s143 = sphi 0, %s129
      %s147 = sphi 0, %s147
      %s149 = sphi 0, %s147
      %s150 = sphi 0, %s149
      %s164 = sphi 0, %s150
      %s168 = sphi 0, %s168
      %s170 = sphi 0, %s168
      %s171 = sphi 0, %s170
      %s185 = sphi 0, %s171
      %s189 = sphi 0, %s189
      %s191 = sphi 0, %s189
      %s192 = sphi 0, %s191
      %s206 = sphi 0, %s192
      %s210 = sphi 0, %s210
      %s212 = sphi 0, %s210
      %s213 = sphi 0, %s212
      %s227 = sphi 0, %s213
      %s231 = sphi 0, %s231
      %s233 = sphi 0, %s231
      %s234 = sphi 0, %s233
      %s248 = sphi 0, %s234
      %s252 = sphi 0, %s252
      %s254 = sphi 0, %s252
      %s255 = sphi 0, %s254
      %s269 = sphi 0, %s255
      %s273 = sphi 0, %s273
      %s275 = sphi 0, %s273
      %s276 = sphi 0, %s275
      %s290 = sphi 0, %s276
      %s294 = sphi 0, %s294
      %s296 = sphi 0, %s294
      %s297 = sphi 0, %s296
      %s311 = sphi 0, %s297
      %s317 = sphi 0, %s319
      %s320 = sphi 0, %s317
      %s321 = sphi 0, %s320
      %s337 = sphi 0, %s321
    $region4: #{tpu_custom_call.1} parent=1 // loop_header_branch
      %32 = sbr.rel (%p30) target = $region8
    $region5: #{tpu_custom_call.1} parent=1 // loop_body
      %s34 = ssub.s32 %s29, 1
      %s35 = ssub.s32 %s29, 2
      %s36 = sadd.s32 %s29, 1
      %s37 = ssub.s32 %s29, %s36
      %p38 = scmp.eq.s32.totalorder %s37, 0
      %s40 = sadd.s32 %s39, 1
      %s41 = scalar_select %p38, %s39, %s40
      %p44 = pneg %p38
      %p45 = scmp.eq.s32.totalorder %s29, 1
      %p46 = por %p44, %p45
      %p47 = scmp.ne.s32.totalorder %s39, %s42
      %p48 = scmp.eq.s32.totalorder %s29, 0
      %p49 = por %p47, %p48
      %p50 = scmp.ne.s32.totalorder %s39, %s42
      %p51 = scmp.eq.s32.totalorder %s34, 1
      %p52 = por %p50, %p51
      %p53 = scmp.ne.s32.totalorder %s42, %s43
      %p54 = scmp.eq.s32.totalorder %s34, 0
      %p55 = por %p53, %p54
      %p56 = scmp.ne.s32.totalorder %s42, %s43
      %p57 = scmp.eq.s32.totalorder %s35, 1
      %p58 = por %p56, %p57
      %p60 = scmp.ne.s32.totalorder %s43, %s59
      %p61 = scmp.eq.s32.totalorder %s35, 0
      %p62 = por %p60, %p61
      %s64 = sadd.s32 %s63, 1
      %p67 = scmp.eq.s32.totalorder %s29, 1
      %p68 = scmp.ne.s32.totalorder %s63, %s65
      %p69 = scmp.eq.s32.totalorder %s29, 0
      %p70 = por %p68, %p69
      %p71 = scmp.ne.s32.totalorder %s63, %s65
      %p72 = scmp.eq.s32.totalorder %s34, 1
      %p73 = por %p71, %p72
      %p74 = scmp.ne.s32.totalorder %s65, %s66
      %p75 = scmp.eq.s32.totalorder %s34, 0
      %p76 = por %p74, %p75
      %p77 = scmp.ne.s32.totalorder %s65, %s66
      %p78 = scmp.eq.s32.totalorder %s35, 1
      %p79 = por %p77, %p78
      %p81 = scmp.ne.s32.totalorder %s66, %s80
      %p82 = scmp.eq.s32.totalorder %s35, 0
      %p83 = por %p81, %p82
      %s85 = sadd.s32 %s84, 1
      %p88 = scmp.eq.s32.totalorder %s29, 1
      %p89 = scmp.ne.s32.totalorder %s84, %s86
      %p90 = scmp.eq.s32.totalorder %s29, 0
      %p91 = por %p89, %p90
      %p92 = scmp.ne.s32.totalorder %s84, %s86
      %p93 = scmp.eq.s32.totalorder %s34, 1
      %p94 = por %p92, %p93
      %p95 = scmp.ne.s32.totalorder %s86, %s87
      %p96 = scmp.eq.s32.totalorder %s34, 0
      %p97 = por %p95, %p96
      %p98 = scmp.ne.s32.totalorder %s86, %s87
      %p99 = scmp.eq.s32.totalorder %s35, 1
      %p100 = por %p98, %p99
      %p102 = scmp.ne.s32.totalorder %s87, %s101
      %p103 = scmp.eq.s32.totalorder %s35, 0
      %p104 = por %p102, %p103
      %s106 = sadd.s32 %s105, 1
      %p109 = scmp.eq.s32.totalorder %s29, 1
      %p110 = scmp.ne.s32.totalorder %s105, %s107
      %p111 = scmp.eq.s32.totalorder %s29, 0
      %p112 = por %p110, %p111
      %p113 = scmp.ne.s32.totalorder %s105, %s107
      %p114 = scmp.eq.s32.totalorder %s34, 1
      %p115 = por %p113, %p114
      %p116 = scmp.ne.s32.totalorder %s107, %s108
      %p117 = scmp.eq.s32.totalorder %s34, 0
      %p118 = por %p116, %p117
      %p119 = scmp.ne.s32.totalorder %s107, %s108
      %p120 = scmp.eq.s32.totalorder %s35, 1
      %p121 = por %p119, %p120
      %p123 = scmp.ne.s32.totalorder %s108, %s122
      %p124 = scmp.eq.s32.totalorder %s35, 0
      %p125 = por %p123, %p124
      %s127 = sadd.s32 %s126, 1
      %p130 = scmp.eq.s32.totalorder %s29, 1
      %p131 = scmp.ne.s32.totalorder %s126, %s128
      %p132 = scmp.eq.s32.totalorder %s29, 0
      %p133 = por %p131, %p132
      %p134 = scmp.ne.s32.totalorder %s126, %s128
      %p135 = scmp.eq.s32.totalorder %s34, 1
      %p136 = por %p134, %p135
      %p137 = scmp.ne.s32.totalorder %s128, %s129
      %p138 = scmp.eq.s32.totalorder %s34, 0
      %p139 = por %p137, %p138
      %p140 = scmp.ne.s32.totalorder %s128, %s129
      %p141 = scmp.eq.s32.totalorder %s35, 1
      %p142 = por %p140, %p141
      %p144 = scmp.ne.s32.totalorder %s129, %s143
      %p145 = scmp.eq.s32.totalorder %s35, 0
      %p146 = por %p144, %p145
      %s148 = sadd.s32 %s147, 1
      %p151 = scmp.eq.s32.totalorder %s29, 1
      %p152 = scmp.ne.s32.totalorder %s147, %s149
      %p153 = scmp.eq.s32.totalorder %s29, 0
      %p154 = por %p152, %p153
      %p155 = scmp.ne.s32.totalorder %s147, %s149
      %p156 = scmp.eq.s32.totalorder %s34, 1
      %p157 = por %p155, %p156
      %p158 = scmp.ne.s32.totalorder %s149, %s150
      %p159 = scmp.eq.s32.totalorder %s34, 0
      %p160 = por %p158, %p159
      %p161 = scmp.ne.s32.totalorder %s149, %s150
      %p162 = scmp.eq.s32.totalorder %s35, 1
      %p163 = por %p161, %p162
      %p165 = scmp.ne.s32.totalorder %s150, %s164
      %p166 = scmp.eq.s32.totalorder %s35, 0
      %p167 = por %p165, %p166
      %s169 = sadd.s32 %s168, 1
      %p172 = scmp.eq.s32.totalorder %s29, 1
      %p173 = scmp.ne.s32.totalorder %s168, %s170
      %p174 = scmp.eq.s32.totalorder %s29, 0
      %p175 = por %p173, %p174
      %p176 = scmp.ne.s32.totalorder %s168, %s170
      %p177 = scmp.eq.s32.totalorder %s34, 1
      %p178 = por %p176, %p177
      %p179 = scmp.ne.s32.totalorder %s170, %s171
      %p180 = scmp.eq.s32.totalorder %s34, 0
      %p181 = por %p179, %p180
      %p182 = scmp.ne.s32.totalorder %s170, %s171
      %p183 = scmp.eq.s32.totalorder %s35, 1
      %p184 = por %p182, %p183
      %p186 = scmp.ne.s32.totalorder %s171, %s185
      %p187 = scmp.eq.s32.totalorder %s35, 0
      %p188 = por %p186, %p187
      %s190 = sadd.s32 %s189, 1
      %p193 = scmp.eq.s32.totalorder %s29, 1
      %p194 = scmp.ne.s32.totalorder %s189, %s191
      %p195 = scmp.eq.s32.totalorder %s29, 0
      %p196 = por %p194, %p195
      %p197 = scmp.ne.s32.totalorder %s189, %s191
      %p198 = scmp.eq.s32.totalorder %s34, 1
      %p199 = por %p197, %p198
      %p200 = scmp.ne.s32.totalorder %s191, %s192
      %p201 = scmp.eq.s32.totalorder %s34, 0
      %p202 = por %p200, %p201
      %p203 = scmp.ne.s32.totalorder %s191, %s192
      %p204 = scmp.eq.s32.totalorder %s35, 1
      %p205 = por %p203, %p204
      %p207 = scmp.ne.s32.totalorder %s192, %s206
      %p208 = scmp.eq.s32.totalorder %s35, 0
      %p209 = por %p207, %p208
      %s211 = sadd.s32 %s210, 1
      %p214 = scmp.eq.s32.totalorder %s29, 1
      %p215 = scmp.ne.s32.totalorder %s210, %s212
      %p216 = scmp.eq.s32.totalorder %s29, 0
      %p217 = por %p215, %p216
      %p218 = scmp.ne.s32.totalorder %s210, %s212
      %p219 = scmp.eq.s32.totalorder %s34, 1
      %p220 = por %p218, %p219
      %p221 = scmp.ne.s32.totalorder %s212, %s213
      %p222 = scmp.eq.s32.totalorder %s34, 0
      %p223 = por %p221, %p222
      %p224 = scmp.ne.s32.totalorder %s212, %s213
      %p225 = scmp.eq.s32.totalorder %s35, 1
      %p226 = por %p224, %p225
      %p228 = scmp.ne.s32.totalorder %s213, %s227
      %p229 = scmp.eq.s32.totalorder %s35, 0
      %p230 = por %p228, %p229
      %s232 = sadd.s32 %s231, 1
      %p235 = scmp.eq.s32.totalorder %s29, 1
      %p236 = scmp.ne.s32.totalorder %s231, %s233
      %p237 = scmp.eq.s32.totalorder %s29, 0
      %p238 = por %p236, %p237
      %p239 = scmp.ne.s32.totalorder %s231, %s233
      %p240 = scmp.eq.s32.totalorder %s34, 1
      %p241 = por %p239, %p240
      %p242 = scmp.ne.s32.totalorder %s233, %s234
      %p243 = scmp.eq.s32.totalorder %s34, 0
      %p244 = por %p242, %p243
      %p245 = scmp.ne.s32.totalorder %s233, %s234
      %p246 = scmp.eq.s32.totalorder %s35, 1
      %p247 = por %p245, %p246
      %p249 = scmp.ne.s32.totalorder %s234, %s248
      %p250 = scmp.eq.s32.totalorder %s35, 0
      %p251 = por %p249, %p250
      %s253 = sadd.s32 %s252, 1
      %p256 = scmp.eq.s32.totalorder %s29, 1
      %p257 = scmp.ne.s32.totalorder %s252, %s254
      %p258 = scmp.eq.s32.totalorder %s29, 0
      %p259 = por %p257, %p258
      %p260 = scmp.ne.s32.totalorder %s252, %s254
      %p261 = scmp.eq.s32.totalorder %s34, 1
      %p262 = por %p260, %p261
      %p263 = scmp.ne.s32.totalorder %s254, %s255
      %p264 = scmp.eq.s32.totalorder %s34, 0
      %p265 = por %p263, %p264
      %p266 = scmp.ne.s32.totalorder %s254, %s255
      %p267 = scmp.eq.s32.totalorder %s35, 1
      %p268 = por %p266, %p267
      %p270 = scmp.ne.s32.totalorder %s255, %s269
      %p271 = scmp.eq.s32.totalorder %s35, 0
      %p272 = por %p270, %p271
      %s274 = sadd.s32 %s273, 1
      %p277 = scmp.eq.s32.totalorder %s29, 1
      %p278 = scmp.ne.s32.totalorder %s273, %s275
      %p279 = scmp.eq.s32.totalorder %s29, 0
      %p280 = por %p278, %p279
      %p281 = scmp.ne.s32.totalorder %s273, %s275
      %p282 = scmp.eq.s32.totalorder %s34, 1
      %p283 = por %p281, %p282
      %p284 = scmp.ne.s32.totalorder %s275, %s276
      %p285 = scmp.eq.s32.totalorder %s34, 0
      %p286 = por %p284, %p285
      %p287 = scmp.ne.s32.totalorder %s275, %s276
      %p288 = scmp.eq.s32.totalorder %s35, 1
      %p289 = por %p287, %p288
      %p291 = scmp.ne.s32.totalorder %s276, %s290
      %p292 = scmp.eq.s32.totalorder %s35, 0
      %p293 = por %p291, %p292
      %s295 = sadd.s32 %s294, 1
      %p298 = scmp.eq.s32.totalorder %s29, 1
      %p299 = scmp.ne.s32.totalorder %s294, %s296
      %p300 = scmp.eq.s32.totalorder %s29, 0
      %p301 = por %p299, %p300
      %p302 = scmp.ne.s32.totalorder %s294, %s296
      %p303 = scmp.eq.s32.totalorder %s34, 1
      %p304 = por %p302, %p303
      %p305 = scmp.ne.s32.totalorder %s296, %s297
      %p306 = scmp.eq.s32.totalorder %s34, 0
      %p307 = por %p305, %p306
      %p308 = scmp.ne.s32.totalorder %s296, %s297
      %p309 = scmp.eq.s32.totalorder %s35, 1
      %p310 = por %p308, %p309
      %p312 = scmp.ne.s32.totalorder %s297, %s311
      %p313 = scmp.eq.s32.totalorder %s35, 0
      %p314 = por %p312, %p313
      %s315 = ssub.s32 %s29, %s36
      %p316 = scmp.eq.s32.totalorder %s315, 0
      %s318 = sadd.s32 %s317, 1
      %s319 = scalar_select %p316, %s317, %s318
      %p322 = pneg %p316
      %p323 = scmp.eq.s32.totalorder %s29, 1
      %p324 = por %p322, %p323
      %p325 = scmp.ne.s32.totalorder %s317, %s320
      %p326 = scmp.eq.s32.totalorder %s29, 0
      %p327 = por %p325, %p326
      %p328 = scmp.ne.s32.totalorder %s317, %s320
      %p329 = scmp.eq.s32.totalorder %s34, 1
      %p330 = por %p328, %p329
      %p331 = scmp.ne.s32.totalorder %s320, %s321
      %p332 = scmp.eq.s32.totalorder %s34, 0
      %p333 = por %p331, %p332
      %p334 = scmp.ne.s32.totalorder %s320, %s321
      %p335 = scmp.eq.s32.totalorder %s35, 1
      %p336 = por %p334, %p335
      %p338 = scmp.ne.s32.totalorder %s321, %s337
      %p339 = scmp.eq.s32.totalorder %s35, 0
      %p340 = por %p338, %p339
      %p341 = scmp.le.s32.totalorder 1, %s29
      %p342 = scmp.lt.s32.totalorder %s29, 3
      %p343 = pnand %p341, %p342
      %p344 = pneg %p343
      // Predicated region
      $region9: #{tpu_custom_call.1} parent=5 // pred_check
        _
      $region10: #{tpu_custom_call.1} parent=5 // pred_check_branch
        %346 = sbr.rel (%p343) target = $region12
      $region11: #{tpu_custom_call.1} parent=5 // pred_region
        %s347 = ssub.s32 %s29, 1
        // Predicated region
        $region13: #{tpu_custom_call.1} parent=11 // pred_check
          %p348 = pneg %p76
        $region14: #{tpu_custom_call.1} parent=11 // pred_check_branch
          %350 = sbr.rel (%p348) target = $region16
        $region15: #{tpu_custom_call.1} parent=11 // pred_region
          %s352 = ssub.s32 32768, 32768
          %353 = vsyncadd [#allocation7], %s352
          %s354 = sshll.u32 [#allocation6], 4
          %s355 = int_to_ptr.vmem [resolvable:$true] %s354
          %360 = dma.hbm_to_vmem [thread:$0]  %s1, 32768, %s355, [#allocation7], 256, 256, 16
        $region16: #{tpu_custom_call.1} parent=11 // pred_fallthru
          _
        // Predicated region
        $region17: #{tpu_custom_call.1} parent=11 // pred_check
          %p361 = pneg %p97
        $region18: #{tpu_custom_call.1} parent=11 // pred_check_branch
          %363 = sbr.rel (%p361) target = $region20
        $region19: #{tpu_custom_call.1} parent=11 // pred_region
          %s365 = ssub.s32 64, 64
          %366 = vsyncadd [#allocation7], %s365
          %s368 = sshll.u32 [#allocation8], 4
          %s369 = int_to_ptr.vmem [resolvable:$true] %s368
          %371 = dma.hbm_to_vmem [thread:$0]  %s2, 64, %s369, [#allocation7]
        $region20: #{tpu_custom_call.1} parent=11 // pred_fallthru
          _
        // Predicated region
        $region21: #{tpu_custom_call.1} parent=11 // pred_check
          %p372 = pneg %p118
        $region22: #{tpu_custom_call.1} parent=11 // pred_check_branch
          %374 = sbr.rel (%p372) target = $region24
        $region23: #{tpu_custom_call.1} parent=11 // pred_region
          %s376 = ssub.s32 16384, 16384
          %377 = vsyncadd [#allocation10], %s376
          %s378 = sshll.u32 [#allocation9], 4
          %s379 = int_to_ptr.vmem [resolvable:$true] %s378
          %384 = dma.hbm_to_vmem [thread:$0]  %s3, 16384, %s379, [#allocation10], 256, 256, 16
        $region24: #{tpu_custom_call.1} parent=11 // pred_fallthru
          _
        // Predicated region
        $region25: #{tpu_custom_call.1} parent=11 // pred_check
          %p385 = pneg %p139
        $region26: #{tpu_custom_call.1} parent=11 // pred_check_branch
          %387 = sbr.rel (%p385) target = $region28
        $region27: #{tpu_custom_call.1} parent=11 // pred_region
          _
        $region28: #{tpu_custom_call.1} parent=11 // pred_fallthru
          _
        // Predicated region
        $region29: #{tpu_custom_call.1} parent=11 // pred_check
          %p388 = pneg %p160
        $region30: #{tpu_custom_call.1} parent=11 // pred_check_branch
          %390 = sbr.rel (%p388) target = $region32
        $region31: #{tpu_custom_call.1} parent=11 // pred_region
          %s392 = ssub.s32 16384, 16384
          %393 = vsyncadd [#allocation10], %s392
          %s394 = sshll.u32 [#allocation11], 4
          %s395 = int_to_ptr.vmem [resolvable:$true] %s394
          %400 = dma.hbm_to_vmem [thread:$0]  %s5, 16384, %s395, [#allocation10], 256, 256, 16
        $region32: #{tpu_custom_call.1} parent=11 // pred_fallthru
          _
        // Predicated region
        $region33: #{tpu_custom_call.1} parent=11 // pred_check
          %p401 = pneg %p181
        $region34: #{tpu_custom_call.1} parent=11 // pred_check_branch
          %403 = sbr.rel (%p401) target = $region36
        $region35: #{tpu_custom_call.1} parent=11 // pred_region
          _
        $region36: #{tpu_custom_call.1} parent=11 // pred_fallthru
          _
        // Predicated region
        $region37: #{tpu_custom_call.1} parent=11 // pred_check
          %p404 = pneg %p202
        $region38: #{tpu_custom_call.1} parent=11 // pred_check_branch
          %406 = sbr.rel (%p404) target = $region40
        $region39: #{tpu_custom_call.1} parent=11 // pred_region
          %s408 = ssub.s32 16384, 16384
          %409 = vsyncadd [#allocation13], %s408
          %s410 = sshll.u32 [#allocation12], 4
          %s411 = int_to_ptr.vmem [resolvable:$true] %s410
          %416 = dma.hbm_to_vmem [thread:$0]  %s7, 16384, %s411, [#allocation13], 256, 256, 16
        $region40: #{tpu_custom_call.1} parent=11 // pred_fallthru
          _
        // Predicated region
        $region41: #{tpu_custom_call.1} parent=11 // pred_check
          %p417 = pneg %p223
        $region42: #{tpu_custom_call.1} parent=11 // pred_check_branch
          %419 = sbr.rel (%p417) target = $region44
        $region43: #{tpu_custom_call.1} parent=11 // pred_region
          _
        $region44: #{tpu_custom_call.1} parent=11 // pred_fallthru
          _
        // Predicated region
        $region45: #{tpu_custom_call.1} parent=11 // pred_check
          %p420 = pneg %p244
        $region46: #{tpu_custom_call.1} parent=11 // pred_check_branch
          %422 = sbr.rel (%p420) target = $region48
        $region47: #{tpu_custom_call.1} parent=11 // pred_region
          %s424 = ssub.s32 16384, 16384
          %425 = vsyncadd [#allocation13], %s424
          %s426 = sshll.u32 [#allocation14], 4
          %s427 = int_to_ptr.vmem [resolvable:$true] %s426
          %432 = dma.hbm_to_vmem [thread:$0]  %s9, 16384, %s427, [#allocation13], 256, 256, 16
        $region48: #{tpu_custom_call.1} parent=11 // pred_fallthru
          _
        // Predicated region
        $region49: #{tpu_custom_call.1} parent=11 // pred_check
          %p433 = pneg %p265
        $region50: #{tpu_custom_call.1} parent=11 // pred_check_branch
          %435 = sbr.rel (%p433) target = $region52
        $region51: #{tpu_custom_call.1} parent=11 // pred_region
          _
        $region52: #{tpu_custom_call.1} parent=11 // pred_fallthru
          _
        // Predicated region
        $region53: #{tpu_custom_call.1} parent=11 // pred_check
          %p436 = pneg %p286
        $region54: #{tpu_custom_call.1} parent=11 // pred_check_branch
          %438 = sbr.rel (%p436) target = $region56
        $region55: #{tpu_custom_call.1} parent=11 // pred_region
          %s440 = ssub.s32 16384, 16384
          %441 = vsyncadd [#allocation16], %s440
          %s442 = sshll.u32 [#allocation15], 4
          %s443 = int_to_ptr.vmem [resolvable:$true] %s442
          %448 = dma.hbm_to_vmem [thread:$0]  %s11, 16384, %s443, [#allocation16], 256, 256, 16
        $region56: #{tpu_custom_call.1} parent=11 // pred_fallthru
          _
        // Predicated region
        $region57: #{tpu_custom_call.1} parent=11 // pred_check
          %p449 = pneg %p307
        $region58: #{tpu_custom_call.1} parent=11 // pred_check_branch
          %451 = sbr.rel (%p449) target = $region60
        $region59: #{tpu_custom_call.1} parent=11 // pred_region
          _
        $region60: #{tpu_custom_call.1} parent=11 // pred_fallthru
          _
      $region12: #{tpu_custom_call.1} parent=5 // pred_fallthru
        _
      %p452 = scmp.lt.s32.totalorder %s29, 2
      // Predicated region
      $region61: #{tpu_custom_call.1} parent=5 // pred_check
        %p453 = pneg %p452
      $region62: #{tpu_custom_call.1} parent=5 // pred_check_branch
        %455 = sbr.rel (%p453) target = $region64
      $region63: #{tpu_custom_call.1} parent=5 // pred_region
        // Predicated region
        $region65: #{tpu_custom_call.1} parent=63 // pred_check
          %p456 = pneg %p49
        $region66: #{tpu_custom_call.1} parent=63 // pred_check_branch
          %458 = sbr.rel (%p456) target = $region68
        $region67: #{tpu_custom_call.1} parent=63 // pred_region
          %s459 = sand.u32 %s39, 1
          %s460 = scalar_lea.sflag [#allocation4], %s459
          %s461 = sand.u32 %s39, 1
          %s462 = smul.addr %s461, 832
          %s463 = scalar_lea.vmem [#allocation3], %s462
          %s464 = smul.u32 13, %s29
          %s465 = ssub.s32 25, %s464
          %p466 = scmp.lt.s32.totalorder %s465, 13
          %s467 = scalar_select %p466, %s465, 13
          %s468 = smul.u32 128, %s467
          %s469 = smul.u32 %s468, 8
          %s471 = ssub.s32 13312, %s469
          %472 = vsyncadd %s460, %s471
          %p473 = scmp.ne.s32.totalorder 0, %s469
          %s474 = smul.addr %s464, 8
          %s475 = smul.addr %s474, 128
          %s476 = scalar_lea.hbm %s0, %s475
          %s477 = smul.u32 64, %s467
          %s478 = sshll.u32 %s463, 4
          %s479 = int_to_ptr.vmem [resolvable:$true] %s478
          %s480 = sshll.u32 %s477, 4
          %484 = dma.hbm_to_vmem [thread:$0]  (%p473), %s476, %s480, %s479, %s460, 1024, 1024, 64
        $region68: #{tpu_custom_call.1} parent=63 // pred_fallthru
          _
      $region64: #{tpu_custom_call.1} parent=5 // pred_fallthru
        _
      %p485 = scmp.le.s32.totalorder 1, %s29
      %p486 = scmp.lt.s32.totalorder %s29, 3
      %p487 = pnand %p485, %p486
      %p488 = pneg %p487
      // Predicated region
      $region69: #{tpu_custom_call.1} parent=5 // pred_check
        _
      $region70: #{tpu_custom_call.1} parent=5 // pred_check_branch
        %490 = sbr.rel (%p487) target = $region72
      $region71: #{tpu_custom_call.1} parent=5 // pred_region
        %s491 = ssub.s32 %s29, 1
        %s492 = sand.u32 %s42, 1
        %s493 = scalar_lea.sflag [#allocation4], %s492
        %s494 = sand.u32 %s42, 1
        %s495 = smul.addr %s494, 832
        %s496 = scalar_lea.vmem [#allocation3], %s495
        // Predicated region
        $region73: #{tpu_custom_call.1} parent=71 // pred_check
          %p497 = pneg %p55
        $region74: #{tpu_custom_call.1} parent=71 // pred_check_branch
          %499 = sbr.rel (%p497) target = $region76
        $region75: #{tpu_custom_call.1} parent=71 // pred_region
          %500 = dma.done %s493, 13312
        $region76: #{tpu_custom_call.1} parent=71 // pred_fallthru
          _
        // Predicated region
        $region77: #{tpu_custom_call.1} parent=71 // pred_check
          %p501 = pneg %p76
        $region78: #{tpu_custom_call.1} parent=71 // pred_check_branch
          %503 = sbr.rel (%p501) target = $region80
        $region79: #{tpu_custom_call.1} parent=71 // pred_region
          %504 = dma.done [#allocation7], 32768
        $region80: #{tpu_custom_call.1} parent=71 // pred_fallthru
          _
        // Predicated region
        $region81: #{tpu_custom_call.1} parent=71 // pred_check
          %p505 = pneg %p97
        $region82: #{tpu_custom_call.1} parent=71 // pred_check_branch
          %507 = sbr.rel (%p505) target = $region84
        $region83: #{tpu_custom_call.1} parent=71 // pred_region
          %508 = dma.done [#allocation7], 64
        $region84: #{tpu_custom_call.1} parent=71 // pred_fallthru
          _
        // Predicated region
        $region85: #{tpu_custom_call.1} parent=71 // pred_check
          %p509 = pneg %p118
        $region86: #{tpu_custom_call.1} parent=71 // pred_check_branch
          %511 = sbr.rel (%p509) target = $region88
        $region87: #{tpu_custom_call.1} parent=71 // pred_region
          %512 = dma.done [#allocation10], 16384
        $region88: #{tpu_custom_call.1} parent=71 // pred_fallthru
          _
        // Predicated region
        $region89: #{tpu_custom_call.1} parent=71 // pred_check
          %p513 = pneg %p160
        $region90: #{tpu_custom_call.1} parent=71 // pred_check_branch
          %515 = sbr.rel (%p513) target = $region92
        $region91: #{tpu_custom_call.1} parent=71 // pred_region
          %516 = dma.done [#allocation10], 16384
        $region92: #{tpu_custom_call.1} parent=71 // pred_fallthru
          _
        // Predicated region
        $region93: #{tpu_custom_call.1} parent=71 // pred_check
          %p517 = pneg %p202
        $region94: #{tpu_custom_call.1} parent=71 // pred_check_branch
          %519 = sbr.rel (%p517) target = $region96
        $region95: #{tpu_custom_call.1} parent=71 // pred_region
          %520 = dma.done [#allocation13], 16384
        $region96: #{tpu_custom_call.1} parent=71 // pred_fallthru
          _
        // Predicated region
        $region97: #{tpu_custom_call.1} parent=71 // pred_check
          %p521 = pneg %p244
        $region98: #{tpu_custom_call.1} parent=71 // pred_check_branch
          %523 = sbr.rel (%p521) target = $region100
        $region99: #{tpu_custom_call.1} parent=71 // pred_region
          %524 = dma.done [#allocation13], 16384
        $region100: #{tpu_custom_call.1} parent=71 // pred_fallthru
          _
        // Predicated region
        $region101: #{tpu_custom_call.1} parent=71 // pred_check
          %p525 = pneg %p286
        $region102: #{tpu_custom_call.1} parent=71 // pred_check_branch
          %527 = sbr.rel (%p525) target = $region104
        $region103: #{tpu_custom_call.1} parent=71 // pred_region
          %528 = dma.done [#allocation16], 16384
        $region104: #{tpu_custom_call.1} parent=71 // pred_fallthru
          _
        %s529 = sand.u32 %s42, 1
        %s530 = scalar_lea.sflag [#allocation4], %s529
        %s531 = sand.u32 %s42, 1
        %s532 = smul.addr %s531, 832
        %s533 = scalar_lea.vmem [#allocation3], %s532
        %p534 = pneg %p55
        %p535 = pneg %p52
        %p536 = pneg %p76
        %p537 = pneg %p73
        %p538 = pneg %p97
        %p539 = pneg %p94
        %p540 = pneg %p118
        %p541 = pneg %p115
        %p542 = pneg %p139
        %p543 = pneg %p136
        %p544 = pneg %p160
        %p545 = pneg %p157
        %p546 = pneg %p181
        %p547 = pneg %p178
        %p548 = pneg %p202
        %p549 = pneg %p199
        %p550 = pneg %p223
        %p551 = pneg %p220
        %p552 = pneg %p244
        %p553 = pneg %p241
        %p554 = pneg %p265
        %p555 = pneg %p262
        %p556 = pneg %p286
        %p557 = pneg %p283
        %p558 = pneg %p307
        %p559 = pneg %p304
        %p560 = pneg %p333
        %p561 = pneg %p330
        %s562 = sand.u32 %s320, 1
        %s563 = scalar_lea.sflag [#allocation5], %s562
        %s564 = sand.u32 %s320, 1
        %s565 = smul.addr %s564, 416
        %s566 = scalar_lea.vmem [#allocation17], %s565
        %s567 = smul.u32 13, %s34
        %s568 = ssub.s32 25, %s567
        %p569 = scmp.lt.s32.totalorder %s568, 13
        %s570 = scalar_select %p569, %s568, 13
        %s571 = smul.u32 128, %s570
        %s572 = smul.u32 %s571, 8
        %s573 = smul.u32 13, %s34
        %s574 = ssub.s32 25, %s573
        %p575 = scmp.lt.s32.totalorder %s574, 13
        %s576 = scalar_select %p575, %s574, 13
        %s577 = smul.u32 128, %s576
        %s578 = smul.u32 %s577, 4
        %vm580 = vcmask 1044288
        %581 = vst.msk [vmem:[#allocation2 + $0x1c] sm:$0xf] %vm580, 0
        %582 = vst.msk [vmem:[#allocation2 + $0x3c] sm:$0xf] %vm580, 0
        %583 = vst.msk [vmem:[#allocation2 + $0x5c] sm:$0xf] %vm580, 0
        %584 = vst.msk [vmem:[#allocation2 + $0x7c] sm:$0xf] %vm580, 0
        %585 = vst.msk [vmem:[#allocation2 + $0x9c] sm:$0xf] %vm580, 0
        %586 = vst.msk [vmem:[#allocation2 + $0xbc] sm:$0xf] %vm580, 0
        %587 = vst.msk [vmem:[#allocation2 + $0xdc] sm:$0xf] %vm580, 0
        %588 = vst.msk [vmem:[#allocation2 + $0xfc] sm:$0xf] %vm580, 0
        %589 = vst.msk [vmem:[#allocation2 + $0x11c] sm:$0xf] %vm580, 0
        %590 = vst.msk [vmem:[#allocation2 + $0x13c] sm:$0xf] %vm580, 0
        %591 = vst.msk [vmem:[#allocation2 + $0x15c] sm:$0xf] %vm580, 0
        %592 = vst.msk [vmem:[#allocation2 + $0x17c] sm:$0xf] %vm580, 0
        %593 = vst.msk [vmem:[#allocation2 + $0x19c] sm:$0xf] %vm580, 0
        %v594 = vld [vmem:[%s496] sm:$0xff]
        %v595 = vld [vmem:[%s496 + $0x8] sm:$0xff]
        %v596 = vld [vmem:[%s496 + $0x10] sm:$0xff]
        %v597 = vld [vmem:[%s496 + $0x18] sm:$0xff]
        %v598 = vld [vmem:[%s496 + $0x20] sm:$0xff]
        %v599 = vld [vmem:[%s496 + $0x28] sm:$0xff]
        %v600 = vld [vmem:[%s496 + $0x30] sm:$0xff]
        %v601 = vld [vmem:[%s496 + $0x38] sm:$0xff]
        %v602 = vld [vmem:[%s496 + $0x40] sm:$0xff]
        %v603 = vld [vmem:[%s496 + $0x48] sm:$0xff]
        %v604 = vld [vmem:[%s496 + $0x50] sm:$0xff]
        %v605 = vld [vmem:[%s496 + $0x58] sm:$0xff]
        %v606 = vld [vmem:[%s496 + $0x60] sm:$0xff]
        %v607 = vld [vmem:[%s496 + $0x68] sm:$0xff]
        %v608 = vld [vmem:[%s496 + $0x70] sm:$0xff]
        %v609 = vld [vmem:[%s496 + $0x78] sm:$0xff]
        %v610 = vld [vmem:[%s496 + $0x80] sm:$0xff]
        %v611 = vld [vmem:[%s496 + $0x88] sm:$0xff]
        %v612 = vld [vmem:[%s496 + $0x90] sm:$0xff]
        %v613 = vld [vmem:[%s496 + $0x98] sm:$0xff]
        %v614 = vld [vmem:[%s496 + $0xa0] sm:$0xff]
        %v615 = vld [vmem:[%s496 + $0xa8] sm:$0xff]
        %v616 = vld [vmem:[%s496 + $0xb0] sm:$0xff]
        %v617 = vld [vmem:[%s496 + $0xb8] sm:$0xff]
        %v618 = vld [vmem:[%s496 + $0xc0] sm:$0xff]
        %v619 = vld [vmem:[%s496 + $0xc8] sm:$0xff]
        %v620 = vld [vmem:[%s496 + $0xd0] sm:$0xff]
        %v621 = vld [vmem:[%s496 + $0xd8] sm:$0xff]
        %v622 = vld [vmem:[%s496 + $0xe0] sm:$0xff]
        %v623 = vld [vmem:[%s496 + $0xe8] sm:$0xff]
        %v624 = vld [vmem:[%s496 + $0xf0] sm:$0xff]
        %v625 = vld [vmem:[%s496 + $0xf8] sm:$0xff]
        %v626 = vld [vmem:[%s496 + $0x100] sm:$0xff]
        %v627 = vld [vmem:[%s496 + $0x108] sm:$0xff]
        %v628 = vld [vmem:[%s496 + $0x110] sm:$0xff]
        %v629 = vld [vmem:[%s496 + $0x118] sm:$0xff]
        %v630 = vld [vmem:[%s496 + $0x120] sm:$0xff]
        %v631 = vld [vmem:[%s496 + $0x128] sm:$0xff]
        %v632 = vld [vmem:[%s496 + $0x130] sm:$0xff]
        %v633 = vld [vmem:[%s496 + $0x138] sm:$0xff]
        %v634 = vld [vmem:[%s496 + $0x140] sm:$0xff]
        %v635 = vld [vmem:[%s496 + $0x148] sm:$0xff]
        %v636 = vld [vmem:[%s496 + $0x150] sm:$0xff]
        %v637 = vld [vmem:[%s496 + $0x158] sm:$0xff]
        %v638 = vld [vmem:[%s496 + $0x160] sm:$0xff]
        %v639 = vld [vmem:[%s496 + $0x168] sm:$0xff]
        %v640 = vld [vmem:[%s496 + $0x170] sm:$0xff]
        %v641 = vld [vmem:[%s496 + $0x178] sm:$0xff]
        %v642 = vld [vmem:[%s496 + $0x180] sm:$0xff]
        %v643 = vld [vmem:[%s496 + $0x188] sm:$0xff]
        %v644 = vld [vmem:[%s496 + $0x190] sm:$0xff]
        %v645 = vld [vmem:[%s496 + $0x198] sm:$0xff]
        %v646 = vld [vmem:[%s496 + $0x1a0] sm:$0xff]
        %v647 = vld [vmem:[%s496 + $0x1a8] sm:$0xff]
        %v648 = vld [vmem:[%s496 + $0x1b0] sm:$0xff]
        %v649 = vld [vmem:[%s496 + $0x1b8] sm:$0xff]
        %v650 = vld [vmem:[%s496 + $0x1c0] sm:$0xff]
        %v651 = vld [vmem:[%s496 + $0x1c8] sm:$0xff]
        %v652 = vld [vmem:[%s496 + $0x1d0] sm:$0xff]
        %v653 = vld [vmem:[%s496 + $0x1d8] sm:$0xff]
        %v654 = vld [vmem:[%s496 + $0x1e0] sm:$0xff]
        %v655 = vld [vmem:[%s496 + $0x1e8] sm:$0xff]
        %v656 = vld [vmem:[%s496 + $0x1f0] sm:$0xff]
        %v657 = vld [vmem:[%s496 + $0x1f8] sm:$0xff]
        %v658 = vld [vmem:[%s496 + $0x200] sm:$0xff]
        %v659 = vld [vmem:[%s496 + $0x208] sm:$0xff]
        %v660 = vld [vmem:[%s496 + $0x210] sm:$0xff]
        %v661 = vld [vmem:[%s496 + $0x218] sm:$0xff]
        %v662 = vld [vmem:[%s496 + $0x220] sm:$0xff]
        %v663 = vld [vmem:[%s496 + $0x228] sm:$0xff]
        %v664 = vld [vmem:[%s496 + $0x230] sm:$0xff]
        %v665 = vld [vmem:[%s496 + $0x238] sm:$0xff]
        %v666 = vld [vmem:[%s496 + $0x240] sm:$0xff]
        %v667 = vld [vmem:[%s496 + $0x248] sm:$0xff]
        %v668 = vld [vmem:[%s496 + $0x250] sm:$0xff]
        %v669 = vld [vmem:[%s496 + $0x258] sm:$0xff]
        %v670 = vld [vmem:[%s496 + $0x260] sm:$0xff]
        %v671 = vld [vmem:[%s496 + $0x268] sm:$0xff]
        %v672 = vld [vmem:[%s496 + $0x270] sm:$0xff]
        %v673 = vld [vmem:[%s496 + $0x278] sm:$0xff]
        %v674 = vld [vmem:[%s496 + $0x280] sm:$0xff]
        %v675 = vld [vmem:[%s496 + $0x288] sm:$0xff]
        %v676 = vld [vmem:[%s496 + $0x290] sm:$0xff]
        %v677 = vld [vmem:[%s496 + $0x298] sm:$0xff]
        %v678 = vld [vmem:[%s496 + $0x2a0] sm:$0xff]
        %v679 = vld [vmem:[%s496 + $0x2a8] sm:$0xff]
        %v680 = vld [vmem:[%s496 + $0x2b0] sm:$0xff]
        %v681 = vld [vmem:[%s496 + $0x2b8] sm:$0xff]
        %v682 = vld [vmem:[%s496 + $0x2c0] sm:$0xff]
        %v683 = vld [vmem:[%s496 + $0x2c8] sm:$0xff]
        %v684 = vld [vmem:[%s496 + $0x2d0] sm:$0xff]
        %v685 = vld [vmem:[%s496 + $0x2d8] sm:$0xff]
        %v686 = vld [vmem:[%s496 + $0x2e0] sm:$0xff]
        %v687 = vld [vmem:[%s496 + $0x2e8] sm:$0xff]
        %v688 = vld [vmem:[%s496 + $0x2f0] sm:$0xff]
        %v689 = vld [vmem:[%s496 + $0x2f8] sm:$0xff]
        %v690 = vld [vmem:[%s496 + $0x300] sm:$0xff]
        %v691 = vld [vmem:[%s496 + $0x308] sm:$0xff]
        %v692 = vld [vmem:[%s496 + $0x310] sm:$0xff]
        %v693 = vld [vmem:[%s496 + $0x318] sm:$0xff]
        %v694 = vld [vmem:[%s496 + $0x320] sm:$0xff]
        %v695 = vld [vmem:[%s496 + $0x328] sm:$0xff]
        %v696 = vld [vmem:[%s496 + $0x330] sm:$0xff]
        %v697 = vld [vmem:[%s496 + $0x338] sm:$0xff]
        %v698 = vpack.c.bf16 %v602, %v594
        %v699 = vpack.c.bf16 %v603, %v595
        %v700 = vpack.c.bf16 %v604, %v596
        %v701 = vpack.c.bf16 %v605, %v597
        %v702 = vpack.c.bf16 %v606, %v598
        %v703 = vpack.c.bf16 %v607, %v599
        %v704 = vpack.c.bf16 %v608, %v600
        %v705 = vpack.c.bf16 %v609, %v601
        %v706 = vpack.c.bf16 %v618, %v610
        %v707 = vpack.c.bf16 %v619, %v611
        %v708 = vpack.c.bf16 %v620, %v612
        %v709 = vpack.c.bf16 %v621, %v613
        %v710 = vpack.c.bf16 %v622, %v614
        %v711 = vpack.c.bf16 %v623, %v615
        %v712 = vpack.c.bf16 %v624, %v616
        %v713 = vpack.c.bf16 %v625, %v617
        %v714 = vpack.c.bf16 %v634, %v626
        %v715 = vpack.c.bf16 %v635, %v627
        %v716 = vpack.c.bf16 %v636, %v628
        %v717 = vpack.c.bf16 %v637, %v629
        %v718 = vpack.c.bf16 %v638, %v630
        %v719 = vpack.c.bf16 %v639, %v631
        %v720 = vpack.c.bf16 %v640, %v632
        %v721 = vpack.c.bf16 %v641, %v633
        %v722 = vpack.c.bf16 %v650, %v642
        %v723 = vpack.c.bf16 %v651, %v643
        %v724 = vpack.c.bf16 %v652, %v644
        %v725 = vpack.c.bf16 %v653, %v645
        %v726 = vpack.c.bf16 %v654, %v646
        %v727 = vpack.c.bf16 %v655, %v647
        %v728 = vpack.c.bf16 %v656, %v648
        %v729 = vpack.c.bf16 %v657, %v649
        %v730 = vpack.c.bf16 %v666, %v658
        %v731 = vpack.c.bf16 %v667, %v659
        %v732 = vpack.c.bf16 %v668, %v660
        %v733 = vpack.c.bf16 %v669, %v661
        %v734 = vpack.c.bf16 %v670, %v662
        %v735 = vpack.c.bf16 %v671, %v663
        %v736 = vpack.c.bf16 %v672, %v664
        %v737 = vpack.c.bf16 %v673, %v665
        %v738 = vpack.c.bf16 %v682, %v674
        %v739 = vpack.c.bf16 %v683, %v675
        %v740 = vpack.c.bf16 %v684, %v676
        %v741 = vpack.c.bf16 %v685, %v677
        %v742 = vpack.c.bf16 %v686, %v678
        %v743 = vpack.c.bf16 %v687, %v679
        %v744 = vpack.c.bf16 %v688, %v680
        %v745 = vpack.c.bf16 %v689, %v681
        %v746 = vpack.c.bf16 %v690, %v690
        %v747 = vpack.c.bf16 %v691, %v691
        %v748 = vpack.c.bf16 %v692, %v692
        %v749 = vpack.c.bf16 %v693, %v693
        %v750 = vpack.c.bf16 %v694, %v694
        %v751 = vpack.c.bf16 %v695, %v695
        %v752 = vpack.c.bf16 %v696, %v696
        %v753 = vpack.c.bf16 %v697, %v697
        %v810 = vunpack.c.l.b16 %v698
        %v811 = vunpack.c.l.b16 %v699
        %v812 = vunpack.c.l.b16 %v700
        %v813 = vunpack.c.l.b16 %v701
        %v814 = vunpack.c.l.b16 %v702
        %v815 = vunpack.c.l.b16 %v703
        %v816 = vunpack.c.l.b16 %v704
        %v817 = vunpack.c.l.b16 %v705
        %v818 = vunpack.c.h.b16 %v698
        %v819 = vunpack.c.h.b16 %v699
        %v820 = vunpack.c.h.b16 %v700
        %v821 = vunpack.c.h.b16 %v701
        %v822 = vunpack.c.h.b16 %v702
        %v823 = vunpack.c.h.b16 %v703
        %v824 = vunpack.c.h.b16 %v704
        %v825 = vunpack.c.h.b16 %v705
        %v826 = vunpack.c.l.b16 %v706
        %v827 = vunpack.c.l.b16 %v707
        %v828 = vunpack.c.l.b16 %v708
        %v829 = vunpack.c.l.b16 %v709
        %v830 = vunpack.c.l.b16 %v710
        %v831 = vunpack.c.l.b16 %v711
        %v832 = vunpack.c.l.b16 %v712
        %v833 = vunpack.c.l.b16 %v713
        %v834 = vunpack.c.h.b16 %v706
        %v835 = vunpack.c.h.b16 %v707
        %v836 = vunpack.c.h.b16 %v708
        %v837 = vunpack.c.h.b16 %v709
        %v838 = vunpack.c.h.b16 %v710
        %v839 = vunpack.c.h.b16 %v711
        %v840 = vunpack.c.h.b16 %v712
        %v841 = vunpack.c.h.b16 %v713
        %v842 = vunpack.c.l.b16 %v714
        %v843 = vunpack.c.l.b16 %v715
        %v844 = vunpack.c.l.b16 %v716
        %v845 = vunpack.c.l.b16 %v717
        %v846 = vunpack.c.l.b16 %v718
        %v847 = vunpack.c.l.b16 %v719
        %v848 = vunpack.c.l.b16 %v720
        %v849 = vunpack.c.l.b16 %v721
        %v850 = vunpack.c.h.b16 %v714
        %v851 = vunpack.c.h.b16 %v715
        %v852 = vunpack.c.h.b16 %v716
        %v853 = vunpack.c.h.b16 %v717
        %v854 = vunpack.c.h.b16 %v718
        %v855 = vunpack.c.h.b16 %v719
        %v856 = vunpack.c.h.b16 %v720
        %v857 = vunpack.c.h.b16 %v721
        %v858 = vunpack.c.l.b16 %v722
        %v859 = vunpack.c.l.b16 %v723
        %v860 = vunpack.c.l.b16 %v724
        %v861 = vunpack.c.l.b16 %v725
        %v862 = vunpack.c.l.b16 %v726
        %v863 = vunpack.c.l.b16 %v727
        %v864 = vunpack.c.l.b16 %v728
        %v865 = vunpack.c.l.b16 %v729
        %v866 = vunpack.c.h.b16 %v722
        %v867 = vunpack.c.h.b16 %v723
        %v868 = vunpack.c.h.b16 %v724
        %v869 = vunpack.c.h.b16 %v725
        %v870 = vunpack.c.h.b16 %v726
        %v871 = vunpack.c.h.b16 %v727
        %v872 = vunpack.c.h.b16 %v728
        %v873 = vunpack.c.h.b16 %v729
        %v874 = vunpack.c.l.b16 %v730
        %v875 = vunpack.c.l.b16 %v731
        %v876 = vunpack.c.l.b16 %v732
        %v877 = vunpack.c.l.b16 %v733
        %v878 = vunpack.c.l.b16 %v734
        %v879 = vunpack.c.l.b16 %v735
        %v880 = vunpack.c.l.b16 %v736
        %v881 = vunpack.c.l.b16 %v737
        %v882 = vunpack.c.h.b16 %v730
        %v883 = vunpack.c.h.b16 %v731
        %v884 = vunpack.c.h.b16 %v732
        %v885 = vunpack.c.h.b16 %v733
        %v886 = vunpack.c.h.b16 %v734
        %v887 = vunpack.c.h.b16 %v735
        %v888 = vunpack.c.h.b16 %v736
        %v889 = vunpack.c.h.b16 %v737
        %v890 = vunpack.c.l.b16 %v738
        %v891 = vunpack.c.l.b16 %v739
        %v892 = vunpack.c.l.b16 %v740
        %v893 = vunpack.c.l.b16 %v741
        %v894 = vunpack.c.l.b16 %v742
        %v895 = vunpack.c.l.b16 %v743
        %v896 = vunpack.c.l.b16 %v744
        %v897 = vunpack.c.l.b16 %v745
        %v898 = vunpack.c.h.b16 %v738
        %v899 = vunpack.c.h.b16 %v739
        %v900 = vunpack.c.h.b16 %v740
        %v901 = vunpack.c.h.b16 %v741
        %v902 = vunpack.c.h.b16 %v742
        %v903 = vunpack.c.h.b16 %v743
        %v904 = vunpack.c.h.b16 %v744
        %v905 = vunpack.c.h.b16 %v745
        %v906 = vunpack.c.l.b16 %v746
        %v907 = vunpack.c.l.b16 %v747
        %v908 = vunpack.c.l.b16 %v748
        %v909 = vunpack.c.l.b16 %v749
        %v910 = vunpack.c.l.b16 %v750
        %v911 = vunpack.c.l.b16 %v751
        %v912 = vunpack.c.l.b16 %v752
        %v913 = vunpack.c.l.b16 %v753
        %v914 = vpack.c.b16 %v811, %v810
        %v915 = vpack.c.b16 %v813, %v812
        %v916 = vpack.c.b16 %v815, %v814
        %v917 = vpack.c.b16 %v817, %v816
        %v918 = vpack.c.b16 %v819, %v818
        %v919 = vpack.c.b16 %v821, %v820
        %v920 = vpack.c.b16 %v823, %v822
        %v921 = vpack.c.b16 %v825, %v824
        %v922 = vpack.c.b16 %v827, %v826
        %v923 = vpack.c.b16 %v829, %v828
        %v924 = vpack.c.b16 %v831, %v830
        %v925 = vpack.c.b16 %v833, %v832
        %v926 = vpack.c.b16 %v835, %v834
        %v927 = vpack.c.b16 %v837, %v836
        %v928 = vpack.c.b16 %v839, %v838
        %v929 = vpack.c.b16 %v841, %v840
        %v930 = vpack.c.b16 %v843, %v842
        %v931 = vpack.c.b16 %v845, %v844
        %v932 = vpack.c.b16 %v847, %v846
        %v933 = vpack.c.b16 %v849, %v848
        %v934 = vpack.c.b16 %v851, %v850
        %v935 = vpack.c.b16 %v853, %v852
        %v936 = vpack.c.b16 %v855, %v854
        %v937 = vpack.c.b16 %v857, %v856
        %v938 = vpack.c.b16 %v859, %v858
        %v939 = vpack.c.b16 %v861, %v860
        %v940 = vpack.c.b16 %v863, %v862
        %v941 = vpack.c.b16 %v865, %v864
        %v942 = vpack.c.b16 %v867, %v866
        %v943 = vpack.c.b16 %v869, %v868
        %v944 = vpack.c.b16 %v871, %v870
        %v945 = vpack.c.b16 %v873, %v872
        %v946 = vpack.c.b16 %v875, %v874
        %v947 = vpack.c.b16 %v877, %v876
        %v948 = vpack.c.b16 %v879, %v878
        %v949 = vpack.c.b16 %v881, %v880
        %v950 = vpack.c.b16 %v883, %v882
        %v951 = vpack.c.b16 %v885, %v884
        %v952 = vpack.c.b16 %v887, %v886
        %v953 = vpack.c.b16 %v889, %v888
        %v954 = vpack.c.b16 %v891, %v890
        %v955 = vpack.c.b16 %v893, %v892
        %v956 = vpack.c.b16 %v895, %v894
        %v957 = vpack.c.b16 %v897, %v896
        %v958 = vpack.c.b16 %v899, %v898
        %v959 = vpack.c.b16 %v901, %v900
        %v960 = vpack.c.b16 %v903, %v902
        %v961 = vpack.c.b16 %v905, %v904
        %v962 = vpack.c.b16 %v907, %v906
        %v963 = vpack.c.b16 %v909, %v908
        %v964 = vpack.c.b16 %v911, %v910
        %v965 = vpack.c.b16 %v913, %v912
        %1018 = vst [vmem:[#allocation2] sm:$0xff] %v914
        %1019 = vst [vmem:[#allocation2 + $0x8] sm:$0xff] %v915
        %1020 = vst [vmem:[#allocation2 + $0x10] sm:$0xff] %v916
        %vm1021 = vcmask 1043456
        %vm1022 = vcmask 850948
        %vm1023 = vmor %vm1022, %vm1021
        %1024 = vst.msk [vmem:[#allocation2 + $0x18] sm:$0xff] %vm1023, %v917
        %1025 = vst [vmem:[#allocation2 + $0x20] sm:$0xff] %v918
        %1026 = vst [vmem:[#allocation2 + $0x28] sm:$0xff] %v919
        %1027 = vst [vmem:[#allocation2 + $0x30] sm:$0xff] %v920
        %1028 = vst.msk [vmem:[#allocation2 + $0x38] sm:$0xff] %vm1023, %v921
        %1029 = vst [vmem:[#allocation2 + $0x40] sm:$0xff] %v922
        %1030 = vst [vmem:[#allocation2 + $0x48] sm:$0xff] %v923
        %1031 = vst [vmem:[#allocation2 + $0x50] sm:$0xff] %v924
        %1032 = vst.msk [vmem:[#allocation2 + $0x58] sm:$0xff] %vm1023, %v925
        %1033 = vst [vmem:[#allocation2 + $0x60] sm:$0xff] %v926
        %1034 = vst [vmem:[#allocation2 + $0x68] sm:$0xff] %v927
        %1035 = vst [vmem:[#allocation2 + $0x70] sm:$0xff] %v928
        %1036 = vst.msk [vmem:[#allocation2 + $0x78] sm:$0xff] %vm1023, %v929
        %1037 = vst [vmem:[#allocation2 + $0x80] sm:$0xff] %v930
        %1038 = vst [vmem:[#allocation2 + $0x88] sm:$0xff] %v931
        %1039 = vst [vmem:[#allocation2 + $0x90] sm:$0xff] %v932
        %1040 = vst.msk [vmem:[#allocation2 + $0x98] sm:$0xff] %vm1023, %v933
        %1041 = vst [vmem:[#allocation2 + $0xa0] sm:$0xff] %v934
        %1042 = vst [vmem:[#allocation2 + $0xa8] sm:$0xff] %v935
        %1043 = vst [vmem:[#allocation2 + $0xb0] sm:$0xff] %v936
        %1044 = vst.msk [vmem:[#allocation2 + $0xb8] sm:$0xff] %vm1023, %v937
        %1045 = vst [vmem:[#allocation2 + $0xc0] sm:$0xff] %v938
        %1046 = vst [vmem:[#allocation2 + $0xc8] sm:$0xff] %v939
        %1047 = vst [vmem:[#allocation2 + $0xd0] sm:$0xff] %v940
        %1048 = vst.msk [vmem:[#allocation2 + $0xd8] sm:$0xff] %vm1023, %v941
        %1049 = vst [vmem:[#allocation2 + $0xe0] sm:$0xff] %v942
        %1050 = vst [vmem:[#allocation2 + $0xe8] sm:$0xff] %v943
        %1051 = vst [vmem:[#allocation2 + $0xf0] sm:$0xff] %v944
        %1052 = vst.msk [vmem:[#allocation2 + $0xf8] sm:$0xff] %vm1023, %v945
        %1053 = vst [vmem:[#allocation2 + $0x100] sm:$0xff] %v946
        %1054 = vst [vmem:[#allocation2 + $0x108] sm:$0xff] %v947
        %1055 = vst [vmem:[#allocation2 + $0x110] sm:$0xff] %v948
        %1056 = vst.msk [vmem:[#allocation2 + $0x118] sm:$0xff] %vm1023, %v949
        %1057 = vst [vmem:[#allocation2 + $0x120] sm:$0xff] %v950
        %1058 = vst [vmem:[#allocation2 + $0x128] sm:$0xff] %v951
        %1059 = vst [vmem:[#allocation2 + $0x130] sm:$0xff] %v952
        %1060 = vst.msk [vmem:[#allocation2 + $0x138] sm:$0xff] %vm1023, %v953
        %1061 = vst [vmem:[#allocation2 + $0x140] sm:$0xff] %v954
        %1062 = vst [vmem:[#allocation2 + $0x148] sm:$0xff] %v955
        %1063 = vst [vmem:[#allocation2 + $0x150] sm:$0xff] %v956
        %1064 = vst.msk [vmem:[#allocation2 + $0x158] sm:$0xff] %vm1023, %v957
        %1065 = vst [vmem:[#allocation2 + $0x160] sm:$0xff] %v958
        %1066 = vst [vmem:[#allocation2 + $0x168] sm:$0xff] %v959
        %1067 = vst [vmem:[#allocation2 + $0x170] sm:$0xff] %v960
        %1068 = vst.msk [vmem:[#allocation2 + $0x178] sm:$0xff] %vm1023, %v961
        %1069 = vst [vmem:[#allocation2 + $0x180] sm:$0xff] %v962
        %1070 = vst [vmem:[#allocation2 + $0x188] sm:$0xff] %v963
        %1071 = vst [vmem:[#allocation2 + $0x190] sm:$0xff] %v964
        %1072 = vst.msk [vmem:[#allocation2 + $0x198] sm:$0xff] %vm1023, %v965
        %v1073 = vld [vmem:[#allocation2] sm:$0xff]
        %v1074 = vld [vmem:[#allocation2 + $0x8] sm:$0xff]
        %v1075 = vld [vmem:[#allocation2 + $0x10] sm:$0xff]
        %v1076 = vld [vmem:[#allocation2 + $0x18] sm:$0xff]
        %v1077 = vld [vmem:[#allocation2 + $0x20] sm:$0xff]
        %v1078 = vld [vmem:[#allocation2 + $0x28] sm:$0xff]
        %v1079 = vld [vmem:[#allocation2 + $0x30] sm:$0xff]
        %v1080 = vld [vmem:[#allocation2 + $0x38] sm:$0xff]
        %v1081 = vld [vmem:[#allocation2 + $0x40] sm:$0xff]
        %v1082 = vld [vmem:[#allocation2 + $0x48] sm:$0xff]
        %v1083 = vld [vmem:[#allocation2 + $0x50] sm:$0xff]
        %v1084 = vld [vmem:[#allocation2 + $0x58] sm:$0xff]
        %v1085 = vld [vmem:[#allocation2 + $0x60] sm:$0xff]
        %v1086 = vld [vmem:[#allocation2 + $0x68] sm:$0xff]
        %v1087 = vld [vmem:[#allocation2 + $0x70] sm:$0xff]
        %v1088 = vld [vmem:[#allocation2 + $0x78] sm:$0xff]
        %v1089 = vld [vmem:[#allocation2 + $0x80] sm:$0xff]
        %v1090 = vld [vmem:[#allocation2 + $0x88] sm:$0xff]
        %v1091 = vld [vmem:[#allocation2 + $0x90] sm:$0xff]
        %v1092 = vld [vmem:[#allocation2 + $0x98] sm:$0xff]
        %v1093 = vld [vmem:[#allocation2 + $0xa0] sm:$0xff]
        %v1094 = vld [vmem:[#allocation2 + $0xa8] sm:$0xff]
        %v1095 = vld [vmem:[#allocation2 + $0xb0] sm:$0xff]
        %v1096 = vld [vmem:[#allocation2 + $0xb8] sm:$0xff]
        %v1097 = vld [vmem:[#allocation2 + $0xc0] sm:$0xff]
        %v1098 = vld [vmem:[#allocation2 + $0xc8] sm:$0xff]
        %v1099 = vld [vmem:[#allocation2 + $0xd0] sm:$0xff]
        %v1100 = vld [vmem:[#allocation2 + $0xd8] sm:$0xff]
        %v1101 = vld [vmem:[#allocation2 + $0xe0] sm:$0xff]
        %v1102 = vld [vmem:[#allocation2 + $0xe8] sm:$0xff]
        %v1103 = vld [vmem:[#allocation2 + $0xf0] sm:$0xff]
        %v1104 = vld [vmem:[#allocation2 + $0xf8] sm:$0xff]
        %v1105 = vld [vmem:[#allocation2 + $0x100] sm:$0xff]
        %v1106 = vld [vmem:[#allocation2 + $0x108] sm:$0xff]
        %v1107 = vld [vmem:[#allocation2 + $0x110] sm:$0xff]
        %v1108 = vld [vmem:[#allocation2 + $0x118] sm:$0xff]
        %v1109 = vld [vmem:[#allocation2 + $0x120] sm:$0xff]
        %v1110 = vld [vmem:[#allocation2 + $0x128] sm:$0xff]
        %v1111 = vld [vmem:[#allocation2 + $0x130] sm:$0xff]
        %v1112 = vld [vmem:[#allocation2 + $0x138] sm:$0xff]
        %v1113 = vld [vmem:[#allocation2 + $0x140] sm:$0xff]
        %v1114 = vld [vmem:[#allocation2 + $0x148] sm:$0xff]
        %v1115 = vld [vmem:[#allocation2 + $0x150] sm:$0xff]
        %v1116 = vld [vmem:[#allocation2 + $0x158] sm:$0xff]
        %v1117 = vld [vmem:[#allocation2 + $0x160] sm:$0xff]
        %v1118 = vld [vmem:[#allocation2 + $0x168] sm:$0xff]
        %v1119 = vld [vmem:[#allocation2 + $0x170] sm:$0xff]
        %v1120 = vld [vmem:[#allocation2 + $0x178] sm:$0xff]
        %v1121 = vld [vmem:[#allocation2 + $0x180] sm:$0xff]
        %v1122 = vld [vmem:[#allocation2 + $0x188] sm:$0xff]
        %v1123 = vld [vmem:[#allocation2 + $0x190] sm:$0xff]
        %v1124 = vld [vmem:[#allocation2 + $0x198] sm:$0xff]
        %v1125 = vld [vmem:[#allocation6] sm:$0xff]
        %v1126 = vld [vmem:[#allocation6 + $0x8] sm:$0xff]
        %v1127 = vld [vmem:[#allocation6 + $0x10] sm:$0xff]
        %v1128 = vld [vmem:[#allocation6 + $0x18] sm:$0xff]
        %v1129 = vld [vmem:[#allocation6 + $0x20] sm:$0xff]
        %v1130 = vld [vmem:[#allocation6 + $0x28] sm:$0xff]
        %v1131 = vld [vmem:[#allocation6 + $0x30] sm:$0xff]
        %v1132 = vld [vmem:[#allocation6 + $0x38] sm:$0xff]
        %v1133 = vld [vmem:[#allocation6 + $0x40] sm:$0xff]
        %v1134 = vld [vmem:[#allocation6 + $0x48] sm:$0xff]
        %v1135 = vld [vmem:[#allocation6 + $0x50] sm:$0xff]
        %v1136 = vld [vmem:[#allocation6 + $0x58] sm:$0xff]
        %v1137 = vld [vmem:[#allocation6 + $0x60] sm:$0xff]
        %v1138 = vld [vmem:[#allocation6 + $0x68] sm:$0xff]
        %v1139 = vld [vmem:[#allocation6 + $0x70] sm:$0xff]
        %v1140 = vld [vmem:[#allocation6 + $0x78] sm:$0xff]
        %v1141 = vld [vmem:[#allocation6 + $0x80] sm:$0xff]
        %v1142 = vld [vmem:[#allocation6 + $0x88] sm:$0xff]
        %v1143 = vld [vmem:[#allocation6 + $0x90] sm:$0xff]
        %v1144 = vld [vmem:[#allocation6 + $0x98] sm:$0xff]
        %v1145 = vld [vmem:[#allocation6 + $0xa0] sm:$0xff]
        %v1146 = vld [vmem:[#allocation6 + $0xa8] sm:$0xff]
        %v1147 = vld [vmem:[#allocation6 + $0xb0] sm:$0xff]
        %v1148 = vld [vmem:[#allocation6 + $0xb8] sm:$0xff]
        %v1149 = vld [vmem:[#allocation6 + $0xc0] sm:$0xff]
        %v1150 = vld [vmem:[#allocation6 + $0xc8] sm:$0xff]
        %v1151 = vld [vmem:[#allocation6 + $0xd0] sm:$0xff]
        %v1152 = vld [vmem:[#allocation6 + $0xd8] sm:$0xff]
        %v1153 = vld [vmem:[#allocation6 + $0xe0] sm:$0xff]
        %v1154 = vld [vmem:[#allocation6 + $0xe8] sm:$0xff]
        %v1155 = vld [vmem:[#allocation6 + $0xf0] sm:$0xff]
        %v1156 = vld [vmem:[#allocation6 + $0xf8] sm:$0xff]
        %v1157 = vld [vmem:[#allocation6 + $0x100] sm:$0xff]
        %v1158 = vld [vmem:[#allocation6 + $0x108] sm:$0xff]
        %v1159 = vld [vmem:[#allocation6 + $0x110] sm:$0xff]
        %v1160 = vld [vmem:[#allocation6 + $0x118] sm:$0xff]
        %v1161 = vld [vmem:[#allocation6 + $0x120] sm:$0xff]
        %v1162 = vld [vmem:[#allocation6 + $0x128] sm:$0xff]
        %v1163 = vld [vmem:[#allocation6 + $0x130] sm:$0xff]
        %v1164 = vld [vmem:[#allocation6 + $0x138] sm:$0xff]
        %v1165 = vld [vmem:[#allocation6 + $0x140] sm:$0xff]
        %v1166 = vld [vmem:[#allocation6 + $0x148] sm:$0xff]
        %v1167 = vld [vmem:[#allocation6 + $0x150] sm:$0xff]
        %v1168 = vld [vmem:[#allocation6 + $0x158] sm:$0xff]
        %v1169 = vld [vmem:[#allocation6 + $0x160] sm:$0xff]
        %v1170 = vld [vmem:[#allocation6 + $0x168] sm:$0xff]
        %v1171 = vld [vmem:[#allocation6 + $0x170] sm:$0xff]
        %v1172 = vld [vmem:[#allocation6 + $0x178] sm:$0xff]
        %v1173 = vld [vmem:[#allocation6 + $0x180] sm:$0xff]
        %v1174 = vld [vmem:[#allocation6 + $0x188] sm:$0xff]
        %v1175 = vld [vmem:[#allocation6 + $0x190] sm:$0xff]
        %v1176 = vld [vmem:[#allocation6 + $0x198] sm:$0xff]
        %v1177 = vld [vmem:[#allocation6 + $0x1a0] sm:$0xff]
        %v1178 = vld [vmem:[#allocation6 + $0x1a8] sm:$0xff]
        %v1179 = vld [vmem:[#allocation6 + $0x1b0] sm:$0xff]
        %v1180 = vld [vmem:[#allocation6 + $0x1b8] sm:$0xff]
        %v1181 = vld [vmem:[#allocation6 + $0x1c0] sm:$0xff]
        %v1182 = vld [vmem:[#allocation6 + $0x1c8] sm:$0xff]
        %v1183 = vld [vmem:[#allocation6 + $0x1d0] sm:$0xff]
        %v1184 = vld [vmem:[#allocation6 + $0x1d8] sm:$0xff]
        %v1185 = vld [vmem:[#allocation6 + $0x1e0] sm:$0xff]
        %v1186 = vld [vmem:[#allocation6 + $0x1e8] sm:$0xff]
        %v1187 = vld [vmem:[#allocation6 + $0x1f0] sm:$0xff]
        %v1188 = vld [vmem:[#allocation6 + $0x1f8] sm:$0xff]
        %v1189 = vld [vmem:[#allocation6 + $0x200] sm:$0xff]
        %v1190 = vld [vmem:[#allocation6 + $0x208] sm:$0xff]
        %v1191 = vld [vmem:[#allocation6 + $0x210] sm:$0xff]
        %v1192 = vld [vmem:[#allocation6 + $0x218] sm:$0xff]
        %v1193 = vld [vmem:[#allocation6 + $0x220] sm:$0xff]
        %v1194 = vld [vmem:[#allocation6 + $0x228] sm:$0xff]
        %v1195 = vld [vmem:[#allocation6 + $0x230] sm:$0xff]
        %v1196 = vld [vmem:[#allocation6 + $0x238] sm:$0xff]
        %v1197 = vld [vmem:[#allocation6 + $0x240] sm:$0xff]
        %v1198 = vld [vmem:[#allocation6 + $0x248] sm:$0xff]
        %v1199 = vld [vmem:[#allocation6 + $0x250] sm:$0xff]
        %v1200 = vld [vmem:[#allocation6 + $0x258] sm:$0xff]
        %v1201 = vld [vmem:[#allocation6 + $0x260] sm:$0xff]
        %v1202 = vld [vmem:[#allocation6 + $0x268] sm:$0xff]
        %v1203 = vld [vmem:[#allocation6 + $0x270] sm:$0xff]
        %v1204 = vld [vmem:[#allocation6 + $0x278] sm:$0xff]
        %v1205 = vld [vmem:[#allocation6 + $0x280] sm:$0xff]
        %v1206 = vld [vmem:[#allocation6 + $0x288] sm:$0xff]
        %v1207 = vld [vmem:[#allocation6 + $0x290] sm:$0xff]
        %v1208 = vld [vmem:[#allocation6 + $0x298] sm:$0xff]
        %v1209 = vld [vmem:[#allocation6 + $0x2a0] sm:$0xff]
        %v1210 = vld [vmem:[#allocation6 + $0x2a8] sm:$0xff]
        %v1211 = vld [vmem:[#allocation6 + $0x2b0] sm:$0xff]
        %v1212 = vld [vmem:[#allocation6 + $0x2b8] sm:$0xff]
        %v1213 = vld [vmem:[#allocation6 + $0x2c0] sm:$0xff]
        %v1214 = vld [vmem:[#allocation6 + $0x2c8] sm:$0xff]
        %v1215 = vld [vmem:[#allocation6 + $0x2d0] sm:$0xff]
        %v1216 = vld [vmem:[#allocation6 + $0x2d8] sm:$0xff]
        %v1217 = vld [vmem:[#allocation6 + $0x2e0] sm:$0xff]
        %v1218 = vld [vmem:[#allocation6 + $0x2e8] sm:$0xff]
        %v1219 = vld [vmem:[#allocation6 + $0x2f0] sm:$0xff]
        %v1220 = vld [vmem:[#allocation6 + $0x2f8] sm:$0xff]
        %v1221 = vld [vmem:[#allocation6 + $0x300] sm:$0xff]
        %v1222 = vld [vmem:[#allocation6 + $0x308] sm:$0xff]
        %v1223 = vld [vmem:[#allocation6 + $0x310] sm:$0xff]
        %v1224 = vld [vmem:[#allocation6 + $0x318] sm:$0xff]
        %v1225 = vld [vmem:[#allocation6 + $0x320] sm:$0xff]
        %v1226 = vld [vmem:[#allocation6 + $0x328] sm:$0xff]
        %v1227 = vld [vmem:[#allocation6 + $0x330] sm:$0xff]
        %v1228 = vld [vmem:[#allocation6 + $0x338] sm:$0xff]
        %v1229 = vld [vmem:[#allocation6 + $0x340] sm:$0xff]
        %v1230 = vld [vmem:[#allocation6 + $0x348] sm:$0xff]
        %v1231 = vld [vmem:[#allocation6 + $0x350] sm:$0xff]
        %v1232 = vld [vmem:[#allocation6 + $0x358] sm:$0xff]
        %v1233 = vld [vmem:[#allocation6 + $0x360] sm:$0xff]
        %v1234 = vld [vmem:[#allocation6 + $0x368] sm:$0xff]
        %v1235 = vld [vmem:[#allocation6 + $0x370] sm:$0xff]
        %v1236 = vld [vmem:[#allocation6 + $0x378] sm:$0xff]
        %v1237 = vld [vmem:[#allocation6 + $0x380] sm:$0xff]
        %v1238 = vld [vmem:[#allocation6 + $0x388] sm:$0xff]
        %v1239 = vld [vmem:[#allocation6 + $0x390] sm:$0xff]
        %v1240 = vld [vmem:[#allocation6 + $0x398] sm:$0xff]
        %v1241 = vld [vmem:[#allocation6 + $0x3a0] sm:$0xff]
        %v1242 = vld [vmem:[#allocation6 + $0x3a8] sm:$0xff]
        %v1243 = vld [vmem:[#allocation6 + $0x3b0] sm:$0xff]
        %v1244 = vld [vmem:[#allocation6 + $0x3b8] sm:$0xff]
        %v1245 = vld [vmem:[#allocation6 + $0x3c0] sm:$0xff]
        %v1246 = vld [vmem:[#allocation6 + $0x3c8] sm:$0xff]
        %v1247 = vld [vmem:[#allocation6 + $0x3d0] sm:$0xff]
        %v1248 = vld [vmem:[#allocation6 + $0x3d8] sm:$0xff]
        %v1249 = vld [vmem:[#allocation6 + $0x3e0] sm:$0xff]
        %v1250 = vld [vmem:[#allocation6 + $0x3e8] sm:$0xff]
        %v1251 = vld [vmem:[#allocation6 + $0x3f0] sm:$0xff]
        %v1252 = vld [vmem:[#allocation6 + $0x3f8] sm:$0xff]
        %v1253 = vld [vmem:[#allocation6 + $0x400] sm:$0xff]
        %v1254 = vld [vmem:[#allocation6 + $0x408] sm:$0xff]
        %v1255 = vld [vmem:[#allocation6 + $0x410] sm:$0xff]
        %v1256 = vld [vmem:[#allocation6 + $0x418] sm:$0xff]
        %v1257 = vld [vmem:[#allocation6 + $0x420] sm:$0xff]
        %v1258 = vld [vmem:[#allocation6 + $0x428] sm:$0xff]
        %v1259 = vld [vmem:[#allocation6 + $0x430] sm:$0xff]
        %v1260 = vld [vmem:[#allocation6 + $0x438] sm:$0xff]
        %v1261 = vld [vmem:[#allocation6 + $0x440] sm:$0xff]
        %v1262 = vld [vmem:[#allocation6 + $0x448] sm:$0xff]
        %v1263 = vld [vmem:[#allocation6 + $0x450] sm:$0xff]
        %v1264 = vld [vmem:[#allocation6 + $0x458] sm:$0xff]
        %v1265 = vld [vmem:[#allocation6 + $0x460] sm:$0xff]
        %v1266 = vld [vmem:[#allocation6 + $0x468] sm:$0xff]
        %v1267 = vld [vmem:[#allocation6 + $0x470] sm:$0xff]
        %v1268 = vld [vmem:[#allocation6 + $0x478] sm:$0xff]
        %v1269 = vld [vmem:[#allocation6 + $0x480] sm:$0xff]
        %v1270 = vld [vmem:[#allocation6 + $0x488] sm:$0xff]
        %v1271 = vld [vmem:[#allocation6 + $0x490] sm:$0xff]
        %v1272 = vld [vmem:[#allocation6 + $0x498] sm:$0xff]
        %v1273 = vld [vmem:[#allocation6 + $0x4a0] sm:$0xff]
        %v1274 = vld [vmem:[#allocation6 + $0x4a8] sm:$0xff]
        %v1275 = vld [vmem:[#allocation6 + $0x4b0] sm:$0xff]
        %v1276 = vld [vmem:[#allocation6 + $0x4b8] sm:$0xff]
        %v1277 = vld [vmem:[#allocation6 + $0x4c0] sm:$0xff]
        %v1278 = vld [vmem:[#allocation6 + $0x4c8] sm:$0xff]
        %v1279 = vld [vmem:[#allocation6 + $0x4d0] sm:$0xff]
        %v1280 = vld [vmem:[#allocation6 + $0x4d8] sm:$0xff]
        %v1281 = vld [vmem:[#allocation6 + $0x4e0] sm:$0xff]
        %v1282 = vld [vmem:[#allocation6 + $0x4e8] sm:$0xff]
        %v1283 = vld [vmem:[#allocation6 + $0x4f0] sm:$0xff]
        %v1284 = vld [vmem:[#allocation6 + $0x4f8] sm:$0xff]
        %v1285 = vld [vmem:[#allocation6 + $0x500] sm:$0xff]
        %v1286 = vld [vmem:[#allocation6 + $0x508] sm:$0xff]
        %v1287 = vld [vmem:[#allocation6 + $0x510] sm:$0xff]
        %v1288 = vld [vmem:[#allocation6 + $0x518] sm:$0xff]
        %v1289 = vld [vmem:[#allocation6 + $0x520] sm:$0xff]
        %v1290 = vld [vmem:[#allocation6 + $0x528] sm:$0xff]
        %v1291 = vld [vmem:[#allocation6 + $0x530] sm:$0xff]
        %v1292 = vld [vmem:[#allocation6 + $0x538] sm:$0xff]
        %v1293 = vld [vmem:[#allocation6 + $0x540] sm:$0xff]
        %v1294 = vld [vmem:[#allocation6 + $0x548] sm:$0xff]
        %v1295 = vld [vmem:[#allocation6 + $0x550] sm:$0xff]
        %v1296 = vld [vmem:[#allocation6 + $0x558] sm:$0xff]
        %v1297 = vld [vmem:[#allocation6 + $0x560] sm:$0xff]
        %v1298 = vld [vmem:[#allocation6 + $0x568] sm:$0xff]
        %v1299 = vld [vmem:[#allocation6 + $0x570] sm:$0xff]
        %v1300 = vld [vmem:[#allocation6 + $0x578] sm:$0xff]
        %v1301 = vld [vmem:[#allocation6 + $0x580] sm:$0xff]
        %v1302 = vld [vmem:[#allocation6 + $0x588] sm:$0xff]
        %v1303 = vld [vmem:[#allocation6 + $0x590] sm:$0xff]
        %v1304 = vld [vmem:[#allocation6 + $0x598] sm:$0xff]
        %v1305 = vld [vmem:[#allocation6 + $0x5a0] sm:$0xff]
        %v1306 = vld [vmem:[#allocation6 + $0x5a8] sm:$0xff]
        %v1307 = vld [vmem:[#allocation6 + $0x5b0] sm:$0xff]
        %v1308 = vld [vmem:[#allocation6 + $0x5b8] sm:$0xff]
        %v1309 = vld [vmem:[#allocation6 + $0x5c0] sm:$0xff]
        %v1310 = vld [vmem:[#allocation6 + $0x5c8] sm:$0xff]
        %v1311 = vld [vmem:[#allocation6 + $0x5d0] sm:$0xff]
        %v1312 = vld [vmem:[#allocation6 + $0x5d8] sm:$0xff]
        %v1313 = vld [vmem:[#allocation6 + $0x5e0] sm:$0xff]
        %v1314 = vld [vmem:[#allocation6 + $0x5e8] sm:$0xff]
        %v1315 = vld [vmem:[#allocation6 + $0x5f0] sm:$0xff]
        %v1316 = vld [vmem:[#allocation6 + $0x5f8] sm:$0xff]
        %v1317 = vld [vmem:[#allocation6 + $0x600] sm:$0xff]
        %v1318 = vld [vmem:[#allocation6 + $0x608] sm:$0xff]
        %v1319 = vld [vmem:[#allocation6 + $0x610] sm:$0xff]
        %v1320 = vld [vmem:[#allocation6 + $0x618] sm:$0xff]
        %v1321 = vld [vmem:[#allocation6 + $0x620] sm:$0xff]
        %v1322 = vld [vmem:[#allocation6 + $0x628] sm:$0xff]
        %v1323 = vld [vmem:[#allocation6 + $0x630] sm:$0xff]
        %v1324 = vld [vmem:[#allocation6 + $0x638] sm:$0xff]
        %v1325 = vld [vmem:[#allocation6 + $0x640] sm:$0xff]
        %v1326 = vld [vmem:[#allocation6 + $0x648] sm:$0xff]
        %v1327 = vld [vmem:[#allocation6 + $0x650] sm:$0xff]
        %v1328 = vld [vmem:[#allocation6 + $0x658] sm:$0xff]
        %v1329 = vld [vmem:[#allocation6 + $0x660] sm:$0xff]
        %v1330 = vld [vmem:[#allocation6 + $0x668] sm:$0xff]
        %v1331 = vld [vmem:[#allocation6 + $0x670] sm:$0xff]
        %v1332 = vld [vmem:[#allocation6 + $0x678] sm:$0xff]
        %v1333 = vld [vmem:[#allocation6 + $0x680] sm:$0xff]
        %v1334 = vld [vmem:[#allocation6 + $0x688] sm:$0xff]
        %v1335 = vld [vmem:[#allocation6 + $0x690] sm:$0xff]
        %v1336 = vld [vmem:[#allocation6 + $0x698] sm:$0xff]
        %v1337 = vld [vmem:[#allocation6 + $0x6a0] sm:$0xff]
        %v1338 = vld [vmem:[#allocation6 + $0x6a8] sm:$0xff]
        %v1339 = vld [vmem:[#allocation6 + $0x6b0] sm:$0xff]
        %v1340 = vld [vmem:[#allocation6 + $0x6b8] sm:$0xff]
        %v1341 = vld [vmem:[#allocation6 + $0x6c0] sm:$0xff]
        %v1342 = vld [vmem:[#allocation6 + $0x6c8] sm:$0xff]
        %v1343 = vld [vmem:[#allocation6 + $0x6d0] sm:$0xff]
        %v1344 = vld [vmem:[#allocation6 + $0x6d8] sm:$0xff]
        %v1345 = vld [vmem:[#allocation6 + $0x6e0] sm:$0xff]
        %v1346 = vld [vmem:[#allocation6 + $0x6e8] sm:$0xff]
        %v1347 = vld [vmem:[#allocation6 + $0x6f0] sm:$0xff]
        %v1348 = vld [vmem:[#allocation6 + $0x6f8] sm:$0xff]
        %v1349 = vld [vmem:[#allocation6 + $0x700] sm:$0xff]
        %v1350 = vld [vmem:[#allocation6 + $0x708] sm:$0xff]
        %v1351 = vld [vmem:[#allocation6 + $0x710] sm:$0xff]
        %v1352 = vld [vmem:[#allocation6 + $0x718] sm:$0xff]
        %v1353 = vld [vmem:[#allocation6 + $0x720] sm:$0xff]
        %v1354 = vld [vmem:[#allocation6 + $0x728] sm:$0xff]
        %v1355 = vld [vmem:[#allocation6 + $0x730] sm:$0xff]
        %v1356 = vld [vmem:[#allocation6 + $0x738] sm:$0xff]
        %v1357 = vld [vmem:[#allocation6 + $0x740] sm:$0xff]
        %v1358 = vld [vmem:[#allocation6 + $0x748] sm:$0xff]
        %v1359 = vld [vmem:[#allocation6 + $0x750] sm:$0xff]
        %v1360 = vld [vmem:[#allocation6 + $0x758] sm:$0xff]
        %v1361 = vld [vmem:[#allocation6 + $0x760] sm:$0xff]
        %v1362 = vld [vmem:[#allocation6 + $0x768] sm:$0xff]
        %v1363 = vld [vmem:[#allocation6 + $0x770] sm:$0xff]
        %v1364 = vld [vmem:[#allocation6 + $0x778] sm:$0xff]
        %v1365 = vld [vmem:[#allocation6 + $0x780] sm:$0xff]
        %v1366 = vld [vmem:[#allocation6 + $0x788] sm:$0xff]
        %v1367 = vld [vmem:[#allocation6 + $0x790] sm:$0xff]
        %v1368 = vld [vmem:[#allocation6 + $0x798] sm:$0xff]
        %v1369 = vld [vmem:[#allocation6 + $0x7a0] sm:$0xff]
        %v1370 = vld [vmem:[#allocation6 + $0x7a8] sm:$0xff]
        %v1371 = vld [vmem:[#allocation6 + $0x7b0] sm:$0xff]
        %v1372 = vld [vmem:[#allocation6 + $0x7b8] sm:$0xff]
        %v1373 = vld [vmem:[#allocation6 + $0x7c0] sm:$0xff]
        %v1374 = vld [vmem:[#allocation6 + $0x7c8] sm:$0xff]
        %v1375 = vld [vmem:[#allocation6 + $0x7d0] sm:$0xff]
        %v1376 = vld [vmem:[#allocation6 + $0x7d8] sm:$0xff]
        %v1377 = vld [vmem:[#allocation6 + $0x7e0] sm:$0xff]
        %v1378 = vld [vmem:[#allocation6 + $0x7e8] sm:$0xff]
        %v1379 = vld [vmem:[#allocation6 + $0x7f0] sm:$0xff]
        %v1380 = vld [vmem:[#allocation6 + $0x7f8] sm:$0xff]
        %v1381 = vld [vmem:[#allocation8] sm:$0xf]
        %v1383 = vlaneseq
        %v1384 = vshrl.u32 %v1383, 7
        %v1385 = vsub.s32 0, %v1384
        %v1386 = vrot.slane %v1381, %v1385
        %v1387 = vlaneseq
        %v1388 = vshrl.u32 %v1387, 7
        %v1389 = vsub.s32 1, %v1388
        %v1390 = vrot.slane %v1381, %v1389
        %v1391 = vlaneseq
        %v1392 = vshrl.u32 %v1391, 7
        %v1393 = vsub.s32 2, %v1392
        %v1394 = vrot.slane %v1381, %v1393
        %v1395 = vlaneseq
        %v1396 = vshrl.u32 %v1395, 7
        %v1397 = vsub.s32 3, %v1396
        %v1398 = vrot.slane %v1381, %v1397
        %v1455 = vunpack.c.l.b16 %v1073
        %v1456 = vunpack.c.h.b16 %v1073
        %v1457 = vunpack.c.l.b16 %v1074
        %v1458 = vunpack.c.h.b16 %v1074
        %v1459 = vunpack.c.l.b16 %v1075
        %v1460 = vunpack.c.h.b16 %v1075
        %v1461 = vunpack.c.l.b16 %v1076
        %v1462 = vunpack.c.h.b16 %v1076
        %v1463 = vunpack.c.l.b16 %v1077
        %v1464 = vunpack.c.h.b16 %v1077
        %v1465 = vunpack.c.l.b16 %v1078
        %v1466 = vunpack.c.h.b16 %v1078
        %v1467 = vunpack.c.l.b16 %v1079
        %v1468 = vunpack.c.h.b16 %v1079
        %v1469 = vunpack.c.l.b16 %v1080
        %v1470 = vunpack.c.h.b16 %v1080
        %v1471 = vunpack.c.l.b16 %v1081
        %v1472 = vunpack.c.h.b16 %v1081
        %v1473 = vunpack.c.l.b16 %v1082
        %v1474 = vunpack.c.h.b16 %v1082
        %v1475 = vunpack.c.l.b16 %v1083
        %v1476 = vunpack.c.h.b16 %v1083
        %v1477 = vunpack.c.l.b16 %v1084
        %v1478 = vunpack.c.h.b16 %v1084
        %v1479 = vunpack.c.l.b16 %v1085
        %v1480 = vunpack.c.h.b16 %v1085
        %v1481 = vunpack.c.l.b16 %v1086
        %v1482 = vunpack.c.h.b16 %v1086
        %v1483 = vunpack.c.l.b16 %v1087
        %v1484 = vunpack.c.h.b16 %v1087
        %v1485 = vunpack.c.l.b16 %v1088
        %v1486 = vunpack.c.h.b16 %v1088
        %v1487 = vunpack.c.l.b16 %v1089
        %v1488 = vunpack.c.h.b16 %v1089
        %v1489 = vunpack.c.l.b16 %v1090
        %v1490 = vunpack.c.h.b16 %v1090
        %v1491 = vunpack.c.l.b16 %v1091
        %v1492 = vunpack.c.h.b16 %v1091
        %v1493 = vunpack.c.l.b16 %v1092
        %v1494 = vunpack.c.h.b16 %v1092
        %v1495 = vunpack.c.l.b16 %v1093
        %v1496 = vunpack.c.h.b16 %v1093
        %v1497 = vunpack.c.l.b16 %v1094
        %v1498 = vunpack.c.h.b16 %v1094
        %v1499 = vunpack.c.l.b16 %v1095
        %v1500 = vunpack.c.h.b16 %v1095
        %v1501 = vunpack.c.l.b16 %v1096
        %v1502 = vunpack.c.h.b16 %v1096
        %v1503 = vunpack.c.l.b16 %v1097
        %v1504 = vunpack.c.h.b16 %v1097
        %v1505 = vunpack.c.l.b16 %v1098
        %v1506 = vunpack.c.h.b16 %v1098
        %v1507 = vunpack.c.l.b16 %v1099
        %v1508 = vunpack.c.h.b16 %v1099
        %v1509 = vunpack.c.l.b16 %v1100
        %v1510 = vunpack.c.h.b16 %v1100
        %v1511 = vunpack.c.l.b16 %v1101
        %v1512 = vunpack.c.h.b16 %v1101
        %v1513 = vunpack.c.l.b16 %v1102
        %v1514 = vunpack.c.h.b16 %v1102
        %v1515 = vunpack.c.l.b16 %v1103
        %v1516 = vunpack.c.h.b16 %v1103
        %v1517 = vunpack.c.l.b16 %v1104
        %v1518 = vunpack.c.h.b16 %v1104
        %v1519 = vunpack.c.l.b16 %v1105
        %v1520 = vunpack.c.h.b16 %v1105
        %v1521 = vunpack.c.l.b16 %v1106
        %v1522 = vunpack.c.h.b16 %v1106
        %v1523 = vunpack.c.l.b16 %v1107
        %v1524 = vunpack.c.h.b16 %v1107
        %v1525 = vunpack.c.l.b16 %v1108
        %v1526 = vunpack.c.h.b16 %v1108
        %v1527 = vunpack.c.l.b16 %v1109
        %v1528 = vunpack.c.h.b16 %v1109
        %v1529 = vunpack.c.l.b16 %v1110
        %v1530 = vunpack.c.h.b16 %v1110
        %v1531 = vunpack.c.l.b16 %v1111
        %v1532 = vunpack.c.h.b16 %v1111
        %v1533 = vunpack.c.l.b16 %v1112
        %v1534 = vunpack.c.h.b16 %v1112
        %v1535 = vunpack.c.l.b16 %v1113
        %v1536 = vunpack.c.h.b16 %v1113
        %v1537 = vunpack.c.l.b16 %v1114
        %v1538 = vunpack.c.h.b16 %v1114
        %v1539 = vunpack.c.l.b16 %v1115
        %v1540 = vunpack.c.h.b16 %v1115
        %v1541 = vunpack.c.l.b16 %v1116
        %v1542 = vunpack.c.h.b16 %v1116
        %v1543 = vunpack.c.l.b16 %v1117
        %v1544 = vunpack.c.h.b16 %v1117
        %v1545 = vunpack.c.l.b16 %v1118
        %v1546 = vunpack.c.h.b16 %v1118
        %v1547 = vunpack.c.l.b16 %v1119
        %v1548 = vunpack.c.h.b16 %v1119
        %v1549 = vunpack.c.l.b16 %v1120
        %v1550 = vunpack.c.h.b16 %v1120
        %v1551 = vunpack.c.l.b16 %v1121
        %v1552 = vunpack.c.h.b16 %v1121
        %v1553 = vunpack.c.l.b16 %v1122
        %v1554 = vunpack.c.h.b16 %v1122
        %v1555 = vunpack.c.l.b16 %v1123
        %v1556 = vunpack.c.h.b16 %v1123
        %v1557 = vunpack.c.l.b16 %v1124
        %v1558 = vunpack.c.h.b16 %v1124
        %v1559 = vpack.c.b16 %v1463, %v1455
        %v1560 = vpack.c.b16 %v1464, %v1456
        %v1561 = vpack.c.b16 %v1465, %v1457
        %v1562 = vpack.c.b16 %v1466, %v1458
        %v1563 = vpack.c.b16 %v1467, %v1459
        %v1564 = vpack.c.b16 %v1468, %v1460
        %v1565 = vpack.c.b16 %v1469, %v1461
        %v1566 = vpack.c.b16 %v1470, %v1462
        %v1567 = vpack.c.b16 %v1479, %v1471
        %v1568 = vpack.c.b16 %v1480, %v1472
        %v1569 = vpack.c.b16 %v1481, %v1473
        %v1570 = vpack.c.b16 %v1482, %v1474
        %v1571 = vpack.c.b16 %v1483, %v1475
        %v1572 = vpack.c.b16 %v1484, %v1476
        %v1573 = vpack.c.b16 %v1485, %v1477
        %v1574 = vpack.c.b16 %v1486, %v1478
        %v1575 = vpack.c.b16 %v1495, %v1487
        %v1576 = vpack.c.b16 %v1496, %v1488
        %v1577 = vpack.c.b16 %v1497, %v1489
        %v1578 = vpack.c.b16 %v1498, %v1490
        %v1579 = vpack.c.b16 %v1499, %v1491
        %v1580 = vpack.c.b16 %v1500, %v1492
        %v1581 = vpack.c.b16 %v1501, %v1493
        %v1582 = vpack.c.b16 %v1502, %v1494
        %v1583 = vpack.c.b16 %v1511, %v1503
        %v1584 = vpack.c.b16 %v1512, %v1504
        %v1585 = vpack.c.b16 %v1513, %v1505
        %v1586 = vpack.c.b16 %v1514, %v1506
        %v1587 = vpack.c.b16 %v1515, %v1507
        %v1588 = vpack.c.b16 %v1516, %v1508
        %v1589 = vpack.c.b16 %v1517, %v1509
        %v1590 = vpack.c.b16 %v1518, %v1510
        %v1591 = vpack.c.b16 %v1527, %v1519
        %v1592 = vpack.c.b16 %v1528, %v1520
        %v1593 = vpack.c.b16 %v1529, %v1521
        %v1594 = vpack.c.b16 %v1530, %v1522
        %v1595 = vpack.c.b16 %v1531, %v1523
        %v1596 = vpack.c.b16 %v1532, %v1524
        %v1597 = vpack.c.b16 %v1533, %v1525
        %v1598 = vpack.c.b16 %v1534, %v1526
        %v1599 = vpack.c.b16 %v1543, %v1535
        %v1600 = vpack.c.b16 %v1544, %v1536
        %v1601 = vpack.c.b16 %v1545, %v1537
        %v1602 = vpack.c.b16 %v1546, %v1538
        %v1603 = vpack.c.b16 %v1547, %v1539
        %v1604 = vpack.c.b16 %v1548, %v1540
        %v1605 = vpack.c.b16 %v1549, %v1541
        %v1606 = vpack.c.b16 %v1550, %v1542
        %v1607 = vpack.c.b16 %v1551, %v1551
        %v1608 = vpack.c.b16 %v1552, %v1552
        %v1609 = vpack.c.b16 %v1553, %v1553
        %v1610 = vpack.c.b16 %v1554, %v1554
        %v1611 = vpack.c.b16 %v1555, %v1555
        %v1612 = vpack.c.b16 %v1556, %v1556
        %v1613 = vpack.c.b16 %v1557, %v1557
        %v1614 = vpack.c.b16 %v1558, %v1558
        %v1927 = vunpack.c.l.b16 %v1125
        %v1928 = vunpack.c.h.b16 %v1125
        %v1929 = vunpack.c.l.b16 %v1126
        %v1930 = vunpack.c.h.b16 %v1126
        %v1931 = vunpack.c.l.b16 %v1127
        %v1932 = vunpack.c.h.b16 %v1127
        %v1933 = vunpack.c.l.b16 %v1128
        %v1934 = vunpack.c.h.b16 %v1128
        %v1935 = vunpack.c.l.b16 %v1129
        %v1936 = vunpack.c.h.b16 %v1129
        %v1937 = vunpack.c.l.b16 %v1130
        %v1938 = vunpack.c.h.b16 %v1130
        %v1939 = vunpack.c.l.b16 %v1131
        %v1940 = vunpack.c.h.b16 %v1131
        %v1941 = vunpack.c.l.b16 %v1132
        %v1942 = vunpack.c.h.b16 %v1132
        %v1943 = vunpack.c.l.b16 %v1133
        %v1944 = vunpack.c.h.b16 %v1133
        %v1945 = vunpack.c.l.b16 %v1134
        %v1946 = vunpack.c.h.b16 %v1134
        %v1947 = vunpack.c.l.b16 %v1135
        %v1948 = vunpack.c.h.b16 %v1135
        %v1949 = vunpack.c.l.b16 %v1136
        %v1950 = vunpack.c.h.b16 %v1136
        %v1951 = vunpack.c.l.b16 %v1137
        %v1952 = vunpack.c.h.b16 %v1137
        %v1953 = vunpack.c.l.b16 %v1138
        %v1954 = vunpack.c.h.b16 %v1138
        %v1955 = vunpack.c.l.b16 %v1139
        %v1956 = vunpack.c.h.b16 %v1139
        %v1957 = vunpack.c.l.b16 %v1140
        %v1958 = vunpack.c.h.b16 %v1140
        %v1959 = vunpack.c.l.b16 %v1141
        %v1960 = vunpack.c.h.b16 %v1141
        %v1961 = vunpack.c.l.b16 %v1142
        %v1962 = vunpack.c.h.b16 %v1142
        %v1963 = vunpack.c.l.b16 %v1143
        %v1964 = vunpack.c.h.b16 %v1143
        %v1965 = vunpack.c.l.b16 %v1144
        %v1966 = vunpack.c.h.b16 %v1144
        %v1967 = vunpack.c.l.b16 %v1145
        %v1968 = vunpack.c.h.b16 %v1145
        %v1969 = vunpack.c.l.b16 %v1146
        %v1970 = vunpack.c.h.b16 %v1146
        %v1971 = vunpack.c.l.b16 %v1147
        %v1972 = vunpack.c.h.b16 %v1147
        %v1973 = vunpack.c.l.b16 %v1148
        %v1974 = vunpack.c.h.b16 %v1148
        %v1975 = vunpack.c.l.b16 %v1149
        %v1976 = vunpack.c.h.b16 %v1149
        %v1977 = vunpack.c.l.b16 %v1150
        %v1978 = vunpack.c.h.b16 %v1150
        %v1979 = vunpack.c.l.b16 %v1151
        %v1980 = vunpack.c.h.b16 %v1151
        %v1981 = vunpack.c.l.b16 %v1152
        %v1982 = vunpack.c.h.b16 %v1152
        %v1983 = vunpack.c.l.b16 %v1153
        %v1984 = vunpack.c.h.b16 %v1153
        %v1985 = vunpack.c.l.b16 %v1154
        %v1986 = vunpack.c.h.b16 %v1154
        %v1987 = vunpack.c.l.b16 %v1155
        %v1988 = vunpack.c.h.b16 %v1155
        %v1989 = vunpack.c.l.b16 %v1156
        %v1990 = vunpack.c.h.b16 %v1156
        %v1991 = vunpack.c.l.b16 %v1157
        %v1992 = vunpack.c.h.b16 %v1157
        %v1993 = vunpack.c.l.b16 %v1158
        %v1994 = vunpack.c.h.b16 %v1158
        %v1995 = vunpack.c.l.b16 %v1159
        %v1996 = vunpack.c.h.b16 %v1159
        %v1997 = vunpack.c.l.b16 %v1160
        %v1998 = vunpack.c.h.b16 %v1160
        %v1999 = vunpack.c.l.b16 %v1161
        %v2000 = vunpack.c.h.b16 %v1161
        %v2001 = vunpack.c.l.b16 %v1162
        %v2002 = vunpack.c.h.b16 %v1162
        %v2003 = vunpack.c.l.b16 %v1163
        %v2004 = vunpack.c.h.b16 %v1163
        %v2005 = vunpack.c.l.b16 %v1164
        %v2006 = vunpack.c.h.b16 %v1164
        %v2007 = vunpack.c.l.b16 %v1165
        %v2008 = vunpack.c.h.b16 %v1165
        %v2009 = vunpack.c.l.b16 %v1166
        %v2010 = vunpack.c.h.b16 %v1166
        %v2011 = vunpack.c.l.b16 %v1167
        %v2012 = vunpack.c.h.b16 %v1167
        %v2013 = vunpack.c.l.b16 %v1168
        %v2014 = vunpack.c.h.b16 %v1168
        %v2015 = vunpack.c.l.b16 %v1169
        %v2016 = vunpack.c.h.b16 %v1169
        %v2017 = vunpack.c.l.b16 %v1170
        %v2018 = vunpack.c.h.b16 %v1170
        %v2019 = vunpack.c.l.b16 %v1171
        %v2020 = vunpack.c.h.b16 %v1171
        %v2021 = vunpack.c.l.b16 %v1172
        %v2022 = vunpack.c.h.b16 %v1172
        %v2023 = vunpack.c.l.b16 %v1173
        %v2024 = vunpack.c.h.b16 %v1173
        %v2025 = vunpack.c.l.b16 %v1174
        %v2026 = vunpack.c.h.b16 %v1174
        %v2027 = vunpack.c.l.b16 %v1175
        %v2028 = vunpack.c.h.b16 %v1175
        %v2029 = vunpack.c.l.b16 %v1176
        %v2030 = vunpack.c.h.b16 %v1176
        %v2031 = vunpack.c.l.b16 %v1177
        %v2032 = vunpack.c.h.b16 %v1177
        %v2033 = vunpack.c.l.b16 %v1178
        %v2034 = vunpack.c.h.b16 %v1178
        %v2035 = vunpack.c.l.b16 %v1179
        %v2036 = vunpack.c.h.b16 %v1179
        %v2037 = vunpack.c.l.b16 %v1180
        %v2038 = vunpack.c.h.b16 %v1180
        %v2039 = vunpack.c.l.b16 %v1181
        %v2040 = vunpack.c.h.b16 %v1181
        %v2041 = vunpack.c.l.b16 %v1182
        %v2042 = vunpack.c.h.b16 %v1182
        %v2043 = vunpack.c.l.b16 %v1183
        %v2044 = vunpack.c.h.b16 %v1183
        %v2045 = vunpack.c.l.b16 %v1184
        %v2046 = vunpack.c.h.b16 %v1184
        %v2047 = vunpack.c.l.b16 %v1185
        %v2048 = vunpack.c.h.b16 %v1185
        %v2049 = vunpack.c.l.b16 %v1186
        %v2050 = vunpack.c.h.b16 %v1186
        %v2051 = vunpack.c.l.b16 %v1187
        %v2052 = vunpack.c.h.b16 %v1187
        %v2053 = vunpack.c.l.b16 %v1188
        %v2054 = vunpack.c.h.b16 %v1188
        %v2055 = vunpack.c.l.b16 %v1189
        %v2056 = vunpack.c.h.b16 %v1189
        %v2057 = vunpack.c.l.b16 %v1190
        %v2058 = vunpack.c.h.b16 %v1190
        %v2059 = vunpack.c.l.b16 %v1191
        %v2060 = vunpack.c.h.b16 %v1191
        %v2061 = vunpack.c.l.b16 %v1192
        %v2062 = vunpack.c.h.b16 %v1192
        %v2063 = vunpack.c.l.b16 %v1193
        %v2064 = vunpack.c.h.b16 %v1193
        %v2065 = vunpack.c.l.b16 %v1194
        %v2066 = vunpack.c.h.b16 %v1194
        %v2067 = vunpack.c.l.b16 %v1195
        %v2068 = vunpack.c.h.b16 %v1195
        %v2069 = vunpack.c.l.b16 %v1196
        %v2070 = vunpack.c.h.b16 %v1196
        %v2071 = vunpack.c.l.b16 %v1197
        %v2072 = vunpack.c.h.b16 %v1197
        %v2073 = vunpack.c.l.b16 %v1198
        %v2074 = vunpack.c.h.b16 %v1198
        %v2075 = vunpack.c.l.b16 %v1199
        %v2076 = vunpack.c.h.b16 %v1199
        %v2077 = vunpack.c.l.b16 %v1200
        %v2078 = vunpack.c.h.b16 %v1200
        %v2079 = vunpack.c.l.b16 %v1201
        %v2080 = vunpack.c.h.b16 %v1201
        %v2081 = vunpack.c.l.b16 %v1202
        %v2082 = vunpack.c.h.b16 %v1202
        %v2083 = vunpack.c.l.b16 %v1203
        %v2084 = vunpack.c.h.b16 %v1203
        %v2085 = vunpack.c.l.b16 %v1204
        %v2086 = vunpack.c.h.b16 %v1204
        %v2087 = vunpack.c.l.b16 %v1205
        %v2088 = vunpack.c.h.b16 %v1205
        %v2089 = vunpack.c.l.b16 %v1206
        %v2090 = vunpack.c.h.b16 %v1206
        %v2091 = vunpack.c.l.b16 %v1207
        %v2092 = vunpack.c.h.b16 %v1207
        %v2093 = vunpack.c.l.b16 %v1208
        %v2094 = vunpack.c.h.b16 %v1208
        %v2095 = vunpack.c.l.b16 %v1209
        %v2096 = vunpack.c.h.b16 %v1209
        %v2097 = vunpack.c.l.b16 %v1210
        %v2098 = vunpack.c.h.b16 %v1210
        %v2099 = vunpack.c.l.b16 %v1211
        %v2100 = vunpack.c.h.b16 %v1211
        %v2101 = vunpack.c.l.b16 %v1212
        %v2102 = vunpack.c.h.b16 %v1212
        %v2103 = vunpack.c.l.b16 %v1213
        %v2104 = vunpack.c.h.b16 %v1213
        %v2105 = vunpack.c.l.b16 %v1214
        %v2106 = vunpack.c.h.b16 %v1214
        %v2107 = vunpack.c.l.b16 %v1215
        %v2108 = vunpack.c.h.b16 %v1215
        %v2109 = vunpack.c.l.b16 %v1216
        %v2110 = vunpack.c.h.b16 %v1216
        %v2111 = vunpack.c.l.b16 %v1217
        %v2112 = vunpack.c.h.b16 %v1217
        %v2113 = vunpack.c.l.b16 %v1218
        %v2114 = vunpack.c.h.b16 %v1218
        %v2115 = vunpack.c.l.b16 %v1219
        %v2116 = vunpack.c.h.b16 %v1219
        %v2117 = vunpack.c.l.b16 %v1220
        %v2118 = vunpack.c.h.b16 %v1220
        %v2119 = vunpack.c.l.b16 %v1221
        %v2120 = vunpack.c.h.b16 %v1221
        %v2121 = vunpack.c.l.b16 %v1222
        %v2122 = vunpack.c.h.b16 %v1222
        %v2123 = vunpack.c.l.b16 %v1223
        %v2124 = vunpack.c.h.b16 %v1223
        %v2125 = vunpack.c.l.b16 %v1224
        %v2126 = vunpack.c.h.b16 %v1224
        %v2127 = vunpack.c.l.b16 %v1225
        %v2128 = vunpack.c.h.b16 %v1225
        %v2129 = vunpack.c.l.b16 %v1226
        %v2130 = vunpack.c.h.b16 %v1226
        %v2131 = vunpack.c.l.b16 %v1227
        %v2132 = vunpack.c.h.b16 %v1227
        %v2133 = vunpack.c.l.b16 %v1228
        %v2134 = vunpack.c.h.b16 %v1228
        %v2135 = vunpack.c.l.b16 %v1229
        %v2136 = vunpack.c.h.b16 %v1229
        %v2137 = vunpack.c.l.b16 %v1230
        %v2138 = vunpack.c.h.b16 %v1230
        %v2139 = vunpack.c.l.b16 %v1231
        %v2140 = vunpack.c.h.b16 %v1231
        %v2141 = vunpack.c.l.b16 %v1232
        %v2142 = vunpack.c.h.b16 %v1232
        %v2143 = vunpack.c.l.b16 %v1233
        %v2144 = vunpack.c.h.b16 %v1233
        %v2145 = vunpack.c.l.b16 %v1234
        %v2146 = vunpack.c.h.b16 %v1234
        %v2147 = vunpack.c.l.b16 %v1235
        %v2148 = vunpack.c.h.b16 %v1235
        %v2149 = vunpack.c.l.b16 %v1236
        %v2150 = vunpack.c.h.b16 %v1236
        %v2151 = vunpack.c.l.b16 %v1237
        %v2152 = vunpack.c.h.b16 %v1237
        %v2153 = vunpack.c.l.b16 %v1238
        %v2154 = vunpack.c.h.b16 %v1238
        %v2155 = vunpack.c.l.b16 %v1239
        %v2156 = vunpack.c.h.b16 %v1239
        %v2157 = vunpack.c.l.b16 %v1240
        %v2158 = vunpack.c.h.b16 %v1240
        %v2159 = vunpack.c.l.b16 %v1241
        %v2160 = vunpack.c.h.b16 %v1241
        %v2161 = vunpack.c.l.b16 %v1242
        %v2162 = vunpack.c.h.b16 %v1242
        %v2163 = vunpack.c.l.b16 %v1243
        %v2164 = vunpack.c.h.b16 %v1243
        %v2165 = vunpack.c.l.b16 %v1244
        %v2166 = vunpack.c.h.b16 %v1244
        %v2167 = vunpack.c.l.b16 %v1245
        %v2168 = vunpack.c.h.b16 %v1245
        %v2169 = vunpack.c.l.b16 %v1246
        %v2170 = vunpack.c.h.b16 %v1246
        %v2171 = vunpack.c.l.b16 %v1247
        %v2172 = vunpack.c.h.b16 %v1247
        %v2173 = vunpack.c.l.b16 %v1248
        %v2174 = vunpack.c.h.b16 %v1248
        %v2175 = vunpack.c.l.b16 %v1249
        %v2176 = vunpack.c.h.b16 %v1249
        %v2177 = vunpack.c.l.b16 %v1250
        %v2178 = vunpack.c.h.b16 %v1250
        %v2179 = vunpack.c.l.b16 %v1251
        %v2180 = vunpack.c.h.b16 %v1251
        %v2181 = vunpack.c.l.b16 %v1252
        %v2182 = vunpack.c.h.b16 %v1252
        %v2183 = vunpack.c.l.b16 %v1253
        %v2184 = vunpack.c.h.b16 %v1253
        %v2185 = vunpack.c.l.b16 %v1254
        %v2186 = vunpack.c.h.b16 %v1254
        %v2187 = vunpack.c.l.b16 %v1255
        %v2188 = vunpack.c.h.b16 %v1255
        %v2189 = vunpack.c.l.b16 %v1256
        %v2190 = vunpack.c.h.b16 %v1256
        %v2191 = vunpack.c.l.b16 %v1257
        %v2192 = vunpack.c.h.b16 %v1257
        %v2193 = vunpack.c.l.b16 %v1258
        %v2194 = vunpack.c.h.b16 %v1258
        %v2195 = vunpack.c.l.b16 %v1259
        %v2196 = vunpack.c.h.b16 %v1259
        %v2197 = vunpack.c.l.b16 %v1260
        %v2198 = vunpack.c.h.b16 %v1260
        %v2199 = vunpack.c.l.b16 %v1261
        %v2200 = vunpack.c.h.b16 %v1261
        %v2201 = vunpack.c.l.b16 %v1262
        %v2202 = vunpack.c.h.b16 %v1262
        %v2203 = vunpack.c.l.b16 %v1263
        %v2204 = vunpack.c.h.b16 %v1263
        %v2205 = vunpack.c.l.b16 %v1264
        %v2206 = vunpack.c.h.b16 %v1264
        %v2207 = vunpack.c.l.b16 %v1265
        %v2208 = vunpack.c.h.b16 %v1265
        %v2209 = vunpack.c.l.b16 %v1266
        %v2210 = vunpack.c.h.b16 %v1266
        %v2211 = vunpack.c.l.b16 %v1267
        %v2212 = vunpack.c.h.b16 %v1267
        %v2213 = vunpack.c.l.b16 %v1268
        %v2214 = vunpack.c.h.b16 %v1268
        %v2215 = vunpack.c.l.b16 %v1269
        %v2216 = vunpack.c.h.b16 %v1269
        %v2217 = vunpack.c.l.b16 %v1270
        %v2218 = vunpack.c.h.b16 %v1270
        %v2219 = vunpack.c.l.b16 %v1271
        %v2220 = vunpack.c.h.b16 %v1271
        %v2221 = vunpack.c.l.b16 %v1272
        %v2222 = vunpack.c.h.b16 %v1272
        %v2223 = vunpack.c.l.b16 %v1273
        %v2224 = vunpack.c.h.b16 %v1273
        %v2225 = vunpack.c.l.b16 %v1274
        %v2226 = vunpack.c.h.b16 %v1274
        %v2227 = vunpack.c.l.b16 %v1275
        %v2228 = vunpack.c.h.b16 %v1275
        %v2229 = vunpack.c.l.b16 %v1276
        %v2230 = vunpack.c.h.b16 %v1276
        %v2231 = vunpack.c.l.b16 %v1277
        %v2232 = vunpack.c.h.b16 %v1277
        %v2233 = vunpack.c.l.b16 %v1278
        %v2234 = vunpack.c.h.b16 %v1278
        %v2235 = vunpack.c.l.b16 %v1279
        %v2236 = vunpack.c.h.b16 %v1279
        %v2237 = vunpack.c.l.b16 %v1280
        %v2238 = vunpack.c.h.b16 %v1280
        %v2239 = vunpack.c.l.b16 %v1281
        %v2240 = vunpack.c.h.b16 %v1281
        %v2241 = vunpack.c.l.b16 %v1282
        %v2242 = vunpack.c.h.b16 %v1282
        %v2243 = vunpack.c.l.b16 %v1283
        %v2244 = vunpack.c.h.b16 %v1283
        %v2245 = vunpack.c.l.b16 %v1284
        %v2246 = vunpack.c.h.b16 %v1284
        %v2247 = vunpack.c.l.b16 %v1285
        %v2248 = vunpack.c.h.b16 %v1285
        %v2249 = vunpack.c.l.b16 %v1286
        %v2250 = vunpack.c.h.b16 %v1286
        %v2251 = vunpack.c.l.b16 %v1287
        %v2252 = vunpack.c.h.b16 %v1287
        %v2253 = vunpack.c.l.b16 %v1288
        %v2254 = vunpack.c.h.b16 %v1288
        %v2255 = vunpack.c.l.b16 %v1289
        %v2256 = vunpack.c.h.b16 %v1289
        %v2257 = vunpack.c.l.b16 %v1290
        %v2258 = vunpack.c.h.b16 %v1290
        %v2259 = vunpack.c.l.b16 %v1291
        %v2260 = vunpack.c.h.b16 %v1291
        %v2261 = vunpack.c.l.b16 %v1292
        %v2262 = vunpack.c.h.b16 %v1292
        %v2263 = vunpack.c.l.b16 %v1293
        %v2264 = vunpack.c.h.b16 %v1293
        %v2265 = vunpack.c.l.b16 %v1294
        %v2266 = vunpack.c.h.b16 %v1294
        %v2267 = vunpack.c.l.b16 %v1295
        %v2268 = vunpack.c.h.b16 %v1295
        %v2269 = vunpack.c.l.b16 %v1296
        %v2270 = vunpack.c.h.b16 %v1296
        %v2271 = vunpack.c.l.b16 %v1297
        %v2272 = vunpack.c.h.b16 %v1297
        %v2273 = vunpack.c.l.b16 %v1298
        %v2274 = vunpack.c.h.b16 %v1298
        %v2275 = vunpack.c.l.b16 %v1299
        %v2276 = vunpack.c.h.b16 %v1299
        %v2277 = vunpack.c.l.b16 %v1300
        %v2278 = vunpack.c.h.b16 %v1300
        %v2279 = vunpack.c.l.b16 %v1301
        %v2280 = vunpack.c.h.b16 %v1301
        %v2281 = vunpack.c.l.b16 %v1302
        %v2282 = vunpack.c.h.b16 %v1302
        %v2283 = vunpack.c.l.b16 %v1303
        %v2284 = vunpack.c.h.b16 %v1303
        %v2285 = vunpack.c.l.b16 %v1304
        %v2286 = vunpack.c.h.b16 %v1304
        %v2287 = vunpack.c.l.b16 %v1305
        %v2288 = vunpack.c.h.b16 %v1305
        %v2289 = vunpack.c.l.b16 %v1306
        %v2290 = vunpack.c.h.b16 %v1306
        %v2291 = vunpack.c.l.b16 %v1307
        %v2292 = vunpack.c.h.b16 %v1307
        %v2293 = vunpack.c.l.b16 %v1308
        %v2294 = vunpack.c.h.b16 %v1308
        %v2295 = vunpack.c.l.b16 %v1309
        %v2296 = vunpack.c.h.b16 %v1309
        %v2297 = vunpack.c.l.b16 %v1310
        %v2298 = vunpack.c.h.b16 %v1310
        %v2299 = vunpack.c.l.b16 %v1311
        %v2300 = vunpack.c.h.b16 %v1311
        %v2301 = vunpack.c.l.b16 %v1312
        %v2302 = vunpack.c.h.b16 %v1312
        %v2303 = vunpack.c.l.b16 %v1313
        %v2304 = vunpack.c.h.b16 %v1313
        %v2305 = vunpack.c.l.b16 %v1314
        %v2306 = vunpack.c.h.b16 %v1314
        %v2307 = vunpack.c.l.b16 %v1315
        %v2308 = vunpack.c.h.b16 %v1315
        %v2309 = vunpack.c.l.b16 %v1316
        %v2310 = vunpack.c.h.b16 %v1316
        %v2311 = vunpack.c.l.b16 %v1317
        %v2312 = vunpack.c.h.b16 %v1317
        %v2313 = vunpack.c.l.b16 %v1318
        %v2314 = vunpack.c.h.b16 %v1318
        %v2315 = vunpack.c.l.b16 %v1319
        %v2316 = vunpack.c.h.b16 %v1319
        %v2317 = vunpack.c.l.b16 %v1320
        %v2318 = vunpack.c.h.b16 %v1320
        %v2319 = vunpack.c.l.b16 %v1321
        %v2320 = vunpack.c.h.b16 %v1321
        %v2321 = vunpack.c.l.b16 %v1322
        %v2322 = vunpack.c.h.b16 %v1322
        %v2323 = vunpack.c.l.b16 %v1323
        %v2324 = vunpack.c.h.b16 %v1323
        %v2325 = vunpack.c.l.b16 %v1324
        %v2326 = vunpack.c.h.b16 %v1324
        %v2327 = vunpack.c.l.b16 %v1325
        %v2328 = vunpack.c.h.b16 %v1325
        %v2329 = vunpack.c.l.b16 %v1326
        %v2330 = vunpack.c.h.b16 %v1326
        %v2331 = vunpack.c.l.b16 %v1327
        %v2332 = vunpack.c.h.b16 %v1327
        %v2333 = vunpack.c.l.b16 %v1328
        %v2334 = vunpack.c.h.b16 %v1328
        %v2335 = vunpack.c.l.b16 %v1329
        %v2336 = vunpack.c.h.b16 %v1329
        %v2337 = vunpack.c.l.b16 %v1330
        %v2338 = vunpack.c.h.b16 %v1330
        %v2339 = vunpack.c.l.b16 %v1331
        %v2340 = vunpack.c.h.b16 %v1331
        %v2341 = vunpack.c.l.b16 %v1332
        %v2342 = vunpack.c.h.b16 %v1332
        %v2343 = vunpack.c.l.b16 %v1333
        %v2344 = vunpack.c.h.b16 %v1333
        %v2345 = vunpack.c.l.b16 %v1334
        %v2346 = vunpack.c.h.b16 %v1334
        %v2347 = vunpack.c.l.b16 %v1335
        %v2348 = vunpack.c.h.b16 %v1335
        %v2349 = vunpack.c.l.b16 %v1336
        %v2350 = vunpack.c.h.b16 %v1336
        %v2351 = vunpack.c.l.b16 %v1337
        %v2352 = vunpack.c.h.b16 %v1337
        %v2353 = vunpack.c.l.b16 %v1338
        %v2354 = vunpack.c.h.b16 %v1338
        %v2355 = vunpack.c.l.b16 %v1339
        %v2356 = vunpack.c.h.b16 %v1339
        %v2357 = vunpack.c.l.b16 %v1340
        %v2358 = vunpack.c.h.b16 %v1340
        %v2359 = vunpack.c.l.b16 %v1341
        %v2360 = vunpack.c.h.b16 %v1341
        %v2361 = vunpack.c.l.b16 %v1342
        %v2362 = vunpack.c.h.b16 %v1342
        %v2363 = vunpack.c.l.b16 %v1343
        %v2364 = vunpack.c.h.b16 %v1343
        %v2365 = vunpack.c.l.b16 %v1344
        %v2366 = vunpack.c.h.b16 %v1344
        %v2367 = vunpack.c.l.b16 %v1345
        %v2368 = vunpack.c.h.b16 %v1345
        %v2369 = vunpack.c.l.b16 %v1346
        %v2370 = vunpack.c.h.b16 %v1346
        %v2371 = vunpack.c.l.b16 %v1347
        %v2372 = vunpack.c.h.b16 %v1347
        %v2373 = vunpack.c.l.b16 %v1348
        %v2374 = vunpack.c.h.b16 %v1348
        %v2375 = vunpack.c.l.b16 %v1349
        %v2376 = vunpack.c.h.b16 %v1349
        %v2377 = vunpack.c.l.b16 %v1350
        %v2378 = vunpack.c.h.b16 %v1350
        %v2379 = vunpack.c.l.b16 %v1351
        %v2380 = vunpack.c.h.b16 %v1351
        %v2381 = vunpack.c.l.b16 %v1352
        %v2382 = vunpack.c.h.b16 %v1352
        %v2383 = vunpack.c.l.b16 %v1353
        %v2384 = vunpack.c.h.b16 %v1353
        %v2385 = vunpack.c.l.b16 %v1354
        %v2386 = vunpack.c.h.b16 %v1354
        %v2387 = vunpack.c.l.b16 %v1355
        %v2388 = vunpack.c.h.b16 %v1355
        %v2389 = vunpack.c.l.b16 %v1356
        %v2390 = vunpack.c.h.b16 %v1356
        %v2391 = vunpack.c.l.b16 %v1357
        %v2392 = vunpack.c.h.b16 %v1357
        %v2393 = vunpack.c.l.b16 %v1358
        %v2394 = vunpack.c.h.b16 %v1358
        %v2395 = vunpack.c.l.b16 %v1359
        %v2396 = vunpack.c.h.b16 %v1359
        %v2397 = vunpack.c.l.b16 %v1360
        %v2398 = vunpack.c.h.b16 %v1360
        %v2399 = vunpack.c.l.b16 %v1361
        %v2400 = vunpack.c.h.b16 %v1361
        %v2401 = vunpack.c.l.b16 %v1362
        %v2402 = vunpack.c.h.b16 %v1362
        %v2403 = vunpack.c.l.b16 %v1363
        %v2404 = vunpack.c.h.b16 %v1363
        %v2405 = vunpack.c.l.b16 %v1364
        %v2406 = vunpack.c.h.b16 %v1364
        %v2407 = vunpack.c.l.b16 %v1365
        %v2408 = vunpack.c.h.b16 %v1365
        %v2409 = vunpack.c.l.b16 %v1366
        %v2410 = vunpack.c.h.b16 %v1366
        %v2411 = vunpack.c.l.b16 %v1367
        %v2412 = vunpack.c.h.b16 %v1367
        %v2413 = vunpack.c.l.b16 %v1368
        %v2414 = vunpack.c.h.b16 %v1368
        %v2415 = vunpack.c.l.b16 %v1369
        %v2416 = vunpack.c.h.b16 %v1369
        %v2417 = vunpack.c.l.b16 %v1370
        %v2418 = vunpack.c.h.b16 %v1370
        %v2419 = vunpack.c.l.b16 %v1371
        %v2420 = vunpack.c.h.b16 %v1371
        %v2421 = vunpack.c.l.b16 %v1372
        %v2422 = vunpack.c.h.b16 %v1372
        %v2423 = vunpack.c.l.b16 %v1373
        %v2424 = vunpack.c.h.b16 %v1373
        %v2425 = vunpack.c.l.b16 %v1374
        %v2426 = vunpack.c.h.b16 %v1374
        %v2427 = vunpack.c.l.b16 %v1375
        %v2428 = vunpack.c.h.b16 %v1375
        %v2429 = vunpack.c.l.b16 %v1376
        %v2430 = vunpack.c.h.b16 %v1376
        %v2431 = vunpack.c.l.b16 %v1377
        %v2432 = vunpack.c.h.b16 %v1377
        %v2433 = vunpack.c.l.b16 %v1378
        %v2434 = vunpack.c.h.b16 %v1378
        %v2435 = vunpack.c.l.b16 %v1379
        %v2436 = vunpack.c.h.b16 %v1379
        %v2437 = vunpack.c.l.b16 %v1380
        %v2438 = vunpack.c.h.b16 %v1380
        %v2439 = vpack.c.b16 %v1931, %v1927
        %v2440 = vpack.c.b16 %v1932, %v1928
        %v2441 = vpack.c.b16 %v1933, %v1929
        %v2442 = vpack.c.b16 %v1934, %v1930
        %v2443 = vpack.c.b16 %v1939, %v1935
        %v2444 = vpack.c.b16 %v1940, %v1936
        %v2445 = vpack.c.b16 %v1941, %v1937
        %v2446 = vpack.c.b16 %v1942, %v1938
        %v2447 = vpack.c.b16 %v1947, %v1943
        %v2448 = vpack.c.b16 %v1948, %v1944
        %v2449 = vpack.c.b16 %v1949, %v1945
        %v2450 = vpack.c.b16 %v1950, %v1946
        %v2451 = vpack.c.b16 %v1955, %v1951
        %v2452 = vpack.c.b16 %v1956, %v1952
        %v2453 = vpack.c.b16 %v1957, %v1953
        %v2454 = vpack.c.b16 %v1958, %v1954
        %v2455 = vpack.c.b16 %v1963, %v1959
        %v2456 = vpack.c.b16 %v1964, %v1960
        %v2457 = vpack.c.b16 %v1965, %v1961
        %v2458 = vpack.c.b16 %v1966, %v1962
        %v2459 = vpack.c.b16 %v1971, %v1967
        %v2460 = vpack.c.b16 %v1972, %v1968
        %v2461 = vpack.c.b16 %v1973, %v1969
        %v2462 = vpack.c.b16 %v1974, %v1970
        %v2463 = vpack.c.b16 %v1979, %v1975
        %v2464 = vpack.c.b16 %v1980, %v1976
        %v2465 = vpack.c.b16 %v1981, %v1977
        %v2466 = vpack.c.b16 %v1982, %v1978
        %v2467 = vpack.c.b16 %v1987, %v1983
        %v2468 = vpack.c.b16 %v1988, %v1984
        %v2469 = vpack.c.b16 %v1989, %v1985
        %v2470 = vpack.c.b16 %v1990, %v1986
        %v2471 = vpack.c.b16 %v1995, %v1991
        %v2472 = vpack.c.b16 %v1996, %v1992
        %v2473 = vpack.c.b16 %v1997, %v1993
        %v2474 = vpack.c.b16 %v1998, %v1994
        %v2475 = vpack.c.b16 %v2003, %v1999
        %v2476 = vpack.c.b16 %v2004, %v2000
        %v2477 = vpack.c.b16 %v2005, %v2001
        %v2478 = vpack.c.b16 %v2006, %v2002
        %v2479 = vpack.c.b16 %v2011, %v2007
        %v2480 = vpack.c.b16 %v2012, %v2008
        %v2481 = vpack.c.b16 %v2013, %v2009
        %v2482 = vpack.c.b16 %v2014, %v2010
        %v2483 = vpack.c.b16 %v2019, %v2015
        %v2484 = vpack.c.b16 %v2020, %v2016
        %v2485 = vpack.c.b16 %v2021, %v2017
        %v2486 = vpack.c.b16 %v2022, %v2018
        %v2487 = vpack.c.b16 %v2027, %v2023
        %v2488 = vpack.c.b16 %v2028, %v2024
        %v2489 = vpack.c.b16 %v2029, %v2025
        %v2490 = vpack.c.b16 %v2030, %v2026
        %v2491 = vpack.c.b16 %v2035, %v2031
        %v2492 = vpack.c.b16 %v2036, %v2032
        %v2493 = vpack.c.b16 %v2037, %v2033
        %v2494 = vpack.c.b16 %v2038, %v2034
        %v2495 = vpack.c.b16 %v2043, %v2039
        %v2496 = vpack.c.b16 %v2044, %v2040
        %v2497 = vpack.c.b16 %v2045, %v2041
        %v2498 = vpack.c.b16 %v2046, %v2042
        %v2499 = vpack.c.b16 %v2051, %v2047
        %v2500 = vpack.c.b16 %v2052, %v2048
        %v2501 = vpack.c.b16 %v2053, %v2049
        %v2502 = vpack.c.b16 %v2054, %v2050
        %v2503 = vpack.c.b16 %v2059, %v2055
        %v2504 = vpack.c.b16 %v2060, %v2056
        %v2505 = vpack.c.b16 %v2061, %v2057
        %v2506 = vpack.c.b16 %v2062, %v2058
        %v2507 = vpack.c.b16 %v2067, %v2063
        %v2508 = vpack.c.b16 %v2068, %v2064
        %v2509 = vpack.c.b16 %v2069, %v2065
        %v2510 = vpack.c.b16 %v2070, %v2066
        %v2511 = vpack.c.b16 %v2075, %v2071
        %v2512 = vpack.c.b16 %v2076, %v2072
        %v2513 = vpack.c.b16 %v2077, %v2073
        %v2514 = vpack.c.b16 %v2078, %v2074
        %v2515 = vpack.c.b16 %v2083, %v2079
        %v2516 = vpack.c.b16 %v2084, %v2080
        %v2517 = vpack.c.b16 %v2085, %v2081
        %v2518 = vpack.c.b16 %v2086, %v2082
        %v2519 = vpack.c.b16 %v2091, %v2087
        %v2520 = vpack.c.b16 %v2092, %v2088
        %v2521 = vpack.c.b16 %v2093, %v2089
        %v2522 = vpack.c.b16 %v2094, %v2090
        %v2523 = vpack.c.b16 %v2099, %v2095
        %v2524 = vpack.c.b16 %v2100, %v2096
        %v2525 = vpack.c.b16 %v2101, %v2097
        %v2526 = vpack.c.b16 %v2102, %v2098
        %v2527 = vpack.c.b16 %v2107, %v2103
        %v2528 = vpack.c.b16 %v2108, %v2104
        %v2529 = vpack.c.b16 %v2109, %v2105
        %v2530 = vpack.c.b16 %v2110, %v2106
        %v2531 = vpack.c.b16 %v2115, %v2111
        %v2532 = vpack.c.b16 %v2116, %v2112
        %v2533 = vpack.c.b16 %v2117, %v2113
        %v2534 = vpack.c.b16 %v2118, %v2114
        %v2535 = vpack.c.b16 %v2123, %v2119
        %v2536 = vpack.c.b16 %v2124, %v2120
        %v2537 = vpack.c.b16 %v2125, %v2121
        %v2538 = vpack.c.b16 %v2126, %v2122
        %v2539 = vpack.c.b16 %v2131, %v2127
        %v2540 = vpack.c.b16 %v2132, %v2128
        %v2541 = vpack.c.b16 %v2133, %v2129
        %v2542 = vpack.c.b16 %v2134, %v2130
        %v2543 = vpack.c.b16 %v2139, %v2135
        %v2544 = vpack.c.b16 %v2140, %v2136
        %v2545 = vpack.c.b16 %v2141, %v2137
        %v2546 = vpack.c.b16 %v2142, %v2138
        %v2547 = vpack.c.b16 %v2147, %v2143
        %v2548 = vpack.c.b16 %v2148, %v2144
        %v2549 = vpack.c.b16 %v2149, %v2145
        %v2550 = vpack.c.b16 %v2150, %v2146
        %v2551 = vpack.c.b16 %v2155, %v2151
        %v2552 = vpack.c.b16 %v2156, %v2152
        %v2553 = vpack.c.b16 %v2157, %v2153
        %v2554 = vpack.c.b16 %v2158, %v2154
        %v2555 = vpack.c.b16 %v2163, %v2159
        %v2556 = vpack.c.b16 %v2164, %v2160
        %v2557 = vpack.c.b16 %v2165, %v2161
        %v2558 = vpack.c.b16 %v2166, %v2162
        %v2559 = vpack.c.b16 %v2171, %v2167
        %v2560 = vpack.c.b16 %v2172, %v2168
        %v2561 = vpack.c.b16 %v2173, %v2169
        %v2562 = vpack.c.b16 %v2174, %v2170
        %v2563 = vpack.c.b16 %v2179, %v2175
        %v2564 = vpack.c.b16 %v2180, %v2176
        %v2565 = vpack.c.b16 %v2181, %v2177
        %v2566 = vpack.c.b16 %v2182, %v2178
        %v2567 = vpack.c.b16 %v2187, %v2183
        %v2568 = vpack.c.b16 %v2188, %v2184
        %v2569 = vpack.c.b16 %v2189, %v2185
        %v2570 = vpack.c.b16 %v2190, %v2186
        %v2571 = vpack.c.b16 %v2195, %v2191
        %v2572 = vpack.c.b16 %v2196, %v2192
        %v2573 = vpack.c.b16 %v2197, %v2193
        %v2574 = vpack.c.b16 %v2198, %v2194
        %v2575 = vpack.c.b16 %v2203, %v2199
        %v2576 = vpack.c.b16 %v2204, %v2200
        %v2577 = vpack.c.b16 %v2205, %v2201
        %v2578 = vpack.c.b16 %v2206, %v2202
        %v2579 = vpack.c.b16 %v2211, %v2207
        %v2580 = vpack.c.b16 %v2212, %v2208
        %v2581 = vpack.c.b16 %v2213, %v2209
        %v2582 = vpack.c.b16 %v2214, %v2210
        %v2583 = vpack.c.b16 %v2219, %v2215
        %v2584 = vpack.c.b16 %v2220, %v2216
        %v2585 = vpack.c.b16 %v2221, %v2217
        %v2586 = vpack.c.b16 %v2222, %v2218
        %v2587 = vpack.c.b16 %v2227, %v2223
        %v2588 = vpack.c.b16 %v2228, %v2224
        %v2589 = vpack.c.b16 %v2229, %v2225
        %v2590 = vpack.c.b16 %v2230, %v2226
        %v2591 = vpack.c.b16 %v2235, %v2231
        %v2592 = vpack.c.b16 %v2236, %v2232
        %v2593 = vpack.c.b16 %v2237, %v2233
        %v2594 = vpack.c.b16 %v2238, %v2234
        %v2595 = vpack.c.b16 %v2243, %v2239
        %v2596 = vpack.c.b16 %v2244, %v2240
        %v2597 = vpack.c.b16 %v2245, %v2241
        %v2598 = vpack.c.b16 %v2246, %v2242
        %v2599 = vpack.c.b16 %v2251, %v2247
        %v2600 = vpack.c.b16 %v2252, %v2248
        %v2601 = vpack.c.b16 %v2253, %v2249
        %v2602 = vpack.c.b16 %v2254, %v2250
        %v2603 = vpack.c.b16 %v2259, %v2255
        %v2604 = vpack.c.b16 %v2260, %v2256
        %v2605 = vpack.c.b16 %v2261, %v2257
        %v2606 = vpack.c.b16 %v2262, %v2258
        %v2607 = vpack.c.b16 %v2267, %v2263
        %v2608 = vpack.c.b16 %v2268, %v2264
        %v2609 = vpack.c.b16 %v2269, %v2265
        %v2610 = vpack.c.b16 %v2270, %v2266
        %v2611 = vpack.c.b16 %v2275, %v2271
        %v2612 = vpack.c.b16 %v2276, %v2272
        %v2613 = vpack.c.b16 %v2277, %v2273
        %v2614 = vpack.c.b16 %v2278, %v2274
        %v2615 = vpack.c.b16 %v2283, %v2279
        %v2616 = vpack.c.b16 %v2284, %v2280
        %v2617 = vpack.c.b16 %v2285, %v2281
        %v2618 = vpack.c.b16 %v2286, %v2282
        %v2619 = vpack.c.b16 %v2291, %v2287
        %v2620 = vpack.c.b16 %v2292, %v2288
        %v2621 = vpack.c.b16 %v2293, %v2289
        %v2622 = vpack.c.b16 %v2294, %v2290
        %v2623 = vpack.c.b16 %v2299, %v2295
        %v2624 = vpack.c.b16 %v2300, %v2296
        %v2625 = vpack.c.b16 %v2301, %v2297
        %v2626 = vpack.c.b16 %v2302, %v2298
        %v2627 = vpack.c.b16 %v2307, %v2303
        %v2628 = vpack.c.b16 %v2308, %v2304
        %v2629 = vpack.c.b16 %v2309, %v2305
        %v2630 = vpack.c.b16 %v2310, %v2306
        %v2631 = vpack.c.b16 %v2315, %v2311
        %v2632 = vpack.c.b16 %v2316, %v2312
        %v2633 = vpack.c.b16 %v2317, %v2313
        %v2634 = vpack.c.b16 %v2318, %v2314
        %v2635 = vpack.c.b16 %v2323, %v2319
        %v2636 = vpack.c.b16 %v2324, %v2320
        %v2637 = vpack.c.b16 %v2325, %v2321
        %v2638 = vpack.c.b16 %v2326, %v2322
        %v2639 = vpack.c.b16 %v2331, %v2327
        %v2640 = vpack.c.b16 %v2332, %v2328
        %v2641 = vpack.c.b16 %v2333, %v2329
        %v2642 = vpack.c.b16 %v2334, %v2330
        %v2643 = vpack.c.b16 %v2339, %v2335
        %v2644 = vpack.c.b16 %v2340, %v2336
        %v2645 = vpack.c.b16 %v2341, %v2337
        %v2646 = vpack.c.b16 %v2342, %v2338
        %v2647 = vpack.c.b16 %v2347, %v2343
        %v2648 = vpack.c.b16 %v2348, %v2344
        %v2649 = vpack.c.b16 %v2349, %v2345
        %v2650 = vpack.c.b16 %v2350, %v2346
        %v2651 = vpack.c.b16 %v2355, %v2351
        %v2652 = vpack.c.b16 %v2356, %v2352
        %v2653 = vpack.c.b16 %v2357, %v2353
        %v2654 = vpack.c.b16 %v2358, %v2354
        %v2655 = vpack.c.b16 %v2363, %v2359
        %v2656 = vpack.c.b16 %v2364, %v2360
        %v2657 = vpack.c.b16 %v2365, %v2361
        %v2658 = vpack.c.b16 %v2366, %v2362
        %v2659 = vpack.c.b16 %v2371, %v2367
        %v2660 = vpack.c.b16 %v2372, %v2368
        %v2661 = vpack.c.b16 %v2373, %v2369
        %v2662 = vpack.c.b16 %v2374, %v2370
        %v2663 = vpack.c.b16 %v2379, %v2375
        %v2664 = vpack.c.b16 %v2380, %v2376
        %v2665 = vpack.c.b16 %v2381, %v2377
        %v2666 = vpack.c.b16 %v2382, %v2378
        %v2667 = vpack.c.b16 %v2387, %v2383
        %v2668 = vpack.c.b16 %v2388, %v2384
        %v2669 = vpack.c.b16 %v2389, %v2385
        %v2670 = vpack.c.b16 %v2390, %v2386
        %v2671 = vpack.c.b16 %v2395, %v2391
        %v2672 = vpack.c.b16 %v2396, %v2392
        %v2673 = vpack.c.b16 %v2397, %v2393
        %v2674 = vpack.c.b16 %v2398, %v2394
        %v2675 = vpack.c.b16 %v2403, %v2399
        %v2676 = vpack.c.b16 %v2404, %v2400
        %v2677 = vpack.c.b16 %v2405, %v2401
        %v2678 = vpack.c.b16 %v2406, %v2402
        %v2679 = vpack.c.b16 %v2411, %v2407
        %v2680 = vpack.c.b16 %v2412, %v2408
        %v2681 = vpack.c.b16 %v2413, %v2409
        %v2682 = vpack.c.b16 %v2414, %v2410
        %v2683 = vpack.c.b16 %v2419, %v2415
        %v2684 = vpack.c.b16 %v2420, %v2416
        %v2685 = vpack.c.b16 %v2421, %v2417
        %v2686 = vpack.c.b16 %v2422, %v2418
        %v2687 = vpack.c.b16 %v2427, %v2423
        %v2688 = vpack.c.b16 %v2428, %v2424
        %v2689 = vpack.c.b16 %v2429, %v2425
        %v2690 = vpack.c.b16 %v2430, %v2426
        %v2691 = vpack.c.b16 %v2435, %v2431
        %v2692 = vpack.c.b16 %v2436, %v2432
        %v2693 = vpack.c.b16 %v2437, %v2433
        %v2694 = vpack.c.b16 %v2438, %v2434
        %2951 = vmatprep.subr.bf16.mxu0 %v2468
        %2952 = vmatpush1.bf16.msra.mxu0 %v2467
        %2953 = vmatprep.subr.bf16.mxu0 %v2464
        %2954 = vmatpush1.bf16.msra.mxu0 %v2463
        %2955 = vmatprep.subr.bf16.mxu0 %v2460
        %2956 = vmatpush1.bf16.msra.mxu0 %v2459
        %2957 = vmatprep.subr.bf16.mxu0 %v2456
        %2958 = vmatpush1.bf16.msra.mxu0 %v2455
        %2959 = vmatprep.subr.bf16.mxu0 %v2452
        %2960 = vmatpush1.bf16.msra.mxu0 %v2451
        %2961 = vmatprep.subr.bf16.mxu0 %v2448
        %2962 = vmatpush1.bf16.msra.mxu0 %v2447
        %2963 = vmatprep.subr.bf16.mxu0 %v2444
        %2964 = vmatpush1.bf16.msra.mxu0 %v2443
        %2965 = vmatprep.subr.bf16.mxu0 %v2440
        %2966 = vmatpush1.bf16.msra.mxu0 %v2439
        %2967 = vmatprep.subr.bf16.mxu0 %v2500
        %2968 = vmatpush2.bf16.msra.mxu0 %v2499
        %2969 = vmatprep.subr.bf16.mxu0 %v2496
        %2970 = vmatpush2.bf16.msra.mxu0 %v2495
        %2971 = vmatprep.subr.bf16.mxu0 %v2492
        %2972 = vmatpush2.bf16.msra.mxu0 %v2491
        %2973 = vmatprep.subr.bf16.mxu0 %v2488
        %2974 = vmatpush2.bf16.msra.mxu0 %v2487
        %2975 = vmatprep.subr.bf16.mxu0 %v2484
        %2976 = vmatpush2.bf16.msra.mxu0 %v2483
        %2977 = vmatprep.subr.bf16.mxu0 %v2480
        %2978 = vmatpush2.bf16.msra.mxu0 %v2479
        %2979 = vmatprep.subr.bf16.mxu0 %v2476
        %2980 = vmatpush2.bf16.msra.mxu0 %v2475
        %2981 = vmatprep.subr.bf16.mxu0 %v2472
        %2982 = vmatpush2.bf16.msra.mxu0 %v2471
        %2983 = vmatprep.mubr.bf16.mxu0 %v1560
        %2984 = vmatmul.mubr.bf16.gmra.mxu0 %v1559
        %v2985 = vpop.f32.mrf.mxu0
        %v2986 = vadd.f32 %v1386, %v2985
        %v2987 = vpop.f32.mrf.mxu0
        %v2988 = vadd.f32 %v1390, %v2987
        %v2989 = vpop.f32.mrf.mxu0
        %v2990 = vadd.f32 %v1386, %v2989
        %v2991 = vpop.f32.mrf.mxu0
        %v2992 = vadd.f32 %v1390, %v2991
        %2993 = vmatprep.mubr.bf16.mxu0 %v1568
        %2994 = vmatmul.mubr.bf16.gmra.mxu0 %v1567
        %v2995 = vpop.f32.mrf.mxu0
        %v2996 = vadd.f32 %v1386, %v2995
        %v2997 = vpop.f32.mrf.mxu0
        %v2998 = vadd.f32 %v1390, %v2997
        %v2999 = vpop.f32.mrf.mxu0
        %v3000 = vadd.f32 %v1386, %v2999
        %v3001 = vpop.f32.mrf.mxu0
        %v3002 = vadd.f32 %v1390, %v3001
        %3003 = vmatprep.mubr.bf16.mxu0 %v1576
        %3004 = vmatmul.mubr.bf16.gmra.mxu0 %v1575
        %v3005 = vpop.f32.mrf.mxu0
        %v3006 = vadd.f32 %v1386, %v3005
        %v3007 = vpop.f32.mrf.mxu0
        %v3008 = vadd.f32 %v1390, %v3007
        %v3009 = vpop.f32.mrf.mxu0
        %v3010 = vadd.f32 %v1386, %v3009
        %v3011 = vpop.f32.mrf.mxu0
        %v3012 = vadd.f32 %v1390, %v3011
        %3013 = vmatprep.mubr.bf16.mxu0 %v1584
        %3014 = vmatmul.mubr.bf16.gmra.mxu0 %v1583
        %v3015 = vpop.f32.mrf.mxu0
        %v3016 = vadd.f32 %v1386, %v3015
        %v3017 = vpop.f32.mrf.mxu0
        %v3018 = vadd.f32 %v1390, %v3017
        %v3019 = vpop.f32.mrf.mxu0
        %v3020 = vadd.f32 %v1386, %v3019
        %v3021 = vpop.f32.mrf.mxu0
        %v3022 = vadd.f32 %v1390, %v3021
        %3023 = vmatprep.mubr.bf16.mxu0 %v1592
        %3024 = vmatmul.mubr.bf16.gmra.mxu0 %v1591
        %v3025 = vpop.f32.mrf.mxu0
        %v3026 = vadd.f32 %v1386, %v3025
        %v3027 = vpop.f32.mrf.mxu0
        %v3028 = vadd.f32 %v1390, %v3027
        %v3029 = vpop.f32.mrf.mxu0
        %v3030 = vadd.f32 %v1386, %v3029
        %v3031 = vpop.f32.mrf.mxu0
        %v3032 = vadd.f32 %v1390, %v3031
        %3033 = vmatprep.mubr.bf16.mxu0 %v1600
        %3034 = vmatmul.mubr.bf16.gmra.mxu0 %v1599
        %v3035 = vpop.f32.mrf.mxu0
        %v3036 = vadd.f32 %v1386, %v3035
        %v3037 = vpop.f32.mrf.mxu0
        %v3038 = vadd.f32 %v1390, %v3037
        %v3039 = vpop.f32.mrf.mxu0
        %v3040 = vadd.f32 %v1386, %v3039
        %v3041 = vpop.f32.mrf.mxu0
        %v3042 = vadd.f32 %v1390, %v3041
        %3043 = vmatprep.mubr.bf16.mxu0 %v1608
        %3044 = vmatmul.mubr.bf16.gmra.mxu0 %v1607
        %v3045 = vpop.f32.mrf.mxu0
        %v3046 = vadd.f32 %v1386, %v3045
        %v3047 = vpop.f32.mrf.mxu0
        %v3048 = vadd.f32 %v1390, %v3047
        %v3049 = vpop.f32.mrf.mxu0
        %v3050 = vpop.f32.mrf.mxu0
        %3051 = vdwg.mxu0
        %3052 = vmatprep.subr.bf16.mxu0 %v2532
        %3053 = vmatpush1.bf16.msra.mxu0 %v2531
        %3054 = vmatprep.subr.bf16.mxu0 %v2528
        %3055 = vmatpush1.bf16.msra.mxu0 %v2527
        %3056 = vmatprep.subr.bf16.mxu0 %v2524
        %3057 = vmatpush1.bf16.msra.mxu0 %v2523
        %3058 = vmatprep.subr.bf16.mxu0 %v2520
        %3059 = vmatpush1.bf16.msra.mxu0 %v2519
        %3060 = vmatprep.subr.bf16.mxu0 %v2516
        %3061 = vmatpush1.bf16.msra.mxu0 %v2515
        %3062 = vmatprep.subr.bf16.mxu0 %v2512
        %3063 = vmatpush1.bf16.msra.mxu0 %v2511
        %3064 = vmatprep.subr.bf16.mxu0 %v2508
        %3065 = vmatpush1.bf16.msra.mxu0 %v2507
        %3066 = vmatprep.subr.bf16.mxu0 %v2504
        %3067 = vmatpush1.bf16.msra.mxu0 %v2503
        %3068 = vmatprep.subr.bf16.mxu0 %v2564
        %3069 = vmatpush2.bf16.msra.mxu0 %v2563
        %3070 = vmatprep.subr.bf16.mxu0 %v2560
        %3071 = vmatpush2.bf16.msra.mxu0 %v2559
        %3072 = vmatprep.subr.bf16.mxu0 %v2556
        %3073 = vmatpush2.bf16.msra.mxu0 %v2555
        %3074 = vmatprep.subr.bf16.mxu0 %v2552
        %3075 = vmatpush2.bf16.msra.mxu0 %v2551
        %3076 = vmatprep.subr.bf16.mxu0 %v2548
        %3077 = vmatpush2.bf16.msra.mxu0 %v2547
        %3078 = vmatprep.subr.bf16.mxu0 %v2544
        %3079 = vmatpush2.bf16.msra.mxu0 %v2543
        %3080 = vmatprep.subr.bf16.mxu0 %v2540
        %3081 = vmatpush2.bf16.msra.mxu0 %v2539
        %3082 = vmatprep.subr.bf16.mxu0 %v2536
        %3083 = vmatpush2.bf16.msra.mxu0 %v2535
        %3084 = vmatprep.mubr.bf16.mxu0 %v1562
        %3085 = vmatmul.mubr.bf16.gmra.mxu0 %v1561
        %v3086 = vpop.f32.mrf.mxu0
        %v3087 = vadd.f32 %v2986, %v3086
        %v3088 = vpop.f32.mrf.mxu0
        %v3089 = vadd.f32 %v2988, %v3088
        %v3090 = vpop.f32.mrf.mxu0
        %v3091 = vadd.f32 %v2990, %v3090
        %v3092 = vpop.f32.mrf.mxu0
        %v3093 = vadd.f32 %v2992, %v3092
        %3094 = vmatprep.mubr.bf16.mxu0 %v1570
        %3095 = vmatmul.mubr.bf16.gmra.mxu0 %v1569
        %v3096 = vpop.f32.mrf.mxu0
        %v3097 = vadd.f32 %v2996, %v3096
        %v3098 = vpop.f32.mrf.mxu0
        %v3099 = vadd.f32 %v2998, %v3098
        %v3100 = vpop.f32.mrf.mxu0
        %v3101 = vadd.f32 %v3000, %v3100
        %v3102 = vpop.f32.mrf.mxu0
        %v3103 = vadd.f32 %v3002, %v3102
        %3104 = vmatprep.mubr.bf16.mxu0 %v1578
        %3105 = vmatmul.mubr.bf16.gmra.mxu0 %v1577
        %v3106 = vpop.f32.mrf.mxu0
        %v3107 = vadd.f32 %v3006, %v3106
        %v3108 = vpop.f32.mrf.mxu0
        %v3109 = vadd.f32 %v3008, %v3108
        %v3110 = vpop.f32.mrf.mxu0
        %v3111 = vadd.f32 %v3010, %v3110
        %v3112 = vpop.f32.mrf.mxu0
        %v3113 = vadd.f32 %v3012, %v3112
        %3114 = vmatprep.mubr.bf16.mxu0 %v1586
        %3115 = vmatmul.mubr.bf16.gmra.mxu0 %v1585
        %v3116 = vpop.f32.mrf.mxu0
        %v3117 = vadd.f32 %v3016, %v3116
        %v3118 = vpop.f32.mrf.mxu0
        %v3119 = vadd.f32 %v3018, %v3118
        %v3120 = vpop.f32.mrf.mxu0
        %v3121 = vadd.f32 %v3020, %v3120
        %v3122 = vpop.f32.mrf.mxu0
        %v3123 = vadd.f32 %v3022, %v3122
        %3124 = vmatprep.mubr.bf16.mxu0 %v1594
        %3125 = vmatmul.mubr.bf16.gmra.mxu0 %v1593
        %v3126 = vpop.f32.mrf.mxu0
        %v3127 = vadd.f32 %v3026, %v3126
        %v3128 = vpop.f32.mrf.mxu0
        %v3129 = vadd.f32 %v3028, %v3128
        %v3130 = vpop.f32.mrf.mxu0
        %v3131 = vadd.f32 %v3030, %v3130
        %v3132 = vpop.f32.mrf.mxu0
        %v3133 = vadd.f32 %v3032, %v3132
        %3134 = vmatprep.mubr.bf16.mxu0 %v1602
        %3135 = vmatmul.mubr.bf16.gmra.mxu0 %v1601
        %v3136 = vpop.f32.mrf.mxu0
        %v3137 = vadd.f32 %v3036, %v3136
        %v3138 = vpop.f32.mrf.mxu0
        %v3139 = vadd.f32 %v3038, %v3138
        %v3140 = vpop.f32.mrf.mxu0
        %v3141 = vadd.f32 %v3040, %v3140
        %v3142 = vpop.f32.mrf.mxu0
        %v3143 = vadd.f32 %v3042, %v3142
        %3144 = vmatprep.mubr.bf16.mxu0 %v1610
        %3145 = vmatmul.mubr.bf16.gmra.mxu0 %v1609
        %v3146 = vpop.f32.mrf.mxu0
        %v3147 = vadd.f32 %v3046, %v3146
        %v3148 = vpop.f32.mrf.mxu0
        %v3149 = vadd.f32 %v3048, %v3148
        %v3150 = vpop.f32.mrf.mxu0
        %v3151 = vpop.f32.mrf.mxu0
        %3152 = vdwg.mxu0
        %3153 = vmatprep.subr.bf16.mxu0 %v2596
        %3154 = vmatpush1.bf16.msra.mxu0 %v2595
        %3155 = vmatprep.subr.bf16.mxu0 %v2592
        %3156 = vmatpush1.bf16.msra.mxu0 %v2591
        %3157 = vmatprep.subr.bf16.mxu0 %v2588
        %3158 = vmatpush1.bf16.msra.mxu0 %v2587
        %3159 = vmatprep.subr.bf16.mxu0 %v2584
        %3160 = vmatpush1.bf16.msra.mxu0 %v2583
        %3161 = vmatprep.subr.bf16.mxu0 %v2580
        %3162 = vmatpush1.bf16.msra.mxu0 %v2579
        %3163 = vmatprep.subr.bf16.mxu0 %v2576
        %3164 = vmatpush1.bf16.msra.mxu0 %v2575
        %3165 = vmatprep.subr.bf16.mxu0 %v2572
        %3166 = vmatpush1.bf16.msra.mxu0 %v2571
        %3167 = vmatprep.subr.bf16.mxu0 %v2568
        %3168 = vmatpush1.bf16.msra.mxu0 %v2567
        %3169 = vmatprep.subr.bf16.mxu0 %v2628
        %3170 = vmatpush2.bf16.msra.mxu0 %v2627
        %3171 = vmatprep.subr.bf16.mxu0 %v2624
        %3172 = vmatpush2.bf16.msra.mxu0 %v2623
        %3173 = vmatprep.subr.bf16.mxu0 %v2620
        %3174 = vmatpush2.bf16.msra.mxu0 %v2619
        %3175 = vmatprep.subr.bf16.mxu0 %v2616
        %3176 = vmatpush2.bf16.msra.mxu0 %v2615
        %3177 = vmatprep.subr.bf16.mxu0 %v2612
        %3178 = vmatpush2.bf16.msra.mxu0 %v2611
        %3179 = vmatprep.subr.bf16.mxu0 %v2608
        %3180 = vmatpush2.bf16.msra.mxu0 %v2607
        %3181 = vmatprep.subr.bf16.mxu0 %v2604
        %3182 = vmatpush2.bf16.msra.mxu0 %v2603
        %3183 = vmatprep.subr.bf16.mxu0 %v2600
        %3184 = vmatpush2.bf16.msra.mxu0 %v2599
        %3185 = vmatprep.mubr.bf16.mxu0 %v1564
        %3186 = vmatmul.mubr.bf16.gmra.mxu0 %v1563
        %v3187 = vpop.f32.mrf.mxu0
        %v3188 = vadd.f32 %v3087, %v3187
        %v3189 = vpop.f32.mrf.mxu0
        %v3190 = vadd.f32 %v3089, %v3189
        %v3191 = vpop.f32.mrf.mxu0
        %v3192 = vadd.f32 %v3091, %v3191
        %v3193 = vpop.f32.mrf.mxu0
        %v3194 = vadd.f32 %v3093, %v3193
        %3195 = vmatprep.mubr.bf16.mxu0 %v1572
        %3196 = vmatmul.mubr.bf16.gmra.mxu0 %v1571
        %v3197 = vpop.f32.mrf.mxu0
        %v3198 = vadd.f32 %v3097, %v3197
        %v3199 = vpop.f32.mrf.mxu0
        %v3200 = vadd.f32 %v3099, %v3199
        %v3201 = vpop.f32.mrf.mxu0
        %v3202 = vadd.f32 %v3101, %v3201
        %v3203 = vpop.f32.mrf.mxu0
        %v3204 = vadd.f32 %v3103, %v3203
        %3205 = vmatprep.mubr.bf16.mxu0 %v1580
        %3206 = vmatmul.mubr.bf16.gmra.mxu0 %v1579
        %v3207 = vpop.f32.mrf.mxu0
        %v3208 = vadd.f32 %v3107, %v3207
        %v3209 = vpop.f32.mrf.mxu0
        %v3210 = vadd.f32 %v3109, %v3209
        %v3211 = vpop.f32.mrf.mxu0
        %v3212 = vadd.f32 %v3111, %v3211
        %v3213 = vpop.f32.mrf.mxu0
        %v3214 = vadd.f32 %v3113, %v3213
        %3215 = vmatprep.mubr.bf16.mxu0 %v1588
        %3216 = vmatmul.mubr.bf16.gmra.mxu0 %v1587
        %v3217 = vpop.f32.mrf.mxu0
        %v3218 = vadd.f32 %v3117, %v3217
        %v3219 = vpop.f32.mrf.mxu0
        %v3220 = vadd.f32 %v3119, %v3219
        %v3221 = vpop.f32.mrf.mxu0
        %v3222 = vadd.f32 %v3121, %v3221
        %v3223 = vpop.f32.mrf.mxu0
        %v3224 = vadd.f32 %v3123, %v3223
        %3225 = vmatprep.mubr.bf16.mxu0 %v1596
        %3226 = vmatmul.mubr.bf16.gmra.mxu0 %v1595
        %v3227 = vpop.f32.mrf.mxu0
        %v3228 = vadd.f32 %v3127, %v3227
        %v3229 = vpop.f32.mrf.mxu0
        %v3230 = vadd.f32 %v3129, %v3229
        %v3231 = vpop.f32.mrf.mxu0
        %v3232 = vadd.f32 %v3131, %v3231
        %v3233 = vpop.f32.mrf.mxu0
        %v3234 = vadd.f32 %v3133, %v3233
        %3235 = vmatprep.mubr.bf16.mxu0 %v1604
        %3236 = vmatmul.mubr.bf16.gmra.mxu0 %v1603
        %v3237 = vpop.f32.mrf.mxu0
        %v3238 = vadd.f32 %v3137, %v3237
        %v3239 = vpop.f32.mrf.mxu0
        %v3240 = vadd.f32 %v3139, %v3239
        %v3241 = vpop.f32.mrf.mxu0
        %v3242 = vadd.f32 %v3141, %v3241
        %v3243 = vpop.f32.mrf.mxu0
        %v3244 = vadd.f32 %v3143, %v3243
        %3245 = vmatprep.mubr.bf16.mxu0 %v1612
        %3246 = vmatmul.mubr.bf16.gmra.mxu0 %v1611
        %v3247 = vpop.f32.mrf.mxu0
        %v3248 = vadd.f32 %v3147, %v3247
        %v3249 = vpop.f32.mrf.mxu0
        %v3250 = vadd.f32 %v3149, %v3249
        %v3251 = vpop.f32.mrf.mxu0
        %v3252 = vpop.f32.mrf.mxu0
        %3253 = vdwg.mxu0
        %3254 = vmatprep.subr.bf16.mxu0 %v2660
        %3255 = vmatpush1.bf16.msra.mxu0 %v2659
        %3256 = vmatprep.subr.bf16.mxu0 %v2656
        %3257 = vmatpush1.bf16.msra.mxu0 %v2655
        %3258 = vmatprep.subr.bf16.mxu0 %v2652
        %3259 = vmatpush1.bf16.msra.mxu0 %v2651
        %3260 = vmatprep.subr.bf16.mxu0 %v2648
        %3261 = vmatpush1.bf16.msra.mxu0 %v2647
        %3262 = vmatprep.subr.bf16.mxu0 %v2644
        %3263 = vmatpush1.bf16.msra.mxu0 %v2643
        %3264 = vmatprep.subr.bf16.mxu0 %v2640
        %3265 = vmatpush1.bf16.msra.mxu0 %v2639
        %3266 = vmatprep.subr.bf16.mxu0 %v2636
        %3267 = vmatpush1.bf16.msra.mxu0 %v2635
        %3268 = vmatprep.subr.bf16.mxu0 %v2632
        %3269 = vmatpush1.bf16.msra.mxu0 %v2631
        %3270 = vmatprep.subr.bf16.mxu0 %v2692
        %3271 = vmatpush2.bf16.msra.mxu0 %v2691
        %3272 = vmatprep.subr.bf16.mxu0 %v2688
        %3273 = vmatpush2.bf16.msra.mxu0 %v2687
        %3274 = vmatprep.subr.bf16.mxu0 %v2684
        %3275 = vmatpush2.bf16.msra.mxu0 %v2683
        %3276 = vmatprep.subr.bf16.mxu0 %v2680
        %3277 = vmatpush2.bf16.msra.mxu0 %v2679
        %3278 = vmatprep.subr.bf16.mxu0 %v2676
        %3279 = vmatpush2.bf16.msra.mxu0 %v2675
        %3280 = vmatprep.subr.bf16.mxu0 %v2672
        %3281 = vmatpush2.bf16.msra.mxu0 %v2671
        %3282 = vmatprep.subr.bf16.mxu0 %v2668
        %3283 = vmatpush2.bf16.msra.mxu0 %v2667
        %3284 = vmatprep.subr.bf16.mxu0 %v2664
        %3285 = vmatpush2.bf16.msra.mxu0 %v2663
        %3286 = vmatprep.mubr.bf16.mxu0 %v1566
        %3287 = vmatmul.mubr.bf16.gmra.mxu0 %v1565
        %v3288 = vpop.f32.mrf.mxu0
        %v3289 = vadd.f32 %v3188, %v3288
        %v3290 = vpop.f32.mrf.mxu0
        %v3291 = vadd.f32 %v3190, %v3290
        %v3292 = vpop.f32.mrf.mxu0
        %v3293 = vadd.f32 %v3192, %v3292
        %v3294 = vpop.f32.mrf.mxu0
        %v3295 = vadd.f32 %v3194, %v3294
        %3296 = vmatprep.mubr.bf16.mxu0 %v1574
        %3297 = vmatmul.mubr.bf16.gmra.mxu0 %v1573
        %v3298 = vpop.f32.mrf.mxu0
        %v3299 = vadd.f32 %v3198, %v3298
        %v3300 = vpop.f32.mrf.mxu0
        %v3301 = vadd.f32 %v3200, %v3300
        %v3302 = vpop.f32.mrf.mxu0
        %v3303 = vadd.f32 %v3202, %v3302
        %v3304 = vpop.f32.mrf.mxu0
        %v3305 = vadd.f32 %v3204, %v3304
        %3306 = vmatprep.mubr.bf16.mxu0 %v1582
        %3307 = vmatmul.mubr.bf16.gmra.mxu0 %v1581
        %v3308 = vpop.f32.mrf.mxu0
        %v3309 = vadd.f32 %v3208, %v3308
        %v3310 = vpop.f32.mrf.mxu0
        %v3311 = vadd.f32 %v3210, %v3310
        %v3312 = vpop.f32.mrf.mxu0
        %v3313 = vadd.f32 %v3212, %v3312
        %v3314 = vpop.f32.mrf.mxu0
        %v3315 = vadd.f32 %v3214, %v3314
        %3316 = vmatprep.mubr.bf16.mxu0 %v1590
        %3317 = vmatmul.mubr.bf16.gmra.mxu0 %v1589
        %v3318 = vpop.f32.mrf.mxu0
        %v3319 = vadd.f32 %v3218, %v3318
        %v3320 = vpop.f32.mrf.mxu0
        %v3321 = vadd.f32 %v3220, %v3320
        %v3322 = vpop.f32.mrf.mxu0
        %v3323 = vadd.f32 %v3222, %v3322
        %v3324 = vpop.f32.mrf.mxu0
        %v3325 = vadd.f32 %v3224, %v3324
        %3326 = vmatprep.mubr.bf16.mxu0 %v1598
        %3327 = vmatmul.mubr.bf16.gmra.mxu0 %v1597
        %v3328 = vpop.f32.mrf.mxu0
        %v3329 = vadd.f32 %v3228, %v3328
        %v3330 = vpop.f32.mrf.mxu0
        %v3331 = vadd.f32 %v3230, %v3330
        %v3332 = vpop.f32.mrf.mxu0
        %v3333 = vadd.f32 %v3232, %v3332
        %v3334 = vpop.f32.mrf.mxu0
        %v3335 = vadd.f32 %v3234, %v3334
        %3336 = vmatprep.mubr.bf16.mxu0 %v1606
        %3337 = vmatmul.mubr.bf16.gmra.mxu0 %v1605
        %v3338 = vpop.f32.mrf.mxu0
        %v3339 = vadd.f32 %v3238, %v3338
        %v3340 = vpop.f32.mrf.mxu0
        %v3341 = vadd.f32 %v3240, %v3340
        %v3342 = vpop.f32.mrf.mxu0
        %v3343 = vadd.f32 %v3242, %v3342
        %v3344 = vpop.f32.mrf.mxu0
        %v3345 = vadd.f32 %v3244, %v3344
        %3346 = vmatprep.mubr.bf16.mxu0 %v1614
        %3347 = vmatmul.mubr.bf16.gmra.mxu0 %v1613
        %v3348 = vpop.f32.mrf.mxu0
        %v3349 = vadd.f32 %v3248, %v3348
        %v3350 = vpop.f32.mrf.mxu0
        %v3351 = vadd.f32 %v3250, %v3350
        %v3352 = vpop.f32.mrf.mxu0
        %v3353 = vpop.f32.mrf.mxu0
        %3354 = vdwg.mxu0
        %3355 = vmatprep.subr.bf16.mxu0 %v2470
        %3356 = vmatpush1.bf16.msra.mxu0 %v2469
        %3357 = vmatprep.subr.bf16.mxu0 %v2466
        %3358 = vmatpush1.bf16.msra.mxu0 %v2465
        %3359 = vmatprep.subr.bf16.mxu0 %v2462
        %3360 = vmatpush1.bf16.msra.mxu0 %v2461
        %3361 = vmatprep.subr.bf16.mxu0 %v2458
        %3362 = vmatpush1.bf16.msra.mxu0 %v2457
        %3363 = vmatprep.subr.bf16.mxu0 %v2454
        %3364 = vmatpush1.bf16.msra.mxu0 %v2453
        %3365 = vmatprep.subr.bf16.mxu0 %v2450
        %3366 = vmatpush1.bf16.msra.mxu0 %v2449
        %3367 = vmatprep.subr.bf16.mxu0 %v2446
        %3368 = vmatpush1.bf16.msra.mxu0 %v2445
        %3369 = vmatprep.subr.bf16.mxu0 %v2442
        %3370 = vmatpush1.bf16.msra.mxu0 %v2441
        %3371 = vmatprep.subr.bf16.mxu0 %v2502
        %3372 = vmatpush2.bf16.msra.mxu0 %v2501
        %3373 = vmatprep.subr.bf16.mxu0 %v2498
        %3374 = vmatpush2.bf16.msra.mxu0 %v2497
        %3375 = vmatprep.subr.bf16.mxu0 %v2494
        %3376 = vmatpush2.bf16.msra.mxu0 %v2493
        %3377 = vmatprep.subr.bf16.mxu0 %v2490
        %3378 = vmatpush2.bf16.msra.mxu0 %v2489
        %3379 = vmatprep.subr.bf16.mxu0 %v2486
        %3380 = vmatpush2.bf16.msra.mxu0 %v2485
        %3381 = vmatprep.subr.bf16.mxu0 %v2482
        %3382 = vmatpush2.bf16.msra.mxu0 %v2481
        %3383 = vmatprep.subr.bf16.mxu0 %v2478
        %3384 = vmatpush2.bf16.msra.mxu0 %v2477
        %3385 = vmatprep.subr.bf16.mxu0 %v2474
        %3386 = vmatpush2.bf16.msra.mxu0 %v2473
        %3387 = vmatprep.mubr.bf16.mxu0 %v1560
        %3388 = vmatmul.mubr.bf16.gmra.mxu0 %v1559
        %v3389 = vpop.f32.mrf.mxu0
        %v3390 = vadd.f32 %v1394, %v3389
        %v3391 = vpop.f32.mrf.mxu0
        %v3392 = vadd.f32 %v1398, %v3391
        %v3393 = vpop.f32.mrf.mxu0
        %v3394 = vadd.f32 %v1394, %v3393
        %v3395 = vpop.f32.mrf.mxu0
        %v3396 = vadd.f32 %v1398, %v3395
        %3397 = vmatprep.mubr.bf16.mxu0 %v1568
        %3398 = vmatmul.mubr.bf16.gmra.mxu0 %v1567
        %v3399 = vpop.f32.mrf.mxu0
        %v3400 = vadd.f32 %v1394, %v3399
        %v3401 = vpop.f32.mrf.mxu0
        %v3402 = vadd.f32 %v1398, %v3401
        %v3403 = vpop.f32.mrf.mxu0
        %v3404 = vadd.f32 %v1394, %v3403
        %v3405 = vpop.f32.mrf.mxu0
        %v3406 = vadd.f32 %v1398, %v3405
        %3407 = vmatprep.mubr.bf16.mxu0 %v1576
        %3408 = vmatmul.mubr.bf16.gmra.mxu0 %v1575
        %v3409 = vpop.f32.mrf.mxu0
        %v3410 = vadd.f32 %v1394, %v3409
        %v3411 = vpop.f32.mrf.mxu0
        %v3412 = vadd.f32 %v1398, %v3411
        %v3413 = vpop.f32.mrf.mxu0
        %v3414 = vadd.f32 %v1394, %v3413
        %v3415 = vpop.f32.mrf.mxu0
        %v3416 = vadd.f32 %v1398, %v3415
        %3417 = vmatprep.mubr.bf16.mxu0 %v1584
        %3418 = vmatmul.mubr.bf16.gmra.mxu0 %v1583
        %v3419 = vpop.f32.mrf.mxu0
        %v3420 = vadd.f32 %v1394, %v3419
        %v3421 = vpop.f32.mrf.mxu0
        %v3422 = vadd.f32 %v1398, %v3421
        %v3423 = vpop.f32.mrf.mxu0
        %v3424 = vadd.f32 %v1394, %v3423
        %v3425 = vpop.f32.mrf.mxu0
        %v3426 = vadd.f32 %v1398, %v3425
        %3427 = vmatprep.mubr.bf16.mxu0 %v1592
        %3428 = vmatmul.mubr.bf16.gmra.mxu0 %v1591
        %v3429 = vpop.f32.mrf.mxu0
        %v3430 = vadd.f32 %v1394, %v3429
        %v3431 = vpop.f32.mrf.mxu0
        %v3432 = vadd.f32 %v1398, %v3431
        %v3433 = vpop.f32.mrf.mxu0
        %v3434 = vadd.f32 %v1394, %v3433
        %v3435 = vpop.f32.mrf.mxu0
        %v3436 = vadd.f32 %v1398, %v3435
        %3437 = vmatprep.mubr.bf16.mxu0 %v1600
        %3438 = vmatmul.mubr.bf16.gmra.mxu0 %v1599
        %v3439 = vpop.f32.mrf.mxu0
        %v3440 = vadd.f32 %v1394, %v3439
        %v3441 = vpop.f32.mrf.mxu0
        %v3442 = vadd.f32 %v1398, %v3441
        %v3443 = vpop.f32.mrf.mxu0
        %v3444 = vadd.f32 %v1394, %v3443
        %v3445 = vpop.f32.mrf.mxu0
        %v3446 = vadd.f32 %v1398, %v3445
        %3447 = vmatprep.mubr.bf16.mxu0 %v1608
        %3448 = vmatmul.mubr.bf16.gmra.mxu0 %v1607
        %v3449 = vpop.f32.mrf.mxu0
        %v3450 = vadd.f32 %v1394, %v3449
        %v3451 = vpop.f32.mrf.mxu0
        %v3452 = vadd.f32 %v1398, %v3451
        %v3453 = vpop.f32.mrf.mxu0
        %v3454 = vpop.f32.mrf.mxu0
        %3455 = vdwg.mxu0
        %3456 = vmatprep.subr.bf16.mxu0 %v2534
        %3457 = vmatpush1.bf16.msra.mxu0 %v2533
        %3458 = vmatprep.subr.bf16.mxu0 %v2530
        %3459 = vmatpush1.bf16.msra.mxu0 %v2529
        %3460 = vmatprep.subr.bf16.mxu0 %v2526
        %3461 = vmatpush1.bf16.msra.mxu0 %v2525
        %3462 = vmatprep.subr.bf16.mxu0 %v2522
        %3463 = vmatpush1.bf16.msra.mxu0 %v2521
        %3464 = vmatprep.subr.bf16.mxu0 %v2518
        %3465 = vmatpush1.bf16.msra.mxu0 %v2517
        %3466 = vmatprep.subr.bf16.mxu0 %v2514
        %3467 = vmatpush1.bf16.msra.mxu0 %v2513
        %3468 = vmatprep.subr.bf16.mxu0 %v2510
        %3469 = vmatpush1.bf16.msra.mxu0 %v2509
        %3470 = vmatprep.subr.bf16.mxu0 %v2506
        %3471 = vmatpush1.bf16.msra.mxu0 %v2505
        %3472 = vmatprep.subr.bf16.mxu0 %v2566
        %3473 = vmatpush2.bf16.msra.mxu0 %v2565
        %3474 = vmatprep.subr.bf16.mxu0 %v2562
        %3475 = vmatpush2.bf16.msra.mxu0 %v2561
        %3476 = vmatprep.subr.bf16.mxu0 %v2558
        %3477 = vmatpush2.bf16.msra.mxu0 %v2557
        %3478 = vmatprep.subr.bf16.mxu0 %v2554
        %3479 = vmatpush2.bf16.msra.mxu0 %v2553
        %3480 = vmatprep.subr.bf16.mxu0 %v2550
        %3481 = vmatpush2.bf16.msra.mxu0 %v2549
        %3482 = vmatprep.subr.bf16.mxu0 %v2546
        %3483 = vmatpush2.bf16.msra.mxu0 %v2545
        %3484 = vmatprep.subr.bf16.mxu0 %v2542
        %3485 = vmatpush2.bf16.msra.mxu0 %v2541
        %3486 = vmatprep.subr.bf16.mxu0 %v2538
        %3487 = vmatpush2.bf16.msra.mxu0 %v2537
        %3488 = vmatprep.mubr.bf16.mxu0 %v1562
        %3489 = vmatmul.mubr.bf16.gmra.mxu0 %v1561
        %v3490 = vpop.f32.mrf.mxu0
        %v3491 = vadd.f32 %v3390, %v3490
        %v3492 = vpop.f32.mrf.mxu0
        %v3493 = vadd.f32 %v3392, %v3492
        %v3494 = vpop.f32.mrf.mxu0
        %v3495 = vadd.f32 %v3394, %v3494
        %v3496 = vpop.f32.mrf.mxu0
        %v3497 = vadd.f32 %v3396, %v3496
        %3498 = vmatprep.mubr.bf16.mxu0 %v1570
        %3499 = vmatmul.mubr.bf16.gmra.mxu0 %v1569
        %v3500 = vpop.f32.mrf.mxu0
        %v3501 = vadd.f32 %v3400, %v3500
        %v3502 = vpop.f32.mrf.mxu0
        %v3503 = vadd.f32 %v3402, %v3502
        %v3504 = vpop.f32.mrf.mxu0
        %v3505 = vadd.f32 %v3404, %v3504
        %v3506 = vpop.f32.mrf.mxu0
        %v3507 = vadd.f32 %v3406, %v3506
        %3508 = vmatprep.mubr.bf16.mxu0 %v1578
        %3509 = vmatmul.mubr.bf16.gmra.mxu0 %v1577
        %v3510 = vpop.f32.mrf.mxu0
        %v3511 = vadd.f32 %v3410, %v3510
        %v3512 = vpop.f32.mrf.mxu0
        %v3513 = vadd.f32 %v3412, %v3512
        %v3514 = vpop.f32.mrf.mxu0
        %v3515 = vadd.f32 %v3414, %v3514
        %v3516 = vpop.f32.mrf.mxu0
        %v3517 = vadd.f32 %v3416, %v3516
        %3518 = vmatprep.mubr.bf16.mxu0 %v1586
        %3519 = vmatmul.mubr.bf16.gmra.mxu0 %v1585
        %v3520 = vpop.f32.mrf.mxu0
        %v3521 = vadd.f32 %v3420, %v3520
        %v3522 = vpop.f32.mrf.mxu0
        %v3523 = vadd.f32 %v3422, %v3522
        %v3524 = vpop.f32.mrf.mxu0
        %v3525 = vadd.f32 %v3424, %v3524
        %v3526 = vpop.f32.mrf.mxu0
        %v3527 = vadd.f32 %v3426, %v3526
        %3528 = vmatprep.mubr.bf16.mxu0 %v1594
        %3529 = vmatmul.mubr.bf16.gmra.mxu0 %v1593
        %v3530 = vpop.f32.mrf.mxu0
        %v3531 = vadd.f32 %v3430, %v3530
        %v3532 = vpop.f32.mrf.mxu0
        %v3533 = vadd.f32 %v3432, %v3532
        %v3534 = vpop.f32.mrf.mxu0
        %v3535 = vadd.f32 %v3434, %v3534
        %v3536 = vpop.f32.mrf.mxu0
        %v3537 = vadd.f32 %v3436, %v3536
        %3538 = vmatprep.mubr.bf16.mxu0 %v1602
        %3539 = vmatmul.mubr.bf16.gmra.mxu0 %v1601
        %v3540 = vpop.f32.mrf.mxu0
        %v3541 = vadd.f32 %v3440, %v3540
        %v3542 = vpop.f32.mrf.mxu0
        %v3543 = vadd.f32 %v3442, %v3542
        %v3544 = vpop.f32.mrf.mxu0
        %v3545 = vadd.f32 %v3444, %v3544
        %v3546 = vpop.f32.mrf.mxu0
        %v3547 = vadd.f32 %v3446, %v3546
        %3548 = vmatprep.mubr.bf16.mxu0 %v1610
        %3549 = vmatmul.mubr.bf16.gmra.mxu0 %v1609
        %v3550 = vpop.f32.mrf.mxu0
        %v3551 = vadd.f32 %v3450, %v3550
        %v3552 = vpop.f32.mrf.mxu0
        %v3553 = vadd.f32 %v3452, %v3552
        %v3554 = vpop.f32.mrf.mxu0
        %v3555 = vpop.f32.mrf.mxu0
        %3556 = vdwg.mxu0
        %3557 = vmatprep.subr.bf16.mxu0 %v2598
        %3558 = vmatpush1.bf16.msra.mxu0 %v2597
        %3559 = vmatprep.subr.bf16.mxu0 %v2594
        %3560 = vmatpush1.bf16.msra.mxu0 %v2593
        %3561 = vmatprep.subr.bf16.mxu0 %v2590
        %3562 = vmatpush1.bf16.msra.mxu0 %v2589
        %3563 = vmatprep.subr.bf16.mxu0 %v2586
        %3564 = vmatpush1.bf16.msra.mxu0 %v2585
        %3565 = vmatprep.subr.bf16.mxu0 %v2582
        %3566 = vmatpush1.bf16.msra.mxu0 %v2581
        %3567 = vmatprep.subr.bf16.mxu0 %v2578
        %3568 = vmatpush1.bf16.msra.mxu0 %v2577
        %3569 = vmatprep.subr.bf16.mxu0 %v2574
        %3570 = vmatpush1.bf16.msra.mxu0 %v2573
        %3571 = vmatprep.subr.bf16.mxu0 %v2570
        %3572 = vmatpush1.bf16.msra.mxu0 %v2569
        %3573 = vmatprep.subr.bf16.mxu0 %v2630
        %3574 = vmatpush2.bf16.msra.mxu0 %v2629
        %3575 = vmatprep.subr.bf16.mxu0 %v2626
        %3576 = vmatpush2.bf16.msra.mxu0 %v2625
        %3577 = vmatprep.subr.bf16.mxu0 %v2622
        %3578 = vmatpush2.bf16.msra.mxu0 %v2621
        %3579 = vmatprep.subr.bf16.mxu0 %v2618
        %3580 = vmatpush2.bf16.msra.mxu0 %v2617
        %3581 = vmatprep.subr.bf16.mxu0 %v2614
        %3582 = vmatpush2.bf16.msra.mxu0 %v2613
        %3583 = vmatprep.subr.bf16.mxu0 %v2610
        %3584 = vmatpush2.bf16.msra.mxu0 %v2609
        %3585 = vmatprep.subr.bf16.mxu0 %v2606
        %3586 = vmatpush2.bf16.msra.mxu0 %v2605
        %3587 = vmatprep.subr.bf16.mxu0 %v2602
        %3588 = vmatpush2.bf16.msra.mxu0 %v2601
        %3589 = vmatprep.mubr.bf16.mxu0 %v1564
        %3590 = vmatmul.mubr.bf16.gmra.mxu0 %v1563
        %v3591 = vpop.f32.mrf.mxu0
        %v3592 = vadd.f32 %v3491, %v3591
        %v3593 = vpop.f32.mrf.mxu0
        %v3594 = vadd.f32 %v3493, %v3593
        %v3595 = vpop.f32.mrf.mxu0
        %v3596 = vadd.f32 %v3495, %v3595
        %v3597 = vpop.f32.mrf.mxu0
        %v3598 = vadd.f32 %v3497, %v3597
        %3599 = vmatprep.mubr.bf16.mxu0 %v1572
        %3600 = vmatmul.mubr.bf16.gmra.mxu0 %v1571
        %v3601 = vpop.f32.mrf.mxu0
        %v3602 = vadd.f32 %v3501, %v3601
        %v3603 = vpop.f32.mrf.mxu0
        %v3604 = vadd.f32 %v3503, %v3603
        %v3605 = vpop.f32.mrf.mxu0
        %v3606 = vadd.f32 %v3505, %v3605
        %v3607 = vpop.f32.mrf.mxu0
        %v3608 = vadd.f32 %v3507, %v3607
        %3609 = vmatprep.mubr.bf16.mxu0 %v1580
        %3610 = vmatmul.mubr.bf16.gmra.mxu0 %v1579
        %v3611 = vpop.f32.mrf.mxu0
        %v3612 = vadd.f32 %v3511, %v3611
        %v3613 = vpop.f32.mrf.mxu0
        %v3614 = vadd.f32 %v3513, %v3613
        %v3615 = vpop.f32.mrf.mxu0
        %v3616 = vadd.f32 %v3515, %v3615
        %v3617 = vpop.f32.mrf.mxu0
        %v3618 = vadd.f32 %v3517, %v3617
        %3619 = vmatprep.mubr.bf16.mxu0 %v1588
        %3620 = vmatmul.mubr.bf16.gmra.mxu0 %v1587
        %v3621 = vpop.f32.mrf.mxu0
        %v3622 = vadd.f32 %v3521, %v3621
        %v3623 = vpop.f32.mrf.mxu0
        %v3624 = vadd.f32 %v3523, %v3623
        %v3625 = vpop.f32.mrf.mxu0
        %v3626 = vadd.f32 %v3525, %v3625
        %v3627 = vpop.f32.mrf.mxu0
        %v3628 = vadd.f32 %v3527, %v3627
        %3629 = vmatprep.mubr.bf16.mxu0 %v1596
        %3630 = vmatmul.mubr.bf16.gmra.mxu0 %v1595
        %v3631 = vpop.f32.mrf.mxu0
        %v3632 = vadd.f32 %v3531, %v3631
        %v3633 = vpop.f32.mrf.mxu0
        %v3634 = vadd.f32 %v3533, %v3633
        %v3635 = vpop.f32.mrf.mxu0
        %v3636 = vadd.f32 %v3535, %v3635
        %v3637 = vpop.f32.mrf.mxu0
        %v3638 = vadd.f32 %v3537, %v3637
        %3639 = vmatprep.mubr.bf16.mxu0 %v1604
        %3640 = vmatmul.mubr.bf16.gmra.mxu0 %v1603
        %v3641 = vpop.f32.mrf.mxu0
        %v3642 = vadd.f32 %v3541, %v3641
        %v3643 = vpop.f32.mrf.mxu0
        %v3644 = vadd.f32 %v3543, %v3643
        %v3645 = vpop.f32.mrf.mxu0
        %v3646 = vadd.f32 %v3545, %v3645
        %v3647 = vpop.f32.mrf.mxu0
        %v3648 = vadd.f32 %v3547, %v3647
        %3649 = vmatprep.mubr.bf16.mxu0 %v1612
        %3650 = vmatmul.mubr.bf16.gmra.mxu0 %v1611
        %v3651 = vpop.f32.mrf.mxu0
        %v3652 = vadd.f32 %v3551, %v3651
        %v3653 = vpop.f32.mrf.mxu0
        %v3654 = vadd.f32 %v3553, %v3653
        %v3655 = vpop.f32.mrf.mxu0
        %v3656 = vpop.f32.mrf.mxu0
        %3657 = vdwg.mxu0
        %3658 = vmatprep.subr.bf16.mxu0 %v2662
        %3659 = vmatpush1.bf16.msra.mxu0 %v2661
        %3660 = vmatprep.subr.bf16.mxu0 %v2658
        %3661 = vmatpush1.bf16.msra.mxu0 %v2657
        %3662 = vmatprep.subr.bf16.mxu0 %v2654
        %3663 = vmatpush1.bf16.msra.mxu0 %v2653
        %3664 = vmatprep.subr.bf16.mxu0 %v2650
        %3665 = vmatpush1.bf16.msra.mxu0 %v2649
        %3666 = vmatprep.subr.bf16.mxu0 %v2646
        %3667 = vmatpush1.bf16.msra.mxu0 %v2645
        %3668 = vmatprep.subr.bf16.mxu0 %v2642
        %3669 = vmatpush1.bf16.msra.mxu0 %v2641
        %3670 = vmatprep.subr.bf16.mxu0 %v2638
        %3671 = vmatpush1.bf16.msra.mxu0 %v2637
        %3672 = vmatprep.subr.bf16.mxu0 %v2634
        %3673 = vmatpush1.bf16.msra.mxu0 %v2633
        %3674 = vmatprep.subr.bf16.mxu0 %v2694
        %3675 = vmatpush2.bf16.msra.mxu0 %v2693
        %3676 = vmatprep.subr.bf16.mxu0 %v2690
        %3677 = vmatpush2.bf16.msra.mxu0 %v2689
        %3678 = vmatprep.subr.bf16.mxu0 %v2686
        %3679 = vmatpush2.bf16.msra.mxu0 %v2685
        %3680 = vmatprep.subr.bf16.mxu0 %v2682
        %3681 = vmatpush2.bf16.msra.mxu0 %v2681
        %3682 = vmatprep.subr.bf16.mxu0 %v2678
        %3683 = vmatpush2.bf16.msra.mxu0 %v2677
        %3684 = vmatprep.subr.bf16.mxu0 %v2674
        %3685 = vmatpush2.bf16.msra.mxu0 %v2673
        %3686 = vmatprep.subr.bf16.mxu0 %v2670
        %3687 = vmatpush2.bf16.msra.mxu0 %v2669
        %3688 = vmatprep.subr.bf16.mxu0 %v2666
        %3689 = vmatpush2.bf16.msra.mxu0 %v2665
        %3690 = vmatprep.mubr.bf16.mxu0 %v1566
        %3691 = vmatmul.mubr.bf16.gmra.mxu0 %v1565
        %v3692 = vpop.f32.mrf.mxu0
        %v3693 = vadd.f32 %v3592, %v3692
        %v3694 = vpop.f32.mrf.mxu0
        %v3695 = vadd.f32 %v3594, %v3694
        %v3696 = vpop.f32.mrf.mxu0
        %v3697 = vadd.f32 %v3596, %v3696
        %v3698 = vpop.f32.mrf.mxu0
        %v3699 = vadd.f32 %v3598, %v3698
        %3700 = vmatprep.mubr.bf16.mxu0 %v1574
        %3701 = vmatmul.mubr.bf16.gmra.mxu0 %v1573
        %v3702 = vpop.f32.mrf.mxu0
        %v3703 = vadd.f32 %v3602, %v3702
        %v3704 = vpop.f32.mrf.mxu0
        %v3705 = vadd.f32 %v3604, %v3704
        %v3706 = vpop.f32.mrf.mxu0
        %v3707 = vadd.f32 %v3606, %v3706
        %v3708 = vpop.f32.mrf.mxu0
        %v3709 = vadd.f32 %v3608, %v3708
        %3710 = vmatprep.mubr.bf16.mxu0 %v1582
        %3711 = vmatmul.mubr.bf16.gmra.mxu0 %v1581
        %v3712 = vpop.f32.mrf.mxu0
        %v3713 = vadd.f32 %v3612, %v3712
        %v3714 = vpop.f32.mrf.mxu0
        %v3715 = vadd.f32 %v3614, %v3714
        %v3716 = vpop.f32.mrf.mxu0
        %v3717 = vadd.f32 %v3616, %v3716
        %v3718 = vpop.f32.mrf.mxu0
        %v3719 = vadd.f32 %v3618, %v3718
        %3720 = vmatprep.mubr.bf16.mxu0 %v1590
        %3721 = vmatmul.mubr.bf16.gmra.mxu0 %v1589
        %v3722 = vpop.f32.mrf.mxu0
        %v3723 = vadd.f32 %v3622, %v3722
        %v3724 = vpop.f32.mrf.mxu0
        %v3725 = vadd.f32 %v3624, %v3724
        %v3726 = vpop.f32.mrf.mxu0
        %v3727 = vadd.f32 %v3626, %v3726
        %v3728 = vpop.f32.mrf.mxu0
        %v3729 = vadd.f32 %v3628, %v3728
        %3730 = vmatprep.mubr.bf16.mxu0 %v1598
        %3731 = vmatmul.mubr.bf16.gmra.mxu0 %v1597
        %v3732 = vpop.f32.mrf.mxu0
        %v3733 = vadd.f32 %v3632, %v3732
        %v3734 = vpop.f32.mrf.mxu0
        %v3735 = vadd.f32 %v3634, %v3734
        %v3736 = vpop.f32.mrf.mxu0
        %v3737 = vadd.f32 %v3636, %v3736
        %v3738 = vpop.f32.mrf.mxu0
        %v3739 = vadd.f32 %v3638, %v3738
        %3740 = vmatprep.mubr.bf16.mxu0 %v1606
        %3741 = vmatmul.mubr.bf16.gmra.mxu0 %v1605
        %v3742 = vpop.f32.mrf.mxu0
        %v3743 = vadd.f32 %v3642, %v3742
        %v3744 = vpop.f32.mrf.mxu0
        %v3745 = vadd.f32 %v3644, %v3744
        %v3746 = vpop.f32.mrf.mxu0
        %v3747 = vadd.f32 %v3646, %v3746
        %v3748 = vpop.f32.mrf.mxu0
        %v3749 = vadd.f32 %v3648, %v3748
        %3750 = vmatprep.mubr.bf16.mxu0 %v1614
        %3751 = vmatmul.mubr.bf16.gmra.mxu0 %v1613
        %v3752 = vpop.f32.mrf.mxu0
        %v3753 = vadd.f32 %v3652, %v3752
        %v3754 = vpop.f32.mrf.mxu0
        %v3755 = vadd.f32 %v3654, %v3754
        %v3756 = vpop.f32.mrf.mxu0
        %v3757 = vpop.f32.mrf.mxu0
        %3758 = vdwg.mxu0
        %v3759 = vmax.f32 %v3289, 0.0
        %v3760 = vmax.f32 %v3291, 0.0
        %v3761 = vmax.f32 %v3693, 0.0
        %v3762 = vmax.f32 %v3695, 0.0
        %v3763 = vmax.f32 %v3293, 0.0
        %v3764 = vmax.f32 %v3295, 0.0
        %v3765 = vmax.f32 %v3697, 0.0
        %v3766 = vmax.f32 %v3699, 0.0
        %v3767 = vmax.f32 %v3299, 0.0
        %v3768 = vmax.f32 %v3301, 0.0
        %v3769 = vmax.f32 %v3703, 0.0
        %v3770 = vmax.f32 %v3705, 0.0
        %v3771 = vmax.f32 %v3303, 0.0
        %v3772 = vmax.f32 %v3305, 0.0
        %v3773 = vmax.f32 %v3707, 0.0
        %v3774 = vmax.f32 %v3709, 0.0
        %v3775 = vmax.f32 %v3309, 0.0
        %v3776 = vmax.f32 %v3311, 0.0
        %v3777 = vmax.f32 %v3713, 0.0
        %v3778 = vmax.f32 %v3715, 0.0
        %v3779 = vmax.f32 %v3313, 0.0
        %v3780 = vmax.f32 %v3315, 0.0
        %v3781 = vmax.f32 %v3717, 0.0
        %v3782 = vmax.f32 %v3719, 0.0
        %v3783 = vmax.f32 %v3319, 0.0
        %v3784 = vmax.f32 %v3321, 0.0
        %v3785 = vmax.f32 %v3723, 0.0
        %v3786 = vmax.f32 %v3725, 0.0
        %v3787 = vmax.f32 %v3323, 0.0
        %v3788 = vmax.f32 %v3325, 0.0
        %v3789 = vmax.f32 %v3727, 0.0
        %v3790 = vmax.f32 %v3729, 0.0
        %v3791 = vmax.f32 %v3329, 0.0
        %v3792 = vmax.f32 %v3331, 0.0
        %v3793 = vmax.f32 %v3733, 0.0
        %v3794 = vmax.f32 %v3735, 0.0
        %v3795 = vmax.f32 %v3333, 0.0
        %v3796 = vmax.f32 %v3335, 0.0
        %v3797 = vmax.f32 %v3737, 0.0
        %v3798 = vmax.f32 %v3739, 0.0
        %v3799 = vmax.f32 %v3339, 0.0
        %v3800 = vmax.f32 %v3341, 0.0
        %v3801 = vmax.f32 %v3743, 0.0
        %v3802 = vmax.f32 %v3745, 0.0
        %v3803 = vmax.f32 %v3343, 0.0
        %v3804 = vmax.f32 %v3345, 0.0
        %v3805 = vmax.f32 %v3747, 0.0
        %v3806 = vmax.f32 %v3749, 0.0
        %v3807 = vmax.f32 %v3349, 0.0
        %v3808 = vmax.f32 %v3351, 0.0
        %v3809 = vmax.f32 %v3753, 0.0
        %v3810 = vmax.f32 %v3755, 0.0
        %v3811 = vpack.c.bf16 %v3763, %v3759
        %v3812 = vpack.c.bf16 %v3764, %v3760
        %v3813 = vpack.c.bf16 %v3765, %v3761
        %v3814 = vpack.c.bf16 %v3766, %v3762
        %v3815 = vpack.c.bf16 %v3771, %v3767
        %v3816 = vpack.c.bf16 %v3772, %v3768
        %v3817 = vpack.c.bf16 %v3773, %v3769
        %v3818 = vpack.c.bf16 %v3774, %v3770
        %v3819 = vpack.c.bf16 %v3779, %v3775
        %v3820 = vpack.c.bf16 %v3780, %v3776
        %v3821 = vpack.c.bf16 %v3781, %v3777
        %v3822 = vpack.c.bf16 %v3782, %v3778
        %v3823 = vpack.c.bf16 %v3787, %v3783
        %v3824 = vpack.c.bf16 %v3788, %v3784
        %v3825 = vpack.c.bf16 %v3789, %v3785
        %v3826 = vpack.c.bf16 %v3790, %v3786
        %v3827 = vpack.c.bf16 %v3795, %v3791
        %v3828 = vpack.c.bf16 %v3796, %v3792
        %v3829 = vpack.c.bf16 %v3797, %v3793
        %v3830 = vpack.c.bf16 %v3798, %v3794
        %v3831 = vpack.c.bf16 %v3803, %v3799
        %v3832 = vpack.c.bf16 %v3804, %v3800
        %v3833 = vpack.c.bf16 %v3805, %v3801
        %v3834 = vpack.c.bf16 %v3806, %v3802
        %v3835 = vpack.c.bf16 %v3807, %v3807
        %v3836 = vpack.c.bf16 %v3808, %v3808
        %v3837 = vpack.c.bf16 %v3809, %v3809
        %v3838 = vpack.c.bf16 %v3810, %v3810
        %v3839 = vld [vmem:[#allocation9] sm:$0xff]
        %v3840 = vld [vmem:[#allocation9 + $0x8] sm:$0xff]
        %v3841 = vld [vmem:[#allocation9 + $0x10] sm:$0xff]
        %v3842 = vld [vmem:[#allocation9 + $0x18] sm:$0xff]
        %v3843 = vld [vmem:[#allocation9 + $0x20] sm:$0xff]
        %v3844 = vld [vmem:[#allocation9 + $0x28] sm:$0xff]
        %v3845 = vld [vmem:[#allocation9 + $0x30] sm:$0xff]
        %v3846 = vld [vmem:[#allocation9 + $0x38] sm:$0xff]
        %v3847 = vld [vmem:[#allocation9 + $0x40] sm:$0xff]
        %v3848 = vld [vmem:[#allocation9 + $0x48] sm:$0xff]
        %v3849 = vld [vmem:[#allocation9 + $0x50] sm:$0xff]
        %v3850 = vld [vmem:[#allocation9 + $0x58] sm:$0xff]
        %v3851 = vld [vmem:[#allocation9 + $0x60] sm:$0xff]
        %v3852 = vld [vmem:[#allocation9 + $0x68] sm:$0xff]
        %v3853 = vld [vmem:[#allocation9 + $0x70] sm:$0xff]
        %v3854 = vld [vmem:[#allocation9 + $0x78] sm:$0xff]
        %v3855 = vld [vmem:[#allocation9 + $0x80] sm:$0xff]
        %v3856 = vld [vmem:[#allocation9 + $0x88] sm:$0xff]
        %v3857 = vld [vmem:[#allocation9 + $0x90] sm:$0xff]
        %v3858 = vld [vmem:[#allocation9 + $0x98] sm:$0xff]
        %v3859 = vld [vmem:[#allocation9 + $0xa0] sm:$0xff]
        %v3860 = vld [vmem:[#allocation9 + $0xa8] sm:$0xff]
        %v3861 = vld [vmem:[#allocation9 + $0xb0] sm:$0xff]
        %v3862 = vld [vmem:[#allocation9 + $0xb8] sm:$0xff]
        %v3863 = vld [vmem:[#allocation9 + $0xc0] sm:$0xff]
        %v3864 = vld [vmem:[#allocation9 + $0xc8] sm:$0xff]
        %v3865 = vld [vmem:[#allocation9 + $0xd0] sm:$0xff]
        %v3866 = vld [vmem:[#allocation9 + $0xd8] sm:$0xff]
        %v3867 = vld [vmem:[#allocation9 + $0xe0] sm:$0xff]
        %v3868 = vld [vmem:[#allocation9 + $0xe8] sm:$0xff]
        %v3869 = vld [vmem:[#allocation9 + $0xf0] sm:$0xff]
        %v3870 = vld [vmem:[#allocation9 + $0xf8] sm:$0xff]
        %v3871 = vld [vmem:[#allocation9 + $0x100] sm:$0xff]
        %v3872 = vld [vmem:[#allocation9 + $0x108] sm:$0xff]
        %v3873 = vld [vmem:[#allocation9 + $0x110] sm:$0xff]
        %v3874 = vld [vmem:[#allocation9 + $0x118] sm:$0xff]
        %v3875 = vld [vmem:[#allocation9 + $0x120] sm:$0xff]
        %v3876 = vld [vmem:[#allocation9 + $0x128] sm:$0xff]
        %v3877 = vld [vmem:[#allocation9 + $0x130] sm:$0xff]
        %v3878 = vld [vmem:[#allocation9 + $0x138] sm:$0xff]
        %v3879 = vld [vmem:[#allocation9 + $0x140] sm:$0xff]
        %v3880 = vld [vmem:[#allocation9 + $0x148] sm:$0xff]
        %v3881 = vld [vmem:[#allocation9 + $0x150] sm:$0xff]
        %v3882 = vld [vmem:[#allocation9 + $0x158] sm:$0xff]
        %v3883 = vld [vmem:[#allocation9 + $0x160] sm:$0xff]
        %v3884 = vld [vmem:[#allocation9 + $0x168] sm:$0xff]
        %v3885 = vld [vmem:[#allocation9 + $0x170] sm:$0xff]
        %v3886 = vld [vmem:[#allocation9 + $0x178] sm:$0xff]
        %v3887 = vld [vmem:[#allocation9 + $0x180] sm:$0xff]
        %v3888 = vld [vmem:[#allocation9 + $0x188] sm:$0xff]
        %v3889 = vld [vmem:[#allocation9 + $0x190] sm:$0xff]
        %v3890 = vld [vmem:[#allocation9 + $0x198] sm:$0xff]
        %v3891 = vld [vmem:[#allocation9 + $0x1a0] sm:$0xff]
        %v3892 = vld [vmem:[#allocation9 + $0x1a8] sm:$0xff]
        %v3893 = vld [vmem:[#allocation9 + $0x1b0] sm:$0xff]
        %v3894 = vld [vmem:[#allocation9 + $0x1b8] sm:$0xff]
        %v3895 = vld [vmem:[#allocation9 + $0x1c0] sm:$0xff]
        %v3896 = vld [vmem:[#allocation9 + $0x1c8] sm:$0xff]
        %v3897 = vld [vmem:[#allocation9 + $0x1d0] sm:$0xff]
        %v3898 = vld [vmem:[#allocation9 + $0x1d8] sm:$0xff]
        %v3899 = vld [vmem:[#allocation9 + $0x1e0] sm:$0xff]
        %v3900 = vld [vmem:[#allocation9 + $0x1e8] sm:$0xff]
        %v3901 = vld [vmem:[#allocation9 + $0x1f0] sm:$0xff]
        %v3902 = vld [vmem:[#allocation9 + $0x1f8] sm:$0xff]
        %v3903 = vld [vmem:[#allocation9 + $0x200] sm:$0xff]
        %v3904 = vld [vmem:[#allocation9 + $0x208] sm:$0xff]
        %v3905 = vld [vmem:[#allocation9 + $0x210] sm:$0xff]
        %v3906 = vld [vmem:[#allocation9 + $0x218] sm:$0xff]
        %v3907 = vld [vmem:[#allocation9 + $0x220] sm:$0xff]
        %v3908 = vld [vmem:[#allocation9 + $0x228] sm:$0xff]
        %v3909 = vld [vmem:[#allocation9 + $0x230] sm:$0xff]
        %v3910 = vld [vmem:[#allocation9 + $0x238] sm:$0xff]
        %v3911 = vld [vmem:[#allocation9 + $0x240] sm:$0xff]
        %v3912 = vld [vmem:[#allocation9 + $0x248] sm:$0xff]
        %v3913 = vld [vmem:[#allocation9 + $0x250] sm:$0xff]
        %v3914 = vld [vmem:[#allocation9 + $0x258] sm:$0xff]
        %v3915 = vld [vmem:[#allocation9 + $0x260] sm:$0xff]
        %v3916 = vld [vmem:[#allocation9 + $0x268] sm:$0xff]
        %v3917 = vld [vmem:[#allocation9 + $0x270] sm:$0xff]
        %v3918 = vld [vmem:[#allocation9 + $0x278] sm:$0xff]
        %v3919 = vld [vmem:[#allocation9 + $0x280] sm:$0xff]
        %v3920 = vld [vmem:[#allocation9 + $0x288] sm:$0xff]
        %v3921 = vld [vmem:[#allocation9 + $0x290] sm:$0xff]
        %v3922 = vld [vmem:[#allocation9 + $0x298] sm:$0xff]
        %v3923 = vld [vmem:[#allocation9 + $0x2a0] sm:$0xff]
        %v3924 = vld [vmem:[#allocation9 + $0x2a8] sm:$0xff]
        %v3925 = vld [vmem:[#allocation9 + $0x2b0] sm:$0xff]
        %v3926 = vld [vmem:[#allocation9 + $0x2b8] sm:$0xff]
        %v3927 = vld [vmem:[#allocation9 + $0x2c0] sm:$0xff]
        %v3928 = vld [vmem:[#allocation9 + $0x2c8] sm:$0xff]
        %v3929 = vld [vmem:[#allocation9 + $0x2d0] sm:$0xff]
        %v3930 = vld [vmem:[#allocation9 + $0x2d8] sm:$0xff]
        %v3931 = vld [vmem:[#allocation9 + $0x2e0] sm:$0xff]
        %v3932 = vld [vmem:[#allocation9 + $0x2e8] sm:$0xff]
        %v3933 = vld [vmem:[#allocation9 + $0x2f0] sm:$0xff]
        %v3934 = vld [vmem:[#allocation9 + $0x2f8] sm:$0xff]
        %v3935 = vld [vmem:[#allocation9 + $0x300] sm:$0xff]
        %v3936 = vld [vmem:[#allocation9 + $0x308] sm:$0xff]
        %v3937 = vld [vmem:[#allocation9 + $0x310] sm:$0xff]
        %v3938 = vld [vmem:[#allocation9 + $0x318] sm:$0xff]
        %v3939 = vld [vmem:[#allocation9 + $0x320] sm:$0xff]
        %v3940 = vld [vmem:[#allocation9 + $0x328] sm:$0xff]
        %v3941 = vld [vmem:[#allocation9 + $0x330] sm:$0xff]
        %v3942 = vld [vmem:[#allocation9 + $0x338] sm:$0xff]
        %v3943 = vld [vmem:[#allocation9 + $0x340] sm:$0xff]
        %v3944 = vld [vmem:[#allocation9 + $0x348] sm:$0xff]
        %v3945 = vld [vmem:[#allocation9 + $0x350] sm:$0xff]
        %v3946 = vld [vmem:[#allocation9 + $0x358] sm:$0xff]
        %v3947 = vld [vmem:[#allocation9 + $0x360] sm:$0xff]
        %v3948 = vld [vmem:[#allocation9 + $0x368] sm:$0xff]
        %v3949 = vld [vmem:[#allocation9 + $0x370] sm:$0xff]
        %v3950 = vld [vmem:[#allocation9 + $0x378] sm:$0xff]
        %v3951 = vld [vmem:[#allocation9 + $0x380] sm:$0xff]
        %v3952 = vld [vmem:[#allocation9 + $0x388] sm:$0xff]
        %v3953 = vld [vmem:[#allocation9 + $0x390] sm:$0xff]
        %v3954 = vld [vmem:[#allocation9 + $0x398] sm:$0xff]
        %v3955 = vld [vmem:[#allocation9 + $0x3a0] sm:$0xff]
        %v3956 = vld [vmem:[#allocation9 + $0x3a8] sm:$0xff]
        %v3957 = vld [vmem:[#allocation9 + $0x3b0] sm:$0xff]
        %v3958 = vld [vmem:[#allocation9 + $0x3b8] sm:$0xff]
        %v3959 = vld [vmem:[#allocation9 + $0x3c0] sm:$0xff]
        %v3960 = vld [vmem:[#allocation9 + $0x3c8] sm:$0xff]
        %v3961 = vld [vmem:[#allocation9 + $0x3d0] sm:$0xff]
        %v3962 = vld [vmem:[#allocation9 + $0x3d8] sm:$0xff]
        %v3963 = vld [vmem:[#allocation9 + $0x3e0] sm:$0xff]
        %v3964 = vld [vmem:[#allocation9 + $0x3e8] sm:$0xff]
        %v3965 = vld [vmem:[#allocation9 + $0x3f0] sm:$0xff]
        %v3966 = vld [vmem:[#allocation9 + $0x3f8] sm:$0xff]
        %v3967 = vld [vmem:[%s4] sm:$0xf]
        %v3969 = vlaneseq
        %v3970 = vshrl.u32 %v3969, 7
        %v3971 = vsub.s32 0, %v3970
        %v3972 = vrot.slane %v3967, %v3971
        %v3973 = vlaneseq
        %v3974 = vshrl.u32 %v3973, 7
        %v3975 = vsub.s32 1, %v3974
        %v3976 = vrot.slane %v3967, %v3975
        %v3977 = vlaneseq
        %v3978 = vshrl.u32 %v3977, 7
        %v3979 = vsub.s32 2, %v3978
        %v3980 = vrot.slane %v3967, %v3979
        %v3981 = vlaneseq
        %v3982 = vshrl.u32 %v3981, 7
        %v3983 = vsub.s32 3, %v3982
        %v3984 = vrot.slane %v3967, %v3983
        %v4117 = vunpack.c.l.b16 %v3839
        %v4118 = vunpack.c.h.b16 %v3839
        %v4119 = vunpack.c.l.b16 %v3840
        %v4120 = vunpack.c.h.b16 %v3840
        %v4121 = vunpack.c.l.b16 %v3841
        %v4122 = vunpack.c.h.b16 %v3841
        %v4123 = vunpack.c.l.b16 %v3842
        %v4124 = vunpack.c.h.b16 %v3842
        %v4125 = vunpack.c.l.b16 %v3843
        %v4126 = vunpack.c.h.b16 %v3843
        %v4127 = vunpack.c.l.b16 %v3844
        %v4128 = vunpack.c.h.b16 %v3844
        %v4129 = vunpack.c.l.b16 %v3845
        %v4130 = vunpack.c.h.b16 %v3845
        %v4131 = vunpack.c.l.b16 %v3846
        %v4132 = vunpack.c.h.b16 %v3846
        %v4133 = vunpack.c.l.b16 %v3847
        %v4134 = vunpack.c.h.b16 %v3847
        %v4135 = vunpack.c.l.b16 %v3848
        %v4136 = vunpack.c.h.b16 %v3848
        %v4137 = vunpack.c.l.b16 %v3849
        %v4138 = vunpack.c.h.b16 %v3849
        %v4139 = vunpack.c.l.b16 %v3850
        %v4140 = vunpack.c.h.b16 %v3850
        %v4141 = vunpack.c.l.b16 %v3851
        %v4142 = vunpack.c.h.b16 %v3851
        %v4143 = vunpack.c.l.b16 %v3852
        %v4144 = vunpack.c.h.b16 %v3852
        %v4145 = vunpack.c.l.b16 %v3853
        %v4146 = vunpack.c.h.b16 %v3853
        %v4147 = vunpack.c.l.b16 %v3854
        %v4148 = vunpack.c.h.b16 %v3854
        %v4149 = vunpack.c.l.b16 %v3855
        %v4150 = vunpack.c.h.b16 %v3855
        %v4151 = vunpack.c.l.b16 %v3856
        %v4152 = vunpack.c.h.b16 %v3856
        %v4153 = vunpack.c.l.b16 %v3857
        %v4154 = vunpack.c.h.b16 %v3857
        %v4155 = vunpack.c.l.b16 %v3858
        %v4156 = vunpack.c.h.b16 %v3858
        %v4157 = vunpack.c.l.b16 %v3859
        %v4158 = vunpack.c.h.b16 %v3859
        %v4159 = vunpack.c.l.b16 %v3860
        %v4160 = vunpack.c.h.b16 %v3860
        %v4161 = vunpack.c.l.b16 %v3861
        %v4162 = vunpack.c.h.b16 %v3861
        %v4163 = vunpack.c.l.b16 %v3862
        %v4164 = vunpack.c.h.b16 %v3862
        %v4165 = vunpack.c.l.b16 %v3863
        %v4166 = vunpack.c.h.b16 %v3863
        %v4167 = vunpack.c.l.b16 %v3864
        %v4168 = vunpack.c.h.b16 %v3864
        %v4169 = vunpack.c.l.b16 %v3865
        %v4170 = vunpack.c.h.b16 %v3865
        %v4171 = vunpack.c.l.b16 %v3866
        %v4172 = vunpack.c.h.b16 %v3866
        %v4173 = vunpack.c.l.b16 %v3867
        %v4174 = vunpack.c.h.b16 %v3867
        %v4175 = vunpack.c.l.b16 %v3868
        %v4176 = vunpack.c.h.b16 %v3868
        %v4177 = vunpack.c.l.b16 %v3869
        %v4178 = vunpack.c.h.b16 %v3869
        %v4179 = vunpack.c.l.b16 %v3870
        %v4180 = vunpack.c.h.b16 %v3870
        %v4181 = vunpack.c.l.b16 %v3871
        %v4182 = vunpack.c.h.b16 %v3871
        %v4183 = vunpack.c.l.b16 %v3872
        %v4184 = vunpack.c.h.b16 %v3872
        %v4185 = vunpack.c.l.b16 %v3873
        %v4186 = vunpack.c.h.b16 %v3873
        %v4187 = vunpack.c.l.b16 %v3874
        %v4188 = vunpack.c.h.b16 %v3874
        %v4189 = vunpack.c.l.b16 %v3875
        %v4190 = vunpack.c.h.b16 %v3875
        %v4191 = vunpack.c.l.b16 %v3876
        %v4192 = vunpack.c.h.b16 %v3876
        %v4193 = vunpack.c.l.b16 %v3877
        %v4194 = vunpack.c.h.b16 %v3877
        %v4195 = vunpack.c.l.b16 %v3878
        %v4196 = vunpack.c.h.b16 %v3878
        %v4197 = vunpack.c.l.b16 %v3879
        %v4198 = vunpack.c.h.b16 %v3879
        %v4199 = vunpack.c.l.b16 %v3880
        %v4200 = vunpack.c.h.b16 %v3880
        %v4201 = vunpack.c.l.b16 %v3881
        %v4202 = vunpack.c.h.b16 %v3881
        %v4203 = vunpack.c.l.b16 %v3882
        %v4204 = vunpack.c.h.b16 %v3882
        %v4205 = vunpack.c.l.b16 %v3883
        %v4206 = vunpack.c.h.b16 %v3883
        %v4207 = vunpack.c.l.b16 %v3884
        %v4208 = vunpack.c.h.b16 %v3884
        %v4209 = vunpack.c.l.b16 %v3885
        %v4210 = vunpack.c.h.b16 %v3885
        %v4211 = vunpack.c.l.b16 %v3886
        %v4212 = vunpack.c.h.b16 %v3886
        %v4213 = vunpack.c.l.b16 %v3887
        %v4214 = vunpack.c.h.b16 %v3887
        %v4215 = vunpack.c.l.b16 %v3888
        %v4216 = vunpack.c.h.b16 %v3888
        %v4217 = vunpack.c.l.b16 %v3889
        %v4218 = vunpack.c.h.b16 %v3889
        %v4219 = vunpack.c.l.b16 %v3890
        %v4220 = vunpack.c.h.b16 %v3890
        %v4221 = vunpack.c.l.b16 %v3891
        %v4222 = vunpack.c.h.b16 %v3891
        %v4223 = vunpack.c.l.b16 %v3892
        %v4224 = vunpack.c.h.b16 %v3892
        %v4225 = vunpack.c.l.b16 %v3893
        %v4226 = vunpack.c.h.b16 %v3893
        %v4227 = vunpack.c.l.b16 %v3894
        %v4228 = vunpack.c.h.b16 %v3894
        %v4229 = vunpack.c.l.b16 %v3895
        %v4230 = vunpack.c.h.b16 %v3895
        %v4231 = vunpack.c.l.b16 %v3896
        %v4232 = vunpack.c.h.b16 %v3896
        %v4233 = vunpack.c.l.b16 %v3897
        %v4234 = vunpack.c.h.b16 %v3897
        %v4235 = vunpack.c.l.b16 %v3898
        %v4236 = vunpack.c.h.b16 %v3898
        %v4237 = vunpack.c.l.b16 %v3899
        %v4238 = vunpack.c.h.b16 %v3899
        %v4239 = vunpack.c.l.b16 %v3900
        %v4240 = vunpack.c.h.b16 %v3900
        %v4241 = vunpack.c.l.b16 %v3901
        %v4242 = vunpack.c.h.b16 %v3901
        %v4243 = vunpack.c.l.b16 %v3902
        %v4244 = vunpack.c.h.b16 %v3902
        %v4245 = vunpack.c.l.b16 %v3903
        %v4246 = vunpack.c.h.b16 %v3903
        %v4247 = vunpack.c.l.b16 %v3904
        %v4248 = vunpack.c.h.b16 %v3904
        %v4249 = vunpack.c.l.b16 %v3905
        %v4250 = vunpack.c.h.b16 %v3905
        %v4251 = vunpack.c.l.b16 %v3906
        %v4252 = vunpack.c.h.b16 %v3906
        %v4253 = vunpack.c.l.b16 %v3907
        %v4254 = vunpack.c.h.b16 %v3907
        %v4255 = vunpack.c.l.b16 %v3908
        %v4256 = vunpack.c.h.b16 %v3908
        %v4257 = vunpack.c.l.b16 %v3909
        %v4258 = vunpack.c.h.b16 %v3909
        %v4259 = vunpack.c.l.b16 %v3910
        %v4260 = vunpack.c.h.b16 %v3910
        %v4261 = vunpack.c.l.b16 %v3911
        %v4262 = vunpack.c.h.b16 %v3911
        %v4263 = vunpack.c.l.b16 %v3912
        %v4264 = vunpack.c.h.b16 %v3912
        %v4265 = vunpack.c.l.b16 %v3913
        %v4266 = vunpack.c.h.b16 %v3913
        %v4267 = vunpack.c.l.b16 %v3914
        %v4268 = vunpack.c.h.b16 %v3914
        %v4269 = vunpack.c.l.b16 %v3915
        %v4270 = vunpack.c.h.b16 %v3915
        %v4271 = vunpack.c.l.b16 %v3916
        %v4272 = vunpack.c.h.b16 %v3916
        %v4273 = vunpack.c.l.b16 %v3917
        %v4274 = vunpack.c.h.b16 %v3917
        %v4275 = vunpack.c.l.b16 %v3918
        %v4276 = vunpack.c.h.b16 %v3918
        %v4277 = vunpack.c.l.b16 %v3919
        %v4278 = vunpack.c.h.b16 %v3919
        %v4279 = vunpack.c.l.b16 %v3920
        %v4280 = vunpack.c.h.b16 %v3920
        %v4281 = vunpack.c.l.b16 %v3921
        %v4282 = vunpack.c.h.b16 %v3921
        %v4283 = vunpack.c.l.b16 %v3922
        %v4284 = vunpack.c.h.b16 %v3922
        %v4285 = vunpack.c.l.b16 %v3923
        %v4286 = vunpack.c.h.b16 %v3923
        %v4287 = vunpack.c.l.b16 %v3924
        %v4288 = vunpack.c.h.b16 %v3924
        %v4289 = vunpack.c.l.b16 %v3925
        %v4290 = vunpack.c.h.b16 %v3925
        %v4291 = vunpack.c.l.b16 %v3926
        %v4292 = vunpack.c.h.b16 %v3926
        %v4293 = vunpack.c.l.b16 %v3927
        %v4294 = vunpack.c.h.b16 %v3927
        %v4295 = vunpack.c.l.b16 %v3928
        %v4296 = vunpack.c.h.b16 %v3928
        %v4297 = vunpack.c.l.b16 %v3929
        %v4298 = vunpack.c.h.b16 %v3929
        %v4299 = vunpack.c.l.b16 %v3930
        %v4300 = vunpack.c.h.b16 %v3930
        %v4301 = vunpack.c.l.b16 %v3931
        %v4302 = vunpack.c.h.b16 %v3931
        %v4303 = vunpack.c.l.b16 %v3932
        %v4304 = vunpack.c.h.b16 %v3932
        %v4305 = vunpack.c.l.b16 %v3933
        %v4306 = vunpack.c.h.b16 %v3933
        %v4307 = vunpack.c.l.b16 %v3934
        %v4308 = vunpack.c.h.b16 %v3934
        %v4309 = vunpack.c.l.b16 %v3935
        %v4310 = vunpack.c.h.b16 %v3935
        %v4311 = vunpack.c.l.b16 %v3936
        %v4312 = vunpack.c.h.b16 %v3936
        %v4313 = vunpack.c.l.b16 %v3937
        %v4314 = vunpack.c.h.b16 %v3937
        %v4315 = vunpack.c.l.b16 %v3938
        %v4316 = vunpack.c.h.b16 %v3938
        %v4317 = vunpack.c.l.b16 %v3939
        %v4318 = vunpack.c.h.b16 %v3939
        %v4319 = vunpack.c.l.b16 %v3940
        %v4320 = vunpack.c.h.b16 %v3940
        %v4321 = vunpack.c.l.b16 %v3941
        %v4322 = vunpack.c.h.b16 %v3941
        %v4323 = vunpack.c.l.b16 %v3942
        %v4324 = vunpack.c.h.b16 %v3942
        %v4325 = vunpack.c.l.b16 %v3943
        %v4326 = vunpack.c.h.b16 %v3943
        %v4327 = vunpack.c.l.b16 %v3944
        %v4328 = vunpack.c.h.b16 %v3944
        %v4329 = vunpack.c.l.b16 %v3945
        %v4330 = vunpack.c.h.b16 %v3945
        %v4331 = vunpack.c.l.b16 %v3946
        %v4332 = vunpack.c.h.b16 %v3946
        %v4333 = vunpack.c.l.b16 %v3947
        %v4334 = vunpack.c.h.b16 %v3947
        %v4335 = vunpack.c.l.b16 %v3948
        %v4336 = vunpack.c.h.b16 %v3948
        %v4337 = vunpack.c.l.b16 %v3949
        %v4338 = vunpack.c.h.b16 %v3949
        %v4339 = vunpack.c.l.b16 %v3950
        %v4340 = vunpack.c.h.b16 %v3950
        %v4341 = vunpack.c.l.b16 %v3951
        %v4342 = vunpack.c.h.b16 %v3951
        %v4343 = vunpack.c.l.b16 %v3952
        %v4344 = vunpack.c.h.b16 %v3952
        %v4345 = vunpack.c.l.b16 %v3953
        %v4346 = vunpack.c.h.b16 %v3953
        %v4347 = vunpack.c.l.b16 %v3954
        %v4348 = vunpack.c.h.b16 %v3954
        %v4349 = vunpack.c.l.b16 %v3955
        %v4350 = vunpack.c.h.b16 %v3955
        %v4351 = vunpack.c.l.b16 %v3956
        %v4352 = vunpack.c.h.b16 %v3956
        %v4353 = vunpack.c.l.b16 %v3957
        %v4354 = vunpack.c.h.b16 %v3957
        %v4355 = vunpack.c.l.b16 %v3958
        %v4356 = vunpack.c.h.b16 %v3958
        %v4357 = vunpack.c.l.b16 %v3959
        %v4358 = vunpack.c.h.b16 %v3959
        %v4359 = vunpack.c.l.b16 %v3960
        %v4360 = vunpack.c.h.b16 %v3960
        %v4361 = vunpack.c.l.b16 %v3961
        %v4362 = vunpack.c.h.b16 %v3961
        %v4363 = vunpack.c.l.b16 %v3962
        %v4364 = vunpack.c.h.b16 %v3962
        %v4365 = vunpack.c.l.b16 %v3963
        %v4366 = vunpack.c.h.b16 %v3963
        %v4367 = vunpack.c.l.b16 %v3964
        %v4368 = vunpack.c.h.b16 %v3964
        %v4369 = vunpack.c.l.b16 %v3965
        %v4370 = vunpack.c.h.b16 %v3965
        %v4371 = vunpack.c.l.b16 %v3966
        %v4372 = vunpack.c.h.b16 %v3966
        %v4373 = vpack.c.b16 %v4121, %v4117
        %v4374 = vpack.c.b16 %v4122, %v4118
        %v4375 = vpack.c.b16 %v4123, %v4119
        %v4376 = vpack.c.b16 %v4124, %v4120
        %v4377 = vpack.c.b16 %v4129, %v4125
        %v4378 = vpack.c.b16 %v4130, %v4126
        %v4379 = vpack.c.b16 %v4131, %v4127
        %v4380 = vpack.c.b16 %v4132, %v4128
        %v4381 = vpack.c.b16 %v4137, %v4133
        %v4382 = vpack.c.b16 %v4138, %v4134
        %v4383 = vpack.c.b16 %v4139, %v4135
        %v4384 = vpack.c.b16 %v4140, %v4136
        %v4385 = vpack.c.b16 %v4145, %v4141
        %v4386 = vpack.c.b16 %v4146, %v4142
        %v4387 = vpack.c.b16 %v4147, %v4143
        %v4388 = vpack.c.b16 %v4148, %v4144
        %v4389 = vpack.c.b16 %v4153, %v4149
        %v4390 = vpack.c.b16 %v4154, %v4150
        %v4391 = vpack.c.b16 %v4155, %v4151
        %v4392 = vpack.c.b16 %v4156, %v4152
        %v4393 = vpack.c.b16 %v4161, %v4157
        %v4394 = vpack.c.b16 %v4162, %v4158
        %v4395 = vpack.c.b16 %v4163, %v4159
        %v4396 = vpack.c.b16 %v4164, %v4160
        %v4397 = vpack.c.b16 %v4169, %v4165
        %v4398 = vpack.c.b16 %v4170, %v4166
        %v4399 = vpack.c.b16 %v4171, %v4167
        %v4400 = vpack.c.b16 %v4172, %v4168
        %v4401 = vpack.c.b16 %v4177, %v4173
        %v4402 = vpack.c.b16 %v4178, %v4174
        %v4403 = vpack.c.b16 %v4179, %v4175
        %v4404 = vpack.c.b16 %v4180, %v4176
        %v4405 = vpack.c.b16 %v4185, %v4181
        %v4406 = vpack.c.b16 %v4186, %v4182
        %v4407 = vpack.c.b16 %v4187, %v4183
        %v4408 = vpack.c.b16 %v4188, %v4184
        %v4409 = vpack.c.b16 %v4193, %v4189
        %v4410 = vpack.c.b16 %v4194, %v4190
        %v4411 = vpack.c.b16 %v4195, %v4191
        %v4412 = vpack.c.b16 %v4196, %v4192
        %v4413 = vpack.c.b16 %v4201, %v4197
        %v4414 = vpack.c.b16 %v4202, %v4198
        %v4415 = vpack.c.b16 %v4203, %v4199
        %v4416 = vpack.c.b16 %v4204, %v4200
        %v4417 = vpack.c.b16 %v4209, %v4205
        %v4418 = vpack.c.b16 %v4210, %v4206
        %v4419 = vpack.c.b16 %v4211, %v4207
        %v4420 = vpack.c.b16 %v4212, %v4208
        %v4421 = vpack.c.b16 %v4217, %v4213
        %v4422 = vpack.c.b16 %v4218, %v4214
        %v4423 = vpack.c.b16 %v4219, %v4215
        %v4424 = vpack.c.b16 %v4220, %v4216
        %v4425 = vpack.c.b16 %v4225, %v4221
        %v4426 = vpack.c.b16 %v4226, %v4222
        %v4427 = vpack.c.b16 %v4227, %v4223
        %v4428 = vpack.c.b16 %v4228, %v4224
        %v4429 = vpack.c.b16 %v4233, %v4229
        %v4430 = vpack.c.b16 %v4234, %v4230
        %v4431 = vpack.c.b16 %v4235, %v4231
        %v4432 = vpack.c.b16 %v4236, %v4232
        %v4433 = vpack.c.b16 %v4241, %v4237
        %v4434 = vpack.c.b16 %v4242, %v4238
        %v4435 = vpack.c.b16 %v4243, %v4239
        %v4436 = vpack.c.b16 %v4244, %v4240
        %v4437 = vpack.c.b16 %v4249, %v4245
        %v4438 = vpack.c.b16 %v4250, %v4246
        %v4439 = vpack.c.b16 %v4251, %v4247
        %v4440 = vpack.c.b16 %v4252, %v4248
        %v4441 = vpack.c.b16 %v4257, %v4253
        %v4442 = vpack.c.b16 %v4258, %v4254
        %v4443 = vpack.c.b16 %v4259, %v4255
        %v4444 = vpack.c.b16 %v4260, %v4256
        %v4445 = vpack.c.b16 %v4265, %v4261
        %v4446 = vpack.c.b16 %v4266, %v4262
        %v4447 = vpack.c.b16 %v4267, %v4263
        %v4448 = vpack.c.b16 %v4268, %v4264
        %v4449 = vpack.c.b16 %v4273, %v4269
        %v4450 = vpack.c.b16 %v4274, %v4270
        %v4451 = vpack.c.b16 %v4275, %v4271
        %v4452 = vpack.c.b16 %v4276, %v4272
        %v4453 = vpack.c.b16 %v4281, %v4277
        %v4454 = vpack.c.b16 %v4282, %v4278
        %v4455 = vpack.c.b16 %v4283, %v4279
        %v4456 = vpack.c.b16 %v4284, %v4280
        %v4457 = vpack.c.b16 %v4289, %v4285
        %v4458 = vpack.c.b16 %v4290, %v4286
        %v4459 = vpack.c.b16 %v4291, %v4287
        %v4460 = vpack.c.b16 %v4292, %v4288
        %v4461 = vpack.c.b16 %v4297, %v4293
        %v4462 = vpack.c.b16 %v4298, %v4294
        %v4463 = vpack.c.b16 %v4299, %v4295
        %v4464 = vpack.c.b16 %v4300, %v4296
        %v4465 = vpack.c.b16 %v4305, %v4301
        %v4466 = vpack.c.b16 %v4306, %v4302
        %v4467 = vpack.c.b16 %v4307, %v4303
        %v4468 = vpack.c.b16 %v4308, %v4304
        %v4469 = vpack.c.b16 %v4313, %v4309
        %v4470 = vpack.c.b16 %v4314, %v4310
        %v4471 = vpack.c.b16 %v4315, %v4311
        %v4472 = vpack.c.b16 %v4316, %v4312
        %v4473 = vpack.c.b16 %v4321, %v4317
        %v4474 = vpack.c.b16 %v4322, %v4318
        %v4475 = vpack.c.b16 %v4323, %v4319
        %v4476 = vpack.c.b16 %v4324, %v4320
        %v4477 = vpack.c.b16 %v4329, %v4325
        %v4478 = vpack.c.b16 %v4330, %v4326
        %v4479 = vpack.c.b16 %v4331, %v4327
        %v4480 = vpack.c.b16 %v4332, %v4328
        %v4481 = vpack.c.b16 %v4337, %v4333
        %v4482 = vpack.c.b16 %v4338, %v4334
        %v4483 = vpack.c.b16 %v4339, %v4335
        %v4484 = vpack.c.b16 %v4340, %v4336
        %v4485 = vpack.c.b16 %v4345, %v4341
        %v4486 = vpack.c.b16 %v4346, %v4342
        %v4487 = vpack.c.b16 %v4347, %v4343
        %v4488 = vpack.c.b16 %v4348, %v4344
        %v4489 = vpack.c.b16 %v4353, %v4349
        %v4490 = vpack.c.b16 %v4354, %v4350
        %v4491 = vpack.c.b16 %v4355, %v4351
        %v4492 = vpack.c.b16 %v4356, %v4352
        %v4493 = vpack.c.b16 %v4361, %v4357
        %v4494 = vpack.c.b16 %v4362, %v4358
        %v4495 = vpack.c.b16 %v4363, %v4359
        %v4496 = vpack.c.b16 %v4364, %v4360
        %v4497 = vpack.c.b16 %v4369, %v4365
        %v4498 = vpack.c.b16 %v4370, %v4366
        %v4499 = vpack.c.b16 %v4371, %v4367
        %v4500 = vpack.c.b16 %v4372, %v4368
        %4629 = vmatprep.subr.bf16.mxu0 %v4402
        %4630 = vmatpush1.bf16.msra.mxu0 %v4401
        %4631 = vmatprep.subr.bf16.mxu0 %v4398
        %4632 = vmatpush1.bf16.msra.mxu0 %v4397
        %4633 = vmatprep.subr.bf16.mxu0 %v4394
        %4634 = vmatpush1.bf16.msra.mxu0 %v4393
        %4635 = vmatprep.subr.bf16.mxu0 %v4390
        %4636 = vmatpush1.bf16.msra.mxu0 %v4389
        %4637 = vmatprep.subr.bf16.mxu0 %v4386
        %4638 = vmatpush1.bf16.msra.mxu0 %v4385
        %4639 = vmatprep.subr.bf16.mxu0 %v4382
        %4640 = vmatpush1.bf16.msra.mxu0 %v4381
        %4641 = vmatprep.subr.bf16.mxu0 %v4378
        %4642 = vmatpush1.bf16.msra.mxu0 %v4377
        %4643 = vmatprep.subr.bf16.mxu0 %v4374
        %4644 = vmatpush1.bf16.msra.mxu0 %v4373
        %4645 = vmatprep.subr.bf16.mxu0 %v4434
        %4646 = vmatpush2.bf16.msra.mxu0 %v4433
        %4647 = vmatprep.subr.bf16.mxu0 %v4430
        %4648 = vmatpush2.bf16.msra.mxu0 %v4429
        %4649 = vmatprep.subr.bf16.mxu0 %v4426
        %4650 = vmatpush2.bf16.msra.mxu0 %v4425
        %4651 = vmatprep.subr.bf16.mxu0 %v4422
        %4652 = vmatpush2.bf16.msra.mxu0 %v4421
        %4653 = vmatprep.subr.bf16.mxu0 %v4418
        %4654 = vmatpush2.bf16.msra.mxu0 %v4417
        %4655 = vmatprep.subr.bf16.mxu0 %v4414
        %4656 = vmatpush2.bf16.msra.mxu0 %v4413
        %4657 = vmatprep.subr.bf16.mxu0 %v4410
        %4658 = vmatpush2.bf16.msra.mxu0 %v4409
        %4659 = vmatprep.subr.bf16.mxu0 %v4406
        %4660 = vmatpush2.bf16.msra.mxu0 %v4405
        %4661 = vmatprep.mubr.bf16.mxu0 %v3812
        %4662 = vmatmul.mubr.bf16.gmra.mxu0 %v3811
        %v4663 = vpop.f32.mrf.mxu0
        %v4664 = vadd.f32 %v3972, %v4663
        %v4665 = vpop.f32.mrf.mxu0
        %v4666 = vadd.f32 %v3976, %v4665
        %v4667 = vpop.f32.mrf.mxu0
        %v4668 = vadd.f32 %v3972, %v4667
        %v4669 = vpop.f32.mrf.mxu0
        %v4670 = vadd.f32 %v3976, %v4669
        %4671 = vmatprep.mubr.bf16.mxu0 %v3816
        %4672 = vmatmul.mubr.bf16.gmra.mxu0 %v3815
        %v4673 = vpop.f32.mrf.mxu0
        %v4674 = vadd.f32 %v3972, %v4673
        %v4675 = vpop.f32.mrf.mxu0
        %v4676 = vadd.f32 %v3976, %v4675
        %v4677 = vpop.f32.mrf.mxu0
        %v4678 = vadd.f32 %v3972, %v4677
        %v4679 = vpop.f32.mrf.mxu0
        %v4680 = vadd.f32 %v3976, %v4679
        %4681 = vmatprep.mubr.bf16.mxu0 %v3820
        %4682 = vmatmul.mubr.bf16.gmra.mxu0 %v3819
        %v4683 = vpop.f32.mrf.mxu0
        %v4684 = vadd.f32 %v3972, %v4683
        %v4685 = vpop.f32.mrf.mxu0
        %v4686 = vadd.f32 %v3976, %v4685
        %v4687 = vpop.f32.mrf.mxu0
        %v4688 = vadd.f32 %v3972, %v4687
        %v4689 = vpop.f32.mrf.mxu0
        %v4690 = vadd.f32 %v3976, %v4689
        %4691 = vmatprep.mubr.bf16.mxu0 %v3824
        %4692 = vmatmul.mubr.bf16.gmra.mxu0 %v3823
        %v4693 = vpop.f32.mrf.mxu0
        %v4694 = vadd.f32 %v3972, %v4693
        %v4695 = vpop.f32.mrf.mxu0
        %v4696 = vadd.f32 %v3976, %v4695
        %v4697 = vpop.f32.mrf.mxu0
        %v4698 = vadd.f32 %v3972, %v4697
        %v4699 = vpop.f32.mrf.mxu0
        %v4700 = vadd.f32 %v3976, %v4699
        %4701 = vmatprep.mubr.bf16.mxu0 %v3828
        %4702 = vmatmul.mubr.bf16.gmra.mxu0 %v3827
        %v4703 = vpop.f32.mrf.mxu0
        %v4704 = vadd.f32 %v3972, %v4703
        %v4705 = vpop.f32.mrf.mxu0
        %v4706 = vadd.f32 %v3976, %v4705
        %v4707 = vpop.f32.mrf.mxu0
        %v4708 = vadd.f32 %v3972, %v4707
        %v4709 = vpop.f32.mrf.mxu0
        %v4710 = vadd.f32 %v3976, %v4709
        %4711 = vmatprep.mubr.bf16.mxu0 %v3832
        %4712 = vmatmul.mubr.bf16.gmra.mxu0 %v3831
        %v4713 = vpop.f32.mrf.mxu0
        %v4714 = vadd.f32 %v3972, %v4713
        %v4715 = vpop.f32.mrf.mxu0
        %v4716 = vadd.f32 %v3976, %v4715
        %v4717 = vpop.f32.mrf.mxu0
        %v4718 = vadd.f32 %v3972, %v4717
        %v4719 = vpop.f32.mrf.mxu0
        %v4720 = vadd.f32 %v3976, %v4719
        %4721 = vmatprep.mubr.bf16.mxu0 %v3836
        %4722 = vmatmul.mubr.bf16.gmra.mxu0 %v3835
        %v4723 = vpop.f32.mrf.mxu0
        %v4724 = vadd.f32 %v3972, %v4723
        %v4725 = vpop.f32.mrf.mxu0
        %v4726 = vadd.f32 %v3976, %v4725
        %v4727 = vpop.f32.mrf.mxu0
        %v4728 = vpop.f32.mrf.mxu0
        %4729 = vdwg.mxu0
        %4730 = vmatprep.subr.bf16.mxu0 %v4466
        %4731 = vmatpush1.bf16.msra.mxu0 %v4465
        %4732 = vmatprep.subr.bf16.mxu0 %v4462
        %4733 = vmatpush1.bf16.msra.mxu0 %v4461
        %4734 = vmatprep.subr.bf16.mxu0 %v4458
        %4735 = vmatpush1.bf16.msra.mxu0 %v4457
        %4736 = vmatprep.subr.bf16.mxu0 %v4454
        %4737 = vmatpush1.bf16.msra.mxu0 %v4453
        %4738 = vmatprep.subr.bf16.mxu0 %v4450
        %4739 = vmatpush1.bf16.msra.mxu0 %v4449
        %4740 = vmatprep.subr.bf16.mxu0 %v4446
        %4741 = vmatpush1.bf16.msra.mxu0 %v4445
        %4742 = vmatprep.subr.bf16.mxu0 %v4442
        %4743 = vmatpush1.bf16.msra.mxu0 %v4441
        %4744 = vmatprep.subr.bf16.mxu0 %v4438
        %4745 = vmatpush1.bf16.msra.mxu0 %v4437
        %4746 = vmatprep.subr.bf16.mxu0 %v4498
        %4747 = vmatpush2.bf16.msra.mxu0 %v4497
        %4748 = vmatprep.subr.bf16.mxu0 %v4494
        %4749 = vmatpush2.bf16.msra.mxu0 %v4493
        %4750 = vmatprep.subr.bf16.mxu0 %v4490
        %4751 = vmatpush2.bf16.msra.mxu0 %v4489
        %4752 = vmatprep.subr.bf16.mxu0 %v4486
        %4753 = vmatpush2.bf16.msra.mxu0 %v4485
        %4754 = vmatprep.subr.bf16.mxu0 %v4482
        %4755 = vmatpush2.bf16.msra.mxu0 %v4481
        %4756 = vmatprep.subr.bf16.mxu0 %v4478
        %4757 = vmatpush2.bf16.msra.mxu0 %v4477
        %4758 = vmatprep.subr.bf16.mxu0 %v4474
        %4759 = vmatpush2.bf16.msra.mxu0 %v4473
        %4760 = vmatprep.subr.bf16.mxu0 %v4470
        %4761 = vmatpush2.bf16.msra.mxu0 %v4469
        %4762 = vmatprep.mubr.bf16.mxu0 %v3814
        %4763 = vmatmul.mubr.bf16.gmra.mxu0 %v3813
        %v4764 = vpop.f32.mrf.mxu0
        %v4765 = vadd.f32 %v4664, %v4764
        %v4766 = vpop.f32.mrf.mxu0
        %v4767 = vadd.f32 %v4666, %v4766
        %v4768 = vpop.f32.mrf.mxu0
        %v4769 = vadd.f32 %v4668, %v4768
        %v4770 = vpop.f32.mrf.mxu0
        %v4771 = vadd.f32 %v4670, %v4770
        %4772 = vmatprep.mubr.bf16.mxu0 %v3818
        %4773 = vmatmul.mubr.bf16.gmra.mxu0 %v3817
        %v4774 = vpop.f32.mrf.mxu0
        %v4775 = vadd.f32 %v4674, %v4774
        %v4776 = vpop.f32.mrf.mxu0
        %v4777 = vadd.f32 %v4676, %v4776
        %v4778 = vpop.f32.mrf.mxu0
        %v4779 = vadd.f32 %v4678, %v4778
        %v4780 = vpop.f32.mrf.mxu0
        %v4781 = vadd.f32 %v4680, %v4780
        %4782 = vmatprep.mubr.bf16.mxu0 %v3822
        %4783 = vmatmul.mubr.bf16.gmra.mxu0 %v3821
        %v4784 = vpop.f32.mrf.mxu0
        %v4785 = vadd.f32 %v4684, %v4784
        %v4786 = vpop.f32.mrf.mxu0
        %v4787 = vadd.f32 %v4686, %v4786
        %v4788 = vpop.f32.mrf.mxu0
        %v4789 = vadd.f32 %v4688, %v4788
        %v4790 = vpop.f32.mrf.mxu0
        %v4791 = vadd.f32 %v4690, %v4790
        %4792 = vmatprep.mubr.bf16.mxu0 %v3826
        %4793 = vmatmul.mubr.bf16.gmra.mxu0 %v3825
        %v4794 = vpop.f32.mrf.mxu0
        %v4795 = vadd.f32 %v4694, %v4794
        %v4796 = vpop.f32.mrf.mxu0
        %v4797 = vadd.f32 %v4696, %v4796
        %v4798 = vpop.f32.mrf.mxu0
        %v4799 = vadd.f32 %v4698, %v4798
        %v4800 = vpop.f32.mrf.mxu0
        %v4801 = vadd.f32 %v4700, %v4800
        %4802 = vmatprep.mubr.bf16.mxu0 %v3830
        %4803 = vmatmul.mubr.bf16.gmra.mxu0 %v3829
        %v4804 = vpop.f32.mrf.mxu0
        %v4805 = vadd.f32 %v4704, %v4804
        %v4806 = vpop.f32.mrf.mxu0
        %v4807 = vadd.f32 %v4706, %v4806
        %v4808 = vpop.f32.mrf.mxu0
        %v4809 = vadd.f32 %v4708, %v4808
        %v4810 = vpop.f32.mrf.mxu0
        %v4811 = vadd.f32 %v4710, %v4810
        %4812 = vmatprep.mubr.bf16.mxu0 %v3834
        %4813 = vmatmul.mubr.bf16.gmra.mxu0 %v3833
        %v4814 = vpop.f32.mrf.mxu0
        %v4815 = vadd.f32 %v4714, %v4814
        %v4816 = vpop.f32.mrf.mxu0
        %v4817 = vadd.f32 %v4716, %v4816
        %v4818 = vpop.f32.mrf.mxu0
        %v4819 = vadd.f32 %v4718, %v4818
        %v4820 = vpop.f32.mrf.mxu0
        %v4821 = vadd.f32 %v4720, %v4820
        %4822 = vmatprep.mubr.bf16.mxu0 %v3838
        %4823 = vmatmul.mubr.bf16.gmra.mxu0 %v3837
        %v4824 = vpop.f32.mrf.mxu0
        %v4825 = vadd.f32 %v4724, %v4824
        %v4826 = vpop.f32.mrf.mxu0
        %v4827 = vadd.f32 %v4726, %v4826
        %v4828 = vpop.f32.mrf.mxu0
        %v4829 = vpop.f32.mrf.mxu0
        %4830 = vdwg.mxu0
        %4831 = vmatprep.subr.bf16.mxu0 %v4404
        %4832 = vmatpush1.bf16.msra.mxu0 %v4403
        %4833 = vmatprep.subr.bf16.mxu0 %v4400
        %4834 = vmatpush1.bf16.msra.mxu0 %v4399
        %4835 = vmatprep.subr.bf16.mxu0 %v4396
        %4836 = vmatpush1.bf16.msra.mxu0 %v4395
        %4837 = vmatprep.subr.bf16.mxu0 %v4392
        %4838 = vmatpush1.bf16.msra.mxu0 %v4391
        %4839 = vmatprep.subr.bf16.mxu0 %v4388
        %4840 = vmatpush1.bf16.msra.mxu0 %v4387
        %4841 = vmatprep.subr.bf16.mxu0 %v4384
        %4842 = vmatpush1.bf16.msra.mxu0 %v4383
        %4843 = vmatprep.subr.bf16.mxu0 %v4380
        %4844 = vmatpush1.bf16.msra.mxu0 %v4379
        %4845 = vmatprep.subr.bf16.mxu0 %v4376
        %4846 = vmatpush1.bf16.msra.mxu0 %v4375
        %4847 = vmatprep.subr.bf16.mxu0 %v4436
        %4848 = vmatpush2.bf16.msra.mxu0 %v4435
        %4849 = vmatprep.subr.bf16.mxu0 %v4432
        %4850 = vmatpush2.bf16.msra.mxu0 %v4431
        %4851 = vmatprep.subr.bf16.mxu0 %v4428
        %4852 = vmatpush2.bf16.msra.mxu0 %v4427
        %4853 = vmatprep.subr.bf16.mxu0 %v4424
        %4854 = vmatpush2.bf16.msra.mxu0 %v4423
        %4855 = vmatprep.subr.bf16.mxu0 %v4420
        %4856 = vmatpush2.bf16.msra.mxu0 %v4419
        %4857 = vmatprep.subr.bf16.mxu0 %v4416
        %4858 = vmatpush2.bf16.msra.mxu0 %v4415
        %4859 = vmatprep.subr.bf16.mxu0 %v4412
        %4860 = vmatpush2.bf16.msra.mxu0 %v4411
        %4861 = vmatprep.subr.bf16.mxu0 %v4408
        %4862 = vmatpush2.bf16.msra.mxu0 %v4407
        %4863 = vmatprep.mubr.bf16.mxu0 %v3812
        %4864 = vmatmul.mubr.bf16.gmra.mxu0 %v3811
        %v4865 = vpop.f32.mrf.mxu0
        %v4866 = vadd.f32 %v3980, %v4865
        %v4867 = vpop.f32.mrf.mxu0
        %v4868 = vadd.f32 %v3984, %v4867
        %v4869 = vpop.f32.mrf.mxu0
        %v4870 = vadd.f32 %v3980, %v4869
        %v4871 = vpop.f32.mrf.mxu0
        %v4872 = vadd.f32 %v3984, %v4871
        %4873 = vmatprep.mubr.bf16.mxu0 %v3816
        %4874 = vmatmul.mubr.bf16.gmra.mxu0 %v3815
        %v4875 = vpop.f32.mrf.mxu0
        %v4876 = vadd.f32 %v3980, %v4875
        %v4877 = vpop.f32.mrf.mxu0
        %v4878 = vadd.f32 %v3984, %v4877
        %v4879 = vpop.f32.mrf.mxu0
        %v4880 = vadd.f32 %v3980, %v4879
        %v4881 = vpop.f32.mrf.mxu0
        %v4882 = vadd.f32 %v3984, %v4881
        %4883 = vmatprep.mubr.bf16.mxu0 %v3820
        %4884 = vmatmul.mubr.bf16.gmra.mxu0 %v3819
        %v4885 = vpop.f32.mrf.mxu0
        %v4886 = vadd.f32 %v3980, %v4885
        %v4887 = vpop.f32.mrf.mxu0
        %v4888 = vadd.f32 %v3984, %v4887
        %v4889 = vpop.f32.mrf.mxu0
        %v4890 = vadd.f32 %v3980, %v4889
        %v4891 = vpop.f32.mrf.mxu0
        %v4892 = vadd.f32 %v3984, %v4891
        %4893 = vmatprep.mubr.bf16.mxu0 %v3824
        %4894 = vmatmul.mubr.bf16.gmra.mxu0 %v3823
        %v4895 = vpop.f32.mrf.mxu0
        %v4896 = vadd.f32 %v3980, %v4895
        %v4897 = vpop.f32.mrf.mxu0
        %v4898 = vadd.f32 %v3984, %v4897
        %v4899 = vpop.f32.mrf.mxu0
        %v4900 = vadd.f32 %v3980, %v4899
        %v4901 = vpop.f32.mrf.mxu0
        %v4902 = vadd.f32 %v3984, %v4901
        %4903 = vmatprep.mubr.bf16.mxu0 %v3828
        %4904 = vmatmul.mubr.bf16.gmra.mxu0 %v3827
        %v4905 = vpop.f32.mrf.mxu0
        %v4906 = vadd.f32 %v3980, %v4905
        %v4907 = vpop.f32.mrf.mxu0
        %v4908 = vadd.f32 %v3984, %v4907
        %v4909 = vpop.f32.mrf.mxu0
        %v4910 = vadd.f32 %v3980, %v4909
        %v4911 = vpop.f32.mrf.mxu0
        %v4912 = vadd.f32 %v3984, %v4911
        %4913 = vmatprep.mubr.bf16.mxu0 %v3832
        %4914 = vmatmul.mubr.bf16.gmra.mxu0 %v3831
        %v4915 = vpop.f32.mrf.mxu0
        %v4916 = vadd.f32 %v3980, %v4915
        %v4917 = vpop.f32.mrf.mxu0
        %v4918 = vadd.f32 %v3984, %v4917
        %v4919 = vpop.f32.mrf.mxu0
        %v4920 = vadd.f32 %v3980, %v4919
        %v4921 = vpop.f32.mrf.mxu0
        %v4922 = vadd.f32 %v3984, %v4921
        %4923 = vmatprep.mubr.bf16.mxu0 %v3836
        %4924 = vmatmul.mubr.bf16.gmra.mxu0 %v3835
        %v4925 = vpop.f32.mrf.mxu0
        %v4926 = vadd.f32 %v3980, %v4925
        %v4927 = vpop.f32.mrf.mxu0
        %v4928 = vadd.f32 %v3984, %v4927
        %v4929 = vpop.f32.mrf.mxu0
        %v4930 = vpop.f32.mrf.mxu0
        %4931 = vdwg.mxu0
        %4932 = vmatprep.subr.bf16.mxu0 %v4468
        %4933 = vmatpush1.bf16.msra.mxu0 %v4467
        %4934 = vmatprep.subr.bf16.mxu0 %v4464
        %4935 = vmatpush1.bf16.msra.mxu0 %v4463
        %4936 = vmatprep.subr.bf16.mxu0 %v4460
        %4937 = vmatpush1.bf16.msra.mxu0 %v4459
        %4938 = vmatprep.subr.bf16.mxu0 %v4456
        %4939 = vmatpush1.bf16.msra.mxu0 %v4455
        %4940 = vmatprep.subr.bf16.mxu0 %v4452
        %4941 = vmatpush1.bf16.msra.mxu0 %v4451
        %4942 = vmatprep.subr.bf16.mxu0 %v4448
        %4943 = vmatpush1.bf16.msra.mxu0 %v4447
        %4944 = vmatprep.subr.bf16.mxu0 %v4444
        %4945 = vmatpush1.bf16.msra.mxu0 %v4443
        %4946 = vmatprep.subr.bf16.mxu0 %v4440
        %4947 = vmatpush1.bf16.msra.mxu0 %v4439
        %4948 = vmatprep.subr.bf16.mxu0 %v4500
        %4949 = vmatpush2.bf16.msra.mxu0 %v4499
        %4950 = vmatprep.subr.bf16.mxu0 %v4496
        %4951 = vmatpush2.bf16.msra.mxu0 %v4495
        %4952 = vmatprep.subr.bf16.mxu0 %v4492
        %4953 = vmatpush2.bf16.msra.mxu0 %v4491
        %4954 = vmatprep.subr.bf16.mxu0 %v4488
        %4955 = vmatpush2.bf16.msra.mxu0 %v4487
        %4956 = vmatprep.subr.bf16.mxu0 %v4484
        %4957 = vmatpush2.bf16.msra.mxu0 %v4483
        %4958 = vmatprep.subr.bf16.mxu0 %v4480
        %4959 = vmatpush2.bf16.msra.mxu0 %v4479
        %4960 = vmatprep.subr.bf16.mxu0 %v4476
        %4961 = vmatpush2.bf16.msra.mxu0 %v4475
        %4962 = vmatprep.subr.bf16.mxu0 %v4472
        %4963 = vmatpush2.bf16.msra.mxu0 %v4471
        %4964 = vmatprep.mubr.bf16.mxu0 %v3814
        %4965 = vmatmul.mubr.bf16.gmra.mxu0 %v3813
        %v4966 = vpop.f32.mrf.mxu0
        %v4967 = vadd.f32 %v4866, %v4966
        %v4968 = vpop.f32.mrf.mxu0
        %v4969 = vadd.f32 %v4868, %v4968
        %v4970 = vpop.f32.mrf.mxu0
        %v4971 = vadd.f32 %v4870, %v4970
        %v4972 = vpop.f32.mrf.mxu0
        %v4973 = vadd.f32 %v4872, %v4972
        %4974 = vmatprep.mubr.bf16.mxu0 %v3818
        %4975 = vmatmul.mubr.bf16.gmra.mxu0 %v3817
        %v4976 = vpop.f32.mrf.mxu0
        %v4977 = vadd.f32 %v4876, %v4976
        %v4978 = vpop.f32.mrf.mxu0
        %v4979 = vadd.f32 %v4878, %v4978
        %v4980 = vpop.f32.mrf.mxu0
        %v4981 = vadd.f32 %v4880, %v4980
        %v4982 = vpop.f32.mrf.mxu0
        %v4983 = vadd.f32 %v4882, %v4982
        %4984 = vmatprep.mubr.bf16.mxu0 %v3822
        %4985 = vmatmul.mubr.bf16.gmra.mxu0 %v3821
        %v4986 = vpop.f32.mrf.mxu0
        %v4987 = vadd.f32 %v4886, %v4986
        %v4988 = vpop.f32.mrf.mxu0
        %v4989 = vadd.f32 %v4888, %v4988
        %v4990 = vpop.f32.mrf.mxu0
        %v4991 = vadd.f32 %v4890, %v4990
        %v4992 = vpop.f32.mrf.mxu0
        %v4993 = vadd.f32 %v4892, %v4992
        %4994 = vmatprep.mubr.bf16.mxu0 %v3826
        %4995 = vmatmul.mubr.bf16.gmra.mxu0 %v3825
        %v4996 = vpop.f32.mrf.mxu0
        %v4997 = vadd.f32 %v4896, %v4996
        %v4998 = vpop.f32.mrf.mxu0
        %v4999 = vadd.f32 %v4898, %v4998
        %v5000 = vpop.f32.mrf.mxu0
        %v5001 = vadd.f32 %v4900, %v5000
        %v5002 = vpop.f32.mrf.mxu0
        %v5003 = vadd.f32 %v4902, %v5002
        %5004 = vmatprep.mubr.bf16.mxu0 %v3830
        %5005 = vmatmul.mubr.bf16.gmra.mxu0 %v3829
        %v5006 = vpop.f32.mrf.mxu0
        %v5007 = vadd.f32 %v4906, %v5006
        %v5008 = vpop.f32.mrf.mxu0
        %v5009 = vadd.f32 %v4908, %v5008
        %v5010 = vpop.f32.mrf.mxu0
        %v5011 = vadd.f32 %v4910, %v5010
        %v5012 = vpop.f32.mrf.mxu0
        %v5013 = vadd.f32 %v4912, %v5012
        %5014 = vmatprep.mubr.bf16.mxu0 %v3834
        %5015 = vmatmul.mubr.bf16.gmra.mxu0 %v3833
        %v5016 = vpop.f32.mrf.mxu0
        %v5017 = vadd.f32 %v4916, %v5016
        %v5018 = vpop.f32.mrf.mxu0
        %v5019 = vadd.f32 %v4918, %v5018
        %v5020 = vpop.f32.mrf.mxu0
        %v5021 = vadd.f32 %v4920, %v5020
        %v5022 = vpop.f32.mrf.mxu0
        %v5023 = vadd.f32 %v4922, %v5022
        %5024 = vmatprep.mubr.bf16.mxu0 %v3838
        %5025 = vmatmul.mubr.bf16.gmra.mxu0 %v3837
        %v5026 = vpop.f32.mrf.mxu0
        %v5027 = vadd.f32 %v4926, %v5026
        %v5028 = vpop.f32.mrf.mxu0
        %v5029 = vadd.f32 %v4928, %v5028
        %v5030 = vpop.f32.mrf.mxu0
        %v5031 = vpop.f32.mrf.mxu0
        %5032 = vdwg.mxu0
        %v5033 = vmax.f32 %v4765, 0.0
        %v5034 = vmax.f32 %v4767, 0.0
        %v5035 = vmax.f32 %v4967, 0.0
        %v5036 = vmax.f32 %v4969, 0.0
        %v5037 = vmax.f32 %v4769, 0.0
        %v5038 = vmax.f32 %v4771, 0.0
        %v5039 = vmax.f32 %v4971, 0.0
        %v5040 = vmax.f32 %v4973, 0.0
        %v5041 = vmax.f32 %v4775, 0.0
        %v5042 = vmax.f32 %v4777, 0.0
        %v5043 = vmax.f32 %v4977, 0.0
        %v5044 = vmax.f32 %v4979, 0.0
        %v5045 = vmax.f32 %v4779, 0.0
        %v5046 = vmax.f32 %v4781, 0.0
        %v5047 = vmax.f32 %v4981, 0.0
        %v5048 = vmax.f32 %v4983, 0.0
        %v5049 = vmax.f32 %v4785, 0.0
        %v5050 = vmax.f32 %v4787, 0.0
        %v5051 = vmax.f32 %v4987, 0.0
        %v5052 = vmax.f32 %v4989, 0.0
        %v5053 = vmax.f32 %v4789, 0.0
        %v5054 = vmax.f32 %v4791, 0.0
        %v5055 = vmax.f32 %v4991, 0.0
        %v5056 = vmax.f32 %v4993, 0.0
        %v5057 = vmax.f32 %v4795, 0.0
        %v5058 = vmax.f32 %v4797, 0.0
        %v5059 = vmax.f32 %v4997, 0.0
        %v5060 = vmax.f32 %v4999, 0.0
        %v5061 = vmax.f32 %v4799, 0.0
        %v5062 = vmax.f32 %v4801, 0.0
        %v5063 = vmax.f32 %v5001, 0.0
        %v5064 = vmax.f32 %v5003, 0.0
        %v5065 = vmax.f32 %v4805, 0.0
        %v5066 = vmax.f32 %v4807, 0.0
        %v5067 = vmax.f32 %v5007, 0.0
        %v5068 = vmax.f32 %v5009, 0.0
        %v5069 = vmax.f32 %v4809, 0.0
        %v5070 = vmax.f32 %v4811, 0.0
        %v5071 = vmax.f32 %v5011, 0.0
        %v5072 = vmax.f32 %v5013, 0.0
        %v5073 = vmax.f32 %v4815, 0.0
        %v5074 = vmax.f32 %v4817, 0.0
        %v5075 = vmax.f32 %v5017, 0.0
        %v5076 = vmax.f32 %v5019, 0.0
        %v5077 = vmax.f32 %v4819, 0.0
        %v5078 = vmax.f32 %v4821, 0.0
        %v5079 = vmax.f32 %v5021, 0.0
        %v5080 = vmax.f32 %v5023, 0.0
        %v5081 = vmax.f32 %v4825, 0.0
        %v5082 = vmax.f32 %v4827, 0.0
        %v5083 = vmax.f32 %v5027, 0.0
        %v5084 = vmax.f32 %v5029, 0.0
        %v5085 = vpack.c.bf16 %v5037, %v5033
        %v5086 = vpack.c.bf16 %v5038, %v5034
        %v5087 = vpack.c.bf16 %v5039, %v5035
        %v5088 = vpack.c.bf16 %v5040, %v5036
        %v5089 = vpack.c.bf16 %v5045, %v5041
        %v5090 = vpack.c.bf16 %v5046, %v5042
        %v5091 = vpack.c.bf16 %v5047, %v5043
        %v5092 = vpack.c.bf16 %v5048, %v5044
        %v5093 = vpack.c.bf16 %v5053, %v5049
        %v5094 = vpack.c.bf16 %v5054, %v5050
        %v5095 = vpack.c.bf16 %v5055, %v5051
        %v5096 = vpack.c.bf16 %v5056, %v5052
        %v5097 = vpack.c.bf16 %v5061, %v5057
        %v5098 = vpack.c.bf16 %v5062, %v5058
        %v5099 = vpack.c.bf16 %v5063, %v5059
        %v5100 = vpack.c.bf16 %v5064, %v5060
        %v5101 = vpack.c.bf16 %v5069, %v5065
        %v5102 = vpack.c.bf16 %v5070, %v5066
        %v5103 = vpack.c.bf16 %v5071, %v5067
        %v5104 = vpack.c.bf16 %v5072, %v5068
        %v5105 = vpack.c.bf16 %v5077, %v5073
        %v5106 = vpack.c.bf16 %v5078, %v5074
        %v5107 = vpack.c.bf16 %v5079, %v5075
        %v5108 = vpack.c.bf16 %v5080, %v5076
        %v5109 = vpack.c.bf16 %v5081, %v5081
        %v5110 = vpack.c.bf16 %v5082, %v5082
        %v5111 = vpack.c.bf16 %v5083, %v5083
        %v5112 = vpack.c.bf16 %v5084, %v5084
        %v5113 = vld [vmem:[#allocation11] sm:$0xff]
        %v5114 = vld [vmem:[#allocation11 + $0x8] sm:$0xff]
        %v5115 = vld [vmem:[#allocation11 + $0x10] sm:$0xff]
        %v5116 = vld [vmem:[#allocation11 + $0x18] sm:$0xff]
        %v5117 = vld [vmem:[#allocation11 + $0x20] sm:$0xff]
        %v5118 = vld [vmem:[#allocation11 + $0x28] sm:$0xff]
        %v5119 = vld [vmem:[#allocation11 + $0x30] sm:$0xff]
        %v5120 = vld [vmem:[#allocation11 + $0x38] sm:$0xff]
        %v5121 = vld [vmem:[#allocation11 + $0x40] sm:$0xff]
        %v5122 = vld [vmem:[#allocation11 + $0x48] sm:$0xff]
        %v5123 = vld [vmem:[#allocation11 + $0x50] sm:$0xff]
        %v5124 = vld [vmem:[#allocation11 + $0x58] sm:$0xff]
        %v5125 = vld [vmem:[#allocation11 + $0x60] sm:$0xff]
        %v5126 = vld [vmem:[#allocation11 + $0x68] sm:$0xff]
        %v5127 = vld [vmem:[#allocation11 + $0x70] sm:$0xff]
        %v5128 = vld [vmem:[#allocation11 + $0x78] sm:$0xff]
        %v5129 = vld [vmem:[#allocation11 + $0x80] sm:$0xff]
        %v5130 = vld [vmem:[#allocation11 + $0x88] sm:$0xff]
        %v5131 = vld [vmem:[#allocation11 + $0x90] sm:$0xff]
        %v5132 = vld [vmem:[#allocation11 + $0x98] sm:$0xff]
        %v5133 = vld [vmem:[#allocation11 + $0xa0] sm:$0xff]
        %v5134 = vld [vmem:[#allocation11 + $0xa8] sm:$0xff]
        %v5135 = vld [vmem:[#allocation11 + $0xb0] sm:$0xff]
        %v5136 = vld [vmem:[#allocation11 + $0xb8] sm:$0xff]
        %v5137 = vld [vmem:[#allocation11 + $0xc0] sm:$0xff]
        %v5138 = vld [vmem:[#allocation11 + $0xc8] sm:$0xff]
        %v5139 = vld [vmem:[#allocation11 + $0xd0] sm:$0xff]
        %v5140 = vld [vmem:[#allocation11 + $0xd8] sm:$0xff]
        %v5141 = vld [vmem:[#allocation11 + $0xe0] sm:$0xff]
        %v5142 = vld [vmem:[#allocation11 + $0xe8] sm:$0xff]
        %v5143 = vld [vmem:[#allocation11 + $0xf0] sm:$0xff]
        %v5144 = vld [vmem:[#allocation11 + $0xf8] sm:$0xff]
        %v5145 = vld [vmem:[#allocation11 + $0x100] sm:$0xff]
        %v5146 = vld [vmem:[#allocation11 + $0x108] sm:$0xff]
        %v5147 = vld [vmem:[#allocation11 + $0x110] sm:$0xff]
        %v5148 = vld [vmem:[#allocation11 + $0x118] sm:$0xff]
        %v5149 = vld [vmem:[#allocation11 + $0x120] sm:$0xff]
        %v5150 = vld [vmem:[#allocation11 + $0x128] sm:$0xff]
        %v5151 = vld [vmem:[#allocation11 + $0x130] sm:$0xff]
        %v5152 = vld [vmem:[#allocation11 + $0x138] sm:$0xff]
        %v5153 = vld [vmem:[#allocation11 + $0x140] sm:$0xff]
        %v5154 = vld [vmem:[#allocation11 + $0x148] sm:$0xff]
        %v5155 = vld [vmem:[#allocation11 + $0x150] sm:$0xff]
        %v5156 = vld [vmem:[#allocation11 + $0x158] sm:$0xff]
        %v5157 = vld [vmem:[#allocation11 + $0x160] sm:$0xff]
        %v5158 = vld [vmem:[#allocation11 + $0x168] sm:$0xff]
        %v5159 = vld [vmem:[#allocation11 + $0x170] sm:$0xff]
        %v5160 = vld [vmem:[#allocation11 + $0x178] sm:$0xff]
        %v5161 = vld [vmem:[#allocation11 + $0x180] sm:$0xff]
        %v5162 = vld [vmem:[#allocation11 + $0x188] sm:$0xff]
        %v5163 = vld [vmem:[#allocation11 + $0x190] sm:$0xff]
        %v5164 = vld [vmem:[#allocation11 + $0x198] sm:$0xff]
        %v5165 = vld [vmem:[#allocation11 + $0x1a0] sm:$0xff]
        %v5166 = vld [vmem:[#allocation11 + $0x1a8] sm:$0xff]
        %v5167 = vld [vmem:[#allocation11 + $0x1b0] sm:$0xff]
        %v5168 = vld [vmem:[#allocation11 + $0x1b8] sm:$0xff]
        %v5169 = vld [vmem:[#allocation11 + $0x1c0] sm:$0xff]
        %v5170 = vld [vmem:[#allocation11 + $0x1c8] sm:$0xff]
        %v5171 = vld [vmem:[#allocation11 + $0x1d0] sm:$0xff]
        %v5172 = vld [vmem:[#allocation11 + $0x1d8] sm:$0xff]
        %v5173 = vld [vmem:[#allocation11 + $0x1e0] sm:$0xff]
        %v5174 = vld [vmem:[#allocation11 + $0x1e8] sm:$0xff]
        %v5175 = vld [vmem:[#allocation11 + $0x1f0] sm:$0xff]
        %v5176 = vld [vmem:[#allocation11 + $0x1f8] sm:$0xff]
        %v5177 = vld [vmem:[#allocation11 + $0x200] sm:$0xff]
        %v5178 = vld [vmem:[#allocation11 + $0x208] sm:$0xff]
        %v5179 = vld [vmem:[#allocation11 + $0x210] sm:$0xff]
        %v5180 = vld [vmem:[#allocation11 + $0x218] sm:$0xff]
        %v5181 = vld [vmem:[#allocation11 + $0x220] sm:$0xff]
        %v5182 = vld [vmem:[#allocation11 + $0x228] sm:$0xff]
        %v5183 = vld [vmem:[#allocation11 + $0x230] sm:$0xff]
        %v5184 = vld [vmem:[#allocation11 + $0x238] sm:$0xff]
        %v5185 = vld [vmem:[#allocation11 + $0x240] sm:$0xff]
        %v5186 = vld [vmem:[#allocation11 + $0x248] sm:$0xff]
        %v5187 = vld [vmem:[#allocation11 + $0x250] sm:$0xff]
        %v5188 = vld [vmem:[#allocation11 + $0x258] sm:$0xff]
        %v5189 = vld [vmem:[#allocation11 + $0x260] sm:$0xff]
        %v5190 = vld [vmem:[#allocation11 + $0x268] sm:$0xff]
        %v5191 = vld [vmem:[#allocation11 + $0x270] sm:$0xff]
        %v5192 = vld [vmem:[#allocation11 + $0x278] sm:$0xff]
        %v5193 = vld [vmem:[#allocation11 + $0x280] sm:$0xff]
        %v5194 = vld [vmem:[#allocation11 + $0x288] sm:$0xff]
        %v5195 = vld [vmem:[#allocation11 + $0x290] sm:$0xff]
        %v5196 = vld [vmem:[#allocation11 + $0x298] sm:$0xff]
        %v5197 = vld [vmem:[#allocation11 + $0x2a0] sm:$0xff]
        %v5198 = vld [vmem:[#allocation11 + $0x2a8] sm:$0xff]
        %v5199 = vld [vmem:[#allocation11 + $0x2b0] sm:$0xff]
        %v5200 = vld [vmem:[#allocation11 + $0x2b8] sm:$0xff]
        %v5201 = vld [vmem:[#allocation11 + $0x2c0] sm:$0xff]
        %v5202 = vld [vmem:[#allocation11 + $0x2c8] sm:$0xff]
        %v5203 = vld [vmem:[#allocation11 + $0x2d0] sm:$0xff]
        %v5204 = vld [vmem:[#allocation11 + $0x2d8] sm:$0xff]
        %v5205 = vld [vmem:[#allocation11 + $0x2e0] sm:$0xff]
        %v5206 = vld [vmem:[#allocation11 + $0x2e8] sm:$0xff]
        %v5207 = vld [vmem:[#allocation11 + $0x2f0] sm:$0xff]
        %v5208 = vld [vmem:[#allocation11 + $0x2f8] sm:$0xff]
        %v5209 = vld [vmem:[#allocation11 + $0x300] sm:$0xff]
        %v5210 = vld [vmem:[#allocation11 + $0x308] sm:$0xff]
        %v5211 = vld [vmem:[#allocation11 + $0x310] sm:$0xff]
        %v5212 = vld [vmem:[#allocation11 + $0x318] sm:$0xff]
        %v5213 = vld [vmem:[#allocation11 + $0x320] sm:$0xff]
        %v5214 = vld [vmem:[#allocation11 + $0x328] sm:$0xff]
        %v5215 = vld [vmem:[#allocation11 + $0x330] sm:$0xff]
        %v5216 = vld [vmem:[#allocation11 + $0x338] sm:$0xff]
        %v5217 = vld [vmem:[#allocation11 + $0x340] sm:$0xff]
        %v5218 = vld [vmem:[#allocation11 + $0x348] sm:$0xff]
        %v5219 = vld [vmem:[#allocation11 + $0x350] sm:$0xff]
        %v5220 = vld [vmem:[#allocation11 + $0x358] sm:$0xff]
        %v5221 = vld [vmem:[#allocation11 + $0x360] sm:$0xff]
        %v5222 = vld [vmem:[#allocation11 + $0x368] sm:$0xff]
        %v5223 = vld [vmem:[#allocation11 + $0x370] sm:$0xff]
        %v5224 = vld [vmem:[#allocation11 + $0x378] sm:$0xff]
        %v5225 = vld [vmem:[#allocation11 + $0x380] sm:$0xff]
        %v5226 = vld [vmem:[#allocation11 + $0x388] sm:$0xff]
        %v5227 = vld [vmem:[#allocation11 + $0x390] sm:$0xff]
        %v5228 = vld [vmem:[#allocation11 + $0x398] sm:$0xff]
        %v5229 = vld [vmem:[#allocation11 + $0x3a0] sm:$0xff]
        %v5230 = vld [vmem:[#allocation11 + $0x3a8] sm:$0xff]
        %v5231 = vld [vmem:[#allocation11 + $0x3b0] sm:$0xff]
        %v5232 = vld [vmem:[#allocation11 + $0x3b8] sm:$0xff]
        %v5233 = vld [vmem:[#allocation11 + $0x3c0] sm:$0xff]
        %v5234 = vld [vmem:[#allocation11 + $0x3c8] sm:$0xff]
        %v5235 = vld [vmem:[#allocation11 + $0x3d0] sm:$0xff]
        %v5236 = vld [vmem:[#allocation11 + $0x3d8] sm:$0xff]
        %v5237 = vld [vmem:[#allocation11 + $0x3e0] sm:$0xff]
        %v5238 = vld [vmem:[#allocation11 + $0x3e8] sm:$0xff]
        %v5239 = vld [vmem:[#allocation11 + $0x3f0] sm:$0xff]
        %v5240 = vld [vmem:[#allocation11 + $0x3f8] sm:$0xff]
        %v5241 = vld [vmem:[%s6] sm:$0xf]
        %v5243 = vlaneseq
        %v5244 = vshrl.u32 %v5243, 7
        %v5245 = vsub.s32 0, %v5244
        %v5246 = vrot.slane %v5241, %v5245
        %v5247 = vlaneseq
        %v5248 = vshrl.u32 %v5247, 7
        %v5249 = vsub.s32 1, %v5248
        %v5250 = vrot.slane %v5241, %v5249
        %v5251 = vlaneseq
        %v5252 = vshrl.u32 %v5251, 7
        %v5253 = vsub.s32 2, %v5252
        %v5254 = vrot.slane %v5241, %v5253
        %v5255 = vlaneseq
        %v5256 = vshrl.u32 %v5255, 7
        %v5257 = vsub.s32 3, %v5256
        %v5258 = vrot.slane %v5241, %v5257
        %v5391 = vunpack.c.l.b16 %v5113
        %v5392 = vunpack.c.h.b16 %v5113
        %v5393 = vunpack.c.l.b16 %v5114
        %v5394 = vunpack.c.h.b16 %v5114
        %v5395 = vunpack.c.l.b16 %v5115
        %v5396 = vunpack.c.h.b16 %v5115
        %v5397 = vunpack.c.l.b16 %v5116
        %v5398 = vunpack.c.h.b16 %v5116
        %v5399 = vunpack.c.l.b16 %v5117
        %v5400 = vunpack.c.h.b16 %v5117
        %v5401 = vunpack.c.l.b16 %v5118
        %v5402 = vunpack.c.h.b16 %v5118
        %v5403 = vunpack.c.l.b16 %v5119
        %v5404 = vunpack.c.h.b16 %v5119
        %v5405 = vunpack.c.l.b16 %v5120
        %v5406 = vunpack.c.h.b16 %v5120
        %v5407 = vunpack.c.l.b16 %v5121
        %v5408 = vunpack.c.h.b16 %v5121
        %v5409 = vunpack.c.l.b16 %v5122
        %v5410 = vunpack.c.h.b16 %v5122
        %v5411 = vunpack.c.l.b16 %v5123
        %v5412 = vunpack.c.h.b16 %v5123
        %v5413 = vunpack.c.l.b16 %v5124
        %v5414 = vunpack.c.h.b16 %v5124
        %v5415 = vunpack.c.l.b16 %v5125
        %v5416 = vunpack.c.h.b16 %v5125
        %v5417 = vunpack.c.l.b16 %v5126
        %v5418 = vunpack.c.h.b16 %v5126
        %v5419 = vunpack.c.l.b16 %v5127
        %v5420 = vunpack.c.h.b16 %v5127
        %v5421 = vunpack.c.l.b16 %v5128
        %v5422 = vunpack.c.h.b16 %v5128
        %v5423 = vunpack.c.l.b16 %v5129
        %v5424 = vunpack.c.h.b16 %v5129
        %v5425 = vunpack.c.l.b16 %v5130
        %v5426 = vunpack.c.h.b16 %v5130
        %v5427 = vunpack.c.l.b16 %v5131
        %v5428 = vunpack.c.h.b16 %v5131
        %v5429 = vunpack.c.l.b16 %v5132
        %v5430 = vunpack.c.h.b16 %v5132
        %v5431 = vunpack.c.l.b16 %v5133
        %v5432 = vunpack.c.h.b16 %v5133
        %v5433 = vunpack.c.l.b16 %v5134
        %v5434 = vunpack.c.h.b16 %v5134
        %v5435 = vunpack.c.l.b16 %v5135
        %v5436 = vunpack.c.h.b16 %v5135
        %v5437 = vunpack.c.l.b16 %v5136
        %v5438 = vunpack.c.h.b16 %v5136
        %v5439 = vunpack.c.l.b16 %v5137
        %v5440 = vunpack.c.h.b16 %v5137
        %v5441 = vunpack.c.l.b16 %v5138
        %v5442 = vunpack.c.h.b16 %v5138
        %v5443 = vunpack.c.l.b16 %v5139
        %v5444 = vunpack.c.h.b16 %v5139
        %v5445 = vunpack.c.l.b16 %v5140
        %v5446 = vunpack.c.h.b16 %v5140
        %v5447 = vunpack.c.l.b16 %v5141
        %v5448 = vunpack.c.h.b16 %v5141
        %v5449 = vunpack.c.l.b16 %v5142
        %v5450 = vunpack.c.h.b16 %v5142
        %v5451 = vunpack.c.l.b16 %v5143
        %v5452 = vunpack.c.h.b16 %v5143
        %v5453 = vunpack.c.l.b16 %v5144
        %v5454 = vunpack.c.h.b16 %v5144
        %v5455 = vunpack.c.l.b16 %v5145
        %v5456 = vunpack.c.h.b16 %v5145
        %v5457 = vunpack.c.l.b16 %v5146
        %v5458 = vunpack.c.h.b16 %v5146
        %v5459 = vunpack.c.l.b16 %v5147
        %v5460 = vunpack.c.h.b16 %v5147
        %v5461 = vunpack.c.l.b16 %v5148
        %v5462 = vunpack.c.h.b16 %v5148
        %v5463 = vunpack.c.l.b16 %v5149
        %v5464 = vunpack.c.h.b16 %v5149
        %v5465 = vunpack.c.l.b16 %v5150
        %v5466 = vunpack.c.h.b16 %v5150
        %v5467 = vunpack.c.l.b16 %v5151
        %v5468 = vunpack.c.h.b16 %v5151
        %v5469 = vunpack.c.l.b16 %v5152
        %v5470 = vunpack.c.h.b16 %v5152
        %v5471 = vunpack.c.l.b16 %v5153
        %v5472 = vunpack.c.h.b16 %v5153
        %v5473 = vunpack.c.l.b16 %v5154
        %v5474 = vunpack.c.h.b16 %v5154
        %v5475 = vunpack.c.l.b16 %v5155
        %v5476 = vunpack.c.h.b16 %v5155
        %v5477 = vunpack.c.l.b16 %v5156
        %v5478 = vunpack.c.h.b16 %v5156
        %v5479 = vunpack.c.l.b16 %v5157
        %v5480 = vunpack.c.h.b16 %v5157
        %v5481 = vunpack.c.l.b16 %v5158
        %v5482 = vunpack.c.h.b16 %v5158
        %v5483 = vunpack.c.l.b16 %v5159
        %v5484 = vunpack.c.h.b16 %v5159
        %v5485 = vunpack.c.l.b16 %v5160
        %v5486 = vunpack.c.h.b16 %v5160
        %v5487 = vunpack.c.l.b16 %v5161
        %v5488 = vunpack.c.h.b16 %v5161
        %v5489 = vunpack.c.l.b16 %v5162
        %v5490 = vunpack.c.h.b16 %v5162
        %v5491 = vunpack.c.l.b16 %v5163
        %v5492 = vunpack.c.h.b16 %v5163
        %v5493 = vunpack.c.l.b16 %v5164
        %v5494 = vunpack.c.h.b16 %v5164
        %v5495 = vunpack.c.l.b16 %v5165
        %v5496 = vunpack.c.h.b16 %v5165
        %v5497 = vunpack.c.l.b16 %v5166
        %v5498 = vunpack.c.h.b16 %v5166
        %v5499 = vunpack.c.l.b16 %v5167
        %v5500 = vunpack.c.h.b16 %v5167
        %v5501 = vunpack.c.l.b16 %v5168
        %v5502 = vunpack.c.h.b16 %v5168
        %v5503 = vunpack.c.l.b16 %v5169
        %v5504 = vunpack.c.h.b16 %v5169
        %v5505 = vunpack.c.l.b16 %v5170
        %v5506 = vunpack.c.h.b16 %v5170
        %v5507 = vunpack.c.l.b16 %v5171
        %v5508 = vunpack.c.h.b16 %v5171
        %v5509 = vunpack.c.l.b16 %v5172
        %v5510 = vunpack.c.h.b16 %v5172
        %v5511 = vunpack.c.l.b16 %v5173
        %v5512 = vunpack.c.h.b16 %v5173
        %v5513 = vunpack.c.l.b16 %v5174
        %v5514 = vunpack.c.h.b16 %v5174
        %v5515 = vunpack.c.l.b16 %v5175
        %v5516 = vunpack.c.h.b16 %v5175
        %v5517 = vunpack.c.l.b16 %v5176
        %v5518 = vunpack.c.h.b16 %v5176
        %v5519 = vunpack.c.l.b16 %v5177
        %v5520 = vunpack.c.h.b16 %v5177
        %v5521 = vunpack.c.l.b16 %v5178
        %v5522 = vunpack.c.h.b16 %v5178
        %v5523 = vunpack.c.l.b16 %v5179
        %v5524 = vunpack.c.h.b16 %v5179
        %v5525 = vunpack.c.l.b16 %v5180
        %v5526 = vunpack.c.h.b16 %v5180
        %v5527 = vunpack.c.l.b16 %v5181
        %v5528 = vunpack.c.h.b16 %v5181
        %v5529 = vunpack.c.l.b16 %v5182
        %v5530 = vunpack.c.h.b16 %v5182
        %v5531 = vunpack.c.l.b16 %v5183
        %v5532 = vunpack.c.h.b16 %v5183
        %v5533 = vunpack.c.l.b16 %v5184
        %v5534 = vunpack.c.h.b16 %v5184
        %v5535 = vunpack.c.l.b16 %v5185
        %v5536 = vunpack.c.h.b16 %v5185
        %v5537 = vunpack.c.l.b16 %v5186
        %v5538 = vunpack.c.h.b16 %v5186
        %v5539 = vunpack.c.l.b16 %v5187
        %v5540 = vunpack.c.h.b16 %v5187
        %v5541 = vunpack.c.l.b16 %v5188
        %v5542 = vunpack.c.h.b16 %v5188
        %v5543 = vunpack.c.l.b16 %v5189
        %v5544 = vunpack.c.h.b16 %v5189
        %v5545 = vunpack.c.l.b16 %v5190
        %v5546 = vunpack.c.h.b16 %v5190
        %v5547 = vunpack.c.l.b16 %v5191
        %v5548 = vunpack.c.h.b16 %v5191
        %v5549 = vunpack.c.l.b16 %v5192
        %v5550 = vunpack.c.h.b16 %v5192
        %v5551 = vunpack.c.l.b16 %v5193
        %v5552 = vunpack.c.h.b16 %v5193
        %v5553 = vunpack.c.l.b16 %v5194
        %v5554 = vunpack.c.h.b16 %v5194
        %v5555 = vunpack.c.l.b16 %v5195
        %v5556 = vunpack.c.h.b16 %v5195
        %v5557 = vunpack.c.l.b16 %v5196
        %v5558 = vunpack.c.h.b16 %v5196
        %v5559 = vunpack.c.l.b16 %v5197
        %v5560 = vunpack.c.h.b16 %v5197
        %v5561 = vunpack.c.l.b16 %v5198
        %v5562 = vunpack.c.h.b16 %v5198
        %v5563 = vunpack.c.l.b16 %v5199
        %v5564 = vunpack.c.h.b16 %v5199
        %v5565 = vunpack.c.l.b16 %v5200
        %v5566 = vunpack.c.h.b16 %v5200
        %v5567 = vunpack.c.l.b16 %v5201
        %v5568 = vunpack.c.h.b16 %v5201
        %v5569 = vunpack.c.l.b16 %v5202
        %v5570 = vunpack.c.h.b16 %v5202
        %v5571 = vunpack.c.l.b16 %v5203
        %v5572 = vunpack.c.h.b16 %v5203
        %v5573 = vunpack.c.l.b16 %v5204
        %v5574 = vunpack.c.h.b16 %v5204
        %v5575 = vunpack.c.l.b16 %v5205
        %v5576 = vunpack.c.h.b16 %v5205
        %v5577 = vunpack.c.l.b16 %v5206
        %v5578 = vunpack.c.h.b16 %v5206
        %v5579 = vunpack.c.l.b16 %v5207
        %v5580 = vunpack.c.h.b16 %v5207
        %v5581 = vunpack.c.l.b16 %v5208
        %v5582 = vunpack.c.h.b16 %v5208
        %v5583 = vunpack.c.l.b16 %v5209
        %v5584 = vunpack.c.h.b16 %v5209
        %v5585 = vunpack.c.l.b16 %v5210
        %v5586 = vunpack.c.h.b16 %v5210
        %v5587 = vunpack.c.l.b16 %v5211
        %v5588 = vunpack.c.h.b16 %v5211
        %v5589 = vunpack.c.l.b16 %v5212
        %v5590 = vunpack.c.h.b16 %v5212
        %v5591 = vunpack.c.l.b16 %v5213
        %v5592 = vunpack.c.h.b16 %v5213
        %v5593 = vunpack.c.l.b16 %v5214
        %v5594 = vunpack.c.h.b16 %v5214
        %v5595 = vunpack.c.l.b16 %v5215
        %v5596 = vunpack.c.h.b16 %v5215
        %v5597 = vunpack.c.l.b16 %v5216
        %v5598 = vunpack.c.h.b16 %v5216
        %v5599 = vunpack.c.l.b16 %v5217
        %v5600 = vunpack.c.h.b16 %v5217
        %v5601 = vunpack.c.l.b16 %v5218
        %v5602 = vunpack.c.h.b16 %v5218
        %v5603 = vunpack.c.l.b16 %v5219
        %v5604 = vunpack.c.h.b16 %v5219
        %v5605 = vunpack.c.l.b16 %v5220
        %v5606 = vunpack.c.h.b16 %v5220
        %v5607 = vunpack.c.l.b16 %v5221
        %v5608 = vunpack.c.h.b16 %v5221
        %v5609 = vunpack.c.l.b16 %v5222
        %v5610 = vunpack.c.h.b16 %v5222
        %v5611 = vunpack.c.l.b16 %v5223
        %v5612 = vunpack.c.h.b16 %v5223
        %v5613 = vunpack.c.l.b16 %v5224
        %v5614 = vunpack.c.h.b16 %v5224
        %v5615 = vunpack.c.l.b16 %v5225
        %v5616 = vunpack.c.h.b16 %v5225
        %v5617 = vunpack.c.l.b16 %v5226
        %v5618 = vunpack.c.h.b16 %v5226
        %v5619 = vunpack.c.l.b16 %v5227
        %v5620 = vunpack.c.h.b16 %v5227
        %v5621 = vunpack.c.l.b16 %v5228
        %v5622 = vunpack.c.h.b16 %v5228
        %v5623 = vunpack.c.l.b16 %v5229
        %v5624 = vunpack.c.h.b16 %v5229
        %v5625 = vunpack.c.l.b16 %v5230
        %v5626 = vunpack.c.h.b16 %v5230
        %v5627 = vunpack.c.l.b16 %v5231
        %v5628 = vunpack.c.h.b16 %v5231
        %v5629 = vunpack.c.l.b16 %v5232
        %v5630 = vunpack.c.h.b16 %v5232
        %v5631 = vunpack.c.l.b16 %v5233
        %v5632 = vunpack.c.h.b16 %v5233
        %v5633 = vunpack.c.l.b16 %v5234
        %v5634 = vunpack.c.h.b16 %v5234
        %v5635 = vunpack.c.l.b16 %v5235
        %v5636 = vunpack.c.h.b16 %v5235
        %v5637 = vunpack.c.l.b16 %v5236
        %v5638 = vunpack.c.h.b16 %v5236
        %v5639 = vunpack.c.l.b16 %v5237
        %v5640 = vunpack.c.h.b16 %v5237
        %v5641 = vunpack.c.l.b16 %v5238
        %v5642 = vunpack.c.h.b16 %v5238
        %v5643 = vunpack.c.l.b16 %v5239
        %v5644 = vunpack.c.h.b16 %v5239
        %v5645 = vunpack.c.l.b16 %v5240
        %v5646 = vunpack.c.h.b16 %v5240
        %v5647 = vpack.c.b16 %v5395, %v5391
        %v5648 = vpack.c.b16 %v5396, %v5392
        %v5649 = vpack.c.b16 %v5397, %v5393
        %v5650 = vpack.c.b16 %v5398, %v5394
        %v5651 = vpack.c.b16 %v5403, %v5399
        %v5652 = vpack.c.b16 %v5404, %v5400
        %v5653 = vpack.c.b16 %v5405, %v5401
        %v5654 = vpack.c.b16 %v5406, %v5402
        %v5655 = vpack.c.b16 %v5411, %v5407
        %v5656 = vpack.c.b16 %v5412, %v5408
        %v5657 = vpack.c.b16 %v5413, %v5409
        %v5658 = vpack.c.b16 %v5414, %v5410
        %v5659 = vpack.c.b16 %v5419, %v5415
        %v5660 = vpack.c.b16 %v5420, %v5416
        %v5661 = vpack.c.b16 %v5421, %v5417
        %v5662 = vpack.c.b16 %v5422, %v5418
        %v5663 = vpack.c.b16 %v5427, %v5423
        %v5664 = vpack.c.b16 %v5428, %v5424
        %v5665 = vpack.c.b16 %v5429, %v5425
        %v5666 = vpack.c.b16 %v5430, %v5426
        %v5667 = vpack.c.b16 %v5435, %v5431
        %v5668 = vpack.c.b16 %v5436, %v5432
        %v5669 = vpack.c.b16 %v5437, %v5433
        %v5670 = vpack.c.b16 %v5438, %v5434
        %v5671 = vpack.c.b16 %v5443, %v5439
        %v5672 = vpack.c.b16 %v5444, %v5440
        %v5673 = vpack.c.b16 %v5445, %v5441
        %v5674 = vpack.c.b16 %v5446, %v5442
        %v5675 = vpack.c.b16 %v5451, %v5447
        %v5676 = vpack.c.b16 %v5452, %v5448
        %v5677 = vpack.c.b16 %v5453, %v5449
        %v5678 = vpack.c.b16 %v5454, %v5450
        %v5679 = vpack.c.b16 %v5459, %v5455
        %v5680 = vpack.c.b16 %v5460, %v5456
        %v5681 = vpack.c.b16 %v5461, %v5457
        %v5682 = vpack.c.b16 %v5462, %v5458
        %v5683 = vpack.c.b16 %v5467, %v5463
        %v5684 = vpack.c.b16 %v5468, %v5464
        %v5685 = vpack.c.b16 %v5469, %v5465
        %v5686 = vpack.c.b16 %v5470, %v5466
        %v5687 = vpack.c.b16 %v5475, %v5471
        %v5688 = vpack.c.b16 %v5476, %v5472
        %v5689 = vpack.c.b16 %v5477, %v5473
        %v5690 = vpack.c.b16 %v5478, %v5474
        %v5691 = vpack.c.b16 %v5483, %v5479
        %v5692 = vpack.c.b16 %v5484, %v5480
        %v5693 = vpack.c.b16 %v5485, %v5481
        %v5694 = vpack.c.b16 %v5486, %v5482
        %v5695 = vpack.c.b16 %v5491, %v5487
        %v5696 = vpack.c.b16 %v5492, %v5488
        %v5697 = vpack.c.b16 %v5493, %v5489
        %v5698 = vpack.c.b16 %v5494, %v5490
        %v5699 = vpack.c.b16 %v5499, %v5495
        %v5700 = vpack.c.b16 %v5500, %v5496
        %v5701 = vpack.c.b16 %v5501, %v5497
        %v5702 = vpack.c.b16 %v5502, %v5498
        %v5703 = vpack.c.b16 %v5507, %v5503
        %v5704 = vpack.c.b16 %v5508, %v5504
        %v5705 = vpack.c.b16 %v5509, %v5505
        %v5706 = vpack.c.b16 %v5510, %v5506
        %v5707 = vpack.c.b16 %v5515, %v5511
        %v5708 = vpack.c.b16 %v5516, %v5512
        %v5709 = vpack.c.b16 %v5517, %v5513
        %v5710 = vpack.c.b16 %v5518, %v5514
        %v5711 = vpack.c.b16 %v5523, %v5519
        %v5712 = vpack.c.b16 %v5524, %v5520
        %v5713 = vpack.c.b16 %v5525, %v5521
        %v5714 = vpack.c.b16 %v5526, %v5522
        %v5715 = vpack.c.b16 %v5531, %v5527
        %v5716 = vpack.c.b16 %v5532, %v5528
        %v5717 = vpack.c.b16 %v5533, %v5529
        %v5718 = vpack.c.b16 %v5534, %v5530
        %v5719 = vpack.c.b16 %v5539, %v5535
        %v5720 = vpack.c.b16 %v5540, %v5536
        %v5721 = vpack.c.b16 %v5541, %v5537
        %v5722 = vpack.c.b16 %v5542, %v5538
        %v5723 = vpack.c.b16 %v5547, %v5543
        %v5724 = vpack.c.b16 %v5548, %v5544
        %v5725 = vpack.c.b16 %v5549, %v5545
        %v5726 = vpack.c.b16 %v5550, %v5546
        %v5727 = vpack.c.b16 %v5555, %v5551
        %v5728 = vpack.c.b16 %v5556, %v5552
        %v5729 = vpack.c.b16 %v5557, %v5553
        %v5730 = vpack.c.b16 %v5558, %v5554
        %v5731 = vpack.c.b16 %v5563, %v5559
        %v5732 = vpack.c.b16 %v5564, %v5560
        %v5733 = vpack.c.b16 %v5565, %v5561
        %v5734 = vpack.c.b16 %v5566, %v5562
        %v5735 = vpack.c.b16 %v5571, %v5567
        %v5736 = vpack.c.b16 %v5572, %v5568
        %v5737 = vpack.c.b16 %v5573, %v5569
        %v5738 = vpack.c.b16 %v5574, %v5570
        %v5739 = vpack.c.b16 %v5579, %v5575
        %v5740 = vpack.c.b16 %v5580, %v5576
        %v5741 = vpack.c.b16 %v5581, %v5577
        %v5742 = vpack.c.b16 %v5582, %v5578
        %v5743 = vpack.c.b16 %v5587, %v5583
        %v5744 = vpack.c.b16 %v5588, %v5584
        %v5745 = vpack.c.b16 %v5589, %v5585
        %v5746 = vpack.c.b16 %v5590, %v5586
        %v5747 = vpack.c.b16 %v5595, %v5591
        %v5748 = vpack.c.b16 %v5596, %v5592
        %v5749 = vpack.c.b16 %v5597, %v5593
        %v5750 = vpack.c.b16 %v5598, %v5594
        %v5751 = vpack.c.b16 %v5603, %v5599
        %v5752 = vpack.c.b16 %v5604, %v5600
        %v5753 = vpack.c.b16 %v5605, %v5601
        %v5754 = vpack.c.b16 %v5606, %v5602
        %v5755 = vpack.c.b16 %v5611, %v5607
        %v5756 = vpack.c.b16 %v5612, %v5608
        %v5757 = vpack.c.b16 %v5613, %v5609
        %v5758 = vpack.c.b16 %v5614, %v5610
        %v5759 = vpack.c.b16 %v5619, %v5615
        %v5760 = vpack.c.b16 %v5620, %v5616
        %v5761 = vpack.c.b16 %v5621, %v5617
        %v5762 = vpack.c.b16 %v5622, %v5618
        %v5763 = vpack.c.b16 %v5627, %v5623
        %v5764 = vpack.c.b16 %v5628, %v5624
        %v5765 = vpack.c.b16 %v5629, %v5625
        %v5766 = vpack.c.b16 %v5630, %v5626
        %v5767 = vpack.c.b16 %v5635, %v5631
        %v5768 = vpack.c.b16 %v5636, %v5632
        %v5769 = vpack.c.b16 %v5637, %v5633
        %v5770 = vpack.c.b16 %v5638, %v5634
        %v5771 = vpack.c.b16 %v5643, %v5639
        %v5772 = vpack.c.b16 %v5644, %v5640
        %v5773 = vpack.c.b16 %v5645, %v5641
        %v5774 = vpack.c.b16 %v5646, %v5642
        %5903 = vmatprep.subr.bf16.mxu0 %v5676
        %5904 = vmatpush1.bf16.msra.mxu0 %v5675
        %5905 = vmatprep.subr.bf16.mxu0 %v5672
        %5906 = vmatpush1.bf16.msra.mxu0 %v5671
        %5907 = vmatprep.subr.bf16.mxu0 %v5668
        %5908 = vmatpush1.bf16.msra.mxu0 %v5667
        %5909 = vmatprep.subr.bf16.mxu0 %v5664
        %5910 = vmatpush1.bf16.msra.mxu0 %v5663
        %5911 = vmatprep.subr.bf16.mxu0 %v5660
        %5912 = vmatpush1.bf16.msra.mxu0 %v5659
        %5913 = vmatprep.subr.bf16.mxu0 %v5656
        %5914 = vmatpush1.bf16.msra.mxu0 %v5655
        %5915 = vmatprep.subr.bf16.mxu0 %v5652
        %5916 = vmatpush1.bf16.msra.mxu0 %v5651
        %5917 = vmatprep.subr.bf16.mxu0 %v5648
        %5918 = vmatpush1.bf16.msra.mxu0 %v5647
        %5919 = vmatprep.subr.bf16.mxu0 %v5708
        %5920 = vmatpush2.bf16.msra.mxu0 %v5707
        %5921 = vmatprep.subr.bf16.mxu0 %v5704
        %5922 = vmatpush2.bf16.msra.mxu0 %v5703
        %5923 = vmatprep.subr.bf16.mxu0 %v5700
        %5924 = vmatpush2.bf16.msra.mxu0 %v5699
        %5925 = vmatprep.subr.bf16.mxu0 %v5696
        %5926 = vmatpush2.bf16.msra.mxu0 %v5695
        %5927 = vmatprep.subr.bf16.mxu0 %v5692
        %5928 = vmatpush2.bf16.msra.mxu0 %v5691
        %5929 = vmatprep.subr.bf16.mxu0 %v5688
        %5930 = vmatpush2.bf16.msra.mxu0 %v5687
        %5931 = vmatprep.subr.bf16.mxu0 %v5684
        %5932 = vmatpush2.bf16.msra.mxu0 %v5683
        %5933 = vmatprep.subr.bf16.mxu0 %v5680
        %5934 = vmatpush2.bf16.msra.mxu0 %v5679
        %5935 = vmatprep.mubr.bf16.mxu0 %v5086
        %5936 = vmatmul.mubr.bf16.gmra.mxu0 %v5085
        %v5937 = vpop.f32.mrf.mxu0
        %v5938 = vadd.f32 %v5246, %v5937
        %v5939 = vpop.f32.mrf.mxu0
        %v5940 = vadd.f32 %v5250, %v5939
        %v5941 = vpop.f32.mrf.mxu0
        %v5942 = vadd.f32 %v5246, %v5941
        %v5943 = vpop.f32.mrf.mxu0
        %v5944 = vadd.f32 %v5250, %v5943
        %5945 = vmatprep.mubr.bf16.mxu0 %v5090
        %5946 = vmatmul.mubr.bf16.gmra.mxu0 %v5089
        %v5947 = vpop.f32.mrf.mxu0
        %v5948 = vadd.f32 %v5246, %v5947
        %v5949 = vpop.f32.mrf.mxu0
        %v5950 = vadd.f32 %v5250, %v5949
        %v5951 = vpop.f32.mrf.mxu0
        %v5952 = vadd.f32 %v5246, %v5951
        %v5953 = vpop.f32.mrf.mxu0
        %v5954 = vadd.f32 %v5250, %v5953
        %5955 = vmatprep.mubr.bf16.mxu0 %v5094
        %5956 = vmatmul.mubr.bf16.gmra.mxu0 %v5093
        %v5957 = vpop.f32.mrf.mxu0
        %v5958 = vadd.f32 %v5246, %v5957
        %v5959 = vpop.f32.mrf.mxu0
        %v5960 = vadd.f32 %v5250, %v5959
        %v5961 = vpop.f32.mrf.mxu0
        %v5962 = vadd.f32 %v5246, %v5961
        %v5963 = vpop.f32.mrf.mxu0
        %v5964 = vadd.f32 %v5250, %v5963
        %5965 = vmatprep.mubr.bf16.mxu0 %v5098
        %5966 = vmatmul.mubr.bf16.gmra.mxu0 %v5097
        %v5967 = vpop.f32.mrf.mxu0
        %v5968 = vadd.f32 %v5246, %v5967
        %v5969 = vpop.f32.mrf.mxu0
        %v5970 = vadd.f32 %v5250, %v5969
        %v5971 = vpop.f32.mrf.mxu0
        %v5972 = vadd.f32 %v5246, %v5971
        %v5973 = vpop.f32.mrf.mxu0
        %v5974 = vadd.f32 %v5250, %v5973
        %5975 = vmatprep.mubr.bf16.mxu0 %v5102
        %5976 = vmatmul.mubr.bf16.gmra.mxu0 %v5101
        %v5977 = vpop.f32.mrf.mxu0
        %v5978 = vadd.f32 %v5246, %v5977
        %v5979 = vpop.f32.mrf.mxu0
        %v5980 = vadd.f32 %v5250, %v5979
        %v5981 = vpop.f32.mrf.mxu0
        %v5982 = vadd.f32 %v5246, %v5981
        %v5983 = vpop.f32.mrf.mxu0
        %v5984 = vadd.f32 %v5250, %v5983
        %5985 = vmatprep.mubr.bf16.mxu0 %v5106
        %5986 = vmatmul.mubr.bf16.gmra.mxu0 %v5105
        %v5987 = vpop.f32.mrf.mxu0
        %v5988 = vadd.f32 %v5246, %v5987
        %v5989 = vpop.f32.mrf.mxu0
        %v5990 = vadd.f32 %v5250, %v5989
        %v5991 = vpop.f32.mrf.mxu0
        %v5992 = vadd.f32 %v5246, %v5991
        %v5993 = vpop.f32.mrf.mxu0
        %v5994 = vadd.f32 %v5250, %v5993
        %5995 = vmatprep.mubr.bf16.mxu0 %v5110
        %5996 = vmatmul.mubr.bf16.gmra.mxu0 %v5109
        %v5997 = vpop.f32.mrf.mxu0
        %v5998 = vadd.f32 %v5246, %v5997
        %v5999 = vpop.f32.mrf.mxu0
        %v6000 = vadd.f32 %v5250, %v5999
        %v6001 = vpop.f32.mrf.mxu0
        %v6002 = vpop.f32.mrf.mxu0
        %6003 = vdwg.mxu0
        %6004 = vmatprep.subr.bf16.mxu0 %v5740
        %6005 = vmatpush1.bf16.msra.mxu0 %v5739
        %6006 = vmatprep.subr.bf16.mxu0 %v5736
        %6007 = vmatpush1.bf16.msra.mxu0 %v5735
        %6008 = vmatprep.subr.bf16.mxu0 %v5732
        %6009 = vmatpush1.bf16.msra.mxu0 %v5731
        %6010 = vmatprep.subr.bf16.mxu0 %v5728
        %6011 = vmatpush1.bf16.msra.mxu0 %v5727
        %6012 = vmatprep.subr.bf16.mxu0 %v5724
        %6013 = vmatpush1.bf16.msra.mxu0 %v5723
        %6014 = vmatprep.subr.bf16.mxu0 %v5720
        %6015 = vmatpush1.bf16.msra.mxu0 %v5719
        %6016 = vmatprep.subr.bf16.mxu0 %v5716
        %6017 = vmatpush1.bf16.msra.mxu0 %v5715
        %6018 = vmatprep.subr.bf16.mxu0 %v5712
        %6019 = vmatpush1.bf16.msra.mxu0 %v5711
        %6020 = vmatprep.subr.bf16.mxu0 %v5772
        %6021 = vmatpush2.bf16.msra.mxu0 %v5771
        %6022 = vmatprep.subr.bf16.mxu0 %v5768
        %6023 = vmatpush2.bf16.msra.mxu0 %v5767
        %6024 = vmatprep.subr.bf16.mxu0 %v5764
        %6025 = vmatpush2.bf16.msra.mxu0 %v5763
        %6026 = vmatprep.subr.bf16.mxu0 %v5760
        %6027 = vmatpush2.bf16.msra.mxu0 %v5759
        %6028 = vmatprep.subr.bf16.mxu0 %v5756
        %6029 = vmatpush2.bf16.msra.mxu0 %v5755
        %6030 = vmatprep.subr.bf16.mxu0 %v5752
        %6031 = vmatpush2.bf16.msra.mxu0 %v5751
        %6032 = vmatprep.subr.bf16.mxu0 %v5748
        %6033 = vmatpush2.bf16.msra.mxu0 %v5747
        %6034 = vmatprep.subr.bf16.mxu0 %v5744
        %6035 = vmatpush2.bf16.msra.mxu0 %v5743
        %6036 = vmatprep.mubr.bf16.mxu0 %v5088
        %6037 = vmatmul.mubr.bf16.gmra.mxu0 %v5087
        %v6038 = vpop.f32.mrf.mxu0
        %v6039 = vadd.f32 %v5938, %v6038
        %v6040 = vpop.f32.mrf.mxu0
        %v6041 = vadd.f32 %v5940, %v6040
        %v6042 = vpop.f32.mrf.mxu0
        %v6043 = vadd.f32 %v5942, %v6042
        %v6044 = vpop.f32.mrf.mxu0
        %v6045 = vadd.f32 %v5944, %v6044
        %6046 = vmatprep.mubr.bf16.mxu0 %v5092
        %6047 = vmatmul.mubr.bf16.gmra.mxu0 %v5091
        %v6048 = vpop.f32.mrf.mxu0
        %v6049 = vadd.f32 %v5948, %v6048
        %v6050 = vpop.f32.mrf.mxu0
        %v6051 = vadd.f32 %v5950, %v6050
        %v6052 = vpop.f32.mrf.mxu0
        %v6053 = vadd.f32 %v5952, %v6052
        %v6054 = vpop.f32.mrf.mxu0
        %v6055 = vadd.f32 %v5954, %v6054
        %6056 = vmatprep.mubr.bf16.mxu0 %v5096
        %6057 = vmatmul.mubr.bf16.gmra.mxu0 %v5095
        %v6058 = vpop.f32.mrf.mxu0
        %v6059 = vadd.f32 %v5958, %v6058
        %v6060 = vpop.f32.mrf.mxu0
        %v6061 = vadd.f32 %v5960, %v6060
        %v6062 = vpop.f32.mrf.mxu0
        %v6063 = vadd.f32 %v5962, %v6062
        %v6064 = vpop.f32.mrf.mxu0
        %v6065 = vadd.f32 %v5964, %v6064
        %6066 = vmatprep.mubr.bf16.mxu0 %v5100
        %6067 = vmatmul.mubr.bf16.gmra.mxu0 %v5099
        %v6068 = vpop.f32.mrf.mxu0
        %v6069 = vadd.f32 %v5968, %v6068
        %v6070 = vpop.f32.mrf.mxu0
        %v6071 = vadd.f32 %v5970, %v6070
        %v6072 = vpop.f32.mrf.mxu0
        %v6073 = vadd.f32 %v5972, %v6072
        %v6074 = vpop.f32.mrf.mxu0
        %v6075 = vadd.f32 %v5974, %v6074
        %6076 = vmatprep.mubr.bf16.mxu0 %v5104
        %6077 = vmatmul.mubr.bf16.gmra.mxu0 %v5103
        %v6078 = vpop.f32.mrf.mxu0
        %v6079 = vadd.f32 %v5978, %v6078
        %v6080 = vpop.f32.mrf.mxu0
        %v6081 = vadd.f32 %v5980, %v6080
        %v6082 = vpop.f32.mrf.mxu0
        %v6083 = vadd.f32 %v5982, %v6082
        %v6084 = vpop.f32.mrf.mxu0
        %v6085 = vadd.f32 %v5984, %v6084
        %6086 = vmatprep.mubr.bf16.mxu0 %v5108
        %6087 = vmatmul.mubr.bf16.gmra.mxu0 %v5107
        %v6088 = vpop.f32.mrf.mxu0
        %v6089 = vadd.f32 %v5988, %v6088
        %v6090 = vpop.f32.mrf.mxu0
        %v6091 = vadd.f32 %v5990, %v6090
        %v6092 = vpop.f32.mrf.mxu0
        %v6093 = vadd.f32 %v5992, %v6092
        %v6094 = vpop.f32.mrf.mxu0
        %v6095 = vadd.f32 %v5994, %v6094
        %6096 = vmatprep.mubr.bf16.mxu0 %v5112
        %6097 = vmatmul.mubr.bf16.gmra.mxu0 %v5111
        %v6098 = vpop.f32.mrf.mxu0
        %v6099 = vadd.f32 %v5998, %v6098
        %v6100 = vpop.f32.mrf.mxu0
        %v6101 = vadd.f32 %v6000, %v6100
        %v6102 = vpop.f32.mrf.mxu0
        %v6103 = vpop.f32.mrf.mxu0
        %6104 = vdwg.mxu0
        %6105 = vmatprep.subr.bf16.mxu0 %v5678
        %6106 = vmatpush1.bf16.msra.mxu0 %v5677
        %6107 = vmatprep.subr.bf16.mxu0 %v5674
        %6108 = vmatpush1.bf16.msra.mxu0 %v5673
        %6109 = vmatprep.subr.bf16.mxu0 %v5670
        %6110 = vmatpush1.bf16.msra.mxu0 %v5669
        %6111 = vmatprep.subr.bf16.mxu0 %v5666
        %6112 = vmatpush1.bf16.msra.mxu0 %v5665
        %6113 = vmatprep.subr.bf16.mxu0 %v5662
        %6114 = vmatpush1.bf16.msra.mxu0 %v5661
        %6115 = vmatprep.subr.bf16.mxu0 %v5658
        %6116 = vmatpush1.bf16.msra.mxu0 %v5657
        %6117 = vmatprep.subr.bf16.mxu0 %v5654
        %6118 = vmatpush1.bf16.msra.mxu0 %v5653
        %6119 = vmatprep.subr.bf16.mxu0 %v5650
        %6120 = vmatpush1.bf16.msra.mxu0 %v5649
        %6121 = vmatprep.subr.bf16.mxu0 %v5710
        %6122 = vmatpush2.bf16.msra.mxu0 %v5709
        %6123 = vmatprep.subr.bf16.mxu0 %v5706
        %6124 = vmatpush2.bf16.msra.mxu0 %v5705
        %6125 = vmatprep.subr.bf16.mxu0 %v5702
        %6126 = vmatpush2.bf16.msra.mxu0 %v5701
        %6127 = vmatprep.subr.bf16.mxu0 %v5698
        %6128 = vmatpush2.bf16.msra.mxu0 %v5697
        %6129 = vmatprep.subr.bf16.mxu0 %v5694
        %6130 = vmatpush2.bf16.msra.mxu0 %v5693
        %6131 = vmatprep.subr.bf16.mxu0 %v5690
        %6132 = vmatpush2.bf16.msra.mxu0 %v5689
        %6133 = vmatprep.subr.bf16.mxu0 %v5686
        %6134 = vmatpush2.bf16.msra.mxu0 %v5685
        %6135 = vmatprep.subr.bf16.mxu0 %v5682
        %6136 = vmatpush2.bf16.msra.mxu0 %v5681
        %6137 = vmatprep.mubr.bf16.mxu0 %v5086
        %6138 = vmatmul.mubr.bf16.gmra.mxu0 %v5085
        %v6139 = vpop.f32.mrf.mxu0
        %v6140 = vadd.f32 %v5254, %v6139
        %v6141 = vpop.f32.mrf.mxu0
        %v6142 = vadd.f32 %v5258, %v6141
        %v6143 = vpop.f32.mrf.mxu0
        %v6144 = vadd.f32 %v5254, %v6143
        %v6145 = vpop.f32.mrf.mxu0
        %v6146 = vadd.f32 %v5258, %v6145
        %6147 = vmatprep.mubr.bf16.mxu0 %v5090
        %6148 = vmatmul.mubr.bf16.gmra.mxu0 %v5089
        %v6149 = vpop.f32.mrf.mxu0
        %v6150 = vadd.f32 %v5254, %v6149
        %v6151 = vpop.f32.mrf.mxu0
        %v6152 = vadd.f32 %v5258, %v6151
        %v6153 = vpop.f32.mrf.mxu0
        %v6154 = vadd.f32 %v5254, %v6153
        %v6155 = vpop.f32.mrf.mxu0
        %v6156 = vadd.f32 %v5258, %v6155
        %6157 = vmatprep.mubr.bf16.mxu0 %v5094
        %6158 = vmatmul.mubr.bf16.gmra.mxu0 %v5093
        %v6159 = vpop.f32.mrf.mxu0
        %v6160 = vadd.f32 %v5254, %v6159
        %v6161 = vpop.f32.mrf.mxu0
        %v6162 = vadd.f32 %v5258, %v6161
        %v6163 = vpop.f32.mrf.mxu0
        %v6164 = vadd.f32 %v5254, %v6163
        %v6165 = vpop.f32.mrf.mxu0
        %v6166 = vadd.f32 %v5258, %v6165
        %6167 = vmatprep.mubr.bf16.mxu0 %v5098
        %6168 = vmatmul.mubr.bf16.gmra.mxu0 %v5097
        %v6169 = vpop.f32.mrf.mxu0
        %v6170 = vadd.f32 %v5254, %v6169
        %v6171 = vpop.f32.mrf.mxu0
        %v6172 = vadd.f32 %v5258, %v6171
        %v6173 = vpop.f32.mrf.mxu0
        %v6174 = vadd.f32 %v5254, %v6173
        %v6175 = vpop.f32.mrf.mxu0
        %v6176 = vadd.f32 %v5258, %v6175
        %6177 = vmatprep.mubr.bf16.mxu0 %v5102
        %6178 = vmatmul.mubr.bf16.gmra.mxu0 %v5101
        %v6179 = vpop.f32.mrf.mxu0
        %v6180 = vadd.f32 %v5254, %v6179
        %v6181 = vpop.f32.mrf.mxu0
        %v6182 = vadd.f32 %v5258, %v6181
        %v6183 = vpop.f32.mrf.mxu0
        %v6184 = vadd.f32 %v5254, %v6183
        %v6185 = vpop.f32.mrf.mxu0
        %v6186 = vadd.f32 %v5258, %v6185
        %6187 = vmatprep.mubr.bf16.mxu0 %v5106
        %6188 = vmatmul.mubr.bf16.gmra.mxu0 %v5105
        %v6189 = vpop.f32.mrf.mxu0
        %v6190 = vadd.f32 %v5254, %v6189
        %v6191 = vpop.f32.mrf.mxu0
        %v6192 = vadd.f32 %v5258, %v6191
        %v6193 = vpop.f32.mrf.mxu0
        %v6194 = vadd.f32 %v5254, %v6193
        %v6195 = vpop.f32.mrf.mxu0
        %v6196 = vadd.f32 %v5258, %v6195
        %6197 = vmatprep.mubr.bf16.mxu0 %v5110
        %6198 = vmatmul.mubr.bf16.gmra.mxu0 %v5109
        %v6199 = vpop.f32.mrf.mxu0
        %v6200 = vadd.f32 %v5254, %v6199
        %v6201 = vpop.f32.mrf.mxu0
        %v6202 = vadd.f32 %v5258, %v6201
        %v6203 = vpop.f32.mrf.mxu0
        %v6204 = vpop.f32.mrf.mxu0
        %6205 = vdwg.mxu0
        %6206 = vmatprep.subr.bf16.mxu0 %v5742
        %6207 = vmatpush1.bf16.msra.mxu0 %v5741
        %6208 = vmatprep.subr.bf16.mxu0 %v5738
        %6209 = vmatpush1.bf16.msra.mxu0 %v5737
        %6210 = vmatprep.subr.bf16.mxu0 %v5734
        %6211 = vmatpush1.bf16.msra.mxu0 %v5733
        %6212 = vmatprep.subr.bf16.mxu0 %v5730
        %6213 = vmatpush1.bf16.msra.mxu0 %v5729
        %6214 = vmatprep.subr.bf16.mxu0 %v5726
        %6215 = vmatpush1.bf16.msra.mxu0 %v5725
        %6216 = vmatprep.subr.bf16.mxu0 %v5722
        %6217 = vmatpush1.bf16.msra.mxu0 %v5721
        %6218 = vmatprep.subr.bf16.mxu0 %v5718
        %6219 = vmatpush1.bf16.msra.mxu0 %v5717
        %6220 = vmatprep.subr.bf16.mxu0 %v5714
        %6221 = vmatpush1.bf16.msra.mxu0 %v5713
        %6222 = vmatprep.subr.bf16.mxu0 %v5774
        %6223 = vmatpush2.bf16.msra.mxu0 %v5773
        %6224 = vmatprep.subr.bf16.mxu0 %v5770
        %6225 = vmatpush2.bf16.msra.mxu0 %v5769
        %6226 = vmatprep.subr.bf16.mxu0 %v5766
        %6227 = vmatpush2.bf16.msra.mxu0 %v5765
        %6228 = vmatprep.subr.bf16.mxu0 %v5762
        %6229 = vmatpush2.bf16.msra.mxu0 %v5761
        %6230 = vmatprep.subr.bf16.mxu0 %v5758
        %6231 = vmatpush2.bf16.msra.mxu0 %v5757
        %6232 = vmatprep.subr.bf16.mxu0 %v5754
        %6233 = vmatpush2.bf16.msra.mxu0 %v5753
        %6234 = vmatprep.subr.bf16.mxu0 %v5750
        %6235 = vmatpush2.bf16.msra.mxu0 %v5749
        %6236 = vmatprep.subr.bf16.mxu0 %v5746
        %6237 = vmatpush2.bf16.msra.mxu0 %v5745
        %6238 = vmatprep.mubr.bf16.mxu0 %v5088
        %6239 = vmatmul.mubr.bf16.gmra.mxu0 %v5087
        %v6240 = vpop.f32.mrf.mxu0
        %v6241 = vadd.f32 %v6140, %v6240
        %v6242 = vpop.f32.mrf.mxu0
        %v6243 = vadd.f32 %v6142, %v6242
        %v6244 = vpop.f32.mrf.mxu0
        %v6245 = vadd.f32 %v6144, %v6244
        %v6246 = vpop.f32.mrf.mxu0
        %v6247 = vadd.f32 %v6146, %v6246
        %6248 = vmatprep.mubr.bf16.mxu0 %v5092
        %6249 = vmatmul.mubr.bf16.gmra.mxu0 %v5091
        %v6250 = vpop.f32.mrf.mxu0
        %v6251 = vadd.f32 %v6150, %v6250
        %v6252 = vpop.f32.mrf.mxu0
        %v6253 = vadd.f32 %v6152, %v6252
        %v6254 = vpop.f32.mrf.mxu0
        %v6255 = vadd.f32 %v6154, %v6254
        %v6256 = vpop.f32.mrf.mxu0
        %v6257 = vadd.f32 %v6156, %v6256
        %6258 = vmatprep.mubr.bf16.mxu0 %v5096
        %6259 = vmatmul.mubr.bf16.gmra.mxu0 %v5095
        %v6260 = vpop.f32.mrf.mxu0
        %v6261 = vadd.f32 %v6160, %v6260
        %v6262 = vpop.f32.mrf.mxu0
        %v6263 = vadd.f32 %v6162, %v6262
        %v6264 = vpop.f32.mrf.mxu0
        %v6265 = vadd.f32 %v6164, %v6264
        %v6266 = vpop.f32.mrf.mxu0
        %v6267 = vadd.f32 %v6166, %v6266
        %6268 = vmatprep.mubr.bf16.mxu0 %v5100
        %6269 = vmatmul.mubr.bf16.gmra.mxu0 %v5099
        %v6270 = vpop.f32.mrf.mxu0
        %v6271 = vadd.f32 %v6170, %v6270
        %v6272 = vpop.f32.mrf.mxu0
        %v6273 = vadd.f32 %v6172, %v6272
        %v6274 = vpop.f32.mrf.mxu0
        %v6275 = vadd.f32 %v6174, %v6274
        %v6276 = vpop.f32.mrf.mxu0
        %v6277 = vadd.f32 %v6176, %v6276
        %6278 = vmatprep.mubr.bf16.mxu0 %v5104
        %6279 = vmatmul.mubr.bf16.gmra.mxu0 %v5103
        %v6280 = vpop.f32.mrf.mxu0
        %v6281 = vadd.f32 %v6180, %v6280
        %v6282 = vpop.f32.mrf.mxu0
        %v6283 = vadd.f32 %v6182, %v6282
        %v6284 = vpop.f32.mrf.mxu0
        %v6285 = vadd.f32 %v6184, %v6284
        %v6286 = vpop.f32.mrf.mxu0
        %v6287 = vadd.f32 %v6186, %v6286
        %6288 = vmatprep.mubr.bf16.mxu0 %v5108
        %6289 = vmatmul.mubr.bf16.gmra.mxu0 %v5107
        %v6290 = vpop.f32.mrf.mxu0
        %v6291 = vadd.f32 %v6190, %v6290
        %v6292 = vpop.f32.mrf.mxu0
        %v6293 = vadd.f32 %v6192, %v6292
        %v6294 = vpop.f32.mrf.mxu0
        %v6295 = vadd.f32 %v6194, %v6294
        %v6296 = vpop.f32.mrf.mxu0
        %v6297 = vadd.f32 %v6196, %v6296
        %6298 = vmatprep.mubr.bf16.mxu0 %v5112
        %6299 = vmatmul.mubr.bf16.gmra.mxu0 %v5111
        %v6300 = vpop.f32.mrf.mxu0
        %v6301 = vadd.f32 %v6200, %v6300
        %v6302 = vpop.f32.mrf.mxu0
        %v6303 = vadd.f32 %v6202, %v6302
        %v6304 = vpop.f32.mrf.mxu0
        %v6305 = vpop.f32.mrf.mxu0
        %6306 = vdwg.mxu0
        %v6307 = vmax.f32 %v6039, 0.0
        %v6308 = vmax.f32 %v6041, 0.0
        %v6309 = vmax.f32 %v6241, 0.0
        %v6310 = vmax.f32 %v6243, 0.0
        %v6311 = vmax.f32 %v6043, 0.0
        %v6312 = vmax.f32 %v6045, 0.0
        %v6313 = vmax.f32 %v6245, 0.0
        %v6314 = vmax.f32 %v6247, 0.0
        %v6315 = vmax.f32 %v6049, 0.0
        %v6316 = vmax.f32 %v6051, 0.0
        %v6317 = vmax.f32 %v6251, 0.0
        %v6318 = vmax.f32 %v6253, 0.0
        %v6319 = vmax.f32 %v6053, 0.0
        %v6320 = vmax.f32 %v6055, 0.0
        %v6321 = vmax.f32 %v6255, 0.0
        %v6322 = vmax.f32 %v6257, 0.0
        %v6323 = vmax.f32 %v6059, 0.0
        %v6324 = vmax.f32 %v6061, 0.0
        %v6325 = vmax.f32 %v6261, 0.0
        %v6326 = vmax.f32 %v6263, 0.0
        %v6327 = vmax.f32 %v6063, 0.0
        %v6328 = vmax.f32 %v6065, 0.0
        %v6329 = vmax.f32 %v6265, 0.0
        %v6330 = vmax.f32 %v6267, 0.0
        %v6331 = vmax.f32 %v6069, 0.0
        %v6332 = vmax.f32 %v6071, 0.0
        %v6333 = vmax.f32 %v6271, 0.0
        %v6334 = vmax.f32 %v6273, 0.0
        %v6335 = vmax.f32 %v6073, 0.0
        %v6336 = vmax.f32 %v6075, 0.0
        %v6337 = vmax.f32 %v6275, 0.0
        %v6338 = vmax.f32 %v6277, 0.0
        %v6339 = vmax.f32 %v6079, 0.0
        %v6340 = vmax.f32 %v6081, 0.0
        %v6341 = vmax.f32 %v6281, 0.0
        %v6342 = vmax.f32 %v6283, 0.0
        %v6343 = vmax.f32 %v6083, 0.0
        %v6344 = vmax.f32 %v6085, 0.0
        %v6345 = vmax.f32 %v6285, 0.0
        %v6346 = vmax.f32 %v6287, 0.0
        %v6347 = vmax.f32 %v6089, 0.0
        %v6348 = vmax.f32 %v6091, 0.0
        %v6349 = vmax.f32 %v6291, 0.0
        %v6350 = vmax.f32 %v6293, 0.0
        %v6351 = vmax.f32 %v6093, 0.0
        %v6352 = vmax.f32 %v6095, 0.0
        %v6353 = vmax.f32 %v6295, 0.0
        %v6354 = vmax.f32 %v6297, 0.0
        %v6355 = vmax.f32 %v6099, 0.0
        %v6356 = vmax.f32 %v6101, 0.0
        %v6357 = vmax.f32 %v6301, 0.0
        %v6358 = vmax.f32 %v6303, 0.0
        %v6359 = vpack.c.bf16 %v6311, %v6307
        %v6360 = vpack.c.bf16 %v6312, %v6308
        %v6361 = vpack.c.bf16 %v6313, %v6309
        %v6362 = vpack.c.bf16 %v6314, %v6310
        %v6363 = vpack.c.bf16 %v6319, %v6315
        %v6364 = vpack.c.bf16 %v6320, %v6316
        %v6365 = vpack.c.bf16 %v6321, %v6317
        %v6366 = vpack.c.bf16 %v6322, %v6318
        %v6367 = vpack.c.bf16 %v6327, %v6323
        %v6368 = vpack.c.bf16 %v6328, %v6324
        %v6369 = vpack.c.bf16 %v6329, %v6325
        %v6370 = vpack.c.bf16 %v6330, %v6326
        %v6371 = vpack.c.bf16 %v6335, %v6331
        %v6372 = vpack.c.bf16 %v6336, %v6332
        %v6373 = vpack.c.bf16 %v6337, %v6333
        %v6374 = vpack.c.bf16 %v6338, %v6334
        %v6375 = vpack.c.bf16 %v6343, %v6339
        %v6376 = vpack.c.bf16 %v6344, %v6340
        %v6377 = vpack.c.bf16 %v6345, %v6341
        %v6378 = vpack.c.bf16 %v6346, %v6342
        %v6379 = vpack.c.bf16 %v6351, %v6347
        %v6380 = vpack.c.bf16 %v6352, %v6348
        %v6381 = vpack.c.bf16 %v6353, %v6349
        %v6382 = vpack.c.bf16 %v6354, %v6350
        %v6383 = vpack.c.bf16 %v6355, %v6355
        %v6384 = vpack.c.bf16 %v6356, %v6356
        %v6385 = vpack.c.bf16 %v6357, %v6357
        %v6386 = vpack.c.bf16 %v6358, %v6358
        %v6387 = vld [vmem:[#allocation12] sm:$0xff]
        %v6388 = vld [vmem:[#allocation12 + $0x8] sm:$0xff]
        %v6389 = vld [vmem:[#allocation12 + $0x10] sm:$0xff]
        %v6390 = vld [vmem:[#allocation12 + $0x18] sm:$0xff]
        %v6391 = vld [vmem:[#allocation12 + $0x20] sm:$0xff]
        %v6392 = vld [vmem:[#allocation12 + $0x28] sm:$0xff]
        %v6393 = vld [vmem:[#allocation12 + $0x30] sm:$0xff]
        %v6394 = vld [vmem:[#allocation12 + $0x38] sm:$0xff]
        %v6395 = vld [vmem:[#allocation12 + $0x40] sm:$0xff]
        %v6396 = vld [vmem:[#allocation12 + $0x48] sm:$0xff]
        %v6397 = vld [vmem:[#allocation12 + $0x50] sm:$0xff]
        %v6398 = vld [vmem:[#allocation12 + $0x58] sm:$0xff]
        %v6399 = vld [vmem:[#allocation12 + $0x60] sm:$0xff]
        %v6400 = vld [vmem:[#allocation12 + $0x68] sm:$0xff]
        %v6401 = vld [vmem:[#allocation12 + $0x70] sm:$0xff]
        %v6402 = vld [vmem:[#allocation12 + $0x78] sm:$0xff]
        %v6403 = vld [vmem:[#allocation12 + $0x80] sm:$0xff]
        %v6404 = vld [vmem:[#allocation12 + $0x88] sm:$0xff]
        %v6405 = vld [vmem:[#allocation12 + $0x90] sm:$0xff]
        %v6406 = vld [vmem:[#allocation12 + $0x98] sm:$0xff]
        %v6407 = vld [vmem:[#allocation12 + $0xa0] sm:$0xff]
        %v6408 = vld [vmem:[#allocation12 + $0xa8] sm:$0xff]
        %v6409 = vld [vmem:[#allocation12 + $0xb0] sm:$0xff]
        %v6410 = vld [vmem:[#allocation12 + $0xb8] sm:$0xff]
        %v6411 = vld [vmem:[#allocation12 + $0xc0] sm:$0xff]
        %v6412 = vld [vmem:[#allocation12 + $0xc8] sm:$0xff]
        %v6413 = vld [vmem:[#allocation12 + $0xd0] sm:$0xff]
        %v6414 = vld [vmem:[#allocation12 + $0xd8] sm:$0xff]
        %v6415 = vld [vmem:[#allocation12 + $0xe0] sm:$0xff]
        %v6416 = vld [vmem:[#allocation12 + $0xe8] sm:$0xff]
        %v6417 = vld [vmem:[#allocation12 + $0xf0] sm:$0xff]
        %v6418 = vld [vmem:[#allocation12 + $0xf8] sm:$0xff]
        %v6419 = vld [vmem:[#allocation12 + $0x100] sm:$0xff]
        %v6420 = vld [vmem:[#allocation12 + $0x108] sm:$0xff]
        %v6421 = vld [vmem:[#allocation12 + $0x110] sm:$0xff]
        %v6422 = vld [vmem:[#allocation12 + $0x118] sm:$0xff]
        %v6423 = vld [vmem:[#allocation12 + $0x120] sm:$0xff]
        %v6424 = vld [vmem:[#allocation12 + $0x128] sm:$0xff]
        %v6425 = vld [vmem:[#allocation12 + $0x130] sm:$0xff]
        %v6426 = vld [vmem:[#allocation12 + $0x138] sm:$0xff]
        %v6427 = vld [vmem:[#allocation12 + $0x140] sm:$0xff]
        %v6428 = vld [vmem:[#allocation12 + $0x148] sm:$0xff]
        %v6429 = vld [vmem:[#allocation12 + $0x150] sm:$0xff]
        %v6430 = vld [vmem:[#allocation12 + $0x158] sm:$0xff]
        %v6431 = vld [vmem:[#allocation12 + $0x160] sm:$0xff]
        %v6432 = vld [vmem:[#allocation12 + $0x168] sm:$0xff]
        %v6433 = vld [vmem:[#allocation12 + $0x170] sm:$0xff]
        %v6434 = vld [vmem:[#allocation12 + $0x178] sm:$0xff]
        %v6435 = vld [vmem:[#allocation12 + $0x180] sm:$0xff]
        %v6436 = vld [vmem:[#allocation12 + $0x188] sm:$0xff]
        %v6437 = vld [vmem:[#allocation12 + $0x190] sm:$0xff]
        %v6438 = vld [vmem:[#allocation12 + $0x198] sm:$0xff]
        %v6439 = vld [vmem:[#allocation12 + $0x1a0] sm:$0xff]
        %v6440 = vld [vmem:[#allocation12 + $0x1a8] sm:$0xff]
        %v6441 = vld [vmem:[#allocation12 + $0x1b0] sm:$0xff]
        %v6442 = vld [vmem:[#allocation12 + $0x1b8] sm:$0xff]
        %v6443 = vld [vmem:[#allocation12 + $0x1c0] sm:$0xff]
        %v6444 = vld [vmem:[#allocation12 + $0x1c8] sm:$0xff]
        %v6445 = vld [vmem:[#allocation12 + $0x1d0] sm:$0xff]
        %v6446 = vld [vmem:[#allocation12 + $0x1d8] sm:$0xff]
        %v6447 = vld [vmem:[#allocation12 + $0x1e0] sm:$0xff]
        %v6448 = vld [vmem:[#allocation12 + $0x1e8] sm:$0xff]
        %v6449 = vld [vmem:[#allocation12 + $0x1f0] sm:$0xff]
        %v6450 = vld [vmem:[#allocation12 + $0x1f8] sm:$0xff]
        %v6451 = vld [vmem:[#allocation12 + $0x200] sm:$0xff]
        %v6452 = vld [vmem:[#allocation12 + $0x208] sm:$0xff]
        %v6453 = vld [vmem:[#allocation12 + $0x210] sm:$0xff]
        %v6454 = vld [vmem:[#allocation12 + $0x218] sm:$0xff]
        %v6455 = vld [vmem:[#allocation12 + $0x220] sm:$0xff]
        %v6456 = vld [vmem:[#allocation12 + $0x228] sm:$0xff]
        %v6457 = vld [vmem:[#allocation12 + $0x230] sm:$0xff]
        %v6458 = vld [vmem:[#allocation12 + $0x238] sm:$0xff]
        %v6459 = vld [vmem:[#allocation12 + $0x240] sm:$0xff]
        %v6460 = vld [vmem:[#allocation12 + $0x248] sm:$0xff]
        %v6461 = vld [vmem:[#allocation12 + $0x250] sm:$0xff]
        %v6462 = vld [vmem:[#allocation12 + $0x258] sm:$0xff]
        %v6463 = vld [vmem:[#allocation12 + $0x260] sm:$0xff]
        %v6464 = vld [vmem:[#allocation12 + $0x268] sm:$0xff]
        %v6465 = vld [vmem:[#allocation12 + $0x270] sm:$0xff]
        %v6466 = vld [vmem:[#allocation12 + $0x278] sm:$0xff]
        %v6467 = vld [vmem:[#allocation12 + $0x280] sm:$0xff]
        %v6468 = vld [vmem:[#allocation12 + $0x288] sm:$0xff]
        %v6469 = vld [vmem:[#allocation12 + $0x290] sm:$0xff]
        %v6470 = vld [vmem:[#allocation12 + $0x298] sm:$0xff]
        %v6471 = vld [vmem:[#allocation12 + $0x2a0] sm:$0xff]
        %v6472 = vld [vmem:[#allocation12 + $0x2a8] sm:$0xff]
        %v6473 = vld [vmem:[#allocation12 + $0x2b0] sm:$0xff]
        %v6474 = vld [vmem:[#allocation12 + $0x2b8] sm:$0xff]
        %v6475 = vld [vmem:[#allocation12 + $0x2c0] sm:$0xff]
        %v6476 = vld [vmem:[#allocation12 + $0x2c8] sm:$0xff]
        %v6477 = vld [vmem:[#allocation12 + $0x2d0] sm:$0xff]
        %v6478 = vld [vmem:[#allocation12 + $0x2d8] sm:$0xff]
        %v6479 = vld [vmem:[#allocation12 + $0x2e0] sm:$0xff]
        %v6480 = vld [vmem:[#allocation12 + $0x2e8] sm:$0xff]
        %v6481 = vld [vmem:[#allocation12 + $0x2f0] sm:$0xff]
        %v6482 = vld [vmem:[#allocation12 + $0x2f8] sm:$0xff]
        %v6483 = vld [vmem:[#allocation12 + $0x300] sm:$0xff]
        %v6484 = vld [vmem:[#allocation12 + $0x308] sm:$0xff]
        %v6485 = vld [vmem:[#allocation12 + $0x310] sm:$0xff]
        %v6486 = vld [vmem:[#allocation12 + $0x318] sm:$0xff]
        %v6487 = vld [vmem:[#allocation12 + $0x320] sm:$0xff]
        %v6488 = vld [vmem:[#allocation12 + $0x328] sm:$0xff]
        %v6489 = vld [vmem:[#allocation12 + $0x330] sm:$0xff]
        %v6490 = vld [vmem:[#allocation12 + $0x338] sm:$0xff]
        %v6491 = vld [vmem:[#allocation12 + $0x340] sm:$0xff]
        %v6492 = vld [vmem:[#allocation12 + $0x348] sm:$0xff]
        %v6493 = vld [vmem:[#allocation12 + $0x350] sm:$0xff]
        %v6494 = vld [vmem:[#allocation12 + $0x358] sm:$0xff]
        %v6495 = vld [vmem:[#allocation12 + $0x360] sm:$0xff]
        %v6496 = vld [vmem:[#allocation12 + $0x368] sm:$0xff]
        %v6497 = vld [vmem:[#allocation12 + $0x370] sm:$0xff]
        %v6498 = vld [vmem:[#allocation12 + $0x378] sm:$0xff]
        %v6499 = vld [vmem:[#allocation12 + $0x380] sm:$0xff]
        %v6500 = vld [vmem:[#allocation12 + $0x388] sm:$0xff]
        %v6501 = vld [vmem:[#allocation12 + $0x390] sm:$0xff]
        %v6502 = vld [vmem:[#allocation12 + $0x398] sm:$0xff]
        %v6503 = vld [vmem:[#allocation12 + $0x3a0] sm:$0xff]
        %v6504 = vld [vmem:[#allocation12 + $0x3a8] sm:$0xff]
        %v6505 = vld [vmem:[#allocation12 + $0x3b0] sm:$0xff]
        %v6506 = vld [vmem:[#allocation12 + $0x3b8] sm:$0xff]
        %v6507 = vld [vmem:[#allocation12 + $0x3c0] sm:$0xff]
        %v6508 = vld [vmem:[#allocation12 + $0x3c8] sm:$0xff]
        %v6509 = vld [vmem:[#allocation12 + $0x3d0] sm:$0xff]
        %v6510 = vld [vmem:[#allocation12 + $0x3d8] sm:$0xff]
        %v6511 = vld [vmem:[#allocation12 + $0x3e0] sm:$0xff]
        %v6512 = vld [vmem:[#allocation12 + $0x3e8] sm:$0xff]
        %v6513 = vld [vmem:[#allocation12 + $0x3f0] sm:$0xff]
        %v6514 = vld [vmem:[#allocation12 + $0x3f8] sm:$0xff]
        %v6515 = vld [vmem:[%s8] sm:$0xf]
        %v6517 = vlaneseq
        %v6518 = vshrl.u32 %v6517, 7
        %v6519 = vsub.s32 0, %v6518
        %v6520 = vrot.slane %v6515, %v6519
        %v6521 = vlaneseq
        %v6522 = vshrl.u32 %v6521, 7
        %v6523 = vsub.s32 1, %v6522
        %v6524 = vrot.slane %v6515, %v6523
        %v6525 = vlaneseq
        %v6526 = vshrl.u32 %v6525, 7
        %v6527 = vsub.s32 2, %v6526
        %v6528 = vrot.slane %v6515, %v6527
        %v6529 = vlaneseq
        %v6530 = vshrl.u32 %v6529, 7
        %v6531 = vsub.s32 3, %v6530
        %v6532 = vrot.slane %v6515, %v6531
        %v6665 = vunpack.c.l.b16 %v6387
        %v6666 = vunpack.c.h.b16 %v6387
        %v6667 = vunpack.c.l.b16 %v6388
        %v6668 = vunpack.c.h.b16 %v6388
        %v6669 = vunpack.c.l.b16 %v6389
        %v6670 = vunpack.c.h.b16 %v6389
        %v6671 = vunpack.c.l.b16 %v6390
        %v6672 = vunpack.c.h.b16 %v6390
        %v6673 = vunpack.c.l.b16 %v6391
        %v6674 = vunpack.c.h.b16 %v6391
        %v6675 = vunpack.c.l.b16 %v6392
        %v6676 = vunpack.c.h.b16 %v6392
        %v6677 = vunpack.c.l.b16 %v6393
        %v6678 = vunpack.c.h.b16 %v6393
        %v6679 = vunpack.c.l.b16 %v6394
        %v6680 = vunpack.c.h.b16 %v6394
        %v6681 = vunpack.c.l.b16 %v6395
        %v6682 = vunpack.c.h.b16 %v6395
        %v6683 = vunpack.c.l.b16 %v6396
        %v6684 = vunpack.c.h.b16 %v6396
        %v6685 = vunpack.c.l.b16 %v6397
        %v6686 = vunpack.c.h.b16 %v6397
        %v6687 = vunpack.c.l.b16 %v6398
        %v6688 = vunpack.c.h.b16 %v6398
        %v6689 = vunpack.c.l.b16 %v6399
        %v6690 = vunpack.c.h.b16 %v6399
        %v6691 = vunpack.c.l.b16 %v6400
        %v6692 = vunpack.c.h.b16 %v6400
        %v6693 = vunpack.c.l.b16 %v6401
        %v6694 = vunpack.c.h.b16 %v6401
        %v6695 = vunpack.c.l.b16 %v6402
        %v6696 = vunpack.c.h.b16 %v6402
        %v6697 = vunpack.c.l.b16 %v6403
        %v6698 = vunpack.c.h.b16 %v6403
        %v6699 = vunpack.c.l.b16 %v6404
        %v6700 = vunpack.c.h.b16 %v6404
        %v6701 = vunpack.c.l.b16 %v6405
        %v6702 = vunpack.c.h.b16 %v6405
        %v6703 = vunpack.c.l.b16 %v6406
        %v6704 = vunpack.c.h.b16 %v6406
        %v6705 = vunpack.c.l.b16 %v6407
        %v6706 = vunpack.c.h.b16 %v6407
        %v6707 = vunpack.c.l.b16 %v6408
        %v6708 = vunpack.c.h.b16 %v6408
        %v6709 = vunpack.c.l.b16 %v6409
        %v6710 = vunpack.c.h.b16 %v6409
        %v6711 = vunpack.c.l.b16 %v6410
        %v6712 = vunpack.c.h.b16 %v6410
        %v6713 = vunpack.c.l.b16 %v6411
        %v6714 = vunpack.c.h.b16 %v6411
        %v6715 = vunpack.c.l.b16 %v6412
        %v6716 = vunpack.c.h.b16 %v6412
        %v6717 = vunpack.c.l.b16 %v6413
        %v6718 = vunpack.c.h.b16 %v6413
        %v6719 = vunpack.c.l.b16 %v6414
        %v6720 = vunpack.c.h.b16 %v6414
        %v6721 = vunpack.c.l.b16 %v6415
        %v6722 = vunpack.c.h.b16 %v6415
        %v6723 = vunpack.c.l.b16 %v6416
        %v6724 = vunpack.c.h.b16 %v6416
        %v6725 = vunpack.c.l.b16 %v6417
        %v6726 = vunpack.c.h.b16 %v6417
        %v6727 = vunpack.c.l.b16 %v6418
        %v6728 = vunpack.c.h.b16 %v6418
        %v6729 = vunpack.c.l.b16 %v6419
        %v6730 = vunpack.c.h.b16 %v6419
        %v6731 = vunpack.c.l.b16 %v6420
        %v6732 = vunpack.c.h.b16 %v6420
        %v6733 = vunpack.c.l.b16 %v6421
        %v6734 = vunpack.c.h.b16 %v6421
        %v6735 = vunpack.c.l.b16 %v6422
        %v6736 = vunpack.c.h.b16 %v6422
        %v6737 = vunpack.c.l.b16 %v6423
        %v6738 = vunpack.c.h.b16 %v6423
        %v6739 = vunpack.c.l.b16 %v6424
        %v6740 = vunpack.c.h.b16 %v6424
        %v6741 = vunpack.c.l.b16 %v6425
        %v6742 = vunpack.c.h.b16 %v6425
        %v6743 = vunpack.c.l.b16 %v6426
        %v6744 = vunpack.c.h.b16 %v6426
        %v6745 = vunpack.c.l.b16 %v6427
        %v6746 = vunpack.c.h.b16 %v6427
        %v6747 = vunpack.c.l.b16 %v6428
        %v6748 = vunpack.c.h.b16 %v6428
        %v6749 = vunpack.c.l.b16 %v6429
        %v6750 = vunpack.c.h.b16 %v6429
        %v6751 = vunpack.c.l.b16 %v6430
        %v6752 = vunpack.c.h.b16 %v6430
        %v6753 = vunpack.c.l.b16 %v6431
        %v6754 = vunpack.c.h.b16 %v6431
        %v6755 = vunpack.c.l.b16 %v6432
        %v6756 = vunpack.c.h.b16 %v6432
        %v6757 = vunpack.c.l.b16 %v6433
        %v6758 = vunpack.c.h.b16 %v6433
        %v6759 = vunpack.c.l.b16 %v6434
        %v6760 = vunpack.c.h.b16 %v6434
        %v6761 = vunpack.c.l.b16 %v6435
        %v6762 = vunpack.c.h.b16 %v6435
        %v6763 = vunpack.c.l.b16 %v6436
        %v6764 = vunpack.c.h.b16 %v6436
        %v6765 = vunpack.c.l.b16 %v6437
        %v6766 = vunpack.c.h.b16 %v6437
        %v6767 = vunpack.c.l.b16 %v6438
        %v6768 = vunpack.c.h.b16 %v6438
        %v6769 = vunpack.c.l.b16 %v6439
        %v6770 = vunpack.c.h.b16 %v6439
        %v6771 = vunpack.c.l.b16 %v6440
        %v6772 = vunpack.c.h.b16 %v6440
        %v6773 = vunpack.c.l.b16 %v6441
        %v6774 = vunpack.c.h.b16 %v6441
        %v6775 = vunpack.c.l.b16 %v6442
        %v6776 = vunpack.c.h.b16 %v6442
        %v6777 = vunpack.c.l.b16 %v6443
        %v6778 = vunpack.c.h.b16 %v6443
        %v6779 = vunpack.c.l.b16 %v6444
        %v6780 = vunpack.c.h.b16 %v6444
        %v6781 = vunpack.c.l.b16 %v6445
        %v6782 = vunpack.c.h.b16 %v6445
        %v6783 = vunpack.c.l.b16 %v6446
        %v6784 = vunpack.c.h.b16 %v6446
        %v6785 = vunpack.c.l.b16 %v6447
        %v6786 = vunpack.c.h.b16 %v6447
        %v6787 = vunpack.c.l.b16 %v6448
        %v6788 = vunpack.c.h.b16 %v6448
        %v6789 = vunpack.c.l.b16 %v6449
        %v6790 = vunpack.c.h.b16 %v6449
        %v6791 = vunpack.c.l.b16 %v6450
        %v6792 = vunpack.c.h.b16 %v6450
        %v6793 = vunpack.c.l.b16 %v6451
        %v6794 = vunpack.c.h.b16 %v6451
        %v6795 = vunpack.c.l.b16 %v6452
        %v6796 = vunpack.c.h.b16 %v6452
        %v6797 = vunpack.c.l.b16 %v6453
        %v6798 = vunpack.c.h.b16 %v6453
        %v6799 = vunpack.c.l.b16 %v6454
        %v6800 = vunpack.c.h.b16 %v6454
        %v6801 = vunpack.c.l.b16 %v6455
        %v6802 = vunpack.c.h.b16 %v6455
        %v6803 = vunpack.c.l.b16 %v6456
        %v6804 = vunpack.c.h.b16 %v6456
        %v6805 = vunpack.c.l.b16 %v6457
        %v6806 = vunpack.c.h.b16 %v6457
        %v6807 = vunpack.c.l.b16 %v6458
        %v6808 = vunpack.c.h.b16 %v6458
        %v6809 = vunpack.c.l.b16 %v6459
        %v6810 = vunpack.c.h.b16 %v6459
        %v6811 = vunpack.c.l.b16 %v6460
        %v6812 = vunpack.c.h.b16 %v6460
        %v6813 = vunpack.c.l.b16 %v6461
        %v6814 = vunpack.c.h.b16 %v6461
        %v6815 = vunpack.c.l.b16 %v6462
        %v6816 = vunpack.c.h.b16 %v6462
        %v6817 = vunpack.c.l.b16 %v6463
        %v6818 = vunpack.c.h.b16 %v6463
        %v6819 = vunpack.c.l.b16 %v6464
        %v6820 = vunpack.c.h.b16 %v6464
        %v6821 = vunpack.c.l.b16 %v6465
        %v6822 = vunpack.c.h.b16 %v6465
        %v6823 = vunpack.c.l.b16 %v6466
        %v6824 = vunpack.c.h.b16 %v6466
        %v6825 = vunpack.c.l.b16 %v6467
        %v6826 = vunpack.c.h.b16 %v6467
        %v6827 = vunpack.c.l.b16 %v6468
        %v6828 = vunpack.c.h.b16 %v6468
        %v6829 = vunpack.c.l.b16 %v6469
        %v6830 = vunpack.c.h.b16 %v6469
        %v6831 = vunpack.c.l.b16 %v6470
        %v6832 = vunpack.c.h.b16 %v6470
        %v6833 = vunpack.c.l.b16 %v6471
        %v6834 = vunpack.c.h.b16 %v6471
        %v6835 = vunpack.c.l.b16 %v6472
        %v6836 = vunpack.c.h.b16 %v6472
        %v6837 = vunpack.c.l.b16 %v6473
        %v6838 = vunpack.c.h.b16 %v6473
        %v6839 = vunpack.c.l.b16 %v6474
        %v6840 = vunpack.c.h.b16 %v6474
        %v6841 = vunpack.c.l.b16 %v6475
        %v6842 = vunpack.c.h.b16 %v6475
        %v6843 = vunpack.c.l.b16 %v6476
        %v6844 = vunpack.c.h.b16 %v6476
        %v6845 = vunpack.c.l.b16 %v6477
        %v6846 = vunpack.c.h.b16 %v6477
        %v6847 = vunpack.c.l.b16 %v6478
        %v6848 = vunpack.c.h.b16 %v6478
        %v6849 = vunpack.c.l.b16 %v6479
        %v6850 = vunpack.c.h.b16 %v6479
        %v6851 = vunpack.c.l.b16 %v6480
        %v6852 = vunpack.c.h.b16 %v6480
        %v6853 = vunpack.c.l.b16 %v6481
        %v6854 = vunpack.c.h.b16 %v6481
        %v6855 = vunpack.c.l.b16 %v6482
        %v6856 = vunpack.c.h.b16 %v6482
        %v6857 = vunpack.c.l.b16 %v6483
        %v6858 = vunpack.c.h.b16 %v6483
        %v6859 = vunpack.c.l.b16 %v6484
        %v6860 = vunpack.c.h.b16 %v6484
        %v6861 = vunpack.c.l.b16 %v6485
        %v6862 = vunpack.c.h.b16 %v6485
        %v6863 = vunpack.c.l.b16 %v6486
        %v6864 = vunpack.c.h.b16 %v6486
        %v6865 = vunpack.c.l.b16 %v6487
        %v6866 = vunpack.c.h.b16 %v6487
        %v6867 = vunpack.c.l.b16 %v6488
        %v6868 = vunpack.c.h.b16 %v6488
        %v6869 = vunpack.c.l.b16 %v6489
        %v6870 = vunpack.c.h.b16 %v6489
        %v6871 = vunpack.c.l.b16 %v6490
        %v6872 = vunpack.c.h.b16 %v6490
        %v6873 = vunpack.c.l.b16 %v6491
        %v6874 = vunpack.c.h.b16 %v6491
        %v6875 = vunpack.c.l.b16 %v6492
        %v6876 = vunpack.c.h.b16 %v6492
        %v6877 = vunpack.c.l.b16 %v6493
        %v6878 = vunpack.c.h.b16 %v6493
        %v6879 = vunpack.c.l.b16 %v6494
        %v6880 = vunpack.c.h.b16 %v6494
        %v6881 = vunpack.c.l.b16 %v6495
        %v6882 = vunpack.c.h.b16 %v6495
        %v6883 = vunpack.c.l.b16 %v6496
        %v6884 = vunpack.c.h.b16 %v6496
        %v6885 = vunpack.c.l.b16 %v6497
        %v6886 = vunpack.c.h.b16 %v6497
        %v6887 = vunpack.c.l.b16 %v6498
        %v6888 = vunpack.c.h.b16 %v6498
        %v6889 = vunpack.c.l.b16 %v6499
        %v6890 = vunpack.c.h.b16 %v6499
        %v6891 = vunpack.c.l.b16 %v6500
        %v6892 = vunpack.c.h.b16 %v6500
        %v6893 = vunpack.c.l.b16 %v6501
        %v6894 = vunpack.c.h.b16 %v6501
        %v6895 = vunpack.c.l.b16 %v6502
        %v6896 = vunpack.c.h.b16 %v6502
        %v6897 = vunpack.c.l.b16 %v6503
        %v6898 = vunpack.c.h.b16 %v6503
        %v6899 = vunpack.c.l.b16 %v6504
        %v6900 = vunpack.c.h.b16 %v6504
        %v6901 = vunpack.c.l.b16 %v6505
        %v6902 = vunpack.c.h.b16 %v6505
        %v6903 = vunpack.c.l.b16 %v6506
        %v6904 = vunpack.c.h.b16 %v6506
        %v6905 = vunpack.c.l.b16 %v6507
        %v6906 = vunpack.c.h.b16 %v6507
        %v6907 = vunpack.c.l.b16 %v6508
        %v6908 = vunpack.c.h.b16 %v6508
        %v6909 = vunpack.c.l.b16 %v6509
        %v6910 = vunpack.c.h.b16 %v6509
        %v6911 = vunpack.c.l.b16 %v6510
        %v6912 = vunpack.c.h.b16 %v6510
        %v6913 = vunpack.c.l.b16 %v6511
        %v6914 = vunpack.c.h.b16 %v6511
        %v6915 = vunpack.c.l.b16 %v6512
        %v6916 = vunpack.c.h.b16 %v6512
        %v6917 = vunpack.c.l.b16 %v6513
        %v6918 = vunpack.c.h.b16 %v6513
        %v6919 = vunpack.c.l.b16 %v6514
        %v6920 = vunpack.c.h.b16 %v6514
        %v6921 = vpack.c.b16 %v6669, %v6665
        %v6922 = vpack.c.b16 %v6670, %v6666
        %v6923 = vpack.c.b16 %v6671, %v6667
        %v6924 = vpack.c.b16 %v6672, %v6668
        %v6925 = vpack.c.b16 %v6677, %v6673
        %v6926 = vpack.c.b16 %v6678, %v6674
        %v6927 = vpack.c.b16 %v6679, %v6675
        %v6928 = vpack.c.b16 %v6680, %v6676
        %v6929 = vpack.c.b16 %v6685, %v6681
        %v6930 = vpack.c.b16 %v6686, %v6682
        %v6931 = vpack.c.b16 %v6687, %v6683
        %v6932 = vpack.c.b16 %v6688, %v6684
        %v6933 = vpack.c.b16 %v6693, %v6689
        %v6934 = vpack.c.b16 %v6694, %v6690
        %v6935 = vpack.c.b16 %v6695, %v6691
        %v6936 = vpack.c.b16 %v6696, %v6692
        %v6937 = vpack.c.b16 %v6701, %v6697
        %v6938 = vpack.c.b16 %v6702, %v6698
        %v6939 = vpack.c.b16 %v6703, %v6699
        %v6940 = vpack.c.b16 %v6704, %v6700
        %v6941 = vpack.c.b16 %v6709, %v6705
        %v6942 = vpack.c.b16 %v6710, %v6706
        %v6943 = vpack.c.b16 %v6711, %v6707
        %v6944 = vpack.c.b16 %v6712, %v6708
        %v6945 = vpack.c.b16 %v6717, %v6713
        %v6946 = vpack.c.b16 %v6718, %v6714
        %v6947 = vpack.c.b16 %v6719, %v6715
        %v6948 = vpack.c.b16 %v6720, %v6716
        %v6949 = vpack.c.b16 %v6725, %v6721
        %v6950 = vpack.c.b16 %v6726, %v6722
        %v6951 = vpack.c.b16 %v6727, %v6723
        %v6952 = vpack.c.b16 %v6728, %v6724
        %v6953 = vpack.c.b16 %v6733, %v6729
        %v6954 = vpack.c.b16 %v6734, %v6730
        %v6955 = vpack.c.b16 %v6735, %v6731
        %v6956 = vpack.c.b16 %v6736, %v6732
        %v6957 = vpack.c.b16 %v6741, %v6737
        %v6958 = vpack.c.b16 %v6742, %v6738
        %v6959 = vpack.c.b16 %v6743, %v6739
        %v6960 = vpack.c.b16 %v6744, %v6740
        %v6961 = vpack.c.b16 %v6749, %v6745
        %v6962 = vpack.c.b16 %v6750, %v6746
        %v6963 = vpack.c.b16 %v6751, %v6747
        %v6964 = vpack.c.b16 %v6752, %v6748
        %v6965 = vpack.c.b16 %v6757, %v6753
        %v6966 = vpack.c.b16 %v6758, %v6754
        %v6967 = vpack.c.b16 %v6759, %v6755
        %v6968 = vpack.c.b16 %v6760, %v6756
        %v6969 = vpack.c.b16 %v6765, %v6761
        %v6970 = vpack.c.b16 %v6766, %v6762
        %v6971 = vpack.c.b16 %v6767, %v6763
        %v6972 = vpack.c.b16 %v6768, %v6764
        %v6973 = vpack.c.b16 %v6773, %v6769
        %v6974 = vpack.c.b16 %v6774, %v6770
        %v6975 = vpack.c.b16 %v6775, %v6771
        %v6976 = vpack.c.b16 %v6776, %v6772
        %v6977 = vpack.c.b16 %v6781, %v6777
        %v6978 = vpack.c.b16 %v6782, %v6778
        %v6979 = vpack.c.b16 %v6783, %v6779
        %v6980 = vpack.c.b16 %v6784, %v6780
        %v6981 = vpack.c.b16 %v6789, %v6785
        %v6982 = vpack.c.b16 %v6790, %v6786
        %v6983 = vpack.c.b16 %v6791, %v6787
        %v6984 = vpack.c.b16 %v6792, %v6788
        %v6985 = vpack.c.b16 %v6797, %v6793
        %v6986 = vpack.c.b16 %v6798, %v6794
        %v6987 = vpack.c.b16 %v6799, %v6795
        %v6988 = vpack.c.b16 %v6800, %v6796
        %v6989 = vpack.c.b16 %v6805, %v6801
        %v6990 = vpack.c.b16 %v6806, %v6802
        %v6991 = vpack.c.b16 %v6807, %v6803
        %v6992 = vpack.c.b16 %v6808, %v6804
        %v6993 = vpack.c.b16 %v6813, %v6809
        %v6994 = vpack.c.b16 %v6814, %v6810
        %v6995 = vpack.c.b16 %v6815, %v6811
        %v6996 = vpack.c.b16 %v6816, %v6812
        %v6997 = vpack.c.b16 %v6821, %v6817
        %v6998 = vpack.c.b16 %v6822, %v6818
        %v6999 = vpack.c.b16 %v6823, %v6819
        %v7000 = vpack.c.b16 %v6824, %v6820
        %v7001 = vpack.c.b16 %v6829, %v6825
        %v7002 = vpack.c.b16 %v6830, %v6826
        %v7003 = vpack.c.b16 %v6831, %v6827
        %v7004 = vpack.c.b16 %v6832, %v6828
        %v7005 = vpack.c.b16 %v6837, %v6833
        %v7006 = vpack.c.b16 %v6838, %v6834
        %v7007 = vpack.c.b16 %v6839, %v6835
        %v7008 = vpack.c.b16 %v6840, %v6836
        %v7009 = vpack.c.b16 %v6845, %v6841
        %v7010 = vpack.c.b16 %v6846, %v6842
        %v7011 = vpack.c.b16 %v6847, %v6843
        %v7012 = vpack.c.b16 %v6848, %v6844
        %v7013 = vpack.c.b16 %v6853, %v6849
        %v7014 = vpack.c.b16 %v6854, %v6850
        %v7015 = vpack.c.b16 %v6855, %v6851
        %v7016 = vpack.c.b16 %v6856, %v6852
        %v7017 = vpack.c.b16 %v6861, %v6857
        %v7018 = vpack.c.b16 %v6862, %v6858
        %v7019 = vpack.c.b16 %v6863, %v6859
        %v7020 = vpack.c.b16 %v6864, %v6860
        %v7021 = vpack.c.b16 %v6869, %v6865
        %v7022 = vpack.c.b16 %v6870, %v6866
        %v7023 = vpack.c.b16 %v6871, %v6867
        %v7024 = vpack.c.b16 %v6872, %v6868
        %v7025 = vpack.c.b16 %v6877, %v6873
        %v7026 = vpack.c.b16 %v6878, %v6874
        %v7027 = vpack.c.b16 %v6879, %v6875
        %v7028 = vpack.c.b16 %v6880, %v6876
        %v7029 = vpack.c.b16 %v6885, %v6881
        %v7030 = vpack.c.b16 %v6886, %v6882
        %v7031 = vpack.c.b16 %v6887, %v6883
        %v7032 = vpack.c.b16 %v6888, %v6884
        %v7033 = vpack.c.b16 %v6893, %v6889
        %v7034 = vpack.c.b16 %v6894, %v6890
        %v7035 = vpack.c.b16 %v6895, %v6891
        %v7036 = vpack.c.b16 %v6896, %v6892
        %v7037 = vpack.c.b16 %v6901, %v6897
        %v7038 = vpack.c.b16 %v6902, %v6898
        %v7039 = vpack.c.b16 %v6903, %v6899
        %v7040 = vpack.c.b16 %v6904, %v6900
        %v7041 = vpack.c.b16 %v6909, %v6905
        %v7042 = vpack.c.b16 %v6910, %v6906
        %v7043 = vpack.c.b16 %v6911, %v6907
        %v7044 = vpack.c.b16 %v6912, %v6908
        %v7045 = vpack.c.b16 %v6917, %v6913
        %v7046 = vpack.c.b16 %v6918, %v6914
        %v7047 = vpack.c.b16 %v6919, %v6915
        %v7048 = vpack.c.b16 %v6920, %v6916
        %7177 = vmatprep.subr.bf16.mxu0 %v6950
        %7178 = vmatpush1.bf16.msra.mxu0 %v6949
        %7179 = vmatprep.subr.bf16.mxu0 %v6946
        %7180 = vmatpush1.bf16.msra.mxu0 %v6945
        %7181 = vmatprep.subr.bf16.mxu0 %v6942
        %7182 = vmatpush1.bf16.msra.mxu0 %v6941
        %7183 = vmatprep.subr.bf16.mxu0 %v6938
        %7184 = vmatpush1.bf16.msra.mxu0 %v6937
        %7185 = vmatprep.subr.bf16.mxu0 %v6934
        %7186 = vmatpush1.bf16.msra.mxu0 %v6933
        %7187 = vmatprep.subr.bf16.mxu0 %v6930
        %7188 = vmatpush1.bf16.msra.mxu0 %v6929
        %7189 = vmatprep.subr.bf16.mxu0 %v6926
        %7190 = vmatpush1.bf16.msra.mxu0 %v6925
        %7191 = vmatprep.subr.bf16.mxu0 %v6922
        %7192 = vmatpush1.bf16.msra.mxu0 %v6921
        %7193 = vmatprep.subr.bf16.mxu0 %v6982
        %7194 = vmatpush2.bf16.msra.mxu0 %v6981
        %7195 = vmatprep.subr.bf16.mxu0 %v6978
        %7196 = vmatpush2.bf16.msra.mxu0 %v6977
        %7197 = vmatprep.subr.bf16.mxu0 %v6974
        %7198 = vmatpush2.bf16.msra.mxu0 %v6973
        %7199 = vmatprep.subr.bf16.mxu0 %v6970
        %7200 = vmatpush2.bf16.msra.mxu0 %v6969
        %7201 = vmatprep.subr.bf16.mxu0 %v6966
        %7202 = vmatpush2.bf16.msra.mxu0 %v6965
        %7203 = vmatprep.subr.bf16.mxu0 %v6962
        %7204 = vmatpush2.bf16.msra.mxu0 %v6961
        %7205 = vmatprep.subr.bf16.mxu0 %v6958
        %7206 = vmatpush2.bf16.msra.mxu0 %v6957
        %7207 = vmatprep.subr.bf16.mxu0 %v6954
        %7208 = vmatpush2.bf16.msra.mxu0 %v6953
        %7209 = vmatprep.mubr.bf16.mxu0 %v6360
        %7210 = vmatmul.mubr.bf16.gmra.mxu0 %v6359
        %v7211 = vpop.f32.mrf.mxu0
        %v7212 = vadd.f32 %v6520, %v7211
        %v7213 = vpop.f32.mrf.mxu0
        %v7214 = vadd.f32 %v6524, %v7213
        %v7215 = vpop.f32.mrf.mxu0
        %v7216 = vadd.f32 %v6520, %v7215
        %v7217 = vpop.f32.mrf.mxu0
        %v7218 = vadd.f32 %v6524, %v7217
        %7219 = vmatprep.mubr.bf16.mxu0 %v6364
        %7220 = vmatmul.mubr.bf16.gmra.mxu0 %v6363
        %v7221 = vpop.f32.mrf.mxu0
        %v7222 = vadd.f32 %v6520, %v7221
        %v7223 = vpop.f32.mrf.mxu0
        %v7224 = vadd.f32 %v6524, %v7223
        %v7225 = vpop.f32.mrf.mxu0
        %v7226 = vadd.f32 %v6520, %v7225
        %v7227 = vpop.f32.mrf.mxu0
        %v7228 = vadd.f32 %v6524, %v7227
        %7229 = vmatprep.mubr.bf16.mxu0 %v6368
        %7230 = vmatmul.mubr.bf16.gmra.mxu0 %v6367
        %v7231 = vpop.f32.mrf.mxu0
        %v7232 = vadd.f32 %v6520, %v7231
        %v7233 = vpop.f32.mrf.mxu0
        %v7234 = vadd.f32 %v6524, %v7233
        %v7235 = vpop.f32.mrf.mxu0
        %v7236 = vadd.f32 %v6520, %v7235
        %v7237 = vpop.f32.mrf.mxu0
        %v7238 = vadd.f32 %v6524, %v7237
        %7239 = vmatprep.mubr.bf16.mxu0 %v6372
        %7240 = vmatmul.mubr.bf16.gmra.mxu0 %v6371
        %v7241 = vpop.f32.mrf.mxu0
        %v7242 = vadd.f32 %v6520, %v7241
        %v7243 = vpop.f32.mrf.mxu0
        %v7244 = vadd.f32 %v6524, %v7243
        %v7245 = vpop.f32.mrf.mxu0
        %v7246 = vadd.f32 %v6520, %v7245
        %v7247 = vpop.f32.mrf.mxu0
        %v7248 = vadd.f32 %v6524, %v7247
        %7249 = vmatprep.mubr.bf16.mxu0 %v6376
        %7250 = vmatmul.mubr.bf16.gmra.mxu0 %v6375
        %v7251 = vpop.f32.mrf.mxu0
        %v7252 = vadd.f32 %v6520, %v7251
        %v7253 = vpop.f32.mrf.mxu0
        %v7254 = vadd.f32 %v6524, %v7253
        %v7255 = vpop.f32.mrf.mxu0
        %v7256 = vadd.f32 %v6520, %v7255
        %v7257 = vpop.f32.mrf.mxu0
        %v7258 = vadd.f32 %v6524, %v7257
        %7259 = vmatprep.mubr.bf16.mxu0 %v6380
        %7260 = vmatmul.mubr.bf16.gmra.mxu0 %v6379
        %v7261 = vpop.f32.mrf.mxu0
        %v7262 = vadd.f32 %v6520, %v7261
        %v7263 = vpop.f32.mrf.mxu0
        %v7264 = vadd.f32 %v6524, %v7263
        %v7265 = vpop.f32.mrf.mxu0
        %v7266 = vadd.f32 %v6520, %v7265
        %v7267 = vpop.f32.mrf.mxu0
        %v7268 = vadd.f32 %v6524, %v7267
        %7269 = vmatprep.mubr.bf16.mxu0 %v6384
        %7270 = vmatmul.mubr.bf16.gmra.mxu0 %v6383
        %v7271 = vpop.f32.mrf.mxu0
        %v7272 = vadd.f32 %v6520, %v7271
        %v7273 = vpop.f32.mrf.mxu0
        %v7274 = vadd.f32 %v6524, %v7273
        %v7275 = vpop.f32.mrf.mxu0
        %v7276 = vpop.f32.mrf.mxu0
        %7277 = vdwg.mxu0
        %7278 = vmatprep.subr.bf16.mxu0 %v7014
        %7279 = vmatpush1.bf16.msra.mxu0 %v7013
        %7280 = vmatprep.subr.bf16.mxu0 %v7010
        %7281 = vmatpush1.bf16.msra.mxu0 %v7009
        %7282 = vmatprep.subr.bf16.mxu0 %v7006
        %7283 = vmatpush1.bf16.msra.mxu0 %v7005
        %7284 = vmatprep.subr.bf16.mxu0 %v7002
        %7285 = vmatpush1.bf16.msra.mxu0 %v7001
        %7286 = vmatprep.subr.bf16.mxu0 %v6998
        %7287 = vmatpush1.bf16.msra.mxu0 %v6997
        %7288 = vmatprep.subr.bf16.mxu0 %v6994
        %7289 = vmatpush1.bf16.msra.mxu0 %v6993
        %7290 = vmatprep.subr.bf16.mxu0 %v6990
        %7291 = vmatpush1.bf16.msra.mxu0 %v6989
        %7292 = vmatprep.subr.bf16.mxu0 %v6986
        %7293 = vmatpush1.bf16.msra.mxu0 %v6985
        %7294 = vmatprep.subr.bf16.mxu0 %v7046
        %7295 = vmatpush2.bf16.msra.mxu0 %v7045
        %7296 = vmatprep.subr.bf16.mxu0 %v7042
        %7297 = vmatpush2.bf16.msra.mxu0 %v7041
        %7298 = vmatprep.subr.bf16.mxu0 %v7038
        %7299 = vmatpush2.bf16.msra.mxu0 %v7037
        %7300 = vmatprep.subr.bf16.mxu0 %v7034
        %7301 = vmatpush2.bf16.msra.mxu0 %v7033
        %7302 = vmatprep.subr.bf16.mxu0 %v7030
        %7303 = vmatpush2.bf16.msra.mxu0 %v7029
        %7304 = vmatprep.subr.bf16.mxu0 %v7026
        %7305 = vmatpush2.bf16.msra.mxu0 %v7025
        %7306 = vmatprep.subr.bf16.mxu0 %v7022
        %7307 = vmatpush2.bf16.msra.mxu0 %v7021
        %7308 = vmatprep.subr.bf16.mxu0 %v7018
        %7309 = vmatpush2.bf16.msra.mxu0 %v7017
        %7310 = vmatprep.mubr.bf16.mxu0 %v6362
        %7311 = vmatmul.mubr.bf16.gmra.mxu0 %v6361
        %v7312 = vpop.f32.mrf.mxu0
        %v7313 = vadd.f32 %v7212, %v7312
        %v7314 = vpop.f32.mrf.mxu0
        %v7315 = vadd.f32 %v7214, %v7314
        %v7316 = vpop.f32.mrf.mxu0
        %v7317 = vadd.f32 %v7216, %v7316
        %v7318 = vpop.f32.mrf.mxu0
        %v7319 = vadd.f32 %v7218, %v7318
        %7320 = vmatprep.mubr.bf16.mxu0 %v6366
        %7321 = vmatmul.mubr.bf16.gmra.mxu0 %v6365
        %v7322 = vpop.f32.mrf.mxu0
        %v7323 = vadd.f32 %v7222, %v7322
        %v7324 = vpop.f32.mrf.mxu0
        %v7325 = vadd.f32 %v7224, %v7324
        %v7326 = vpop.f32.mrf.mxu0
        %v7327 = vadd.f32 %v7226, %v7326
        %v7328 = vpop.f32.mrf.mxu0
        %v7329 = vadd.f32 %v7228, %v7328
        %7330 = vmatprep.mubr.bf16.mxu0 %v6370
        %7331 = vmatmul.mubr.bf16.gmra.mxu0 %v6369
        %v7332 = vpop.f32.mrf.mxu0
        %v7333 = vadd.f32 %v7232, %v7332
        %v7334 = vpop.f32.mrf.mxu0
        %v7335 = vadd.f32 %v7234, %v7334
        %v7336 = vpop.f32.mrf.mxu0
        %v7337 = vadd.f32 %v7236, %v7336
        %v7338 = vpop.f32.mrf.mxu0
        %v7339 = vadd.f32 %v7238, %v7338
        %7340 = vmatprep.mubr.bf16.mxu0 %v6374
        %7341 = vmatmul.mubr.bf16.gmra.mxu0 %v6373
        %v7342 = vpop.f32.mrf.mxu0
        %v7343 = vadd.f32 %v7242, %v7342
        %v7344 = vpop.f32.mrf.mxu0
        %v7345 = vadd.f32 %v7244, %v7344
        %v7346 = vpop.f32.mrf.mxu0
        %v7347 = vadd.f32 %v7246, %v7346
        %v7348 = vpop.f32.mrf.mxu0
        %v7349 = vadd.f32 %v7248, %v7348
        %7350 = vmatprep.mubr.bf16.mxu0 %v6378
        %7351 = vmatmul.mubr.bf16.gmra.mxu0 %v6377
        %v7352 = vpop.f32.mrf.mxu0
        %v7353 = vadd.f32 %v7252, %v7352
        %v7354 = vpop.f32.mrf.mxu0
        %v7355 = vadd.f32 %v7254, %v7354
        %v7356 = vpop.f32.mrf.mxu0
        %v7357 = vadd.f32 %v7256, %v7356
        %v7358 = vpop.f32.mrf.mxu0
        %v7359 = vadd.f32 %v7258, %v7358
        %7360 = vmatprep.mubr.bf16.mxu0 %v6382
        %7361 = vmatmul.mubr.bf16.gmra.mxu0 %v6381
        %v7362 = vpop.f32.mrf.mxu0
        %v7363 = vadd.f32 %v7262, %v7362
        %v7364 = vpop.f32.mrf.mxu0
        %v7365 = vadd.f32 %v7264, %v7364
        %v7366 = vpop.f32.mrf.mxu0
        %v7367 = vadd.f32 %v7266, %v7366
        %v7368 = vpop.f32.mrf.mxu0
        %v7369 = vadd.f32 %v7268, %v7368
        %7370 = vmatprep.mubr.bf16.mxu0 %v6386
        %7371 = vmatmul.mubr.bf16.gmra.mxu0 %v6385
        %v7372 = vpop.f32.mrf.mxu0
        %v7373 = vadd.f32 %v7272, %v7372
        %v7374 = vpop.f32.mrf.mxu0
        %v7375 = vadd.f32 %v7274, %v7374
        %v7376 = vpop.f32.mrf.mxu0
        %v7377 = vpop.f32.mrf.mxu0
        %7378 = vdwg.mxu0
        %7379 = vmatprep.subr.bf16.mxu0 %v6952
        %7380 = vmatpush1.bf16.msra.mxu0 %v6951
        %7381 = vmatprep.subr.bf16.mxu0 %v6948
        %7382 = vmatpush1.bf16.msra.mxu0 %v6947
        %7383 = vmatprep.subr.bf16.mxu0 %v6944
        %7384 = vmatpush1.bf16.msra.mxu0 %v6943
        %7385 = vmatprep.subr.bf16.mxu0 %v6940
        %7386 = vmatpush1.bf16.msra.mxu0 %v6939
        %7387 = vmatprep.subr.bf16.mxu0 %v6936
        %7388 = vmatpush1.bf16.msra.mxu0 %v6935
        %7389 = vmatprep.subr.bf16.mxu0 %v6932
        %7390 = vmatpush1.bf16.msra.mxu0 %v6931
        %7391 = vmatprep.subr.bf16.mxu0 %v6928
        %7392 = vmatpush1.bf16.msra.mxu0 %v6927
        %7393 = vmatprep.subr.bf16.mxu0 %v6924
        %7394 = vmatpush1.bf16.msra.mxu0 %v6923
        %7395 = vmatprep.subr.bf16.mxu0 %v6984
        %7396 = vmatpush2.bf16.msra.mxu0 %v6983
        %7397 = vmatprep.subr.bf16.mxu0 %v6980
        %7398 = vmatpush2.bf16.msra.mxu0 %v6979
        %7399 = vmatprep.subr.bf16.mxu0 %v6976
        %7400 = vmatpush2.bf16.msra.mxu0 %v6975
        %7401 = vmatprep.subr.bf16.mxu0 %v6972
        %7402 = vmatpush2.bf16.msra.mxu0 %v6971
        %7403 = vmatprep.subr.bf16.mxu0 %v6968
        %7404 = vmatpush2.bf16.msra.mxu0 %v6967
        %7405 = vmatprep.subr.bf16.mxu0 %v6964
        %7406 = vmatpush2.bf16.msra.mxu0 %v6963
        %7407 = vmatprep.subr.bf16.mxu0 %v6960
        %7408 = vmatpush2.bf16.msra.mxu0 %v6959
        %7409 = vmatprep.subr.bf16.mxu0 %v6956
        %7410 = vmatpush2.bf16.msra.mxu0 %v6955
        %7411 = vmatprep.mubr.bf16.mxu0 %v6360
        %7412 = vmatmul.mubr.bf16.gmra.mxu0 %v6359
        %v7413 = vpop.f32.mrf.mxu0
        %v7414 = vadd.f32 %v6528, %v7413
        %v7415 = vpop.f32.mrf.mxu0
        %v7416 = vadd.f32 %v6532, %v7415
        %v7417 = vpop.f32.mrf.mxu0
        %v7418 = vadd.f32 %v6528, %v7417
        %v7419 = vpop.f32.mrf.mxu0
        %v7420 = vadd.f32 %v6532, %v7419
        %7421 = vmatprep.mubr.bf16.mxu0 %v6364
        %7422 = vmatmul.mubr.bf16.gmra.mxu0 %v6363
        %v7423 = vpop.f32.mrf.mxu0
        %v7424 = vadd.f32 %v6528, %v7423
        %v7425 = vpop.f32.mrf.mxu0
        %v7426 = vadd.f32 %v6532, %v7425
        %v7427 = vpop.f32.mrf.mxu0
        %v7428 = vadd.f32 %v6528, %v7427
        %v7429 = vpop.f32.mrf.mxu0
        %v7430 = vadd.f32 %v6532, %v7429
        %7431 = vmatprep.mubr.bf16.mxu0 %v6368
        %7432 = vmatmul.mubr.bf16.gmra.mxu0 %v6367
        %v7433 = vpop.f32.mrf.mxu0
        %v7434 = vadd.f32 %v6528, %v7433
        %v7435 = vpop.f32.mrf.mxu0
        %v7436 = vadd.f32 %v6532, %v7435
        %v7437 = vpop.f32.mrf.mxu0
        %v7438 = vadd.f32 %v6528, %v7437
        %v7439 = vpop.f32.mrf.mxu0
        %v7440 = vadd.f32 %v6532, %v7439
        %7441 = vmatprep.mubr.bf16.mxu0 %v6372
        %7442 = vmatmul.mubr.bf16.gmra.mxu0 %v6371
        %v7443 = vpop.f32.mrf.mxu0
        %v7444 = vadd.f32 %v6528, %v7443
        %v7445 = vpop.f32.mrf.mxu0
        %v7446 = vadd.f32 %v6532, %v7445
        %v7447 = vpop.f32.mrf.mxu0
        %v7448 = vadd.f32 %v6528, %v7447
        %v7449 = vpop.f32.mrf.mxu0
        %v7450 = vadd.f32 %v6532, %v7449
        %7451 = vmatprep.mubr.bf16.mxu0 %v6376
        %7452 = vmatmul.mubr.bf16.gmra.mxu0 %v6375
        %v7453 = vpop.f32.mrf.mxu0
        %v7454 = vadd.f32 %v6528, %v7453
        %v7455 = vpop.f32.mrf.mxu0
        %v7456 = vadd.f32 %v6532, %v7455
        %v7457 = vpop.f32.mrf.mxu0
        %v7458 = vadd.f32 %v6528, %v7457
        %v7459 = vpop.f32.mrf.mxu0
        %v7460 = vadd.f32 %v6532, %v7459
        %7461 = vmatprep.mubr.bf16.mxu0 %v6380
        %7462 = vmatmul.mubr.bf16.gmra.mxu0 %v6379
        %v7463 = vpop.f32.mrf.mxu0
        %v7464 = vadd.f32 %v6528, %v7463
        %v7465 = vpop.f32.mrf.mxu0
        %v7466 = vadd.f32 %v6532, %v7465
        %v7467 = vpop.f32.mrf.mxu0
        %v7468 = vadd.f32 %v6528, %v7467
        %v7469 = vpop.f32.mrf.mxu0
        %v7470 = vadd.f32 %v6532, %v7469
        %7471 = vmatprep.mubr.bf16.mxu0 %v6384
        %7472 = vmatmul.mubr.bf16.gmra.mxu0 %v6383
        %v7473 = vpop.f32.mrf.mxu0
        %v7474 = vadd.f32 %v6528, %v7473
        %v7475 = vpop.f32.mrf.mxu0
        %v7476 = vadd.f32 %v6532, %v7475
        %v7477 = vpop.f32.mrf.mxu0
        %v7478 = vpop.f32.mrf.mxu0
        %7479 = vdwg.mxu0
        %7480 = vmatprep.subr.bf16.mxu0 %v7016
        %7481 = vmatpush1.bf16.msra.mxu0 %v7015
        %7482 = vmatprep.subr.bf16.mxu0 %v7012
        %7483 = vmatpush1.bf16.msra.mxu0 %v7011
        %7484 = vmatprep.subr.bf16.mxu0 %v7008
        %7485 = vmatpush1.bf16.msra.mxu0 %v7007
        %7486 = vmatprep.subr.bf16.mxu0 %v7004
        %7487 = vmatpush1.bf16.msra.mxu0 %v7003
        %7488 = vmatprep.subr.bf16.mxu0 %v7000
        %7489 = vmatpush1.bf16.msra.mxu0 %v6999
        %7490 = vmatprep.subr.bf16.mxu0 %v6996
        %7491 = vmatpush1.bf16.msra.mxu0 %v6995
        %7492 = vmatprep.subr.bf16.mxu0 %v6992
        %7493 = vmatpush1.bf16.msra.mxu0 %v6991
        %7494 = vmatprep.subr.bf16.mxu0 %v6988
        %7495 = vmatpush1.bf16.msra.mxu0 %v6987
        %7496 = vmatprep.subr.bf16.mxu0 %v7048
        %7497 = vmatpush2.bf16.msra.mxu0 %v7047
        %7498 = vmatprep.subr.bf16.mxu0 %v7044
        %7499 = vmatpush2.bf16.msra.mxu0 %v7043
        %7500 = vmatprep.subr.bf16.mxu0 %v7040
        %7501 = vmatpush2.bf16.msra.mxu0 %v7039
        %7502 = vmatprep.subr.bf16.mxu0 %v7036
        %7503 = vmatpush2.bf16.msra.mxu0 %v7035
        %7504 = vmatprep.subr.bf16.mxu0 %v7032
        %7505 = vmatpush2.bf16.msra.mxu0 %v7031
        %7506 = vmatprep.subr.bf16.mxu0 %v7028
        %7507 = vmatpush2.bf16.msra.mxu0 %v7027
        %7508 = vmatprep.subr.bf16.mxu0 %v7024
        %7509 = vmatpush2.bf16.msra.mxu0 %v7023
        %7510 = vmatprep.subr.bf16.mxu0 %v7020
        %7511 = vmatpush2.bf16.msra.mxu0 %v7019
        %7512 = vmatprep.mubr.bf16.mxu0 %v6362
        %7513 = vmatmul.mubr.bf16.gmra.mxu0 %v6361
        %v7514 = vpop.f32.mrf.mxu0
        %v7515 = vadd.f32 %v7414, %v7514
        %v7516 = vpop.f32.mrf.mxu0
        %v7517 = vadd.f32 %v7416, %v7516
        %v7518 = vpop.f32.mrf.mxu0
        %v7519 = vadd.f32 %v7418, %v7518
        %v7520 = vpop.f32.mrf.mxu0
        %v7521 = vadd.f32 %v7420, %v7520
        %7522 = vmatprep.mubr.bf16.mxu0 %v6366
        %7523 = vmatmul.mubr.bf16.gmra.mxu0 %v6365
        %v7524 = vpop.f32.mrf.mxu0
        %v7525 = vadd.f32 %v7424, %v7524
        %v7526 = vpop.f32.mrf.mxu0
        %v7527 = vadd.f32 %v7426, %v7526
        %v7528 = vpop.f32.mrf.mxu0
        %v7529 = vadd.f32 %v7428, %v7528
        %v7530 = vpop.f32.mrf.mxu0
        %v7531 = vadd.f32 %v7430, %v7530
        %7532 = vmatprep.mubr.bf16.mxu0 %v6370
        %7533 = vmatmul.mubr.bf16.gmra.mxu0 %v6369
        %v7534 = vpop.f32.mrf.mxu0
        %v7535 = vadd.f32 %v7434, %v7534
        %v7536 = vpop.f32.mrf.mxu0
        %v7537 = vadd.f32 %v7436, %v7536
        %v7538 = vpop.f32.mrf.mxu0
        %v7539 = vadd.f32 %v7438, %v7538
        %v7540 = vpop.f32.mrf.mxu0
        %v7541 = vadd.f32 %v7440, %v7540
        %7542 = vmatprep.mubr.bf16.mxu0 %v6374
        %7543 = vmatmul.mubr.bf16.gmra.mxu0 %v6373
        %v7544 = vpop.f32.mrf.mxu0
        %v7545 = vadd.f32 %v7444, %v7544
        %v7546 = vpop.f32.mrf.mxu0
        %v7547 = vadd.f32 %v7446, %v7546
        %v7548 = vpop.f32.mrf.mxu0
        %v7549 = vadd.f32 %v7448, %v7548
        %v7550 = vpop.f32.mrf.mxu0
        %v7551 = vadd.f32 %v7450, %v7550
        %7552 = vmatprep.mubr.bf16.mxu0 %v6378
        %7553 = vmatmul.mubr.bf16.gmra.mxu0 %v6377
        %v7554 = vpop.f32.mrf.mxu0
        %v7555 = vadd.f32 %v7454, %v7554
        %v7556 = vpop.f32.mrf.mxu0
        %v7557 = vadd.f32 %v7456, %v7556
        %v7558 = vpop.f32.mrf.mxu0
        %v7559 = vadd.f32 %v7458, %v7558
        %v7560 = vpop.f32.mrf.mxu0
        %v7561 = vadd.f32 %v7460, %v7560
        %7562 = vmatprep.mubr.bf16.mxu0 %v6382
        %7563 = vmatmul.mubr.bf16.gmra.mxu0 %v6381
        %v7564 = vpop.f32.mrf.mxu0
        %v7565 = vadd.f32 %v7464, %v7564
        %v7566 = vpop.f32.mrf.mxu0
        %v7567 = vadd.f32 %v7466, %v7566
        %v7568 = vpop.f32.mrf.mxu0
        %v7569 = vadd.f32 %v7468, %v7568
        %v7570 = vpop.f32.mrf.mxu0
        %v7571 = vadd.f32 %v7470, %v7570
        %7572 = vmatprep.mubr.bf16.mxu0 %v6386
        %7573 = vmatmul.mubr.bf16.gmra.mxu0 %v6385
        %v7574 = vpop.f32.mrf.mxu0
        %v7575 = vadd.f32 %v7474, %v7574
        %v7576 = vpop.f32.mrf.mxu0
        %v7577 = vadd.f32 %v7476, %v7576
        %v7578 = vpop.f32.mrf.mxu0
        %v7579 = vpop.f32.mrf.mxu0
        %7580 = vdwg.mxu0
        %v7581 = vmax.f32 %v7313, 0.0
        %v7582 = vmax.f32 %v7315, 0.0
        %v7583 = vmax.f32 %v7515, 0.0
        %v7584 = vmax.f32 %v7517, 0.0
        %v7585 = vmax.f32 %v7317, 0.0
        %v7586 = vmax.f32 %v7319, 0.0
        %v7587 = vmax.f32 %v7519, 0.0
        %v7588 = vmax.f32 %v7521, 0.0
        %v7589 = vmax.f32 %v7323, 0.0
        %v7590 = vmax.f32 %v7325, 0.0
        %v7591 = vmax.f32 %v7525, 0.0
        %v7592 = vmax.f32 %v7527, 0.0
        %v7593 = vmax.f32 %v7327, 0.0
        %v7594 = vmax.f32 %v7329, 0.0
        %v7595 = vmax.f32 %v7529, 0.0
        %v7596 = vmax.f32 %v7531, 0.0
        %v7597 = vmax.f32 %v7333, 0.0
        %v7598 = vmax.f32 %v7335, 0.0
        %v7599 = vmax.f32 %v7535, 0.0
        %v7600 = vmax.f32 %v7537, 0.0
        %v7601 = vmax.f32 %v7337, 0.0
        %v7602 = vmax.f32 %v7339, 0.0
        %v7603 = vmax.f32 %v7539, 0.0
        %v7604 = vmax.f32 %v7541, 0.0
        %v7605 = vmax.f32 %v7343, 0.0
        %v7606 = vmax.f32 %v7345, 0.0
        %v7607 = vmax.f32 %v7545, 0.0
        %v7608 = vmax.f32 %v7547, 0.0
        %v7609 = vmax.f32 %v7347, 0.0
        %v7610 = vmax.f32 %v7349, 0.0
        %v7611 = vmax.f32 %v7549, 0.0
        %v7612 = vmax.f32 %v7551, 0.0
        %v7613 = vmax.f32 %v7353, 0.0
        %v7614 = vmax.f32 %v7355, 0.0
        %v7615 = vmax.f32 %v7555, 0.0
        %v7616 = vmax.f32 %v7557, 0.0
        %v7617 = vmax.f32 %v7357, 0.0
        %v7618 = vmax.f32 %v7359, 0.0
        %v7619 = vmax.f32 %v7559, 0.0
        %v7620 = vmax.f32 %v7561, 0.0
        %v7621 = vmax.f32 %v7363, 0.0
        %v7622 = vmax.f32 %v7365, 0.0
        %v7623 = vmax.f32 %v7565, 0.0
        %v7624 = vmax.f32 %v7567, 0.0
        %v7625 = vmax.f32 %v7367, 0.0
        %v7626 = vmax.f32 %v7369, 0.0
        %v7627 = vmax.f32 %v7569, 0.0
        %v7628 = vmax.f32 %v7571, 0.0
        %v7629 = vmax.f32 %v7373, 0.0
        %v7630 = vmax.f32 %v7375, 0.0
        %v7631 = vmax.f32 %v7575, 0.0
        %v7632 = vmax.f32 %v7577, 0.0
        %v7633 = vpack.c.bf16 %v7585, %v7581
        %v7634 = vpack.c.bf16 %v7586, %v7582
        %v7635 = vpack.c.bf16 %v7587, %v7583
        %v7636 = vpack.c.bf16 %v7588, %v7584
        %v7637 = vpack.c.bf16 %v7593, %v7589
        %v7638 = vpack.c.bf16 %v7594, %v7590
        %v7639 = vpack.c.bf16 %v7595, %v7591
        %v7640 = vpack.c.bf16 %v7596, %v7592
        %v7641 = vpack.c.bf16 %v7601, %v7597
        %v7642 = vpack.c.bf16 %v7602, %v7598
        %v7643 = vpack.c.bf16 %v7603, %v7599
        %v7644 = vpack.c.bf16 %v7604, %v7600
        %v7645 = vpack.c.bf16 %v7609, %v7605
        %v7646 = vpack.c.bf16 %v7610, %v7606
        %v7647 = vpack.c.bf16 %v7611, %v7607
        %v7648 = vpack.c.bf16 %v7612, %v7608
        %v7649 = vpack.c.bf16 %v7617, %v7613
        %v7650 = vpack.c.bf16 %v7618, %v7614
        %v7651 = vpack.c.bf16 %v7619, %v7615
        %v7652 = vpack.c.bf16 %v7620, %v7616
        %v7653 = vpack.c.bf16 %v7625, %v7621
        %v7654 = vpack.c.bf16 %v7626, %v7622
        %v7655 = vpack.c.bf16 %v7627, %v7623
        %v7656 = vpack.c.bf16 %v7628, %v7624
        %v7657 = vpack.c.bf16 %v7629, %v7629
        %v7658 = vpack.c.bf16 %v7630, %v7630
        %v7659 = vpack.c.bf16 %v7631, %v7631
        %v7660 = vpack.c.bf16 %v7632, %v7632
        %v7661 = vadd.bf16 %v7633, %v3811
        %v7662 = vadd.bf16 %v7634, %v3812
        %v7663 = vadd.bf16 %v7635, %v3813
        %v7664 = vadd.bf16 %v7636, %v3814
        %v7665 = vadd.bf16 %v7637, %v3815
        %v7666 = vadd.bf16 %v7638, %v3816
        %v7667 = vadd.bf16 %v7639, %v3817
        %v7668 = vadd.bf16 %v7640, %v3818
        %v7669 = vadd.bf16 %v7641, %v3819
        %v7670 = vadd.bf16 %v7642, %v3820
        %v7671 = vadd.bf16 %v7643, %v3821
        %v7672 = vadd.bf16 %v7644, %v3822
        %v7673 = vadd.bf16 %v7645, %v3823
        %v7674 = vadd.bf16 %v7646, %v3824
        %v7675 = vadd.bf16 %v7647, %v3825
        %v7676 = vadd.bf16 %v7648, %v3826
        %v7677 = vadd.bf16 %v7649, %v3827
        %v7678 = vadd.bf16 %v7650, %v3828
        %v7679 = vadd.bf16 %v7651, %v3829
        %v7680 = vadd.bf16 %v7652, %v3830
        %v7681 = vadd.bf16 %v7653, %v3831
        %v7682 = vadd.bf16 %v7654, %v3832
        %v7683 = vadd.bf16 %v7655, %v3833
        %v7684 = vadd.bf16 %v7656, %v3834
        %v7685 = vadd.bf16 %v7657, %v3835
        %v7686 = vadd.bf16 %v7658, %v3836
        %v7687 = vadd.bf16 %v7659, %v3837
        %v7688 = vadd.bf16 %v7660, %v3838
        %v7689 = vld [vmem:[#allocation14] sm:$0xff]
        %v7690 = vld [vmem:[#allocation14 + $0x8] sm:$0xff]
        %v7691 = vld [vmem:[#allocation14 + $0x10] sm:$0xff]
        %v7692 = vld [vmem:[#allocation14 + $0x18] sm:$0xff]
        %v7693 = vld [vmem:[#allocation14 + $0x20] sm:$0xff]
        %v7694 = vld [vmem:[#allocation14 + $0x28] sm:$0xff]
        %v7695 = vld [vmem:[#allocation14 + $0x30] sm:$0xff]
        %v7696 = vld [vmem:[#allocation14 + $0x38] sm:$0xff]
        %v7697 = vld [vmem:[#allocation14 + $0x40] sm:$0xff]
        %v7698 = vld [vmem:[#allocation14 + $0x48] sm:$0xff]
        %v7699 = vld [vmem:[#allocation14 + $0x50] sm:$0xff]
        %v7700 = vld [vmem:[#allocation14 + $0x58] sm:$0xff]
        %v7701 = vld [vmem:[#allocation14 + $0x60] sm:$0xff]
        %v7702 = vld [vmem:[#allocation14 + $0x68] sm:$0xff]
        %v7703 = vld [vmem:[#allocation14 + $0x70] sm:$0xff]
        %v7704 = vld [vmem:[#allocation14 + $0x78] sm:$0xff]
        %v7705 = vld [vmem:[#allocation14 + $0x80] sm:$0xff]
        %v7706 = vld [vmem:[#allocation14 + $0x88] sm:$0xff]
        %v7707 = vld [vmem:[#allocation14 + $0x90] sm:$0xff]
        %v7708 = vld [vmem:[#allocation14 + $0x98] sm:$0xff]
        %v7709 = vld [vmem:[#allocation14 + $0xa0] sm:$0xff]
        %v7710 = vld [vmem:[#allocation14 + $0xa8] sm:$0xff]
        %v7711 = vld [vmem:[#allocation14 + $0xb0] sm:$0xff]
        %v7712 = vld [vmem:[#allocation14 + $0xb8] sm:$0xff]
        %v7713 = vld [vmem:[#allocation14 + $0xc0] sm:$0xff]
        %v7714 = vld [vmem:[#allocation14 + $0xc8] sm:$0xff]
        %v7715 = vld [vmem:[#allocation14 + $0xd0] sm:$0xff]
        %v7716 = vld [vmem:[#allocation14 + $0xd8] sm:$0xff]
        %v7717 = vld [vmem:[#allocation14 + $0xe0] sm:$0xff]
        %v7718 = vld [vmem:[#allocation14 + $0xe8] sm:$0xff]
        %v7719 = vld [vmem:[#allocation14 + $0xf0] sm:$0xff]
        %v7720 = vld [vmem:[#allocation14 + $0xf8] sm:$0xff]
        %v7721 = vld [vmem:[#allocation14 + $0x100] sm:$0xff]
        %v7722 = vld [vmem:[#allocation14 + $0x108] sm:$0xff]
        %v7723 = vld [vmem:[#allocation14 + $0x110] sm:$0xff]
        %v7724 = vld [vmem:[#allocation14 + $0x118] sm:$0xff]
        %v7725 = vld [vmem:[#allocation14 + $0x120] sm:$0xff]
        %v7726 = vld [vmem:[#allocation14 + $0x128] sm:$0xff]
        %v7727 = vld [vmem:[#allocation14 + $0x130] sm:$0xff]
        %v7728 = vld [vmem:[#allocation14 + $0x138] sm:$0xff]
        %v7729 = vld [vmem:[#allocation14 + $0x140] sm:$0xff]
        %v7730 = vld [vmem:[#allocation14 + $0x148] sm:$0xff]
        %v7731 = vld [vmem:[#allocation14 + $0x150] sm:$0xff]
        %v7732 = vld [vmem:[#allocation14 + $0x158] sm:$0xff]
        %v7733 = vld [vmem:[#allocation14 + $0x160] sm:$0xff]
        %v7734 = vld [vmem:[#allocation14 + $0x168] sm:$0xff]
        %v7735 = vld [vmem:[#allocation14 + $0x170] sm:$0xff]
        %v7736 = vld [vmem:[#allocation14 + $0x178] sm:$0xff]
        %v7737 = vld [vmem:[#allocation14 + $0x180] sm:$0xff]
        %v7738 = vld [vmem:[#allocation14 + $0x188] sm:$0xff]
        %v7739 = vld [vmem:[#allocation14 + $0x190] sm:$0xff]
        %v7740 = vld [vmem:[#allocation14 + $0x198] sm:$0xff]
        %v7741 = vld [vmem:[#allocation14 + $0x1a0] sm:$0xff]
        %v7742 = vld [vmem:[#allocation14 + $0x1a8] sm:$0xff]
        %v7743 = vld [vmem:[#allocation14 + $0x1b0] sm:$0xff]
        %v7744 = vld [vmem:[#allocation14 + $0x1b8] sm:$0xff]
        %v7745 = vld [vmem:[#allocation14 + $0x1c0] sm:$0xff]
        %v7746 = vld [vmem:[#allocation14 + $0x1c8] sm:$0xff]
        %v7747 = vld [vmem:[#allocation14 + $0x1d0] sm:$0xff]
        %v7748 = vld [vmem:[#allocation14 + $0x1d8] sm:$0xff]
        %v7749 = vld [vmem:[#allocation14 + $0x1e0] sm:$0xff]
        %v7750 = vld [vmem:[#allocation14 + $0x1e8] sm:$0xff]
        %v7751 = vld [vmem:[#allocation14 + $0x1f0] sm:$0xff]
        %v7752 = vld [vmem:[#allocation14 + $0x1f8] sm:$0xff]
        %v7753 = vld [vmem:[#allocation14 + $0x200] sm:$0xff]
        %v7754 = vld [vmem:[#allocation14 + $0x208] sm:$0xff]
        %v7755 = vld [vmem:[#allocation14 + $0x210] sm:$0xff]
        %v7756 = vld [vmem:[#allocation14 + $0x218] sm:$0xff]
        %v7757 = vld [vmem:[#allocation14 + $0x220] sm:$0xff]
        %v7758 = vld [vmem:[#allocation14 + $0x228] sm:$0xff]
        %v7759 = vld [vmem:[#allocation14 + $0x230] sm:$0xff]
        %v7760 = vld [vmem:[#allocation14 + $0x238] sm:$0xff]
        %v7761 = vld [vmem:[#allocation14 + $0x240] sm:$0xff]
        %v7762 = vld [vmem:[#allocation14 + $0x248] sm:$0xff]
        %v7763 = vld [vmem:[#allocation14 + $0x250] sm:$0xff]
        %v7764 = vld [vmem:[#allocation14 + $0x258] sm:$0xff]
        %v7765 = vld [vmem:[#allocation14 + $0x260] sm:$0xff]
        %v7766 = vld [vmem:[#allocation14 + $0x268] sm:$0xff]
        %v7767 = vld [vmem:[#allocation14 + $0x270] sm:$0xff]
        %v7768 = vld [vmem:[#allocation14 + $0x278] sm:$0xff]
        %v7769 = vld [vmem:[#allocation14 + $0x280] sm:$0xff]
        %v7770 = vld [vmem:[#allocation14 + $0x288] sm:$0xff]
        %v7771 = vld [vmem:[#allocation14 + $0x290] sm:$0xff]
        %v7772 = vld [vmem:[#allocation14 + $0x298] sm:$0xff]
        %v7773 = vld [vmem:[#allocation14 + $0x2a0] sm:$0xff]
        %v7774 = vld [vmem:[#allocation14 + $0x2a8] sm:$0xff]
        %v7775 = vld [vmem:[#allocation14 + $0x2b0] sm:$0xff]
        %v7776 = vld [vmem:[#allocation14 + $0x2b8] sm:$0xff]
        %v7777 = vld [vmem:[#allocation14 + $0x2c0] sm:$0xff]
        %v7778 = vld [vmem:[#allocation14 + $0x2c8] sm:$0xff]
        %v7779 = vld [vmem:[#allocation14 + $0x2d0] sm:$0xff]
        %v7780 = vld [vmem:[#allocation14 + $0x2d8] sm:$0xff]
        %v7781 = vld [vmem:[#allocation14 + $0x2e0] sm:$0xff]
        %v7782 = vld [vmem:[#allocation14 + $0x2e8] sm:$0xff]
        %v7783 = vld [vmem:[#allocation14 + $0x2f0] sm:$0xff]
        %v7784 = vld [vmem:[#allocation14 + $0x2f8] sm:$0xff]
        %v7785 = vld [vmem:[#allocation14 + $0x300] sm:$0xff]
        %v7786 = vld [vmem:[#allocation14 + $0x308] sm:$0xff]
        %v7787 = vld [vmem:[#allocation14 + $0x310] sm:$0xff]
        %v7788 = vld [vmem:[#allocation14 + $0x318] sm:$0xff]
        %v7789 = vld [vmem:[#allocation14 + $0x320] sm:$0xff]
        %v7790 = vld [vmem:[#allocation14 + $0x328] sm:$0xff]
        %v7791 = vld [vmem:[#allocation14 + $0x330] sm:$0xff]
        %v7792 = vld [vmem:[#allocation14 + $0x338] sm:$0xff]
        %v7793 = vld [vmem:[#allocation14 + $0x340] sm:$0xff]
        %v7794 = vld [vmem:[#allocation14 + $0x348] sm:$0xff]
        %v7795 = vld [vmem:[#allocation14 + $0x350] sm:$0xff]
        %v7796 = vld [vmem:[#allocation14 + $0x358] sm:$0xff]
        %v7797 = vld [vmem:[#allocation14 + $0x360] sm:$0xff]
        %v7798 = vld [vmem:[#allocation14 + $0x368] sm:$0xff]
        %v7799 = vld [vmem:[#allocation14 + $0x370] sm:$0xff]
        %v7800 = vld [vmem:[#allocation14 + $0x378] sm:$0xff]
        %v7801 = vld [vmem:[#allocation14 + $0x380] sm:$0xff]
        %v7802 = vld [vmem:[#allocation14 + $0x388] sm:$0xff]
        %v7803 = vld [vmem:[#allocation14 + $0x390] sm:$0xff]
        %v7804 = vld [vmem:[#allocation14 + $0x398] sm:$0xff]
        %v7805 = vld [vmem:[#allocation14 + $0x3a0] sm:$0xff]
        %v7806 = vld [vmem:[#allocation14 + $0x3a8] sm:$0xff]
        %v7807 = vld [vmem:[#allocation14 + $0x3b0] sm:$0xff]
        %v7808 = vld [vmem:[#allocation14 + $0x3b8] sm:$0xff]
        %v7809 = vld [vmem:[#allocation14 + $0x3c0] sm:$0xff]
        %v7810 = vld [vmem:[#allocation14 + $0x3c8] sm:$0xff]
        %v7811 = vld [vmem:[#allocation14 + $0x3d0] sm:$0xff]
        %v7812 = vld [vmem:[#allocation14 + $0x3d8] sm:$0xff]
        %v7813 = vld [vmem:[#allocation14 + $0x3e0] sm:$0xff]
        %v7814 = vld [vmem:[#allocation14 + $0x3e8] sm:$0xff]
        %v7815 = vld [vmem:[#allocation14 + $0x3f0] sm:$0xff]
        %v7816 = vld [vmem:[#allocation14 + $0x3f8] sm:$0xff]
        %v7817 = vld [vmem:[%s10] sm:$0xf]
        %v7819 = vlaneseq
        %v7820 = vshrl.u32 %v7819, 7
        %v7821 = vsub.s32 0, %v7820
        %v7822 = vrot.slane %v7817, %v7821
        %v7823 = vlaneseq
        %v7824 = vshrl.u32 %v7823, 7
        %v7825 = vsub.s32 1, %v7824
        %v7826 = vrot.slane %v7817, %v7825
        %v7827 = vlaneseq
        %v7828 = vshrl.u32 %v7827, 7
        %v7829 = vsub.s32 2, %v7828
        %v7830 = vrot.slane %v7817, %v7829
        %v7831 = vlaneseq
        %v7832 = vshrl.u32 %v7831, 7
        %v7833 = vsub.s32 3, %v7832
        %v7834 = vrot.slane %v7817, %v7833
        %v7967 = vunpack.c.l.b16 %v7689
        %v7968 = vunpack.c.h.b16 %v7689
        %v7969 = vunpack.c.l.b16 %v7690
        %v7970 = vunpack.c.h.b16 %v7690
        %v7971 = vunpack.c.l.b16 %v7691
        %v7972 = vunpack.c.h.b16 %v7691
        %v7973 = vunpack.c.l.b16 %v7692
        %v7974 = vunpack.c.h.b16 %v7692
        %v7975 = vunpack.c.l.b16 %v7693
        %v7976 = vunpack.c.h.b16 %v7693
        %v7977 = vunpack.c.l.b16 %v7694
        %v7978 = vunpack.c.h.b16 %v7694
        %v7979 = vunpack.c.l.b16 %v7695
        %v7980 = vunpack.c.h.b16 %v7695
        %v7981 = vunpack.c.l.b16 %v7696
        %v7982 = vunpack.c.h.b16 %v7696
        %v7983 = vunpack.c.l.b16 %v7697
        %v7984 = vunpack.c.h.b16 %v7697
        %v7985 = vunpack.c.l.b16 %v7698
        %v7986 = vunpack.c.h.b16 %v7698
        %v7987 = vunpack.c.l.b16 %v7699
        %v7988 = vunpack.c.h.b16 %v7699
        %v7989 = vunpack.c.l.b16 %v7700
        %v7990 = vunpack.c.h.b16 %v7700
        %v7991 = vunpack.c.l.b16 %v7701
        %v7992 = vunpack.c.h.b16 %v7701
        %v7993 = vunpack.c.l.b16 %v7702
        %v7994 = vunpack.c.h.b16 %v7702
        %v7995 = vunpack.c.l.b16 %v7703
        %v7996 = vunpack.c.h.b16 %v7703
        %v7997 = vunpack.c.l.b16 %v7704
        %v7998 = vunpack.c.h.b16 %v7704
        %v7999 = vunpack.c.l.b16 %v7705
        %v8000 = vunpack.c.h.b16 %v7705
        %v8001 = vunpack.c.l.b16 %v7706
        %v8002 = vunpack.c.h.b16 %v7706
        %v8003 = vunpack.c.l.b16 %v7707
        %v8004 = vunpack.c.h.b16 %v7707
        %v8005 = vunpack.c.l.b16 %v7708
        %v8006 = vunpack.c.h.b16 %v7708
        %v8007 = vunpack.c.l.b16 %v7709
        %v8008 = vunpack.c.h.b16 %v7709
        %v8009 = vunpack.c.l.b16 %v7710
        %v8010 = vunpack.c.h.b16 %v7710
        %v8011 = vunpack.c.l.b16 %v7711
        %v8012 = vunpack.c.h.b16 %v7711
        %v8013 = vunpack.c.l.b16 %v7712
        %v8014 = vunpack.c.h.b16 %v7712
        %v8015 = vunpack.c.l.b16 %v7713
        %v8016 = vunpack.c.h.b16 %v7713
        %v8017 = vunpack.c.l.b16 %v7714
        %v8018 = vunpack.c.h.b16 %v7714
        %v8019 = vunpack.c.l.b16 %v7715
        %v8020 = vunpack.c.h.b16 %v7715
        %v8021 = vunpack.c.l.b16 %v7716
        %v8022 = vunpack.c.h.b16 %v7716
        %v8023 = vunpack.c.l.b16 %v7717
        %v8024 = vunpack.c.h.b16 %v7717
        %v8025 = vunpack.c.l.b16 %v7718
        %v8026 = vunpack.c.h.b16 %v7718
        %v8027 = vunpack.c.l.b16 %v7719
        %v8028 = vunpack.c.h.b16 %v7719
        %v8029 = vunpack.c.l.b16 %v7720
        %v8030 = vunpack.c.h.b16 %v7720
        %v8031 = vunpack.c.l.b16 %v7721
        %v8032 = vunpack.c.h.b16 %v7721
        %v8033 = vunpack.c.l.b16 %v7722
        %v8034 = vunpack.c.h.b16 %v7722
        %v8035 = vunpack.c.l.b16 %v7723
        %v8036 = vunpack.c.h.b16 %v7723
        %v8037 = vunpack.c.l.b16 %v7724
        %v8038 = vunpack.c.h.b16 %v7724
        %v8039 = vunpack.c.l.b16 %v7725
        %v8040 = vunpack.c.h.b16 %v7725
        %v8041 = vunpack.c.l.b16 %v7726
        %v8042 = vunpack.c.h.b16 %v7726
        %v8043 = vunpack.c.l.b16 %v7727
        %v8044 = vunpack.c.h.b16 %v7727
        %v8045 = vunpack.c.l.b16 %v7728
        %v8046 = vunpack.c.h.b16 %v7728
        %v8047 = vunpack.c.l.b16 %v7729
        %v8048 = vunpack.c.h.b16 %v7729
        %v8049 = vunpack.c.l.b16 %v7730
        %v8050 = vunpack.c.h.b16 %v7730
        %v8051 = vunpack.c.l.b16 %v7731
        %v8052 = vunpack.c.h.b16 %v7731
        %v8053 = vunpack.c.l.b16 %v7732
        %v8054 = vunpack.c.h.b16 %v7732
        %v8055 = vunpack.c.l.b16 %v7733
        %v8056 = vunpack.c.h.b16 %v7733
        %v8057 = vunpack.c.l.b16 %v7734
        %v8058 = vunpack.c.h.b16 %v7734
        %v8059 = vunpack.c.l.b16 %v7735
        %v8060 = vunpack.c.h.b16 %v7735
        %v8061 = vunpack.c.l.b16 %v7736
        %v8062 = vunpack.c.h.b16 %v7736
        %v8063 = vunpack.c.l.b16 %v7737
        %v8064 = vunpack.c.h.b16 %v7737
        %v8065 = vunpack.c.l.b16 %v7738
        %v8066 = vunpack.c.h.b16 %v7738
        %v8067 = vunpack.c.l.b16 %v7739
        %v8068 = vunpack.c.h.b16 %v7739
        %v8069 = vunpack.c.l.b16 %v7740
        %v8070 = vunpack.c.h.b16 %v7740
        %v8071 = vunpack.c.l.b16 %v7741
        %v8072 = vunpack.c.h.b16 %v7741
        %v8073 = vunpack.c.l.b16 %v7742
        %v8074 = vunpack.c.h.b16 %v7742
        %v8075 = vunpack.c.l.b16 %v7743
        %v8076 = vunpack.c.h.b16 %v7743
        %v8077 = vunpack.c.l.b16 %v7744
        %v8078 = vunpack.c.h.b16 %v7744
        %v8079 = vunpack.c.l.b16 %v7745
        %v8080 = vunpack.c.h.b16 %v7745
        %v8081 = vunpack.c.l.b16 %v7746
        %v8082 = vunpack.c.h.b16 %v7746
        %v8083 = vunpack.c.l.b16 %v7747
        %v8084 = vunpack.c.h.b16 %v7747
        %v8085 = vunpack.c.l.b16 %v7748
        %v8086 = vunpack.c.h.b16 %v7748
        %v8087 = vunpack.c.l.b16 %v7749
        %v8088 = vunpack.c.h.b16 %v7749
        %v8089 = vunpack.c.l.b16 %v7750
        %v8090 = vunpack.c.h.b16 %v7750
        %v8091 = vunpack.c.l.b16 %v7751
        %v8092 = vunpack.c.h.b16 %v7751
        %v8093 = vunpack.c.l.b16 %v7752
        %v8094 = vunpack.c.h.b16 %v7752
        %v8095 = vunpack.c.l.b16 %v7753
        %v8096 = vunpack.c.h.b16 %v7753
        %v8097 = vunpack.c.l.b16 %v7754
        %v8098 = vunpack.c.h.b16 %v7754
        %v8099 = vunpack.c.l.b16 %v7755
        %v8100 = vunpack.c.h.b16 %v7755
        %v8101 = vunpack.c.l.b16 %v7756
        %v8102 = vunpack.c.h.b16 %v7756
        %v8103 = vunpack.c.l.b16 %v7757
        %v8104 = vunpack.c.h.b16 %v7757
        %v8105 = vunpack.c.l.b16 %v7758
        %v8106 = vunpack.c.h.b16 %v7758
        %v8107 = vunpack.c.l.b16 %v7759
        %v8108 = vunpack.c.h.b16 %v7759
        %v8109 = vunpack.c.l.b16 %v7760
        %v8110 = vunpack.c.h.b16 %v7760
        %v8111 = vunpack.c.l.b16 %v7761
        %v8112 = vunpack.c.h.b16 %v7761
        %v8113 = vunpack.c.l.b16 %v7762
        %v8114 = vunpack.c.h.b16 %v7762
        %v8115 = vunpack.c.l.b16 %v7763
        %v8116 = vunpack.c.h.b16 %v7763
        %v8117 = vunpack.c.l.b16 %v7764
        %v8118 = vunpack.c.h.b16 %v7764
        %v8119 = vunpack.c.l.b16 %v7765
        %v8120 = vunpack.c.h.b16 %v7765
        %v8121 = vunpack.c.l.b16 %v7766
        %v8122 = vunpack.c.h.b16 %v7766
        %v8123 = vunpack.c.l.b16 %v7767
        %v8124 = vunpack.c.h.b16 %v7767
        %v8125 = vunpack.c.l.b16 %v7768
        %v8126 = vunpack.c.h.b16 %v7768
        %v8127 = vunpack.c.l.b16 %v7769
        %v8128 = vunpack.c.h.b16 %v7769
        %v8129 = vunpack.c.l.b16 %v7770
        %v8130 = vunpack.c.h.b16 %v7770
        %v8131 = vunpack.c.l.b16 %v7771
        %v8132 = vunpack.c.h.b16 %v7771
        %v8133 = vunpack.c.l.b16 %v7772
        %v8134 = vunpack.c.h.b16 %v7772
        %v8135 = vunpack.c.l.b16 %v7773
        %v8136 = vunpack.c.h.b16 %v7773
        %v8137 = vunpack.c.l.b16 %v7774
        %v8138 = vunpack.c.h.b16 %v7774
        %v8139 = vunpack.c.l.b16 %v7775
        %v8140 = vunpack.c.h.b16 %v7775
        %v8141 = vunpack.c.l.b16 %v7776
        %v8142 = vunpack.c.h.b16 %v7776
        %v8143 = vunpack.c.l.b16 %v7777
        %v8144 = vunpack.c.h.b16 %v7777
        %v8145 = vunpack.c.l.b16 %v7778
        %v8146 = vunpack.c.h.b16 %v7778
        %v8147 = vunpack.c.l.b16 %v7779
        %v8148 = vunpack.c.h.b16 %v7779
        %v8149 = vunpack.c.l.b16 %v7780
        %v8150 = vunpack.c.h.b16 %v7780
        %v8151 = vunpack.c.l.b16 %v7781
        %v8152 = vunpack.c.h.b16 %v7781
        %v8153 = vunpack.c.l.b16 %v7782
        %v8154 = vunpack.c.h.b16 %v7782
        %v8155 = vunpack.c.l.b16 %v7783
        %v8156 = vunpack.c.h.b16 %v7783
        %v8157 = vunpack.c.l.b16 %v7784
        %v8158 = vunpack.c.h.b16 %v7784
        %v8159 = vunpack.c.l.b16 %v7785
        %v8160 = vunpack.c.h.b16 %v7785
        %v8161 = vunpack.c.l.b16 %v7786
        %v8162 = vunpack.c.h.b16 %v7786
        %v8163 = vunpack.c.l.b16 %v7787
        %v8164 = vunpack.c.h.b16 %v7787
        %v8165 = vunpack.c.l.b16 %v7788
        %v8166 = vunpack.c.h.b16 %v7788
        %v8167 = vunpack.c.l.b16 %v7789
        %v8168 = vunpack.c.h.b16 %v7789
        %v8169 = vunpack.c.l.b16 %v7790
        %v8170 = vunpack.c.h.b16 %v7790
        %v8171 = vunpack.c.l.b16 %v7791
        %v8172 = vunpack.c.h.b16 %v7791
        %v8173 = vunpack.c.l.b16 %v7792
        %v8174 = vunpack.c.h.b16 %v7792
        %v8175 = vunpack.c.l.b16 %v7793
        %v8176 = vunpack.c.h.b16 %v7793
        %v8177 = vunpack.c.l.b16 %v7794
        %v8178 = vunpack.c.h.b16 %v7794
        %v8179 = vunpack.c.l.b16 %v7795
        %v8180 = vunpack.c.h.b16 %v7795
        %v8181 = vunpack.c.l.b16 %v7796
        %v8182 = vunpack.c.h.b16 %v7796
        %v8183 = vunpack.c.l.b16 %v7797
        %v8184 = vunpack.c.h.b16 %v7797
        %v8185 = vunpack.c.l.b16 %v7798
        %v8186 = vunpack.c.h.b16 %v7798
        %v8187 = vunpack.c.l.b16 %v7799
        %v8188 = vunpack.c.h.b16 %v7799
        %v8189 = vunpack.c.l.b16 %v7800
        %v8190 = vunpack.c.h.b16 %v7800
        %v8191 = vunpack.c.l.b16 %v7801
        %v8192 = vunpack.c.h.b16 %v7801
        %v8193 = vunpack.c.l.b16 %v7802
        %v8194 = vunpack.c.h.b16 %v7802
        %v8195 = vunpack.c.l.b16 %v7803
        %v8196 = vunpack.c.h.b16 %v7803
        %v8197 = vunpack.c.l.b16 %v7804
        %v8198 = vunpack.c.h.b16 %v7804
        %v8199 = vunpack.c.l.b16 %v7805
        %v8200 = vunpack.c.h.b16 %v7805
        %v8201 = vunpack.c.l.b16 %v7806
        %v8202 = vunpack.c.h.b16 %v7806
        %v8203 = vunpack.c.l.b16 %v7807
        %v8204 = vunpack.c.h.b16 %v7807
        %v8205 = vunpack.c.l.b16 %v7808
        %v8206 = vunpack.c.h.b16 %v7808
        %v8207 = vunpack.c.l.b16 %v7809
        %v8208 = vunpack.c.h.b16 %v7809
        %v8209 = vunpack.c.l.b16 %v7810
        %v8210 = vunpack.c.h.b16 %v7810
        %v8211 = vunpack.c.l.b16 %v7811
        %v8212 = vunpack.c.h.b16 %v7811
        %v8213 = vunpack.c.l.b16 %v7812
        %v8214 = vunpack.c.h.b16 %v7812
        %v8215 = vunpack.c.l.b16 %v7813
        %v8216 = vunpack.c.h.b16 %v7813
        %v8217 = vunpack.c.l.b16 %v7814
        %v8218 = vunpack.c.h.b16 %v7814
        %v8219 = vunpack.c.l.b16 %v7815
        %v8220 = vunpack.c.h.b16 %v7815
        %v8221 = vunpack.c.l.b16 %v7816
        %v8222 = vunpack.c.h.b16 %v7816
        %v8223 = vpack.c.b16 %v7971, %v7967
        %v8224 = vpack.c.b16 %v7972, %v7968
        %v8225 = vpack.c.b16 %v7973, %v7969
        %v8226 = vpack.c.b16 %v7974, %v7970
        %v8227 = vpack.c.b16 %v7979, %v7975
        %v8228 = vpack.c.b16 %v7980, %v7976
        %v8229 = vpack.c.b16 %v7981, %v7977
        %v8230 = vpack.c.b16 %v7982, %v7978
        %v8231 = vpack.c.b16 %v7987, %v7983
        %v8232 = vpack.c.b16 %v7988, %v7984
        %v8233 = vpack.c.b16 %v7989, %v7985
        %v8234 = vpack.c.b16 %v7990, %v7986
        %v8235 = vpack.c.b16 %v7995, %v7991
        %v8236 = vpack.c.b16 %v7996, %v7992
        %v8237 = vpack.c.b16 %v7997, %v7993
        %v8238 = vpack.c.b16 %v7998, %v7994
        %v8239 = vpack.c.b16 %v8003, %v7999
        %v8240 = vpack.c.b16 %v8004, %v8000
        %v8241 = vpack.c.b16 %v8005, %v8001
        %v8242 = vpack.c.b16 %v8006, %v8002
        %v8243 = vpack.c.b16 %v8011, %v8007
        %v8244 = vpack.c.b16 %v8012, %v8008
        %v8245 = vpack.c.b16 %v8013, %v8009
        %v8246 = vpack.c.b16 %v8014, %v8010
        %v8247 = vpack.c.b16 %v8019, %v8015
        %v8248 = vpack.c.b16 %v8020, %v8016
        %v8249 = vpack.c.b16 %v8021, %v8017
        %v8250 = vpack.c.b16 %v8022, %v8018
        %v8251 = vpack.c.b16 %v8027, %v8023
        %v8252 = vpack.c.b16 %v8028, %v8024
        %v8253 = vpack.c.b16 %v8029, %v8025
        %v8254 = vpack.c.b16 %v8030, %v8026
        %v8255 = vpack.c.b16 %v8035, %v8031
        %v8256 = vpack.c.b16 %v8036, %v8032
        %v8257 = vpack.c.b16 %v8037, %v8033
        %v8258 = vpack.c.b16 %v8038, %v8034
        %v8259 = vpack.c.b16 %v8043, %v8039
        %v8260 = vpack.c.b16 %v8044, %v8040
        %v8261 = vpack.c.b16 %v8045, %v8041
        %v8262 = vpack.c.b16 %v8046, %v8042
        %v8263 = vpack.c.b16 %v8051, %v8047
        %v8264 = vpack.c.b16 %v8052, %v8048
        %v8265 = vpack.c.b16 %v8053, %v8049
        %v8266 = vpack.c.b16 %v8054, %v8050
        %v8267 = vpack.c.b16 %v8059, %v8055
        %v8268 = vpack.c.b16 %v8060, %v8056
        %v8269 = vpack.c.b16 %v8061, %v8057
        %v8270 = vpack.c.b16 %v8062, %v8058
        %v8271 = vpack.c.b16 %v8067, %v8063
        %v8272 = vpack.c.b16 %v8068, %v8064
        %v8273 = vpack.c.b16 %v8069, %v8065
        %v8274 = vpack.c.b16 %v8070, %v8066
        %v8275 = vpack.c.b16 %v8075, %v8071
        %v8276 = vpack.c.b16 %v8076, %v8072
        %v8277 = vpack.c.b16 %v8077, %v8073
        %v8278 = vpack.c.b16 %v8078, %v8074
        %v8279 = vpack.c.b16 %v8083, %v8079
        %v8280 = vpack.c.b16 %v8084, %v8080
        %v8281 = vpack.c.b16 %v8085, %v8081
        %v8282 = vpack.c.b16 %v8086, %v8082
        %v8283 = vpack.c.b16 %v8091, %v8087
        %v8284 = vpack.c.b16 %v8092, %v8088
        %v8285 = vpack.c.b16 %v8093, %v8089
        %v8286 = vpack.c.b16 %v8094, %v8090
        %v8287 = vpack.c.b16 %v8099, %v8095
        %v8288 = vpack.c.b16 %v8100, %v8096
        %v8289 = vpack.c.b16 %v8101, %v8097
        %v8290 = vpack.c.b16 %v8102, %v8098
        %v8291 = vpack.c.b16 %v8107, %v8103
        %v8292 = vpack.c.b16 %v8108, %v8104
        %v8293 = vpack.c.b16 %v8109, %v8105
        %v8294 = vpack.c.b16 %v8110, %v8106
        %v8295 = vpack.c.b16 %v8115, %v8111
        %v8296 = vpack.c.b16 %v8116, %v8112
        %v8297 = vpack.c.b16 %v8117, %v8113
        %v8298 = vpack.c.b16 %v8118, %v8114
        %v8299 = vpack.c.b16 %v8123, %v8119
        %v8300 = vpack.c.b16 %v8124, %v8120
        %v8301 = vpack.c.b16 %v8125, %v8121
        %v8302 = vpack.c.b16 %v8126, %v8122
        %v8303 = vpack.c.b16 %v8131, %v8127
        %v8304 = vpack.c.b16 %v8132, %v8128
        %v8305 = vpack.c.b16 %v8133, %v8129
        %v8306 = vpack.c.b16 %v8134, %v8130
        %v8307 = vpack.c.b16 %v8139, %v8135
        %v8308 = vpack.c.b16 %v8140, %v8136
        %v8309 = vpack.c.b16 %v8141, %v8137
        %v8310 = vpack.c.b16 %v8142, %v8138
        %v8311 = vpack.c.b16 %v8147, %v8143
        %v8312 = vpack.c.b16 %v8148, %v8144
        %v8313 = vpack.c.b16 %v8149, %v8145
        %v8314 = vpack.c.b16 %v8150, %v8146
        %v8315 = vpack.c.b16 %v8155, %v8151
        %v8316 = vpack.c.b16 %v8156, %v8152
        %v8317 = vpack.c.b16 %v8157, %v8153
        %v8318 = vpack.c.b16 %v8158, %v8154
        %v8319 = vpack.c.b16 %v8163, %v8159
        %v8320 = vpack.c.b16 %v8164, %v8160
        %v8321 = vpack.c.b16 %v8165, %v8161
        %v8322 = vpack.c.b16 %v8166, %v8162
        %v8323 = vpack.c.b16 %v8171, %v8167
        %v8324 = vpack.c.b16 %v8172, %v8168
        %v8325 = vpack.c.b16 %v8173, %v8169
        %v8326 = vpack.c.b16 %v8174, %v8170
        %v8327 = vpack.c.b16 %v8179, %v8175
        %v8328 = vpack.c.b16 %v8180, %v8176
        %v8329 = vpack.c.b16 %v8181, %v8177
        %v8330 = vpack.c.b16 %v8182, %v8178
        %v8331 = vpack.c.b16 %v8187, %v8183
        %v8332 = vpack.c.b16 %v8188, %v8184
        %v8333 = vpack.c.b16 %v8189, %v8185
        %v8334 = vpack.c.b16 %v8190, %v8186
        %v8335 = vpack.c.b16 %v8195, %v8191
        %v8336 = vpack.c.b16 %v8196, %v8192
        %v8337 = vpack.c.b16 %v8197, %v8193
        %v8338 = vpack.c.b16 %v8198, %v8194
        %v8339 = vpack.c.b16 %v8203, %v8199
        %v8340 = vpack.c.b16 %v8204, %v8200
        %v8341 = vpack.c.b16 %v8205, %v8201
        %v8342 = vpack.c.b16 %v8206, %v8202
        %v8343 = vpack.c.b16 %v8211, %v8207
        %v8344 = vpack.c.b16 %v8212, %v8208
        %v8345 = vpack.c.b16 %v8213, %v8209
        %v8346 = vpack.c.b16 %v8214, %v8210
        %v8347 = vpack.c.b16 %v8219, %v8215
        %v8348 = vpack.c.b16 %v8220, %v8216
        %v8349 = vpack.c.b16 %v8221, %v8217
        %v8350 = vpack.c.b16 %v8222, %v8218
        %8479 = vmatprep.subr.bf16.mxu0 %v8252
        %8480 = vmatpush1.bf16.msra.mxu0 %v8251
        %8481 = vmatprep.subr.bf16.mxu0 %v8248
        %8482 = vmatpush1.bf16.msra.mxu0 %v8247
        %8483 = vmatprep.subr.bf16.mxu0 %v8244
        %8484 = vmatpush1.bf16.msra.mxu0 %v8243
        %8485 = vmatprep.subr.bf16.mxu0 %v8240
        %8486 = vmatpush1.bf16.msra.mxu0 %v8239
        %8487 = vmatprep.subr.bf16.mxu0 %v8236
        %8488 = vmatpush1.bf16.msra.mxu0 %v8235
        %8489 = vmatprep.subr.bf16.mxu0 %v8232
        %8490 = vmatpush1.bf16.msra.mxu0 %v8231
        %8491 = vmatprep.subr.bf16.mxu0 %v8228
        %8492 = vmatpush1.bf16.msra.mxu0 %v8227
        %8493 = vmatprep.subr.bf16.mxu0 %v8224
        %8494 = vmatpush1.bf16.msra.mxu0 %v8223
        %8495 = vmatprep.subr.bf16.mxu0 %v8284
        %8496 = vmatpush2.bf16.msra.mxu0 %v8283
        %8497 = vmatprep.subr.bf16.mxu0 %v8280
        %8498 = vmatpush2.bf16.msra.mxu0 %v8279
        %8499 = vmatprep.subr.bf16.mxu0 %v8276
        %8500 = vmatpush2.bf16.msra.mxu0 %v8275
        %8501 = vmatprep.subr.bf16.mxu0 %v8272
        %8502 = vmatpush2.bf16.msra.mxu0 %v8271
        %8503 = vmatprep.subr.bf16.mxu0 %v8268
        %8504 = vmatpush2.bf16.msra.mxu0 %v8267
        %8505 = vmatprep.subr.bf16.mxu0 %v8264
        %8506 = vmatpush2.bf16.msra.mxu0 %v8263
        %8507 = vmatprep.subr.bf16.mxu0 %v8260
        %8508 = vmatpush2.bf16.msra.mxu0 %v8259
        %8509 = vmatprep.subr.bf16.mxu0 %v8256
        %8510 = vmatpush2.bf16.msra.mxu0 %v8255
        %8511 = vmatprep.mubr.bf16.mxu0 %v7662
        %8512 = vmatmul.mubr.bf16.gmra.mxu0 %v7661
        %v8513 = vpop.f32.mrf.mxu0
        %v8514 = vadd.f32 %v7822, %v8513
        %v8515 = vpop.f32.mrf.mxu0
        %v8516 = vadd.f32 %v7826, %v8515
        %v8517 = vpop.f32.mrf.mxu0
        %v8518 = vadd.f32 %v7822, %v8517
        %v8519 = vpop.f32.mrf.mxu0
        %v8520 = vadd.f32 %v7826, %v8519
        %8521 = vmatprep.mubr.bf16.mxu0 %v7666
        %8522 = vmatmul.mubr.bf16.gmra.mxu0 %v7665
        %v8523 = vpop.f32.mrf.mxu0
        %v8524 = vadd.f32 %v7822, %v8523
        %v8525 = vpop.f32.mrf.mxu0
        %v8526 = vadd.f32 %v7826, %v8525
        %v8527 = vpop.f32.mrf.mxu0
        %v8528 = vadd.f32 %v7822, %v8527
        %v8529 = vpop.f32.mrf.mxu0
        %v8530 = vadd.f32 %v7826, %v8529
        %8531 = vmatprep.mubr.bf16.mxu0 %v7670
        %8532 = vmatmul.mubr.bf16.gmra.mxu0 %v7669
        %v8533 = vpop.f32.mrf.mxu0
        %v8534 = vadd.f32 %v7822, %v8533
        %v8535 = vpop.f32.mrf.mxu0
        %v8536 = vadd.f32 %v7826, %v8535
        %v8537 = vpop.f32.mrf.mxu0
        %v8538 = vadd.f32 %v7822, %v8537
        %v8539 = vpop.f32.mrf.mxu0
        %v8540 = vadd.f32 %v7826, %v8539
        %8541 = vmatprep.mubr.bf16.mxu0 %v7674
        %8542 = vmatmul.mubr.bf16.gmra.mxu0 %v7673
        %v8543 = vpop.f32.mrf.mxu0
        %v8544 = vadd.f32 %v7822, %v8543
        %v8545 = vpop.f32.mrf.mxu0
        %v8546 = vadd.f32 %v7826, %v8545
        %v8547 = vpop.f32.mrf.mxu0
        %v8548 = vadd.f32 %v7822, %v8547
        %v8549 = vpop.f32.mrf.mxu0
        %v8550 = vadd.f32 %v7826, %v8549
        %8551 = vmatprep.mubr.bf16.mxu0 %v7678
        %8552 = vmatmul.mubr.bf16.gmra.mxu0 %v7677
        %v8553 = vpop.f32.mrf.mxu0
        %v8554 = vadd.f32 %v7822, %v8553
        %v8555 = vpop.f32.mrf.mxu0
        %v8556 = vadd.f32 %v7826, %v8555
        %v8557 = vpop.f32.mrf.mxu0
        %v8558 = vadd.f32 %v7822, %v8557
        %v8559 = vpop.f32.mrf.mxu0
        %v8560 = vadd.f32 %v7826, %v8559
        %8561 = vmatprep.mubr.bf16.mxu0 %v7682
        %8562 = vmatmul.mubr.bf16.gmra.mxu0 %v7681
        %v8563 = vpop.f32.mrf.mxu0
        %v8564 = vadd.f32 %v7822, %v8563
        %v8565 = vpop.f32.mrf.mxu0
        %v8566 = vadd.f32 %v7826, %v8565
        %v8567 = vpop.f32.mrf.mxu0
        %v8568 = vadd.f32 %v7822, %v8567
        %v8569 = vpop.f32.mrf.mxu0
        %v8570 = vadd.f32 %v7826, %v8569
        %8571 = vmatprep.mubr.bf16.mxu0 %v7686
        %8572 = vmatmul.mubr.bf16.gmra.mxu0 %v7685
        %v8573 = vpop.f32.mrf.mxu0
        %v8574 = vadd.f32 %v7822, %v8573
        %v8575 = vpop.f32.mrf.mxu0
        %v8576 = vadd.f32 %v7826, %v8575
        %v8577 = vpop.f32.mrf.mxu0
        %v8578 = vpop.f32.mrf.mxu0
        %8579 = vdwg.mxu0
        %8580 = vmatprep.subr.bf16.mxu0 %v8316
        %8581 = vmatpush1.bf16.msra.mxu0 %v8315
        %8582 = vmatprep.subr.bf16.mxu0 %v8312
        %8583 = vmatpush1.bf16.msra.mxu0 %v8311
        %8584 = vmatprep.subr.bf16.mxu0 %v8308
        %8585 = vmatpush1.bf16.msra.mxu0 %v8307
        %8586 = vmatprep.subr.bf16.mxu0 %v8304
        %8587 = vmatpush1.bf16.msra.mxu0 %v8303
        %8588 = vmatprep.subr.bf16.mxu0 %v8300
        %8589 = vmatpush1.bf16.msra.mxu0 %v8299
        %8590 = vmatprep.subr.bf16.mxu0 %v8296
        %8591 = vmatpush1.bf16.msra.mxu0 %v8295
        %8592 = vmatprep.subr.bf16.mxu0 %v8292
        %8593 = vmatpush1.bf16.msra.mxu0 %v8291
        %8594 = vmatprep.subr.bf16.mxu0 %v8288
        %8595 = vmatpush1.bf16.msra.mxu0 %v8287
        %8596 = vmatprep.subr.bf16.mxu0 %v8348
        %8597 = vmatpush2.bf16.msra.mxu0 %v8347
        %8598 = vmatprep.subr.bf16.mxu0 %v8344
        %8599 = vmatpush2.bf16.msra.mxu0 %v8343
        %8600 = vmatprep.subr.bf16.mxu0 %v8340
        %8601 = vmatpush2.bf16.msra.mxu0 %v8339
        %8602 = vmatprep.subr.bf16.mxu0 %v8336
        %8603 = vmatpush2.bf16.msra.mxu0 %v8335
        %8604 = vmatprep.subr.bf16.mxu0 %v8332
        %8605 = vmatpush2.bf16.msra.mxu0 %v8331
        %8606 = vmatprep.subr.bf16.mxu0 %v8328
        %8607 = vmatpush2.bf16.msra.mxu0 %v8327
        %8608 = vmatprep.subr.bf16.mxu0 %v8324
        %8609 = vmatpush2.bf16.msra.mxu0 %v8323
        %8610 = vmatprep.subr.bf16.mxu0 %v8320
        %8611 = vmatpush2.bf16.msra.mxu0 %v8319
        %8612 = vmatprep.mubr.bf16.mxu0 %v7664
        %8613 = vmatmul.mubr.bf16.gmra.mxu0 %v7663
        %v8614 = vpop.f32.mrf.mxu0
        %v8615 = vadd.f32 %v8514, %v8614
        %v8616 = vpop.f32.mrf.mxu0
        %v8617 = vadd.f32 %v8516, %v8616
        %v8618 = vpop.f32.mrf.mxu0
        %v8619 = vadd.f32 %v8518, %v8618
        %v8620 = vpop.f32.mrf.mxu0
        %v8621 = vadd.f32 %v8520, %v8620
        %8622 = vmatprep.mubr.bf16.mxu0 %v7668
        %8623 = vmatmul.mubr.bf16.gmra.mxu0 %v7667
        %v8624 = vpop.f32.mrf.mxu0
        %v8625 = vadd.f32 %v8524, %v8624
        %v8626 = vpop.f32.mrf.mxu0
        %v8627 = vadd.f32 %v8526, %v8626
        %v8628 = vpop.f32.mrf.mxu0
        %v8629 = vadd.f32 %v8528, %v8628
        %v8630 = vpop.f32.mrf.mxu0
        %v8631 = vadd.f32 %v8530, %v8630
        %8632 = vmatprep.mubr.bf16.mxu0 %v7672
        %8633 = vmatmul.mubr.bf16.gmra.mxu0 %v7671
        %v8634 = vpop.f32.mrf.mxu0
        %v8635 = vadd.f32 %v8534, %v8634
        %v8636 = vpop.f32.mrf.mxu0
        %v8637 = vadd.f32 %v8536, %v8636
        %v8638 = vpop.f32.mrf.mxu0
        %v8639 = vadd.f32 %v8538, %v8638
        %v8640 = vpop.f32.mrf.mxu0
        %v8641 = vadd.f32 %v8540, %v8640
        %8642 = vmatprep.mubr.bf16.mxu0 %v7676
        %8643 = vmatmul.mubr.bf16.gmra.mxu0 %v7675
        %v8644 = vpop.f32.mrf.mxu0
        %v8645 = vadd.f32 %v8544, %v8644
        %v8646 = vpop.f32.mrf.mxu0
        %v8647 = vadd.f32 %v8546, %v8646
        %v8648 = vpop.f32.mrf.mxu0
        %v8649 = vadd.f32 %v8548, %v8648
        %v8650 = vpop.f32.mrf.mxu0
        %v8651 = vadd.f32 %v8550, %v8650
        %8652 = vmatprep.mubr.bf16.mxu0 %v7680
        %8653 = vmatmul.mubr.bf16.gmra.mxu0 %v7679
        %v8654 = vpop.f32.mrf.mxu0
        %v8655 = vadd.f32 %v8554, %v8654
        %v8656 = vpop.f32.mrf.mxu0
        %v8657 = vadd.f32 %v8556, %v8656
        %v8658 = vpop.f32.mrf.mxu0
        %v8659 = vadd.f32 %v8558, %v8658
        %v8660 = vpop.f32.mrf.mxu0
        %v8661 = vadd.f32 %v8560, %v8660
        %8662 = vmatprep.mubr.bf16.mxu0 %v7684
        %8663 = vmatmul.mubr.bf16.gmra.mxu0 %v7683
        %v8664 = vpop.f32.mrf.mxu0
        %v8665 = vadd.f32 %v8564, %v8664
        %v8666 = vpop.f32.mrf.mxu0
        %v8667 = vadd.f32 %v8566, %v8666
        %v8668 = vpop.f32.mrf.mxu0
        %v8669 = vadd.f32 %v8568, %v8668
        %v8670 = vpop.f32.mrf.mxu0
        %v8671 = vadd.f32 %v8570, %v8670
        %8672 = vmatprep.mubr.bf16.mxu0 %v7688
        %8673 = vmatmul.mubr.bf16.gmra.mxu0 %v7687
        %v8674 = vpop.f32.mrf.mxu0
        %v8675 = vadd.f32 %v8574, %v8674
        %v8676 = vpop.f32.mrf.mxu0
        %v8677 = vadd.f32 %v8576, %v8676
        %v8678 = vpop.f32.mrf.mxu0
        %v8679 = vpop.f32.mrf.mxu0
        %8680 = vdwg.mxu0
        %8681 = vmatprep.subr.bf16.mxu0 %v8254
        %8682 = vmatpush1.bf16.msra.mxu0 %v8253
        %8683 = vmatprep.subr.bf16.mxu0 %v8250
        %8684 = vmatpush1.bf16.msra.mxu0 %v8249
        %8685 = vmatprep.subr.bf16.mxu0 %v8246
        %8686 = vmatpush1.bf16.msra.mxu0 %v8245
        %8687 = vmatprep.subr.bf16.mxu0 %v8242
        %8688 = vmatpush1.bf16.msra.mxu0 %v8241
        %8689 = vmatprep.subr.bf16.mxu0 %v8238
        %8690 = vmatpush1.bf16.msra.mxu0 %v8237
        %8691 = vmatprep.subr.bf16.mxu0 %v8234
        %8692 = vmatpush1.bf16.msra.mxu0 %v8233
        %8693 = vmatprep.subr.bf16.mxu0 %v8230
        %8694 = vmatpush1.bf16.msra.mxu0 %v8229
        %8695 = vmatprep.subr.bf16.mxu0 %v8226
        %8696 = vmatpush1.bf16.msra.mxu0 %v8225
        %8697 = vmatprep.subr.bf16.mxu0 %v8286
        %8698 = vmatpush2.bf16.msra.mxu0 %v8285
        %8699 = vmatprep.subr.bf16.mxu0 %v8282
        %8700 = vmatpush2.bf16.msra.mxu0 %v8281
        %8701 = vmatprep.subr.bf16.mxu0 %v8278
        %8702 = vmatpush2.bf16.msra.mxu0 %v8277
        %8703 = vmatprep.subr.bf16.mxu0 %v8274
        %8704 = vmatpush2.bf16.msra.mxu0 %v8273
        %8705 = vmatprep.subr.bf16.mxu0 %v8270
        %8706 = vmatpush2.bf16.msra.mxu0 %v8269
        %8707 = vmatprep.subr.bf16.mxu0 %v8266
        %8708 = vmatpush2.bf16.msra.mxu0 %v8265
        %8709 = vmatprep.subr.bf16.mxu0 %v8262
        %8710 = vmatpush2.bf16.msra.mxu0 %v8261
        %8711 = vmatprep.subr.bf16.mxu0 %v8258
        %8712 = vmatpush2.bf16.msra.mxu0 %v8257
        %8713 = vmatprep.mubr.bf16.mxu0 %v7662
        %8714 = vmatmul.mubr.bf16.gmra.mxu0 %v7661
        %v8715 = vpop.f32.mrf.mxu0
        %v8716 = vadd.f32 %v7830, %v8715
        %v8717 = vpop.f32.mrf.mxu0
        %v8718 = vadd.f32 %v7834, %v8717
        %v8719 = vpop.f32.mrf.mxu0
        %v8720 = vadd.f32 %v7830, %v8719
        %v8721 = vpop.f32.mrf.mxu0
        %v8722 = vadd.f32 %v7834, %v8721
        %8723 = vmatprep.mubr.bf16.mxu0 %v7666
        %8724 = vmatmul.mubr.bf16.gmra.mxu0 %v7665
        %v8725 = vpop.f32.mrf.mxu0
        %v8726 = vadd.f32 %v7830, %v8725
        %v8727 = vpop.f32.mrf.mxu0
        %v8728 = vadd.f32 %v7834, %v8727
        %v8729 = vpop.f32.mrf.mxu0
        %v8730 = vadd.f32 %v7830, %v8729
        %v8731 = vpop.f32.mrf.mxu0
        %v8732 = vadd.f32 %v7834, %v8731
        %8733 = vmatprep.mubr.bf16.mxu0 %v7670
        %8734 = vmatmul.mubr.bf16.gmra.mxu0 %v7669
        %v8735 = vpop.f32.mrf.mxu0
        %v8736 = vadd.f32 %v7830, %v8735
        %v8737 = vpop.f32.mrf.mxu0
        %v8738 = vadd.f32 %v7834, %v8737
        %v8739 = vpop.f32.mrf.mxu0
        %v8740 = vadd.f32 %v7830, %v8739
        %v8741 = vpop.f32.mrf.mxu0
        %v8742 = vadd.f32 %v7834, %v8741
        %8743 = vmatprep.mubr.bf16.mxu0 %v7674
        %8744 = vmatmul.mubr.bf16.gmra.mxu0 %v7673
        %v8745 = vpop.f32.mrf.mxu0
        %v8746 = vadd.f32 %v7830, %v8745
        %v8747 = vpop.f32.mrf.mxu0
        %v8748 = vadd.f32 %v7834, %v8747
        %v8749 = vpop.f32.mrf.mxu0
        %v8750 = vadd.f32 %v7830, %v8749
        %v8751 = vpop.f32.mrf.mxu0
        %v8752 = vadd.f32 %v7834, %v8751
        %8753 = vmatprep.mubr.bf16.mxu0 %v7678
        %8754 = vmatmul.mubr.bf16.gmra.mxu0 %v7677
        %v8755 = vpop.f32.mrf.mxu0
        %v8756 = vadd.f32 %v7830, %v8755
        %v8757 = vpop.f32.mrf.mxu0
        %v8758 = vadd.f32 %v7834, %v8757
        %v8759 = vpop.f32.mrf.mxu0
        %v8760 = vadd.f32 %v7830, %v8759
        %v8761 = vpop.f32.mrf.mxu0
        %v8762 = vadd.f32 %v7834, %v8761
        %8763 = vmatprep.mubr.bf16.mxu0 %v7682
        %8764 = vmatmul.mubr.bf16.gmra.mxu0 %v7681
        %v8765 = vpop.f32.mrf.mxu0
        %v8766 = vadd.f32 %v7830, %v8765
        %v8767 = vpop.f32.mrf.mxu0
        %v8768 = vadd.f32 %v7834, %v8767
        %v8769 = vpop.f32.mrf.mxu0
        %v8770 = vadd.f32 %v7830, %v8769
        %v8771 = vpop.f32.mrf.mxu0
        %v8772 = vadd.f32 %v7834, %v8771
        %8773 = vmatprep.mubr.bf16.mxu0 %v7686
        %8774 = vmatmul.mubr.bf16.gmra.mxu0 %v7685
        %v8775 = vpop.f32.mrf.mxu0
        %v8776 = vadd.f32 %v7830, %v8775
        %v8777 = vpop.f32.mrf.mxu0
        %v8778 = vadd.f32 %v7834, %v8777
        %v8779 = vpop.f32.mrf.mxu0
        %v8780 = vpop.f32.mrf.mxu0
        %8781 = vdwg.mxu0
        %8782 = vmatprep.subr.bf16.mxu0 %v8318
        %8783 = vmatpush1.bf16.msra.mxu0 %v8317
        %8784 = vmatprep.subr.bf16.mxu0 %v8314
        %8785 = vmatpush1.bf16.msra.mxu0 %v8313
        %8786 = vmatprep.subr.bf16.mxu0 %v8310
        %8787 = vmatpush1.bf16.msra.mxu0 %v8309
        %8788 = vmatprep.subr.bf16.mxu0 %v8306
        %8789 = vmatpush1.bf16.msra.mxu0 %v8305
        %8790 = vmatprep.subr.bf16.mxu0 %v8302
        %8791 = vmatpush1.bf16.msra.mxu0 %v8301
        %8792 = vmatprep.subr.bf16.mxu0 %v8298
        %8793 = vmatpush1.bf16.msra.mxu0 %v8297
        %8794 = vmatprep.subr.bf16.mxu0 %v8294
        %8795 = vmatpush1.bf16.msra.mxu0 %v8293
        %8796 = vmatprep.subr.bf16.mxu0 %v8290
        %8797 = vmatpush1.bf16.msra.mxu0 %v8289
        %8798 = vmatprep.subr.bf16.mxu0 %v8350
        %8799 = vmatpush2.bf16.msra.mxu0 %v8349
        %8800 = vmatprep.subr.bf16.mxu0 %v8346
        %8801 = vmatpush2.bf16.msra.mxu0 %v8345
        %8802 = vmatprep.subr.bf16.mxu0 %v8342
        %8803 = vmatpush2.bf16.msra.mxu0 %v8341
        %8804 = vmatprep.subr.bf16.mxu0 %v8338
        %8805 = vmatpush2.bf16.msra.mxu0 %v8337
        %8806 = vmatprep.subr.bf16.mxu0 %v8334
        %8807 = vmatpush2.bf16.msra.mxu0 %v8333
        %8808 = vmatprep.subr.bf16.mxu0 %v8330
        %8809 = vmatpush2.bf16.msra.mxu0 %v8329
        %8810 = vmatprep.subr.bf16.mxu0 %v8326
        %8811 = vmatpush2.bf16.msra.mxu0 %v8325
        %8812 = vmatprep.subr.bf16.mxu0 %v8322
        %8813 = vmatpush2.bf16.msra.mxu0 %v8321
        %8814 = vmatprep.mubr.bf16.mxu0 %v7664
        %8815 = vmatmul.mubr.bf16.gmra.mxu0 %v7663
        %v8816 = vpop.f32.mrf.mxu0
        %v8817 = vadd.f32 %v8716, %v8816
        %v8818 = vpop.f32.mrf.mxu0
        %v8819 = vadd.f32 %v8718, %v8818
        %v8820 = vpop.f32.mrf.mxu0
        %v8821 = vadd.f32 %v8720, %v8820
        %v8822 = vpop.f32.mrf.mxu0
        %v8823 = vadd.f32 %v8722, %v8822
        %8824 = vmatprep.mubr.bf16.mxu0 %v7668
        %8825 = vmatmul.mubr.bf16.gmra.mxu0 %v7667
        %v8826 = vpop.f32.mrf.mxu0
        %v8827 = vadd.f32 %v8726, %v8826
        %v8828 = vpop.f32.mrf.mxu0
        %v8829 = vadd.f32 %v8728, %v8828
        %v8830 = vpop.f32.mrf.mxu0
        %v8831 = vadd.f32 %v8730, %v8830
        %v8832 = vpop.f32.mrf.mxu0
        %v8833 = vadd.f32 %v8732, %v8832
        %8834 = vmatprep.mubr.bf16.mxu0 %v7672
        %8835 = vmatmul.mubr.bf16.gmra.mxu0 %v7671
        %v8836 = vpop.f32.mrf.mxu0
        %v8837 = vadd.f32 %v8736, %v8836
        %v8838 = vpop.f32.mrf.mxu0
        %v8839 = vadd.f32 %v8738, %v8838
        %v8840 = vpop.f32.mrf.mxu0
        %v8841 = vadd.f32 %v8740, %v8840
        %v8842 = vpop.f32.mrf.mxu0
        %v8843 = vadd.f32 %v8742, %v8842
        %8844 = vmatprep.mubr.bf16.mxu0 %v7676
        %8845 = vmatmul.mubr.bf16.gmra.mxu0 %v7675
        %v8846 = vpop.f32.mrf.mxu0
        %v8847 = vadd.f32 %v8746, %v8846
        %v8848 = vpop.f32.mrf.mxu0
        %v8849 = vadd.f32 %v8748, %v8848
        %v8850 = vpop.f32.mrf.mxu0
        %v8851 = vadd.f32 %v8750, %v8850
        %v8852 = vpop.f32.mrf.mxu0
        %v8853 = vadd.f32 %v8752, %v8852
        %8854 = vmatprep.mubr.bf16.mxu0 %v7680
        %8855 = vmatmul.mubr.bf16.gmra.mxu0 %v7679
        %v8856 = vpop.f32.mrf.mxu0
        %v8857 = vadd.f32 %v8756, %v8856
        %v8858 = vpop.f32.mrf.mxu0
        %v8859 = vadd.f32 %v8758, %v8858
        %v8860 = vpop.f32.mrf.mxu0
        %v8861 = vadd.f32 %v8760, %v8860
        %v8862 = vpop.f32.mrf.mxu0
        %v8863 = vadd.f32 %v8762, %v8862
        %8864 = vmatprep.mubr.bf16.mxu0 %v7684
        %8865 = vmatmul.mubr.bf16.gmra.mxu0 %v7683
        %v8866 = vpop.f32.mrf.mxu0
        %v8867 = vadd.f32 %v8766, %v8866
        %v8868 = vpop.f32.mrf.mxu0
        %v8869 = vadd.f32 %v8768, %v8868
        %v8870 = vpop.f32.mrf.mxu0
        %v8871 = vadd.f32 %v8770, %v8870
        %v8872 = vpop.f32.mrf.mxu0
        %v8873 = vadd.f32 %v8772, %v8872
        %8874 = vmatprep.mubr.bf16.mxu0 %v7688
        %8875 = vmatmul.mubr.bf16.gmra.mxu0 %v7687
        %v8876 = vpop.f32.mrf.mxu0
        %v8877 = vadd.f32 %v8776, %v8876
        %v8878 = vpop.f32.mrf.mxu0
        %v8879 = vadd.f32 %v8778, %v8878
        %v8880 = vpop.f32.mrf.mxu0
        %v8881 = vpop.f32.mrf.mxu0
        %8882 = vdwg.mxu0
        %v8883 = vmax.f32 %v8615, 0.0
        %v8884 = vmax.f32 %v8617, 0.0
        %v8885 = vmax.f32 %v8817, 0.0
        %v8886 = vmax.f32 %v8819, 0.0
        %v8887 = vmax.f32 %v8619, 0.0
        %v8888 = vmax.f32 %v8621, 0.0
        %v8889 = vmax.f32 %v8821, 0.0
        %v8890 = vmax.f32 %v8823, 0.0
        %v8891 = vmax.f32 %v8625, 0.0
        %v8892 = vmax.f32 %v8627, 0.0
        %v8893 = vmax.f32 %v8827, 0.0
        %v8894 = vmax.f32 %v8829, 0.0
        %v8895 = vmax.f32 %v8629, 0.0
        %v8896 = vmax.f32 %v8631, 0.0
        %v8897 = vmax.f32 %v8831, 0.0
        %v8898 = vmax.f32 %v8833, 0.0
        %v8899 = vmax.f32 %v8635, 0.0
        %v8900 = vmax.f32 %v8637, 0.0
        %v8901 = vmax.f32 %v8837, 0.0
        %v8902 = vmax.f32 %v8839, 0.0
        %v8903 = vmax.f32 %v8639, 0.0
        %v8904 = vmax.f32 %v8641, 0.0
        %v8905 = vmax.f32 %v8841, 0.0
        %v8906 = vmax.f32 %v8843, 0.0
        %v8907 = vmax.f32 %v8645, 0.0
        %v8908 = vmax.f32 %v8647, 0.0
        %v8909 = vmax.f32 %v8847, 0.0
        %v8910 = vmax.f32 %v8849, 0.0
        %v8911 = vmax.f32 %v8649, 0.0
        %v8912 = vmax.f32 %v8651, 0.0
        %v8913 = vmax.f32 %v8851, 0.0
        %v8914 = vmax.f32 %v8853, 0.0
        %v8915 = vmax.f32 %v8655, 0.0
        %v8916 = vmax.f32 %v8657, 0.0
        %v8917 = vmax.f32 %v8857, 0.0
        %v8918 = vmax.f32 %v8859, 0.0
        %v8919 = vmax.f32 %v8659, 0.0
        %v8920 = vmax.f32 %v8661, 0.0
        %v8921 = vmax.f32 %v8861, 0.0
        %v8922 = vmax.f32 %v8863, 0.0
        %v8923 = vmax.f32 %v8665, 0.0
        %v8924 = vmax.f32 %v8667, 0.0
        %v8925 = vmax.f32 %v8867, 0.0
        %v8926 = vmax.f32 %v8869, 0.0
        %v8927 = vmax.f32 %v8669, 0.0
        %v8928 = vmax.f32 %v8671, 0.0
        %v8929 = vmax.f32 %v8871, 0.0
        %v8930 = vmax.f32 %v8873, 0.0
        %v8931 = vmax.f32 %v8675, 0.0
        %v8932 = vmax.f32 %v8677, 0.0
        %v8933 = vmax.f32 %v8877, 0.0
        %v8934 = vmax.f32 %v8879, 0.0
        %v8935 = vpack.c.bf16 %v8887, %v8883
        %v8936 = vpack.c.bf16 %v8888, %v8884
        %v8937 = vpack.c.bf16 %v8889, %v8885
        %v8938 = vpack.c.bf16 %v8890, %v8886
        %v8939 = vpack.c.bf16 %v8895, %v8891
        %v8940 = vpack.c.bf16 %v8896, %v8892
        %v8941 = vpack.c.bf16 %v8897, %v8893
        %v8942 = vpack.c.bf16 %v8898, %v8894
        %v8943 = vpack.c.bf16 %v8903, %v8899
        %v8944 = vpack.c.bf16 %v8904, %v8900
        %v8945 = vpack.c.bf16 %v8905, %v8901
        %v8946 = vpack.c.bf16 %v8906, %v8902
        %v8947 = vpack.c.bf16 %v8911, %v8907
        %v8948 = vpack.c.bf16 %v8912, %v8908
        %v8949 = vpack.c.bf16 %v8913, %v8909
        %v8950 = vpack.c.bf16 %v8914, %v8910
        %v8951 = vpack.c.bf16 %v8919, %v8915
        %v8952 = vpack.c.bf16 %v8920, %v8916
        %v8953 = vpack.c.bf16 %v8921, %v8917
        %v8954 = vpack.c.bf16 %v8922, %v8918
        %v8955 = vpack.c.bf16 %v8927, %v8923
        %v8956 = vpack.c.bf16 %v8928, %v8924
        %v8957 = vpack.c.bf16 %v8929, %v8925
        %v8958 = vpack.c.bf16 %v8930, %v8926
        %v8959 = vpack.c.bf16 %v8931, %v8931
        %v8960 = vpack.c.bf16 %v8932, %v8932
        %v8961 = vpack.c.bf16 %v8933, %v8933
        %v8962 = vpack.c.bf16 %v8934, %v8934
        %v8963 = vld [vmem:[#allocation15] sm:$0xff]
        %v8964 = vld [vmem:[#allocation15 + $0x8] sm:$0xff]
        %v8965 = vld [vmem:[#allocation15 + $0x10] sm:$0xff]
        %v8966 = vld [vmem:[#allocation15 + $0x18] sm:$0xff]
        %v8967 = vld [vmem:[#allocation15 + $0x20] sm:$0xff]
        %v8968 = vld [vmem:[#allocation15 + $0x28] sm:$0xff]
        %v8969 = vld [vmem:[#allocation15 + $0x30] sm:$0xff]
        %v8970 = vld [vmem:[#allocation15 + $0x38] sm:$0xff]
        %v8971 = vld [vmem:[#allocation15 + $0x40] sm:$0xff]
        %v8972 = vld [vmem:[#allocation15 + $0x48] sm:$0xff]
        %v8973 = vld [vmem:[#allocation15 + $0x50] sm:$0xff]
        %v8974 = vld [vmem:[#allocation15 + $0x58] sm:$0xff]
        %v8975 = vld [vmem:[#allocation15 + $0x60] sm:$0xff]
        %v8976 = vld [vmem:[#allocation15 + $0x68] sm:$0xff]
        %v8977 = vld [vmem:[#allocation15 + $0x70] sm:$0xff]
        %v8978 = vld [vmem:[#allocation15 + $0x78] sm:$0xff]
        %v8979 = vld [vmem:[#allocation15 + $0x80] sm:$0xff]
        %v8980 = vld [vmem:[#allocation15 + $0x88] sm:$0xff]
        %v8981 = vld [vmem:[#allocation15 + $0x90] sm:$0xff]
        %v8982 = vld [vmem:[#allocation15 + $0x98] sm:$0xff]
        %v8983 = vld [vmem:[#allocation15 + $0xa0] sm:$0xff]
        %v8984 = vld [vmem:[#allocation15 + $0xa8] sm:$0xff]
        %v8985 = vld [vmem:[#allocation15 + $0xb0] sm:$0xff]
        %v8986 = vld [vmem:[#allocation15 + $0xb8] sm:$0xff]
        %v8987 = vld [vmem:[#allocation15 + $0xc0] sm:$0xff]
        %v8988 = vld [vmem:[#allocation15 + $0xc8] sm:$0xff]
        %v8989 = vld [vmem:[#allocation15 + $0xd0] sm:$0xff]
        %v8990 = vld [vmem:[#allocation15 + $0xd8] sm:$0xff]
        %v8991 = vld [vmem:[#allocation15 + $0xe0] sm:$0xff]
        %v8992 = vld [vmem:[#allocation15 + $0xe8] sm:$0xff]
        %v8993 = vld [vmem:[#allocation15 + $0xf0] sm:$0xff]
        %v8994 = vld [vmem:[#allocation15 + $0xf8] sm:$0xff]
        %v8995 = vld [vmem:[#allocation15 + $0x100] sm:$0xff]
        %v8996 = vld [vmem:[#allocation15 + $0x108] sm:$0xff]
        %v8997 = vld [vmem:[#allocation15 + $0x110] sm:$0xff]
        %v8998 = vld [vmem:[#allocation15 + $0x118] sm:$0xff]
        %v8999 = vld [vmem:[#allocation15 + $0x120] sm:$0xff]
        %v9000 = vld [vmem:[#allocation15 + $0x128] sm:$0xff]
        %v9001 = vld [vmem:[#allocation15 + $0x130] sm:$0xff]
        %v9002 = vld [vmem:[#allocation15 + $0x138] sm:$0xff]
        %v9003 = vld [vmem:[#allocation15 + $0x140] sm:$0xff]
        %v9004 = vld [vmem:[#allocation15 + $0x148] sm:$0xff]
        %v9005 = vld [vmem:[#allocation15 + $0x150] sm:$0xff]
        %v9006 = vld [vmem:[#allocation15 + $0x158] sm:$0xff]
        %v9007 = vld [vmem:[#allocation15 + $0x160] sm:$0xff]
        %v9008 = vld [vmem:[#allocation15 + $0x168] sm:$0xff]
        %v9009 = vld [vmem:[#allocation15 + $0x170] sm:$0xff]
        %v9010 = vld [vmem:[#allocation15 + $0x178] sm:$0xff]
        %v9011 = vld [vmem:[#allocation15 + $0x180] sm:$0xff]
        %v9012 = vld [vmem:[#allocation15 + $0x188] sm:$0xff]
        %v9013 = vld [vmem:[#allocation15 + $0x190] sm:$0xff]
        %v9014 = vld [vmem:[#allocation15 + $0x198] sm:$0xff]
        %v9015 = vld [vmem:[#allocation15 + $0x1a0] sm:$0xff]
        %v9016 = vld [vmem:[#allocation15 + $0x1a8] sm:$0xff]
        %v9017 = vld [vmem:[#allocation15 + $0x1b0] sm:$0xff]
        %v9018 = vld [vmem:[#allocation15 + $0x1b8] sm:$0xff]
        %v9019 = vld [vmem:[#allocation15 + $0x1c0] sm:$0xff]
        %v9020 = vld [vmem:[#allocation15 + $0x1c8] sm:$0xff]
        %v9021 = vld [vmem:[#allocation15 + $0x1d0] sm:$0xff]
        %v9022 = vld [vmem:[#allocation15 + $0x1d8] sm:$0xff]
        %v9023 = vld [vmem:[#allocation15 + $0x1e0] sm:$0xff]
        %v9024 = vld [vmem:[#allocation15 + $0x1e8] sm:$0xff]
        %v9025 = vld [vmem:[#allocation15 + $0x1f0] sm:$0xff]
        %v9026 = vld [vmem:[#allocation15 + $0x1f8] sm:$0xff]
        %v9027 = vld [vmem:[#allocation15 + $0x200] sm:$0xff]
        %v9028 = vld [vmem:[#allocation15 + $0x208] sm:$0xff]
        %v9029 = vld [vmem:[#allocation15 + $0x210] sm:$0xff]
        %v9030 = vld [vmem:[#allocation15 + $0x218] sm:$0xff]
        %v9031 = vld [vmem:[#allocation15 + $0x220] sm:$0xff]
        %v9032 = vld [vmem:[#allocation15 + $0x228] sm:$0xff]
        %v9033 = vld [vmem:[#allocation15 + $0x230] sm:$0xff]
        %v9034 = vld [vmem:[#allocation15 + $0x238] sm:$0xff]
        %v9035 = vld [vmem:[#allocation15 + $0x240] sm:$0xff]
        %v9036 = vld [vmem:[#allocation15 + $0x248] sm:$0xff]
        %v9037 = vld [vmem:[#allocation15 + $0x250] sm:$0xff]
        %v9038 = vld [vmem:[#allocation15 + $0x258] sm:$0xff]
        %v9039 = vld [vmem:[#allocation15 + $0x260] sm:$0xff]
        %v9040 = vld [vmem:[#allocation15 + $0x268] sm:$0xff]
        %v9041 = vld [vmem:[#allocation15 + $0x270] sm:$0xff]
        %v9042 = vld [vmem:[#allocation15 + $0x278] sm:$0xff]
        %v9043 = vld [vmem:[#allocation15 + $0x280] sm:$0xff]
        %v9044 = vld [vmem:[#allocation15 + $0x288] sm:$0xff]
        %v9045 = vld [vmem:[#allocation15 + $0x290] sm:$0xff]
        %v9046 = vld [vmem:[#allocation15 + $0x298] sm:$0xff]
        %v9047 = vld [vmem:[#allocation15 + $0x2a0] sm:$0xff]
        %v9048 = vld [vmem:[#allocation15 + $0x2a8] sm:$0xff]
        %v9049 = vld [vmem:[#allocation15 + $0x2b0] sm:$0xff]
        %v9050 = vld [vmem:[#allocation15 + $0x2b8] sm:$0xff]
        %v9051 = vld [vmem:[#allocation15 + $0x2c0] sm:$0xff]
        %v9052 = vld [vmem:[#allocation15 + $0x2c8] sm:$0xff]
        %v9053 = vld [vmem:[#allocation15 + $0x2d0] sm:$0xff]
        %v9054 = vld [vmem:[#allocation15 + $0x2d8] sm:$0xff]
        %v9055 = vld [vmem:[#allocation15 + $0x2e0] sm:$0xff]
        %v9056 = vld [vmem:[#allocation15 + $0x2e8] sm:$0xff]
        %v9057 = vld [vmem:[#allocation15 + $0x2f0] sm:$0xff]
        %v9058 = vld [vmem:[#allocation15 + $0x2f8] sm:$0xff]
        %v9059 = vld [vmem:[#allocation15 + $0x300] sm:$0xff]
        %v9060 = vld [vmem:[#allocation15 + $0x308] sm:$0xff]
        %v9061 = vld [vmem:[#allocation15 + $0x310] sm:$0xff]
        %v9062 = vld [vmem:[#allocation15 + $0x318] sm:$0xff]
        %v9063 = vld [vmem:[#allocation15 + $0x320] sm:$0xff]
        %v9064 = vld [vmem:[#allocation15 + $0x328] sm:$0xff]
        %v9065 = vld [vmem:[#allocation15 + $0x330] sm:$0xff]
        %v9066 = vld [vmem:[#allocation15 + $0x338] sm:$0xff]
        %v9067 = vld [vmem:[#allocation15 + $0x340] sm:$0xff]
        %v9068 = vld [vmem:[#allocation15 + $0x348] sm:$0xff]
        %v9069 = vld [vmem:[#allocation15 + $0x350] sm:$0xff]
        %v9070 = vld [vmem:[#allocation15 + $0x358] sm:$0xff]
        %v9071 = vld [vmem:[#allocation15 + $0x360] sm:$0xff]
        %v9072 = vld [vmem:[#allocation15 + $0x368] sm:$0xff]
        %v9073 = vld [vmem:[#allocation15 + $0x370] sm:$0xff]
        %v9074 = vld [vmem:[#allocation15 + $0x378] sm:$0xff]
        %v9075 = vld [vmem:[#allocation15 + $0x380] sm:$0xff]
        %v9076 = vld [vmem:[#allocation15 + $0x388] sm:$0xff]
        %v9077 = vld [vmem:[#allocation15 + $0x390] sm:$0xff]
        %v9078 = vld [vmem:[#allocation15 + $0x398] sm:$0xff]
        %v9079 = vld [vmem:[#allocation15 + $0x3a0] sm:$0xff]
        %v9080 = vld [vmem:[#allocation15 + $0x3a8] sm:$0xff]
        %v9081 = vld [vmem:[#allocation15 + $0x3b0] sm:$0xff]
        %v9082 = vld [vmem:[#allocation15 + $0x3b8] sm:$0xff]
        %v9083 = vld [vmem:[#allocation15 + $0x3c0] sm:$0xff]
        %v9084 = vld [vmem:[#allocation15 + $0x3c8] sm:$0xff]
        %v9085 = vld [vmem:[#allocation15 + $0x3d0] sm:$0xff]
        %v9086 = vld [vmem:[#allocation15 + $0x3d8] sm:$0xff]
        %v9087 = vld [vmem:[#allocation15 + $0x3e0] sm:$0xff]
        %v9088 = vld [vmem:[#allocation15 + $0x3e8] sm:$0xff]
        %v9089 = vld [vmem:[#allocation15 + $0x3f0] sm:$0xff]
        %v9090 = vld [vmem:[#allocation15 + $0x3f8] sm:$0xff]
        %v9091 = vld [vmem:[%s12] sm:$0xf]
        %v9093 = vlaneseq
        %v9094 = vshrl.u32 %v9093, 7
        %v9095 = vsub.s32 0, %v9094
        %v9096 = vrot.slane %v9091, %v9095
        %v9097 = vlaneseq
        %v9098 = vshrl.u32 %v9097, 7
        %v9099 = vsub.s32 1, %v9098
        %v9100 = vrot.slane %v9091, %v9099
        %v9101 = vlaneseq
        %v9102 = vshrl.u32 %v9101, 7
        %v9103 = vsub.s32 2, %v9102
        %v9104 = vrot.slane %v9091, %v9103
        %v9105 = vlaneseq
        %v9106 = vshrl.u32 %v9105, 7
        %v9107 = vsub.s32 3, %v9106
        %v9108 = vrot.slane %v9091, %v9107
        %v9241 = vunpack.c.l.b16 %v8963
        %v9242 = vunpack.c.h.b16 %v8963
        %v9243 = vunpack.c.l.b16 %v8964
        %v9244 = vunpack.c.h.b16 %v8964
        %v9245 = vunpack.c.l.b16 %v8965
        %v9246 = vunpack.c.h.b16 %v8965
        %v9247 = vunpack.c.l.b16 %v8966
        %v9248 = vunpack.c.h.b16 %v8966
        %v9249 = vunpack.c.l.b16 %v8967
        %v9250 = vunpack.c.h.b16 %v8967
        %v9251 = vunpack.c.l.b16 %v8968
        %v9252 = vunpack.c.h.b16 %v8968
        %v9253 = vunpack.c.l.b16 %v8969
        %v9254 = vunpack.c.h.b16 %v8969
        %v9255 = vunpack.c.l.b16 %v8970
        %v9256 = vunpack.c.h.b16 %v8970
        %v9257 = vunpack.c.l.b16 %v8971
        %v9258 = vunpack.c.h.b16 %v8971
        %v9259 = vunpack.c.l.b16 %v8972
        %v9260 = vunpack.c.h.b16 %v8972
        %v9261 = vunpack.c.l.b16 %v8973
        %v9262 = vunpack.c.h.b16 %v8973
        %v9263 = vunpack.c.l.b16 %v8974
        %v9264 = vunpack.c.h.b16 %v8974
        %v9265 = vunpack.c.l.b16 %v8975
        %v9266 = vunpack.c.h.b16 %v8975
        %v9267 = vunpack.c.l.b16 %v8976
        %v9268 = vunpack.c.h.b16 %v8976
        %v9269 = vunpack.c.l.b16 %v8977
        %v9270 = vunpack.c.h.b16 %v8977
        %v9271 = vunpack.c.l.b16 %v8978
        %v9272 = vunpack.c.h.b16 %v8978
        %v9273 = vunpack.c.l.b16 %v8979
        %v9274 = vunpack.c.h.b16 %v8979
        %v9275 = vunpack.c.l.b16 %v8980
        %v9276 = vunpack.c.h.b16 %v8980
        %v9277 = vunpack.c.l.b16 %v8981
        %v9278 = vunpack.c.h.b16 %v8981
        %v9279 = vunpack.c.l.b16 %v8982
        %v9280 = vunpack.c.h.b16 %v8982
        %v9281 = vunpack.c.l.b16 %v8983
        %v9282 = vunpack.c.h.b16 %v8983
        %v9283 = vunpack.c.l.b16 %v8984
        %v9284 = vunpack.c.h.b16 %v8984
        %v9285 = vunpack.c.l.b16 %v8985
        %v9286 = vunpack.c.h.b16 %v8985
        %v9287 = vunpack.c.l.b16 %v8986
        %v9288 = vunpack.c.h.b16 %v8986
        %v9289 = vunpack.c.l.b16 %v8987
        %v9290 = vunpack.c.h.b16 %v8987
        %v9291 = vunpack.c.l.b16 %v8988
        %v9292 = vunpack.c.h.b16 %v8988
        %v9293 = vunpack.c.l.b16 %v8989
        %v9294 = vunpack.c.h.b16 %v8989
        %v9295 = vunpack.c.l.b16 %v8990
        %v9296 = vunpack.c.h.b16 %v8990
        %v9297 = vunpack.c.l.b16 %v8991
        %v9298 = vunpack.c.h.b16 %v8991
        %v9299 = vunpack.c.l.b16 %v8992
        %v9300 = vunpack.c.h.b16 %v8992
        %v9301 = vunpack.c.l.b16 %v8993
        %v9302 = vunpack.c.h.b16 %v8993
        %v9303 = vunpack.c.l.b16 %v8994
        %v9304 = vunpack.c.h.b16 %v8994
        %v9305 = vunpack.c.l.b16 %v8995
        %v9306 = vunpack.c.h.b16 %v8995
        %v9307 = vunpack.c.l.b16 %v8996
        %v9308 = vunpack.c.h.b16 %v8996
        %v9309 = vunpack.c.l.b16 %v8997
        %v9310 = vunpack.c.h.b16 %v8997
        %v9311 = vunpack.c.l.b16 %v8998
        %v9312 = vunpack.c.h.b16 %v8998
        %v9313 = vunpack.c.l.b16 %v8999
        %v9314 = vunpack.c.h.b16 %v8999
        %v9315 = vunpack.c.l.b16 %v9000
        %v9316 = vunpack.c.h.b16 %v9000
        %v9317 = vunpack.c.l.b16 %v9001
        %v9318 = vunpack.c.h.b16 %v9001
        %v9319 = vunpack.c.l.b16 %v9002
        %v9320 = vunpack.c.h.b16 %v9002
        %v9321 = vunpack.c.l.b16 %v9003
        %v9322 = vunpack.c.h.b16 %v9003
        %v9323 = vunpack.c.l.b16 %v9004
        %v9324 = vunpack.c.h.b16 %v9004
        %v9325 = vunpack.c.l.b16 %v9005
        %v9326 = vunpack.c.h.b16 %v9005
        %v9327 = vunpack.c.l.b16 %v9006
        %v9328 = vunpack.c.h.b16 %v9006
        %v9329 = vunpack.c.l.b16 %v9007
        %v9330 = vunpack.c.h.b16 %v9007
        %v9331 = vunpack.c.l.b16 %v9008
        %v9332 = vunpack.c.h.b16 %v9008
        %v9333 = vunpack.c.l.b16 %v9009
        %v9334 = vunpack.c.h.b16 %v9009
        %v9335 = vunpack.c.l.b16 %v9010
        %v9336 = vunpack.c.h.b16 %v9010
        %v9337 = vunpack.c.l.b16 %v9011
        %v9338 = vunpack.c.h.b16 %v9011
        %v9339 = vunpack.c.l.b16 %v9012
        %v9340 = vunpack.c.h.b16 %v9012
        %v9341 = vunpack.c.l.b16 %v9013
        %v9342 = vunpack.c.h.b16 %v9013
        %v9343 = vunpack.c.l.b16 %v9014
        %v9344 = vunpack.c.h.b16 %v9014
        %v9345 = vunpack.c.l.b16 %v9015
        %v9346 = vunpack.c.h.b16 %v9015
        %v9347 = vunpack.c.l.b16 %v9016
        %v9348 = vunpack.c.h.b16 %v9016
        %v9349 = vunpack.c.l.b16 %v9017
        %v9350 = vunpack.c.h.b16 %v9017
        %v9351 = vunpack.c.l.b16 %v9018
        %v9352 = vunpack.c.h.b16 %v9018
        %v9353 = vunpack.c.l.b16 %v9019
        %v9354 = vunpack.c.h.b16 %v9019
        %v9355 = vunpack.c.l.b16 %v9020
        %v9356 = vunpack.c.h.b16 %v9020
        %v9357 = vunpack.c.l.b16 %v9021
        %v9358 = vunpack.c.h.b16 %v9021
        %v9359 = vunpack.c.l.b16 %v9022
        %v9360 = vunpack.c.h.b16 %v9022
        %v9361 = vunpack.c.l.b16 %v9023
        %v9362 = vunpack.c.h.b16 %v9023
        %v9363 = vunpack.c.l.b16 %v9024
        %v9364 = vunpack.c.h.b16 %v9024
        %v9365 = vunpack.c.l.b16 %v9025
        %v9366 = vunpack.c.h.b16 %v9025
        %v9367 = vunpack.c.l.b16 %v9026
        %v9368 = vunpack.c.h.b16 %v9026
        %v9369 = vunpack.c.l.b16 %v9027
        %v9370 = vunpack.c.h.b16 %v9027
        %v9371 = vunpack.c.l.b16 %v9028
        %v9372 = vunpack.c.h.b16 %v9028
        %v9373 = vunpack.c.l.b16 %v9029
        %v9374 = vunpack.c.h.b16 %v9029
        %v9375 = vunpack.c.l.b16 %v9030
        %v9376 = vunpack.c.h.b16 %v9030
        %v9377 = vunpack.c.l.b16 %v9031
        %v9378 = vunpack.c.h.b16 %v9031
        %v9379 = vunpack.c.l.b16 %v9032
        %v9380 = vunpack.c.h.b16 %v9032
        %v9381 = vunpack.c.l.b16 %v9033
        %v9382 = vunpack.c.h.b16 %v9033
        %v9383 = vunpack.c.l.b16 %v9034
        %v9384 = vunpack.c.h.b16 %v9034
        %v9385 = vunpack.c.l.b16 %v9035
        %v9386 = vunpack.c.h.b16 %v9035
        %v9387 = vunpack.c.l.b16 %v9036
        %v9388 = vunpack.c.h.b16 %v9036
        %v9389 = vunpack.c.l.b16 %v9037
        %v9390 = vunpack.c.h.b16 %v9037
        %v9391 = vunpack.c.l.b16 %v9038
        %v9392 = vunpack.c.h.b16 %v9038
        %v9393 = vunpack.c.l.b16 %v9039
        %v9394 = vunpack.c.h.b16 %v9039
        %v9395 = vunpack.c.l.b16 %v9040
        %v9396 = vunpack.c.h.b16 %v9040
        %v9397 = vunpack.c.l.b16 %v9041
        %v9398 = vunpack.c.h.b16 %v9041
        %v9399 = vunpack.c.l.b16 %v9042
        %v9400 = vunpack.c.h.b16 %v9042
        %v9401 = vunpack.c.l.b16 %v9043
        %v9402 = vunpack.c.h.b16 %v9043
        %v9403 = vunpack.c.l.b16 %v9044
        %v9404 = vunpack.c.h.b16 %v9044
        %v9405 = vunpack.c.l.b16 %v9045
        %v9406 = vunpack.c.h.b16 %v9045
        %v9407 = vunpack.c.l.b16 %v9046
        %v9408 = vunpack.c.h.b16 %v9046
        %v9409 = vunpack.c.l.b16 %v9047
        %v9410 = vunpack.c.h.b16 %v9047
        %v9411 = vunpack.c.l.b16 %v9048
        %v9412 = vunpack.c.h.b16 %v9048
        %v9413 = vunpack.c.l.b16 %v9049
        %v9414 = vunpack.c.h.b16 %v9049
        %v9415 = vunpack.c.l.b16 %v9050
        %v9416 = vunpack.c.h.b16 %v9050
        %v9417 = vunpack.c.l.b16 %v9051
        %v9418 = vunpack.c.h.b16 %v9051
        %v9419 = vunpack.c.l.b16 %v9052
        %v9420 = vunpack.c.h.b16 %v9052
        %v9421 = vunpack.c.l.b16 %v9053
        %v9422 = vunpack.c.h.b16 %v9053
        %v9423 = vunpack.c.l.b16 %v9054
        %v9424 = vunpack.c.h.b16 %v9054
        %v9425 = vunpack.c.l.b16 %v9055
        %v9426 = vunpack.c.h.b16 %v9055
        %v9427 = vunpack.c.l.b16 %v9056
        %v9428 = vunpack.c.h.b16 %v9056
        %v9429 = vunpack.c.l.b16 %v9057
        %v9430 = vunpack.c.h.b16 %v9057
        %v9431 = vunpack.c.l.b16 %v9058
        %v9432 = vunpack.c.h.b16 %v9058
        %v9433 = vunpack.c.l.b16 %v9059
        %v9434 = vunpack.c.h.b16 %v9059
        %v9435 = vunpack.c.l.b16 %v9060
        %v9436 = vunpack.c.h.b16 %v9060
        %v9437 = vunpack.c.l.b16 %v9061
        %v9438 = vunpack.c.h.b16 %v9061
        %v9439 = vunpack.c.l.b16 %v9062
        %v9440 = vunpack.c.h.b16 %v9062
        %v9441 = vunpack.c.l.b16 %v9063
        %v9442 = vunpack.c.h.b16 %v9063
        %v9443 = vunpack.c.l.b16 %v9064
        %v9444 = vunpack.c.h.b16 %v9064
        %v9445 = vunpack.c.l.b16 %v9065
        %v9446 = vunpack.c.h.b16 %v9065
        %v9447 = vunpack.c.l.b16 %v9066
        %v9448 = vunpack.c.h.b16 %v9066
        %v9449 = vunpack.c.l.b16 %v9067
        %v9450 = vunpack.c.h.b16 %v9067
        %v9451 = vunpack.c.l.b16 %v9068
        %v9452 = vunpack.c.h.b16 %v9068
        %v9453 = vunpack.c.l.b16 %v9069
        %v9454 = vunpack.c.h.b16 %v9069
        %v9455 = vunpack.c.l.b16 %v9070
        %v9456 = vunpack.c.h.b16 %v9070
        %v9457 = vunpack.c.l.b16 %v9071
        %v9458 = vunpack.c.h.b16 %v9071
        %v9459 = vunpack.c.l.b16 %v9072
        %v9460 = vunpack.c.h.b16 %v9072
        %v9461 = vunpack.c.l.b16 %v9073
        %v9462 = vunpack.c.h.b16 %v9073
        %v9463 = vunpack.c.l.b16 %v9074
        %v9464 = vunpack.c.h.b16 %v9074
        %v9465 = vunpack.c.l.b16 %v9075
        %v9466 = vunpack.c.h.b16 %v9075
        %v9467 = vunpack.c.l.b16 %v9076
        %v9468 = vunpack.c.h.b16 %v9076
        %v9469 = vunpack.c.l.b16 %v9077
        %v9470 = vunpack.c.h.b16 %v9077
        %v9471 = vunpack.c.l.b16 %v9078
        %v9472 = vunpack.c.h.b16 %v9078
        %v9473 = vunpack.c.l.b16 %v9079
        %v9474 = vunpack.c.h.b16 %v9079
        %v9475 = vunpack.c.l.b16 %v9080
        %v9476 = vunpack.c.h.b16 %v9080
        %v9477 = vunpack.c.l.b16 %v9081
        %v9478 = vunpack.c.h.b16 %v9081
        %v9479 = vunpack.c.l.b16 %v9082
        %v9480 = vunpack.c.h.b16 %v9082
        %v9481 = vunpack.c.l.b16 %v9083
        %v9482 = vunpack.c.h.b16 %v9083
        %v9483 = vunpack.c.l.b16 %v9084
        %v9484 = vunpack.c.h.b16 %v9084
        %v9485 = vunpack.c.l.b16 %v9085
        %v9486 = vunpack.c.h.b16 %v9085
        %v9487 = vunpack.c.l.b16 %v9086
        %v9488 = vunpack.c.h.b16 %v9086
        %v9489 = vunpack.c.l.b16 %v9087
        %v9490 = vunpack.c.h.b16 %v9087
        %v9491 = vunpack.c.l.b16 %v9088
        %v9492 = vunpack.c.h.b16 %v9088
        %v9493 = vunpack.c.l.b16 %v9089
        %v9494 = vunpack.c.h.b16 %v9089
        %v9495 = vunpack.c.l.b16 %v9090
        %v9496 = vunpack.c.h.b16 %v9090
        %v9497 = vpack.c.b16 %v9245, %v9241
        %v9498 = vpack.c.b16 %v9246, %v9242
        %v9499 = vpack.c.b16 %v9247, %v9243
        %v9500 = vpack.c.b16 %v9248, %v9244
        %v9501 = vpack.c.b16 %v9253, %v9249
        %v9502 = vpack.c.b16 %v9254, %v9250
        %v9503 = vpack.c.b16 %v9255, %v9251
        %v9504 = vpack.c.b16 %v9256, %v9252
        %v9505 = vpack.c.b16 %v9261, %v9257
        %v9506 = vpack.c.b16 %v9262, %v9258
        %v9507 = vpack.c.b16 %v9263, %v9259
        %v9508 = vpack.c.b16 %v9264, %v9260
        %v9509 = vpack.c.b16 %v9269, %v9265
        %v9510 = vpack.c.b16 %v9270, %v9266
        %v9511 = vpack.c.b16 %v9271, %v9267
        %v9512 = vpack.c.b16 %v9272, %v9268
        %v9513 = vpack.c.b16 %v9277, %v9273
        %v9514 = vpack.c.b16 %v9278, %v9274
        %v9515 = vpack.c.b16 %v9279, %v9275
        %v9516 = vpack.c.b16 %v9280, %v9276
        %v9517 = vpack.c.b16 %v9285, %v9281
        %v9518 = vpack.c.b16 %v9286, %v9282
        %v9519 = vpack.c.b16 %v9287, %v9283
        %v9520 = vpack.c.b16 %v9288, %v9284
        %v9521 = vpack.c.b16 %v9293, %v9289
        %v9522 = vpack.c.b16 %v9294, %v9290
        %v9523 = vpack.c.b16 %v9295, %v9291
        %v9524 = vpack.c.b16 %v9296, %v9292
        %v9525 = vpack.c.b16 %v9301, %v9297
        %v9526 = vpack.c.b16 %v9302, %v9298
        %v9527 = vpack.c.b16 %v9303, %v9299
        %v9528 = vpack.c.b16 %v9304, %v9300
        %v9529 = vpack.c.b16 %v9309, %v9305
        %v9530 = vpack.c.b16 %v9310, %v9306
        %v9531 = vpack.c.b16 %v9311, %v9307
        %v9532 = vpack.c.b16 %v9312, %v9308
        %v9533 = vpack.c.b16 %v9317, %v9313
        %v9534 = vpack.c.b16 %v9318, %v9314
        %v9535 = vpack.c.b16 %v9319, %v9315
        %v9536 = vpack.c.b16 %v9320, %v9316
        %v9537 = vpack.c.b16 %v9325, %v9321
        %v9538 = vpack.c.b16 %v9326, %v9322
        %v9539 = vpack.c.b16 %v9327, %v9323
        %v9540 = vpack.c.b16 %v9328, %v9324
        %v9541 = vpack.c.b16 %v9333, %v9329
        %v9542 = vpack.c.b16 %v9334, %v9330
        %v9543 = vpack.c.b16 %v9335, %v9331
        %v9544 = vpack.c.b16 %v9336, %v9332
        %v9545 = vpack.c.b16 %v9341, %v9337
        %v9546 = vpack.c.b16 %v9342, %v9338
        %v9547 = vpack.c.b16 %v9343, %v9339
        %v9548 = vpack.c.b16 %v9344, %v9340
        %v9549 = vpack.c.b16 %v9349, %v9345
        %v9550 = vpack.c.b16 %v9350, %v9346
        %v9551 = vpack.c.b16 %v9351, %v9347
        %v9552 = vpack.c.b16 %v9352, %v9348
        %v9553 = vpack.c.b16 %v9357, %v9353
        %v9554 = vpack.c.b16 %v9358, %v9354
        %v9555 = vpack.c.b16 %v9359, %v9355
        %v9556 = vpack.c.b16 %v9360, %v9356
        %v9557 = vpack.c.b16 %v9365, %v9361
        %v9558 = vpack.c.b16 %v9366, %v9362
        %v9559 = vpack.c.b16 %v9367, %v9363
        %v9560 = vpack.c.b16 %v9368, %v9364
        %v9561 = vpack.c.b16 %v9373, %v9369
        %v9562 = vpack.c.b16 %v9374, %v9370
        %v9563 = vpack.c.b16 %v9375, %v9371
        %v9564 = vpack.c.b16 %v9376, %v9372
        %v9565 = vpack.c.b16 %v9381, %v9377
        %v9566 = vpack.c.b16 %v9382, %v9378
        %v9567 = vpack.c.b16 %v9383, %v9379
        %v9568 = vpack.c.b16 %v9384, %v9380
        %v9569 = vpack.c.b16 %v9389, %v9385
        %v9570 = vpack.c.b16 %v9390, %v9386
        %v9571 = vpack.c.b16 %v9391, %v9387
        %v9572 = vpack.c.b16 %v9392, %v9388
        %v9573 = vpack.c.b16 %v9397, %v9393
        %v9574 = vpack.c.b16 %v9398, %v9394
        %v9575 = vpack.c.b16 %v9399, %v9395
        %v9576 = vpack.c.b16 %v9400, %v9396
        %v9577 = vpack.c.b16 %v9405, %v9401
        %v9578 = vpack.c.b16 %v9406, %v9402
        %v9579 = vpack.c.b16 %v9407, %v9403
        %v9580 = vpack.c.b16 %v9408, %v9404
        %v9581 = vpack.c.b16 %v9413, %v9409
        %v9582 = vpack.c.b16 %v9414, %v9410
        %v9583 = vpack.c.b16 %v9415, %v9411
        %v9584 = vpack.c.b16 %v9416, %v9412
        %v9585 = vpack.c.b16 %v9421, %v9417
        %v9586 = vpack.c.b16 %v9422, %v9418
        %v9587 = vpack.c.b16 %v9423, %v9419
        %v9588 = vpack.c.b16 %v9424, %v9420
        %v9589 = vpack.c.b16 %v9429, %v9425
        %v9590 = vpack.c.b16 %v9430, %v9426
        %v9591 = vpack.c.b16 %v9431, %v9427
        %v9592 = vpack.c.b16 %v9432, %v9428
        %v9593 = vpack.c.b16 %v9437, %v9433
        %v9594 = vpack.c.b16 %v9438, %v9434
        %v9595 = vpack.c.b16 %v9439, %v9435
        %v9596 = vpack.c.b16 %v9440, %v9436
        %v9597 = vpack.c.b16 %v9445, %v9441
        %v9598 = vpack.c.b16 %v9446, %v9442
        %v9599 = vpack.c.b16 %v9447, %v9443
        %v9600 = vpack.c.b16 %v9448, %v9444
        %v9601 = vpack.c.b16 %v9453, %v9449
        %v9602 = vpack.c.b16 %v9454, %v9450
        %v9603 = vpack.c.b16 %v9455, %v9451
        %v9604 = vpack.c.b16 %v9456, %v9452
        %v9605 = vpack.c.b16 %v9461, %v9457
        %v9606 = vpack.c.b16 %v9462, %v9458
        %v9607 = vpack.c.b16 %v9463, %v9459
        %v9608 = vpack.c.b16 %v9464, %v9460
        %v9609 = vpack.c.b16 %v9469, %v9465
        %v9610 = vpack.c.b16 %v9470, %v9466
        %v9611 = vpack.c.b16 %v9471, %v9467
        %v9612 = vpack.c.b16 %v9472, %v9468
        %v9613 = vpack.c.b16 %v9477, %v9473
        %v9614 = vpack.c.b16 %v9478, %v9474
        %v9615 = vpack.c.b16 %v9479, %v9475
        %v9616 = vpack.c.b16 %v9480, %v9476
        %v9617 = vpack.c.b16 %v9485, %v9481
        %v9618 = vpack.c.b16 %v9486, %v9482
        %v9619 = vpack.c.b16 %v9487, %v9483
        %v9620 = vpack.c.b16 %v9488, %v9484
        %v9621 = vpack.c.b16 %v9493, %v9489
        %v9622 = vpack.c.b16 %v9494, %v9490
        %v9623 = vpack.c.b16 %v9495, %v9491
        %v9624 = vpack.c.b16 %v9496, %v9492
        %9753 = vmatprep.subr.bf16.mxu0 %v9526
        %9754 = vmatpush1.bf16.msra.mxu0 %v9525
        %9755 = vmatprep.subr.bf16.mxu0 %v9522
        %9756 = vmatpush1.bf16.msra.mxu0 %v9521
        %9757 = vmatprep.subr.bf16.mxu0 %v9518
        %9758 = vmatpush1.bf16.msra.mxu0 %v9517
        %9759 = vmatprep.subr.bf16.mxu0 %v9514
        %9760 = vmatpush1.bf16.msra.mxu0 %v9513
        %9761 = vmatprep.subr.bf16.mxu0 %v9510
        %9762 = vmatpush1.bf16.msra.mxu0 %v9509
        %9763 = vmatprep.subr.bf16.mxu0 %v9506
        %9764 = vmatpush1.bf16.msra.mxu0 %v9505
        %9765 = vmatprep.subr.bf16.mxu0 %v9502
        %9766 = vmatpush1.bf16.msra.mxu0 %v9501
        %9767 = vmatprep.subr.bf16.mxu0 %v9498
        %9768 = vmatpush1.bf16.msra.mxu0 %v9497
        %9769 = vmatprep.subr.bf16.mxu0 %v9558
        %9770 = vmatpush2.bf16.msra.mxu0 %v9557
        %9771 = vmatprep.subr.bf16.mxu0 %v9554
        %9772 = vmatpush2.bf16.msra.mxu0 %v9553
        %9773 = vmatprep.subr.bf16.mxu0 %v9550
        %9774 = vmatpush2.bf16.msra.mxu0 %v9549
        %9775 = vmatprep.subr.bf16.mxu0 %v9546
        %9776 = vmatpush2.bf16.msra.mxu0 %v9545
        %9777 = vmatprep.subr.bf16.mxu0 %v9542
        %9778 = vmatpush2.bf16.msra.mxu0 %v9541
        %9779 = vmatprep.subr.bf16.mxu0 %v9538
        %9780 = vmatpush2.bf16.msra.mxu0 %v9537
        %9781 = vmatprep.subr.bf16.mxu0 %v9534
        %9782 = vmatpush2.bf16.msra.mxu0 %v9533
        %9783 = vmatprep.subr.bf16.mxu0 %v9530
        %9784 = vmatpush2.bf16.msra.mxu0 %v9529
        %9785 = vmatprep.mubr.bf16.mxu0 %v8936
        %9786 = vmatmul.mubr.bf16.gmra.mxu0 %v8935
        %v9787 = vpop.f32.mrf.mxu0
        %v9788 = vadd.f32 %v9096, %v9787
        %v9789 = vpop.f32.mrf.mxu0
        %v9790 = vadd.f32 %v9100, %v9789
        %v9791 = vpop.f32.mrf.mxu0
        %v9792 = vadd.f32 %v9096, %v9791
        %v9793 = vpop.f32.mrf.mxu0
        %v9794 = vadd.f32 %v9100, %v9793
        %9795 = vmatprep.mubr.bf16.mxu0 %v8940
        %9796 = vmatmul.mubr.bf16.gmra.mxu0 %v8939
        %v9797 = vpop.f32.mrf.mxu0
        %v9798 = vadd.f32 %v9096, %v9797
        %v9799 = vpop.f32.mrf.mxu0
        %v9800 = vadd.f32 %v9100, %v9799
        %v9801 = vpop.f32.mrf.mxu0
        %v9802 = vadd.f32 %v9096, %v9801
        %v9803 = vpop.f32.mrf.mxu0
        %v9804 = vadd.f32 %v9100, %v9803
        %9805 = vmatprep.mubr.bf16.mxu0 %v8944
        %9806 = vmatmul.mubr.bf16.gmra.mxu0 %v8943
        %v9807 = vpop.f32.mrf.mxu0
        %v9808 = vadd.f32 %v9096, %v9807
        %v9809 = vpop.f32.mrf.mxu0
        %v9810 = vadd.f32 %v9100, %v9809
        %v9811 = vpop.f32.mrf.mxu0
        %v9812 = vadd.f32 %v9096, %v9811
        %v9813 = vpop.f32.mrf.mxu0
        %v9814 = vadd.f32 %v9100, %v9813
        %9815 = vmatprep.mubr.bf16.mxu0 %v8948
        %9816 = vmatmul.mubr.bf16.gmra.mxu0 %v8947
        %v9817 = vpop.f32.mrf.mxu0
        %v9818 = vadd.f32 %v9096, %v9817
        %v9819 = vpop.f32.mrf.mxu0
        %v9820 = vadd.f32 %v9100, %v9819
        %v9821 = vpop.f32.mrf.mxu0
        %v9822 = vadd.f32 %v9096, %v9821
        %v9823 = vpop.f32.mrf.mxu0
        %v9824 = vadd.f32 %v9100, %v9823
        %9825 = vmatprep.mubr.bf16.mxu0 %v8952
        %9826 = vmatmul.mubr.bf16.gmra.mxu0 %v8951
        %v9827 = vpop.f32.mrf.mxu0
        %v9828 = vadd.f32 %v9096, %v9827
        %v9829 = vpop.f32.mrf.mxu0
        %v9830 = vadd.f32 %v9100, %v9829
        %v9831 = vpop.f32.mrf.mxu0
        %v9832 = vadd.f32 %v9096, %v9831
        %v9833 = vpop.f32.mrf.mxu0
        %v9834 = vadd.f32 %v9100, %v9833
        %9835 = vmatprep.mubr.bf16.mxu0 %v8956
        %9836 = vmatmul.mubr.bf16.gmra.mxu0 %v8955
        %v9837 = vpop.f32.mrf.mxu0
        %v9838 = vadd.f32 %v9096, %v9837
        %v9839 = vpop.f32.mrf.mxu0
        %v9840 = vadd.f32 %v9100, %v9839
        %v9841 = vpop.f32.mrf.mxu0
        %v9842 = vadd.f32 %v9096, %v9841
        %v9843 = vpop.f32.mrf.mxu0
        %v9844 = vadd.f32 %v9100, %v9843
        %9845 = vmatprep.mubr.bf16.mxu0 %v8960
        %9846 = vmatmul.mubr.bf16.gmra.mxu0 %v8959
        %v9847 = vpop.f32.mrf.mxu0
        %v9848 = vadd.f32 %v9096, %v9847
        %v9849 = vpop.f32.mrf.mxu0
        %v9850 = vadd.f32 %v9100, %v9849
        %v9851 = vpop.f32.mrf.mxu0
        %v9852 = vpop.f32.mrf.mxu0
        %9853 = vdwg.mxu0
        %9854 = vmatprep.subr.bf16.mxu0 %v9590
        %9855 = vmatpush1.bf16.msra.mxu0 %v9589
        %9856 = vmatprep.subr.bf16.mxu0 %v9586
        %9857 = vmatpush1.bf16.msra.mxu0 %v9585
        %9858 = vmatprep.subr.bf16.mxu0 %v9582
        %9859 = vmatpush1.bf16.msra.mxu0 %v9581
        %9860 = vmatprep.subr.bf16.mxu0 %v9578
        %9861 = vmatpush1.bf16.msra.mxu0 %v9577
        %9862 = vmatprep.subr.bf16.mxu0 %v9574
        %9863 = vmatpush1.bf16.msra.mxu0 %v9573
        %9864 = vmatprep.subr.bf16.mxu0 %v9570
        %9865 = vmatpush1.bf16.msra.mxu0 %v9569
        %9866 = vmatprep.subr.bf16.mxu0 %v9566
        %9867 = vmatpush1.bf16.msra.mxu0 %v9565
        %9868 = vmatprep.subr.bf16.mxu0 %v9562
        %9869 = vmatpush1.bf16.msra.mxu0 %v9561
        %9870 = vmatprep.subr.bf16.mxu0 %v9622
        %9871 = vmatpush2.bf16.msra.mxu0 %v9621
        %9872 = vmatprep.subr.bf16.mxu0 %v9618
        %9873 = vmatpush2.bf16.msra.mxu0 %v9617
        %9874 = vmatprep.subr.bf16.mxu0 %v9614
        %9875 = vmatpush2.bf16.msra.mxu0 %v9613
        %9876 = vmatprep.subr.bf16.mxu0 %v9610
        %9877 = vmatpush2.bf16.msra.mxu0 %v9609
        %9878 = vmatprep.subr.bf16.mxu0 %v9606
        %9879 = vmatpush2.bf16.msra.mxu0 %v9605
        %9880 = vmatprep.subr.bf16.mxu0 %v9602
        %9881 = vmatpush2.bf16.msra.mxu0 %v9601
        %9882 = vmatprep.subr.bf16.mxu0 %v9598
        %9883 = vmatpush2.bf16.msra.mxu0 %v9597
        %9884 = vmatprep.subr.bf16.mxu0 %v9594
        %9885 = vmatpush2.bf16.msra.mxu0 %v9593
        %9886 = vmatprep.mubr.bf16.mxu0 %v8938
        %9887 = vmatmul.mubr.bf16.gmra.mxu0 %v8937
        %v9888 = vpop.f32.mrf.mxu0
        %v9889 = vadd.f32 %v9788, %v9888
        %v9890 = vpop.f32.mrf.mxu0
        %v9891 = vadd.f32 %v9790, %v9890
        %v9892 = vpop.f32.mrf.mxu0
        %v9893 = vadd.f32 %v9792, %v9892
        %v9894 = vpop.f32.mrf.mxu0
        %v9895 = vadd.f32 %v9794, %v9894
        %9896 = vmatprep.mubr.bf16.mxu0 %v8942
        %9897 = vmatmul.mubr.bf16.gmra.mxu0 %v8941
        %v9898 = vpop.f32.mrf.mxu0
        %v9899 = vadd.f32 %v9798, %v9898
        %v9900 = vpop.f32.mrf.mxu0
        %v9901 = vadd.f32 %v9800, %v9900
        %v9902 = vpop.f32.mrf.mxu0
        %v9903 = vadd.f32 %v9802, %v9902
        %v9904 = vpop.f32.mrf.mxu0
        %v9905 = vadd.f32 %v9804, %v9904
        %9906 = vmatprep.mubr.bf16.mxu0 %v8946
        %9907 = vmatmul.mubr.bf16.gmra.mxu0 %v8945
        %v9908 = vpop.f32.mrf.mxu0
        %v9909 = vadd.f32 %v9808, %v9908
        %v9910 = vpop.f32.mrf.mxu0
        %v9911 = vadd.f32 %v9810, %v9910
        %v9912 = vpop.f32.mrf.mxu0
        %v9913 = vadd.f32 %v9812, %v9912
        %v9914 = vpop.f32.mrf.mxu0
        %v9915 = vadd.f32 %v9814, %v9914
        %9916 = vmatprep.mubr.bf16.mxu0 %v8950
        %9917 = vmatmul.mubr.bf16.gmra.mxu0 %v8949
        %v9918 = vpop.f32.mrf.mxu0
        %v9919 = vadd.f32 %v9818, %v9918
        %v9920 = vpop.f32.mrf.mxu0
        %v9921 = vadd.f32 %v9820, %v9920
        %v9922 = vpop.f32.mrf.mxu0
        %v9923 = vadd.f32 %v9822, %v9922
        %v9924 = vpop.f32.mrf.mxu0
        %v9925 = vadd.f32 %v9824, %v9924
        %9926 = vmatprep.mubr.bf16.mxu0 %v8954
        %9927 = vmatmul.mubr.bf16.gmra.mxu0 %v8953
        %v9928 = vpop.f32.mrf.mxu0
        %v9929 = vadd.f32 %v9828, %v9928
        %v9930 = vpop.f32.mrf.mxu0
        %v9931 = vadd.f32 %v9830, %v9930
        %v9932 = vpop.f32.mrf.mxu0
        %v9933 = vadd.f32 %v9832, %v9932
        %v9934 = vpop.f32.mrf.mxu0
        %v9935 = vadd.f32 %v9834, %v9934
        %9936 = vmatprep.mubr.bf16.mxu0 %v8958
        %9937 = vmatmul.mubr.bf16.gmra.mxu0 %v8957
        %v9938 = vpop.f32.mrf.mxu0
        %v9939 = vadd.f32 %v9838, %v9938
        %v9940 = vpop.f32.mrf.mxu0
        %v9941 = vadd.f32 %v9840, %v9940
        %v9942 = vpop.f32.mrf.mxu0
        %v9943 = vadd.f32 %v9842, %v9942
        %v9944 = vpop.f32.mrf.mxu0
        %v9945 = vadd.f32 %v9844, %v9944
        %9946 = vmatprep.mubr.bf16.mxu0 %v8962
        %9947 = vmatmul.mubr.bf16.gmra.mxu0 %v8961
        %v9948 = vpop.f32.mrf.mxu0
        %v9949 = vadd.f32 %v9848, %v9948
        %v9950 = vpop.f32.mrf.mxu0
        %v9951 = vadd.f32 %v9850, %v9950
        %v9952 = vpop.f32.mrf.mxu0
        %v9953 = vpop.f32.mrf.mxu0
        %9954 = vdwg.mxu0
        %9955 = vmatprep.subr.bf16.mxu0 %v9528
        %9956 = vmatpush1.bf16.msra.mxu0 %v9527
        %9957 = vmatprep.subr.bf16.mxu0 %v9524
        %9958 = vmatpush1.bf16.msra.mxu0 %v9523
        %9959 = vmatprep.subr.bf16.mxu0 %v9520
        %9960 = vmatpush1.bf16.msra.mxu0 %v9519
        %9961 = vmatprep.subr.bf16.mxu0 %v9516
        %9962 = vmatpush1.bf16.msra.mxu0 %v9515
        %9963 = vmatprep.subr.bf16.mxu0 %v9512
        %9964 = vmatpush1.bf16.msra.mxu0 %v9511
        %9965 = vmatprep.subr.bf16.mxu0 %v9508
        %9966 = vmatpush1.bf16.msra.mxu0 %v9507
        %9967 = vmatprep.subr.bf16.mxu0 %v9504
        %9968 = vmatpush1.bf16.msra.mxu0 %v9503
        %9969 = vmatprep.subr.bf16.mxu0 %v9500
        %9970 = vmatpush1.bf16.msra.mxu0 %v9499
        %9971 = vmatprep.subr.bf16.mxu0 %v9560
        %9972 = vmatpush2.bf16.msra.mxu0 %v9559
        %9973 = vmatprep.subr.bf16.mxu0 %v9556
        %9974 = vmatpush2.bf16.msra.mxu0 %v9555
        %9975 = vmatprep.subr.bf16.mxu0 %v9552
        %9976 = vmatpush2.bf16.msra.mxu0 %v9551
        %9977 = vmatprep.subr.bf16.mxu0 %v9548
        %9978 = vmatpush2.bf16.msra.mxu0 %v9547
        %9979 = vmatprep.subr.bf16.mxu0 %v9544
        %9980 = vmatpush2.bf16.msra.mxu0 %v9543
        %9981 = vmatprep.subr.bf16.mxu0 %v9540
        %9982 = vmatpush2.bf16.msra.mxu0 %v9539
        %9983 = vmatprep.subr.bf16.mxu0 %v9536
        %9984 = vmatpush2.bf16.msra.mxu0 %v9535
        %9985 = vmatprep.subr.bf16.mxu0 %v9532
        %9986 = vmatpush2.bf16.msra.mxu0 %v9531
        %9987 = vmatprep.mubr.bf16.mxu0 %v8936
        %9988 = vmatmul.mubr.bf16.gmra.mxu0 %v8935
        %v9989 = vpop.f32.mrf.mxu0
        %v9990 = vadd.f32 %v9104, %v9989
        %v9991 = vpop.f32.mrf.mxu0
        %v9992 = vadd.f32 %v9108, %v9991
        %v9993 = vpop.f32.mrf.mxu0
        %v9994 = vadd.f32 %v9104, %v9993
        %v9995 = vpop.f32.mrf.mxu0
        %v9996 = vadd.f32 %v9108, %v9995
        %9997 = vmatprep.mubr.bf16.mxu0 %v8940
        %9998 = vmatmul.mubr.bf16.gmra.mxu0 %v8939
        %v9999 = vpop.f32.mrf.mxu0
        %v10000 = vadd.f32 %v9104, %v9999
        %v10001 = vpop.f32.mrf.mxu0
        %v10002 = vadd.f32 %v9108, %v10001
        %v10003 = vpop.f32.mrf.mxu0
        %v10004 = vadd.f32 %v9104, %v10003
        %v10005 = vpop.f32.mrf.mxu0
        %v10006 = vadd.f32 %v9108, %v10005
        %10007 = vmatprep.mubr.bf16.mxu0 %v8944
        %10008 = vmatmul.mubr.bf16.gmra.mxu0 %v8943
        %v10009 = vpop.f32.mrf.mxu0
        %v10010 = vadd.f32 %v9104, %v10009
        %v10011 = vpop.f32.mrf.mxu0
        %v10012 = vadd.f32 %v9108, %v10011
        %v10013 = vpop.f32.mrf.mxu0
        %v10014 = vadd.f32 %v9104, %v10013
        %v10015 = vpop.f32.mrf.mxu0
        %v10016 = vadd.f32 %v9108, %v10015
        %10017 = vmatprep.mubr.bf16.mxu0 %v8948
        %10018 = vmatmul.mubr.bf16.gmra.mxu0 %v8947
        %v10019 = vpop.f32.mrf.mxu0
        %v10020 = vadd.f32 %v9104, %v10019
        %v10021 = vpop.f32.mrf.mxu0
        %v10022 = vadd.f32 %v9108, %v10021
        %v10023 = vpop.f32.mrf.mxu0
        %v10024 = vadd.f32 %v9104, %v10023
        %v10025 = vpop.f32.mrf.mxu0
        %v10026 = vadd.f32 %v9108, %v10025
        %10027 = vmatprep.mubr.bf16.mxu0 %v8952
        %10028 = vmatmul.mubr.bf16.gmra.mxu0 %v8951
        %v10029 = vpop.f32.mrf.mxu0
        %v10030 = vadd.f32 %v9104, %v10029
        %v10031 = vpop.f32.mrf.mxu0
        %v10032 = vadd.f32 %v9108, %v10031
        %v10033 = vpop.f32.mrf.mxu0
        %v10034 = vadd.f32 %v9104, %v10033
        %v10035 = vpop.f32.mrf.mxu0
        %v10036 = vadd.f32 %v9108, %v10035
        %10037 = vmatprep.mubr.bf16.mxu0 %v8956
        %10038 = vmatmul.mubr.bf16.gmra.mxu0 %v8955
        %v10039 = vpop.f32.mrf.mxu0
        %v10040 = vadd.f32 %v9104, %v10039
        %v10041 = vpop.f32.mrf.mxu0
        %v10042 = vadd.f32 %v9108, %v10041
        %v10043 = vpop.f32.mrf.mxu0
        %v10044 = vadd.f32 %v9104, %v10043
        %v10045 = vpop.f32.mrf.mxu0
        %v10046 = vadd.f32 %v9108, %v10045
        %10047 = vmatprep.mubr.bf16.mxu0 %v8960
        %10048 = vmatmul.mubr.bf16.gmra.mxu0 %v8959
        %v10049 = vpop.f32.mrf.mxu0
        %v10050 = vadd.f32 %v9104, %v10049
        %v10051 = vpop.f32.mrf.mxu0
        %v10052 = vadd.f32 %v9108, %v10051
        %v10053 = vpop.f32.mrf.mxu0
        %v10054 = vpop.f32.mrf.mxu0
        %10055 = vdwg.mxu0
        %10056 = vmatprep.subr.bf16.mxu0 %v9592
        %10057 = vmatpush1.bf16.msra.mxu0 %v9591
        %10058 = vmatprep.subr.bf16.mxu0 %v9588
        %10059 = vmatpush1.bf16.msra.mxu0 %v9587
        %10060 = vmatprep.subr.bf16.mxu0 %v9584
        %10061 = vmatpush1.bf16.msra.mxu0 %v9583
        %10062 = vmatprep.subr.bf16.mxu0 %v9580
        %10063 = vmatpush1.bf16.msra.mxu0 %v9579
        %10064 = vmatprep.subr.bf16.mxu0 %v9576
        %10065 = vmatpush1.bf16.msra.mxu0 %v9575
        %10066 = vmatprep.subr.bf16.mxu0 %v9572
        %10067 = vmatpush1.bf16.msra.mxu0 %v9571
        %10068 = vmatprep.subr.bf16.mxu0 %v9568
        %10069 = vmatpush1.bf16.msra.mxu0 %v9567
        %10070 = vmatprep.subr.bf16.mxu0 %v9564
        %10071 = vmatpush1.bf16.msra.mxu0 %v9563
        %10072 = vmatprep.subr.bf16.mxu0 %v9624
        %10073 = vmatpush2.bf16.msra.mxu0 %v9623
        %10074 = vmatprep.subr.bf16.mxu0 %v9620
        %10075 = vmatpush2.bf16.msra.mxu0 %v9619
        %10076 = vmatprep.subr.bf16.mxu0 %v9616
        %10077 = vmatpush2.bf16.msra.mxu0 %v9615
        %10078 = vmatprep.subr.bf16.mxu0 %v9612
        %10079 = vmatpush2.bf16.msra.mxu0 %v9611
        %10080 = vmatprep.subr.bf16.mxu0 %v9608
        %10081 = vmatpush2.bf16.msra.mxu0 %v9607
        %10082 = vmatprep.subr.bf16.mxu0 %v9604
        %10083 = vmatpush2.bf16.msra.mxu0 %v9603
        %10084 = vmatprep.subr.bf16.mxu0 %v9600
        %10085 = vmatpush2.bf16.msra.mxu0 %v9599
        %10086 = vmatprep.subr.bf16.mxu0 %v9596
        %10087 = vmatpush2.bf16.msra.mxu0 %v9595
        %10088 = vmatprep.mubr.bf16.mxu0 %v8938
        %10089 = vmatmul.mubr.bf16.gmra.mxu0 %v8937
        %v10090 = vpop.f32.mrf.mxu0
        %v10091 = vadd.f32 %v9990, %v10090
        %v10092 = vpop.f32.mrf.mxu0
        %v10093 = vadd.f32 %v9992, %v10092
        %v10094 = vpop.f32.mrf.mxu0
        %v10095 = vadd.f32 %v9994, %v10094
        %v10096 = vpop.f32.mrf.mxu0
        %v10097 = vadd.f32 %v9996, %v10096
        %10098 = vmatprep.mubr.bf16.mxu0 %v8942
        %10099 = vmatmul.mubr.bf16.gmra.mxu0 %v8941
        %v10100 = vpop.f32.mrf.mxu0
        %v10101 = vadd.f32 %v10000, %v10100
        %v10102 = vpop.f32.mrf.mxu0
        %v10103 = vadd.f32 %v10002, %v10102
        %v10104 = vpop.f32.mrf.mxu0
        %v10105 = vadd.f32 %v10004, %v10104
        %v10106 = vpop.f32.mrf.mxu0
        %v10107 = vadd.f32 %v10006, %v10106
        %10108 = vmatprep.mubr.bf16.mxu0 %v8946
        %10109 = vmatmul.mubr.bf16.gmra.mxu0 %v8945
        %v10110 = vpop.f32.mrf.mxu0
        %v10111 = vadd.f32 %v10010, %v10110
        %v10112 = vpop.f32.mrf.mxu0
        %v10113 = vadd.f32 %v10012, %v10112
        %v10114 = vpop.f32.mrf.mxu0
        %v10115 = vadd.f32 %v10014, %v10114
        %v10116 = vpop.f32.mrf.mxu0
        %v10117 = vadd.f32 %v10016, %v10116
        %10118 = vmatprep.mubr.bf16.mxu0 %v8950
        %10119 = vmatmul.mubr.bf16.gmra.mxu0 %v8949
        %v10120 = vpop.f32.mrf.mxu0
        %v10121 = vadd.f32 %v10020, %v10120
        %v10122 = vpop.f32.mrf.mxu0
        %v10123 = vadd.f32 %v10022, %v10122
        %v10124 = vpop.f32.mrf.mxu0
        %v10125 = vadd.f32 %v10024, %v10124
        %v10126 = vpop.f32.mrf.mxu0
        %v10127 = vadd.f32 %v10026, %v10126
        %10128 = vmatprep.mubr.bf16.mxu0 %v8954
        %10129 = vmatmul.mubr.bf16.gmra.mxu0 %v8953
        %v10130 = vpop.f32.mrf.mxu0
        %v10131 = vadd.f32 %v10030, %v10130
        %v10132 = vpop.f32.mrf.mxu0
        %v10133 = vadd.f32 %v10032, %v10132
        %v10134 = vpop.f32.mrf.mxu0
        %v10135 = vadd.f32 %v10034, %v10134
        %v10136 = vpop.f32.mrf.mxu0
        %v10137 = vadd.f32 %v10036, %v10136
        %10138 = vmatprep.mubr.bf16.mxu0 %v8958
        %10139 = vmatmul.mubr.bf16.gmra.mxu0 %v8957
        %v10140 = vpop.f32.mrf.mxu0
        %v10141 = vadd.f32 %v10040, %v10140
        %v10142 = vpop.f32.mrf.mxu0
        %v10143 = vadd.f32 %v10042, %v10142
        %v10144 = vpop.f32.mrf.mxu0
        %v10145 = vadd.f32 %v10044, %v10144
        %v10146 = vpop.f32.mrf.mxu0
        %v10147 = vadd.f32 %v10046, %v10146
        %10148 = vmatprep.mubr.bf16.mxu0 %v8962
        %10149 = vmatmul.mubr.bf16.gmra.mxu0 %v8961
        %v10150 = vpop.f32.mrf.mxu0
        %v10151 = vadd.f32 %v10050, %v10150
        %v10152 = vpop.f32.mrf.mxu0
        %v10153 = vadd.f32 %v10052, %v10152
        %v10154 = vpop.f32.mrf.mxu0
        %v10155 = vpop.f32.mrf.mxu0
        %10156 = vdwg.mxu0
        %v10157 = vmax.f32 %v9889, 0.0
        %v10158 = vmax.f32 %v9891, 0.0
        %v10159 = vmax.f32 %v10091, 0.0
        %v10160 = vmax.f32 %v10093, 0.0
        %v10161 = vmax.f32 %v9893, 0.0
        %v10162 = vmax.f32 %v9895, 0.0
        %v10163 = vmax.f32 %v10095, 0.0
        %v10164 = vmax.f32 %v10097, 0.0
        %v10165 = vmax.f32 %v9899, 0.0
        %v10166 = vmax.f32 %v9901, 0.0
        %v10167 = vmax.f32 %v10101, 0.0
        %v10168 = vmax.f32 %v10103, 0.0
        %v10169 = vmax.f32 %v9903, 0.0
        %v10170 = vmax.f32 %v9905, 0.0
        %v10171 = vmax.f32 %v10105, 0.0
        %v10172 = vmax.f32 %v10107, 0.0
        %v10173 = vmax.f32 %v9909, 0.0
        %v10174 = vmax.f32 %v9911, 0.0
        %v10175 = vmax.f32 %v10111, 0.0
        %v10176 = vmax.f32 %v10113, 0.0
        %v10177 = vmax.f32 %v9913, 0.0
        %v10178 = vmax.f32 %v9915, 0.0
        %v10179 = vmax.f32 %v10115, 0.0
        %v10180 = vmax.f32 %v10117, 0.0
        %v10181 = vmax.f32 %v9919, 0.0
        %v10182 = vmax.f32 %v9921, 0.0
        %v10183 = vmax.f32 %v10121, 0.0
        %v10184 = vmax.f32 %v10123, 0.0
        %v10185 = vmax.f32 %v9923, 0.0
        %v10186 = vmax.f32 %v9925, 0.0
        %v10187 = vmax.f32 %v10125, 0.0
        %v10188 = vmax.f32 %v10127, 0.0
        %v10189 = vmax.f32 %v9929, 0.0
        %v10190 = vmax.f32 %v9931, 0.0
        %v10191 = vmax.f32 %v10131, 0.0
        %v10192 = vmax.f32 %v10133, 0.0
        %v10193 = vmax.f32 %v9933, 0.0
        %v10194 = vmax.f32 %v9935, 0.0
        %v10195 = vmax.f32 %v10135, 0.0
        %v10196 = vmax.f32 %v10137, 0.0
        %v10197 = vmax.f32 %v9939, 0.0
        %v10198 = vmax.f32 %v9941, 0.0
        %v10199 = vmax.f32 %v10141, 0.0
        %v10200 = vmax.f32 %v10143, 0.0
        %v10201 = vmax.f32 %v9943, 0.0
        %v10202 = vmax.f32 %v9945, 0.0
        %v10203 = vmax.f32 %v10145, 0.0
        %v10204 = vmax.f32 %v10147, 0.0
        %v10205 = vmax.f32 %v9949, 0.0
        %v10206 = vmax.f32 %v9951, 0.0
        %v10207 = vmax.f32 %v10151, 0.0
        %v10208 = vmax.f32 %v10153, 0.0
        %10209 = vst [vmem:[%s566] sm:$0xff] %v10157
        %10210 = vst [vmem:[%s566 + $0x8] sm:$0xff] %v10158
        %10211 = vst [vmem:[%s566 + $0x10] sm:$0xff] %v10159
        %10212 = vst [vmem:[%s566 + $0x18] sm:$0xff] %v10160
        %10213 = vst [vmem:[%s566 + $0x20] sm:$0xff] %v10161
        %10214 = vst [vmem:[%s566 + $0x28] sm:$0xff] %v10162
        %10215 = vst [vmem:[%s566 + $0x30] sm:$0xff] %v10163
        %10216 = vst [vmem:[%s566 + $0x38] sm:$0xff] %v10164
        %10217 = vst [vmem:[%s566 + $0x40] sm:$0xff] %v10165
        %10218 = vst [vmem:[%s566 + $0x48] sm:$0xff] %v10166
        %10219 = vst [vmem:[%s566 + $0x50] sm:$0xff] %v10167
        %10220 = vst [vmem:[%s566 + $0x58] sm:$0xff] %v10168
        %10221 = vst [vmem:[%s566 + $0x60] sm:$0xff] %v10169
        %10222 = vst [vmem:[%s566 + $0x68] sm:$0xff] %v10170
        %10223 = vst [vmem:[%s566 + $0x70] sm:$0xff] %v10171
        %10224 = vst [vmem:[%s566 + $0x78] sm:$0xff] %v10172
        %10225 = vst [vmem:[%s566 + $0x80] sm:$0xff] %v10173
        %10226 = vst [vmem:[%s566 + $0x88] sm:$0xff] %v10174
        %10227 = vst [vmem:[%s566 + $0x90] sm:$0xff] %v10175
        %10228 = vst [vmem:[%s566 + $0x98] sm:$0xff] %v10176
        %10229 = vst [vmem:[%s566 + $0xa0] sm:$0xff] %v10177
        %10230 = vst [vmem:[%s566 + $0xa8] sm:$0xff] %v10178
        %10231 = vst [vmem:[%s566 + $0xb0] sm:$0xff] %v10179
        %10232 = vst [vmem:[%s566 + $0xb8] sm:$0xff] %v10180
        %10233 = vst [vmem:[%s566 + $0xc0] sm:$0xff] %v10181
        %10234 = vst [vmem:[%s566 + $0xc8] sm:$0xff] %v10182
        %10235 = vst [vmem:[%s566 + $0xd0] sm:$0xff] %v10183
        %10236 = vst [vmem:[%s566 + $0xd8] sm:$0xff] %v10184
        %10237 = vst [vmem:[%s566 + $0xe0] sm:$0xff] %v10185
        %10238 = vst [vmem:[%s566 + $0xe8] sm:$0xff] %v10186
        %10239 = vst [vmem:[%s566 + $0xf0] sm:$0xff] %v10187
        %10240 = vst [vmem:[%s566 + $0xf8] sm:$0xff] %v10188
        %10241 = vst [vmem:[%s566 + $0x100] sm:$0xff] %v10189
        %10242 = vst [vmem:[%s566 + $0x108] sm:$0xff] %v10190
        %10243 = vst [vmem:[%s566 + $0x110] sm:$0xff] %v10191
        %10244 = vst [vmem:[%s566 + $0x118] sm:$0xff] %v10192
        %10245 = vst [vmem:[%s566 + $0x120] sm:$0xff] %v10193
        %10246 = vst [vmem:[%s566 + $0x128] sm:$0xff] %v10194
        %10247 = vst [vmem:[%s566 + $0x130] sm:$0xff] %v10195
        %10248 = vst [vmem:[%s566 + $0x138] sm:$0xff] %v10196
        %10249 = vst [vmem:[%s566 + $0x140] sm:$0xff] %v10197
        %10250 = vst [vmem:[%s566 + $0x148] sm:$0xff] %v10198
        %10251 = vst [vmem:[%s566 + $0x150] sm:$0xff] %v10199
        %10252 = vst [vmem:[%s566 + $0x158] sm:$0xff] %v10200
        %10253 = vst [vmem:[%s566 + $0x160] sm:$0xff] %v10201
        %10254 = vst [vmem:[%s566 + $0x168] sm:$0xff] %v10202
        %10255 = vst [vmem:[%s566 + $0x170] sm:$0xff] %v10203
        %10256 = vst [vmem:[%s566 + $0x178] sm:$0xff] %v10204
        %10257 = vst [vmem:[%s566 + $0x180] sm:$0xff] %v10205
        %10258 = vst [vmem:[%s566 + $0x188] sm:$0xff] %v10206
        %10259 = vst [vmem:[%s566 + $0x190] sm:$0xff] %v10207
        %10260 = vst [vmem:[%s566 + $0x198] sm:$0xff] %v10208
        %s10261 = sand.u32 %s320, 1
        %s10262 = scalar_lea.sflag [#allocation5], %s10261
        %s10263 = sand.u32 %s320, 1
        %s10264 = smul.addr %s10263, 416
        %s10265 = scalar_lea.vmem [#allocation17], %s10264
        // Predicated region
        $region105: #{tpu_custom_call.1} parent=71 // pred_check
          %p10266 = pneg %p330
        $region106: #{tpu_custom_call.1} parent=71 // pred_check_branch
          %10268 = sbr.rel (%p10266) target = $region108
        $region107: #{tpu_custom_call.1} parent=71 // pred_region
          %s10269 = smul.u32 13, %s34
          %s10270 = ssub.s32 25, %s10269
          %p10271 = scmp.lt.s32.totalorder %s10270, 13
          %s10272 = scalar_select %p10271, %s10270, 13
          %s10273 = smul.u32 128, %s10272
          %s10274 = smul.u32 %s10273, 4
          %s10276 = ssub.s32 6656, %s10274
          %10277 = vsyncadd %s10262, %s10276
          %p10278 = scmp.ne.s32.totalorder 0, %s10274
          %s10279 = smul.addr %s10269, 4
          %s10280 = smul.addr %s10279, 128
          %s10281 = scalar_lea.hbm %s13, %s10280
          %s10282 = smul.u32 32, %s10272
          %s10283 = sshll.u32 %s10265, 4
          %s10284 = int_to_ptr.vmem [resolvable:$true] %s10283
          %s10285 = sshll.u32 %s10282, 4
          %10289 = dma.vmem_to_hbm [thread:$0]  (%p10278), %s10284, %s10285, %s10281, %s10262, 512, 512, 32
        $region108: #{tpu_custom_call.1} parent=71 // pred_fallthru
          _
      $region72: #{tpu_custom_call.1} parent=5 // pred_fallthru
        _
      %p10290 = scmp.le.s32.totalorder 2, %s29
      // Predicated region
      $region109: #{tpu_custom_call.1} parent=5 // pred_check
        %p10291 = pneg %p10290
      $region110: #{tpu_custom_call.1} parent=5 // pred_check_branch
        %10293 = sbr.rel (%p10291) target = $region112
      $region111: #{tpu_custom_call.1} parent=5 // pred_region
        %s10294 = ssub.s32 %s29, 2
        // Predicated region
        $region113: #{tpu_custom_call.1} parent=111 // pred_check
          %p10295 = pneg %p336
        $region114: #{tpu_custom_call.1} parent=111 // pred_check_branch
          %10297 = sbr.rel (%p10295) target = $region116
        $region115: #{tpu_custom_call.1} parent=111 // pred_region
          %s10298 = sand.u32 %s321, 1
          %s10299 = scalar_lea.sflag [#allocation5], %s10298
          %s10300 = sand.u32 %s321, 1
          %s10301 = smul.addr %s10300, 416
          %s10302 = scalar_lea.vmem [#allocation17], %s10301
          %10303 = dma.done %s10299, 6656
        $region116: #{tpu_custom_call.1} parent=111 // pred_fallthru
          _
      $region112: #{tpu_custom_call.1} parent=5 // pred_fallthru
        _
    $region6: #{tpu_custom_call.1} parent=1 // loop_footer
      %s33 = sadd.s32 1, %s29
    $region7: #{tpu_custom_call.1} parent=1 // loop_footer_branch
      %28 = sbr.rel target = $region3
    $region8: #{tpu_custom_call.1} parent=1 // loop_exit
      _
    %10304 = vsyncpa [#allocation4], 1
    %s10305 = scalar_lea.sflag [#allocation4], 1
    %10306 = vsyncpa %s10305, 1
    %10307 = vsyncpa [#allocation7], 1
    %10308 = vsyncpa [#allocation10], 1
    %10309 = vsyncpa [#allocation13], 1
    %10310 = vsyncpa [#allocation16], 1
    %10311 = vsyncpa [#allocation5], 1
    %s10312 = scalar_lea.sflag [#allocation5], 1
    %10313 = vsyncpa %s10312, 1

</llo_original>
